<compile_context>
chip_gen: v7x
topology: tpu7x:2x2x1
jax: 0.10.0
libtpu: 0.0.40
codegen_flags: <defaults>
</compile_context>

<pallas_src>
import functools

import jax
import jax.numpy as jnp
from jax import lax
from jax.experimental import pallas as pl
from jax.experimental.pallas import tpu as pltpu


# ----------------------------- small helpers -----------------------------

_VMEM_LIMIT = 32 * 1024 * 1024   # fits v5e/v6e/v7x scoped VMEM budgets


def _round_up(n, m):
    return ((n + m - 1) // m) * m


def _pad_axis(a, axis, target):
    pad = target - a.shape[axis]
    if pad == 0:
        return a
    widths = [(0, 0)] * a.ndim
    widths[axis] = (0, pad)
    return jnp.pad(a, widths)


def _fs(shape):
    """Full-array block at grid position 0 (any number of grid axes)."""
    n = len(shape)
    return pl.BlockSpec(shape, lambda *_: (0,) * n)


# --------------------------- Pallas kernels ---------------------------

def _mlp_max_kernel(feat_ref, mask_ref, w1_ref, b1_ref, w2_ref, b2_ref,
                    out_ref, *, kc):
    """PointNetConv tile: per-edge local_nn MLP then max-aggregation over K.

    Neighbor-major layout; K processed in chunks of `kc` with a running max.
      feat: (K, TM, Cin) bf16   grouped edge features cat([x_j, pos_j - pos_i])
      mask: (K, TM, 1)   f32    1.0 where neighbor is valid (inside radius)
      out : (TM, Cout)   f32    Cout padded to a lane multiple (sliced outside)
    """
    K, TM, Cin = feat_ref.shape
    Cout = out_ref.shape[1]
    w1 = w1_ref[...]
    b1 = b1_ref[...]
    w2 = w2_ref[...]
    b2 = b2_ref[...]

    acc = jnp.zeros((TM, Cout), jnp.float32)
    # Static loop over K chunks (K is small, <= 32); each chunk's leading-dim
    # merge/split is relayout-free because TM is a multiple of 8.
    for k0 in range(0, K, kc):
        f = feat_ref[k0:k0 + kc].reshape(kc * TM, Cin)            # bf16
        m = mask_ref[k0:k0 + kc].reshape(kc * TM, 1)              # f32
        h = jnp.maximum(
            jnp.dot(f, w1, preferred_element_type=jnp.float32) + b1, 0.0)
        o = jnp.maximum(
            jnp.dot(h.astype(jnp.bfloat16), w2,
                    preferred_element_type=jnp.float32) + b2, 0.0)
        # post-ReLU values are >= 0, so a multiplicative mask == masked max
        # (acc is initialized to 0).
        o = o * m
        acc = jnp.maximum(acc, jnp.max(o.reshape(kc, TM, Cout), axis=0))
    out_ref[...] = acc


def _ga_pool_kernel(feat_ref, gw1_ref, gb1_ref, gw2_ref, gb2_ref, f0_ref):
    """GlobalAbstraction MLP + per-batch running max pool (tiled over points).

    feat: (1, TN, Cin) bf16 ; f0: (1, 1, D0) f32, resident across the N axis.
    """
    n = pl.program_id(1)
    f = feat_ref[0]                                               # (TN, Cin)
    h = jnp.maximum(
        jnp.dot(f, gw1_ref[...], preferred_element_type=jnp.float32)
        + gb1_ref[...], 0.0)
    o = jnp.maximum(
        jnp.dot(h.astype(jnp.bfloat16), gw2_ref[...],
                preferred_element_type=jnp.float32) + gb2_ref[...], 0.0)
    part = jnp.max(o, axis=0, keepdims=True)                      # (1, D0)

    @pl.when(n == 0)
    def _():
        f0_ref[0] = part

    @pl.when(n > 0)
    def _():
        f0_ref[0] = jnp.maximum(f0_ref[0], part)


def _head_kernel(f0_ref, hw1_ref, hb1_ref, hw2_ref, hb2_ref, wcc_ref, bcc_ref,
                 f1_ref, f2_ref, logits_ref):
    """lin1 -> ReLU -> lin2 -> ReLU -> fused [class | color] classifier."""
    f1 = jnp.maximum(
        jnp.dot(f0_ref[...], hw1_ref[...],
                preferred_element_type=jnp.float32) + hb1_ref[...], 0.0)
    f1_ref[...] = f1
    f2 = jnp.maximum(
        jnp.dot(f1.astype(jnp.bfloat16), hw2_ref[...],
                preferred_element_type=jnp.float32) + hb2_ref[...], 0.0)
    f2_ref[...] = f2
    logits_ref[...] = jnp.dot(f2.astype(jnp.bfloat16), wcc_ref[...],
                              preferred_element_type=jnp.float32) + bcc_ref[...]


# --------------------------- Pallas wrappers ---------------------------

def mlp_max_pallas(feat, mask, w1, b1, w2, b2, *, tm=256, kc=8):
    """feat: (rows, K, Cin) bf16, mask: (rows, K) f32 -> (rows, Cout) f32."""
    rows, K, Cin = feat.shape
    H = w1.shape[1]
    Cout = w2.shape[1]                     # already padded to a 128 multiple
    TM = min(tm, _round_up(rows, 8))       # row tile, multiple of 8
    rows_pad = _round_up(rows, TM)
    kc = min(kc, _round_up(K, 8))
    K_pad = _round_up(K, kc)

    # pad rows / neighbors; padded entries have mask == 0
    feat = _pad_axis(_pad_axis(feat, 0, rows_pad), 1, K_pad)
    mask = _pad_axis(_pad_axis(mask, 0, rows_pad), 1, K_pad)

    # neighbor-major layout: K-chunk slices + reshapes are leading-dim only
    feat_t = jnp.transpose(feat, (1, 0, 2))              # (K_pad, rows_pad, Cin)
    mask_t = jnp.transpose(mask, (1, 0))[:, :, None]     # (K_pad, rows_pad, 1)

    cost = pl.CostEstimate(
        flops=2 * rows_pad * K_pad * (Cin * H + H * Cout),
        transcendentals=0,
        bytes_accessed=(feat_t.size * 2 + mask_t.size * 4
                        + (w1.size + w2.size) * 2 + (b1.size + b2.size) * 4
                        + rows_pad * Cout * 4))

    out = pl.pallas_call(
        functools.partial(_mlp_max_kernel, kc=kc),
        grid=(rows_pad // TM,),
        in_specs=[
            pl.BlockSpec((K_pad, TM, Cin), lambda i: (0, i, 0)),
            pl.BlockSpec((K_pad, TM, 1), lambda i: (0, i, 0)),
            pl.BlockSpec(w1.shape, lambda i: (0, 0)),
            pl.BlockSpec(b1.shape, lambda i: (0, 0)),
            pl.BlockSpec(w2.shape, lambda i: (0, 0)),
            pl.BlockSpec(b2.shape, lambda i: (0, 0)),
        ],
        out_specs=pl.BlockSpec((TM, Cout), lambda i: (i, 0)),
        out_shape=jax.ShapeDtypeStruct((rows_pad, Cout), jnp.float32),
        compiler_params=pltpu.CompilerParams(
            dimension_semantics=("parallel",),
            vmem_limit_bytes=_VMEM_LIMIT),
        cost_estimate=cost,
    )(feat_t, mask_t, w1, b1, w2, b2)
    return out[:rows]


def ga_head_pallas(feat, ga_params, head_params, num_classes, num_colors, *,
                   tn=256):
    """feat: (B, N, Cin) f32 -> (f0, f1, f2, class_pred, color_pred)."""
    B, N, Cin = feat.shape
    (gw1, gb1), (gw2, gb2) = ga_params
    (hw1, hb1), (hw2, hb2), (wc, bc), (wk, bk) = head_params
    H1 = gw1.shape[1]
    D0 = gw2.shape[1]                                   # 1024

    # point-chunk tile; pad N with copies of the last point (max unchanged)
    TN = min(tn, _round_up(N, 8))
    n_pad = _round_up(N, TN)
    if n_pad > N:
        feat = jnp.concatenate(
            [feat, jnp.broadcast_to(feat[:, -1:, :], (B, n_pad - N, Cin))],
            axis=1)
    featb = feat.astype(jnp.bfloat16)
    gw1b, gw2b = gw1.astype(jnp.bfloat16), gw2.astype(jnp.bfloat16)

    pool_cost = pl.CostEstimate(
        flops=2 * B * n_pad * (Cin * H1 + H1 * D0),
        transcendentals=0,
        bytes_accessed=(featb.size * 2 + (gw1.size + gw2.size) * 2
                        + (gb1.size + gb2.size) * 4 + B * D0 * 4))

    f0_3d = pl.pallas_call(
        _ga_pool_kernel,
        grid=(B, n_pad // TN),
        in_specs=[
            pl.BlockSpec((1, TN, Cin), lambda b, n: (b, n, 0)),
            pl.BlockSpec(gw1b.shape, lambda b, n: (0, 0)),
            pl.BlockSpec(gb1.shape, lambda b, n: (0, 0)),
            pl.BlockSpec(gw2b.shape, lambda b, n: (0, 0)),
            pl.BlockSpec(gb2.shape, lambda b, n: (0, 0)),
        ],
        out_specs=pl.BlockSpec((1, 1, D0), lambda b, n: (b, 0, 0)),
        out_shape=jax.ShapeDtypeStruct((B, 1, D0), jnp.float32),
        compiler_params=pltpu.CompilerParams(
            dimension_semantics=("parallel", "arbitrary"),
            vmem_limit_bytes=_VMEM_LIMIT),
        cost_estimate=pool_cost,
    )(featb, gw1b, gb1, gw2b, gb2)
    f0 = f0_3d.reshape(B, D0)

    # fuse the two classifier heads into one lane-dense matmul
    wcc = jnp.concatenate([wc, wk], axis=1)
    bcc = jnp.concatenate([bc, bk], axis=1)
    ncc = wcc.shape[1]
    ncc_pad = _round_up(ncc, 128)
    wcc = _pad_axis(wcc, 1, ncc_pad)
    bcc = _pad_axis(bcc, 1, ncc_pad)

    head_args = (f0.astype(jnp.bfloat16),
                 hw1.astype(jnp.bfloat16), hb1,
                 hw2.astype(jnp.bfloat16), hb2,
                 wcc.astype(jnp.bfloat16), bcc)
    out_shapes = (
        jax.ShapeDtypeStruct((B, hw1.shape[1]), jnp.float32),   # features1
        jax.ShapeDtypeStruct((B, hw2.shape[1]), jnp.float32),   # features2
        jax.ShapeDtypeStruct((B, ncc_pad), jnp.float32),        # fused logits
    )
    f1, f2, logits = pl.pallas_call(
        _head_kernel,
        grid=(1,),
        in_specs=[_fs(a.shape) for a in head_args],
        out_specs=tuple(_fs(s.shape) for s in out_shapes),
        out_shape=out_shapes,
        compiler_params=pltpu.CompilerParams(vmem_limit_bytes=_VMEM_LIMIT),
    )(*head_args)

    class_pred = logits[:, :num_classes]
    color_pred = logits[:, num_classes:num_classes + num_colors]
    return f0, f1, f2, class_pred, color_pred


# ------------------ plain-JAX glue (graph construction) ------------------

def fps_indices(pos, n_samples):
    """Farthest point sampling for one batch element. pos: (N, 3)."""
    N = pos.shape[0]
    idxs0 = jnp.zeros((n_samples,), jnp.int32)
    d0 = jnp.full((N,), jnp.inf, jnp.float32)

    def body(i, carry):
        idxs, dmin = carry
        last = pos[idxs[i - 1]]
        d = jnp.sum((pos - last[None, :]) ** 2, axis=-1)
        dmin = jnp.minimum(dmin, d)
        nxt = jnp.argmax(dmin).astype(jnp.int32)
        return idxs.at[i].set(nxt), dmin

    idxs, _ = lax.fori_loop(1, n_samples, body, (idxs0, d0))
    return idxs


def radius_neighbors(pos, centers, r, k):
    """K nearest neighbors of each center, masked to distance <= r."""
    # TODO(synk): at large N this materializes a (M, N) distance matrix; should
    #             be tiled / moved into a Pallas pass for realistic point clouds.
    d2 = jnp.sum((centers[:, None, :] - pos[None, :, :]) ** 2, axis=-1)   # (M, N)
    neg_d2, idx = lax.top_k(-d2, k)
    mask = (-neg_d2) <= r * r
    return idx.astype(jnp.int32), mask.astype(jnp.float32)


def set_abstraction(x, pos, ratio, radius_, mlp_params, *, k_max=32, tm=256):
    """SetAbstractionLayer: fps -> radius graph -> PointNetConv(local_nn, aggr=max)."""
    B, N, C = x.shape
    M = max(int(N * ratio), 1)
    K = min(k_max, N)

    idx_c = jax.vmap(lambda p: fps_indices(p, M))(pos)                        # (B, M)
    centers = jnp.take_along_axis(pos, idx_c[:, :, None], axis=1)             # (B, M, 3)
    nbr_idx, nbr_mask = jax.vmap(
        lambda p, c: radius_neighbors(p, c, radius_, K))(pos, centers)        # (B, M, K)

    x_j = jax.vmap(lambda xb, ib: xb[ib])(x, nbr_idx)                         # (B, M, K, C)
    pos_j = jax.vmap(lambda pb, ib: pb[ib])(pos, nbr_idx)                     # (B, M, K, 3)
    rel = pos_j - centers[:, :, None, :]                                      # (B, M, K, 3)
    feat = jnp.concatenate([x_j, rel], axis=-1)                               # (B, M, K, C+3)

    (w1, b1), (w2, b2) = mlp_params
    Cout = w2.shape[1]
    cout_pad = _round_up(Cout, 128)          # lane-dense output store
    w2p = _pad_axis(w2, 1, cout_pad)
    b2p = _pad_axis(b2, 1, cout_pad)

    feat = feat.reshape(B * M, K, C + 3).astype(jnp.bfloat16)  # no input lane pad
    mask = nbr_mask.reshape(B * M, K)

    out = mlp_max_pallas(feat, mask,
                         w1.astype(jnp.bfloat16), b1,
                         w2p.astype(jnp.bfloat16), b2p, tm=tm)                # (B*M, cout_pad)
    out = out[:, :Cout]
    return out.reshape(B, M, Cout), centers


def pointnet2_forward(params, x, pos, num_classes, num_colors):
    # SA1/SA2 have tiny hidden widths -> bigger row tiles; SA3 stays at 256
    # (conservative for v7x's 64 MiB VMEM even though K-chunking already
    #  bounds the intermediates).
    x1, pos1 = set_abstraction(x, pos, 0.5, 0.2, params['sa1'], tm=512)
    x2, pos2 = set_abstraction(x1, pos1, 0.5, 0.3, params['sa2'], tm=512)
    x3, pos3 = set_abstraction(x2, pos2, 0.5, 0.4, params['sa3'], tm=256)

    feat = jnp.concatenate([x3, pos3], axis=-1)                               # (B, N3, 259)
    head_params = (params['lin1'], params['lin2'], params['cls'], params['col'])
    f0, f1, f2, class_pred, color_pred = ga_head_pallas(
        feat, params['ga'], head_params, num_classes, num_colors)

    return dict(features0=f0, features1=f1, features2=f2,
                class_pred=class_pred, color_pred=color_pred)


# --------------------- deterministic parameter init ---------------------

def _linear_params(key, fan_in, fan_out):
    kw, kb = jax.random.split(key)
    bound = 1.0 / float(fan_in) ** 0.5
    # stored as (in, out) for y = x @ W + b  (PyTorch stores (out, in))
    w = jax.random.uniform(kw, (fan_in, fan_out), jnp.float32, -bound, bound)
    b = jax.random.uniform(kb, (1, fan_out), jnp.float32, -bound, bound)
    return w, b


def _mlp_params(key, dims):
    keys = jax.random.split(key, len(dims) - 1)
    return [_linear_params(k, i, o) for k, i, o in zip(keys, dims[:-1], dims[1:])]


def init_params(key, num_classes, num_colors):
    ks = jax.random.split(key, 8)
    return {
        'sa1': _mlp_params(ks[0], [3 + 3, 32, 64]),
        'sa2': _mlp_params(ks[1], [64 + 3, 128, 128]),
        'sa3': _mlp_params(ks[2], [128 + 3, 256, 256]),
        'ga':  _mlp_params(ks[3], [256 + 3, 512, 1024]),
        'lin1': _linear_params(ks[4], 1024, 512),
        'lin2': _linear_params(ks[5], 512, 256),
        'cls':  _linear_params(ks[6], 256, num_classes),
        'col':  _linear_params(ks[7], 256, num_colors),
    }


# --------------------------- main ---------------------------

if __name__ == "__main__":
    key = jax.random.PRNGKey(0)
    B, N = 2, 32                      # 2 point clouds, 32 points each
    num_classes, num_colors = 10, 8
    k_pos, k_x, k_p = jax.random.split(key, 3)
    pos = jax.random.normal(k_pos, (B, N, 3), jnp.float32)      # data.pos
    x = jax.random.uniform(k_x, (B, N, 3), jnp.float32)         # data.x (3 extra feats)
    params = init_params(k_p, num_classes, num_colors)

    fwd = jax.jit(functools.partial(
        pointnet2_forward, num_classes=num_classes, num_colors=num_colors))
    out = fwd(params, x, pos)
    out = jax.tree_util.tree_map(jax.block_until_ready, out)

    assert out['features0'].shape == (B, 1024)
    assert out['features1'].shape == (B, 512)
    assert out['features2'].shape == (B, 256)
    assert out['class_pred'].shape == (B, num_classes)
    assert out['color_pred'].shape == (B, num_colors)
    for v in out.values():
        assert bool(jnp.all(jnp.isfinite(v)))
    print("KERNEL_OK")
</pallas_src>

<mosaic_0001>
module attributes {stable_mosaic.version = 11 : i64} {
  func.func @_mlp_max_kernel(%arg0: i32, %arg1: memref<32x32x6xbf16, #tpu.memory_space<vmem>>, %arg2: memref<32x32x1xf32, #tpu.memory_space<vmem>>, %arg3: memref<6x32xbf16, #tpu.memory_space<vmem>>, %arg4: memref<1x32xf32, #tpu.memory_space<vmem>>, %arg5: memref<32x128xbf16, #tpu.memory_space<vmem>>, %arg6: memref<1x128xf32, #tpu.memory_space<vmem>>, %arg7: memref<32x128xf32, #tpu.memory_space<vmem>>) attributes {dimension_semantics = [#tpu.dimension_semantics<parallel>], iteration_bounds = array<i64: 1>, scalar_prefetch = 0 : i64, scratch_operands = 0 : i64, tpu.core_type = #tpu.core_type<tc>, window_params = [{transform_indices = @transform_0, window_bounds = array<i64: 32, 32, 6>}, {transform_indices = @transform_1, window_bounds = array<i64: 32, 32, 1>}, {pipeline_mode = #tpu.pipeline_mode<synchronous>, transform_indices = @transform_2, window_bounds = array<i64: 6, 32>}, {pipeline_mode = #tpu.pipeline_mode<synchronous>, transform_indices = @transform_3, window_bounds = array<i64: 1, 32>}, {pipeline_mode = #tpu.pipeline_mode<synchronous>, transform_indices = @transform_4, window_bounds = array<i64: 32, 128>}, {pipeline_mode = #tpu.pipeline_mode<synchronous>, transform_indices = @transform_5, window_bounds = array<i64: 1, 128>}, {transform_indices = @transform_6, window_bounds = array<i64: 32, 128>}]} {
    %c0 = arith.constant 0 : index
    %c0_0 = arith.constant 0 : index
    %0 = vector.load %arg3[%c0, %c0_0] : memref<6x32xbf16, #tpu.memory_space<vmem>>, vector<6x32xbf16>
    %c0_1 = arith.constant 0 : index
    %c0_2 = arith.constant 0 : index
    %1 = vector.load %arg4[%c0_1, %c0_2] : memref<1x32xf32, #tpu.memory_space<vmem>>, vector<1x32xf32>
    %c0_3 = arith.constant 0 : index
    %c0_4 = arith.constant 0 : index
    %2 = vector.load %arg5[%c0_3, %c0_4] : memref<32x128xbf16, #tpu.memory_space<vmem>>, vector<32x128xbf16>
    %c0_5 = arith.constant 0 : index
    %c0_6 = arith.constant 0 : index
    %3 = vector.load %arg6[%c0_5, %c0_6] : memref<1x128xf32, #tpu.memory_space<vmem>>, vector<1x128xf32>
    %cst = arith.constant 0.000000e+00 : f32
    %4 = vector.broadcast %cst : f32 to vector<32x128xf32>
    %c0_7 = arith.constant 0 : index
    %c0_8 = arith.constant 0 : index
    %c0_9 = arith.constant 0 : index
    %5 = vector.load %arg1[%c0_7, %c0_8, %c0_9] : memref<32x32x6xbf16, #tpu.memory_space<vmem>>, vector<8x32x6xbf16>
    %6 = vector.shape_cast %5 : vector<8x32x6xbf16> to vector<256x6xbf16>
    %c0_10 = arith.constant 0 : index
    %c0_11 = arith.constant 0 : index
    %c0_12 = arith.constant 0 : index
    %7 = vector.load %arg2[%c0_10, %c0_11, %c0_12] : memref<32x32x1xf32, #tpu.memory_space<vmem>>, vector<8x32x1xf32>
    %8 = vector.shape_cast %7 : vector<8x32x1xf32> to vector<256x1xf32>
    %cst_13 = arith.constant dense<0.000000e+00> : vector<256x32xf32>
    %9 = tpu.matmul %6, %0, %cst_13 {dimension_numbers = #tpu.dot_dimension_numbers<[1], [0], [0], [1], [0, 0, 1, 1], [], []>} : vector<256x6xbf16>, vector<6x32xbf16>, vector<256x32xf32> -> vector<256x32xf32>
    %10 = vector.broadcast %1 : vector<1x32xf32> to vector<256x32xf32>
    %11 = arith.addf %9, %10 : vector<256x32xf32>
    %cst_14 = arith.constant 0.000000e+00 : f32
    %12 = vector.broadcast %cst_14 : f32 to vector<256x32xf32>
    %13 = arith.maximumf %11, %12 : vector<256x32xf32>
    %14 = arith.truncf %13 : vector<256x32xf32> to vector<256x32xbf16>
    %cst_15 = arith.constant dense<0.000000e+00> : vector<256x128xf32>
    %15 = tpu.matmul %14, %2, %cst_15 {dimension_numbers = #tpu.dot_dimension_numbers<[1], [0], [0], [1], [0, 0, 1, 1], [], []>} : vector<256x32xbf16>, vector<32x128xbf16>, vector<256x128xf32> -> vector<256x128xf32>
    %16 = vector.broadcast %3 : vector<1x128xf32> to vector<256x128xf32>
    %17 = arith.addf %15, %16 : vector<256x128xf32>
    %cst_16 = arith.constant 0.000000e+00 : f32
    %18 = vector.broadcast %cst_16 : f32 to vector<256x128xf32>
    %19 = arith.maximumf %17, %18 : vector<256x128xf32>
    %20 = vector.broadcast %8 : vector<256x1xf32> to vector<256x128xf32>
    %21 = arith.mulf %19, %20 : vector<256x128xf32>
    %22 = vector.shape_cast %21 : vector<256x128xf32> to vector<8x32x128xf32>
    %cst_17 = arith.constant dense<0xFF800000> : vector<32x128xf32>
    %23 = vector.multi_reduction <maximumf>, %22, %cst_17 [0] : vector<8x32x128xf32> to vector<32x128xf32>
    %24 = arith.maximumf %4, %23 : vector<32x128xf32>
    %c8 = arith.constant 8 : index
    %c0_18 = arith.constant 0 : index
    %c0_19 = arith.constant 0 : index
    %25 = vector.load %arg1[%c8, %c0_18, %c0_19] : memref<32x32x6xbf16, #tpu.memory_space<vmem>>, vector<8x32x6xbf16>
    %26 = vector.shape_cast %25 : vector<8x32x6xbf16> to vector<256x6xbf16>
    %c8_20 = arith.constant 8 : index
    %c0_21 = arith.constant 0 : index
    %c0_22 = arith.constant 0 : index
    %27 = vector.load %arg2[%c8_20, %c0_21, %c0_22] : memref<32x32x1xf32, #tpu.memory_space<vmem>>, vector<8x32x1xf32>
    %28 = vector.shape_cast %27 : vector<8x32x1xf32> to vector<256x1xf32>
    %cst_23 = arith.constant dense<0.000000e+00> : vector<256x32xf32>
    %29 = tpu.matmul %26, %0, %cst_23 {dimension_numbers = #tpu.dot_dimension_numbers<[1], [0], [0], [1], [0, 0, 1, 1], [], []>} : vector<256x6xbf16>, vector<6x32xbf16>, vector<256x32xf32> -> vector<256x32xf32>
    %30 = vector.broadcast %1 : vector<1x32xf32> to vector<256x32xf32>
    %31 = arith.addf %29, %30 : vector<256x32xf32>
    %cst_24 = arith.constant 0.000000e+00 : f32
    %32 = vector.broadcast %cst_24 : f32 to vector<256x32xf32>
    %33 = arith.maximumf %31, %32 : vector<256x32xf32>
    %34 = arith.truncf %33 : vector<256x32xf32> to vector<256x32xbf16>
    %cst_25 = arith.constant dense<0.000000e+00> : vector<256x128xf32>
    %35 = tpu.matmul %34, %2, %cst_25 {dimension_numbers = #tpu.dot_dimension_numbers<[1], [0], [0], [1], [0, 0, 1, 1], [], []>} : vector<256x32xbf16>, vector<32x128xbf16>, vector<256x128xf32> -> vector<256x128xf32>
    %36 = vector.broadcast %3 : vector<1x128xf32> to vector<256x128xf32>
    %37 = arith.addf %35, %36 : vector<256x128xf32>
    %cst_26 = arith.constant 0.000000e+00 : f32
    %38 = vector.broadcast %cst_26 : f32 to vector<256x128xf32>
    %39 = arith.maximumf %37, %38 : vector<256x128xf32>
    %40 = vector.broadcast %28 : vector<256x1xf32> to vector<256x128xf32>
    %41 = arith.mulf %39, %40 : vector<256x128xf32>
    %42 = vector.shape_cast %41 : vector<256x128xf32> to vector<8x32x128xf32>
    %cst_27 = arith.constant dense<0xFF800000> : vector<32x128xf32>
    %43 = vector.multi_reduction <maximumf>, %42, %cst_27 [0] : vector<8x32x128xf32> to vector<32x128xf32>
    %44 = arith.maximumf %24, %43 : vector<32x128xf32>
    %c16 = arith.constant 16 : index
    %c0_28 = arith.constant 0 : index
    %c0_29 = arith.constant 0 : index
    %45 = vector.load %arg1[%c16, %c0_28, %c0_29] : memref<32x32x6xbf16, #tpu.memory_space<vmem>>, vector<8x32x6xbf16>
    %46 = vector.shape_cast %45 : vector<8x32x6xbf16> to vector<256x6xbf16>
    %c16_30 = arith.constant 16 : index
    %c0_31 = arith.constant 0 : index
    %c0_32 = arith.constant 0 : index
    %47 = vector.load %arg2[%c16_30, %c0_31, %c0_32] : memref<32x32x1xf32, #tpu.memory_space<vmem>>, vector<8x32x1xf32>
    %48 = vector.shape_cast %47 : vector<8x32x1xf32> to vector<256x1xf32>
    %cst_33 = arith.constant dense<0.000000e+00> : vector<256x32xf32>
    %49 = tpu.matmul %46, %0, %cst_33 {dimension_numbers = #tpu.dot_dimension_numbers<[1], [0], [0], [1], [0, 0, 1, 1], [], []>} : vector<256x6xbf16>, vector<6x32xbf16>, vector<256x32xf32> -> vector<256x32xf32>
    %50 = vector.broadcast %1 : vector<1x32xf32> to vector<256x32xf32>
    %51 = arith.addf %49, %50 : vector<256x32xf32>
    %cst_34 = arith.constant 0.000000e+00 : f32
    %52 = vector.broadcast %cst_34 : f32 to vector<256x32xf32>
    %53 = arith.maximumf %51, %52 : vector<256x32xf32>
    %54 = arith.truncf %53 : vector<256x32xf32> to vector<256x32xbf16>
    %cst_35 = arith.constant dense<0.000000e+00> : vector<256x128xf32>
    %55 = tpu.matmul %54, %2, %cst_35 {dimension_numbers = #tpu.dot_dimension_numbers<[1], [0], [0], [1], [0, 0, 1, 1], [], []>} : vector<256x32xbf16>, vector<32x128xbf16>, vector<256x128xf32> -> vector<256x128xf32>
    %56 = vector.broadcast %3 : vector<1x128xf32> to vector<256x128xf32>
    %57 = arith.addf %55, %56 : vector<256x128xf32>
    %cst_36 = arith.constant 0.000000e+00 : f32
    %58 = vector.broadcast %cst_36 : f32 to vector<256x128xf32>
    %59 = arith.maximumf %57, %58 : vector<256x128xf32>
    %60 = vector.broadcast %48 : vector<256x1xf32> to vector<256x128xf32>
    %61 = arith.mulf %59, %60 : vector<256x128xf32>
    %62 = vector.shape_cast %61 : vector<256x128xf32> to vector<8x32x128xf32>
    %cst_37 = arith.constant dense<0xFF800000> : vector<32x128xf32>
    %63 = vector.multi_reduction <maximumf>, %62, %cst_37 [0] : vector<8x32x128xf32> to vector<32x128xf32>
    %64 = arith.maximumf %44, %63 : vector<32x128xf32>
    %c24 = arith.constant 24 : index
    %c0_38 = arith.constant 0 : index
    %c0_39 = arith.constant 0 : index
    %65 = vector.load %arg1[%c24, %c0_38, %c0_39] : memref<32x32x6xbf16, #tpu.memory_space<vmem>>, vector<8x32x6xbf16>
    %66 = vector.shape_cast %65 : vector<8x32x6xbf16> to vector<256x6xbf16>
    %c24_40 = arith.constant 24 : index
    %c0_41 = arith.constant 0 : index
    %c0_42 = arith.constant 0 : index
    %67 = vector.load %arg2[%c24_40, %c0_41, %c0_42] : memref<32x32x1xf32, #tpu.memory_space<vmem>>, vector<8x32x1xf32>
    %68 = vector.shape_cast %67 : vector<8x32x1xf32> to vector<256x1xf32>
    %cst_43 = arith.constant dense<0.000000e+00> : vector<256x32xf32>
    %69 = tpu.matmul %66, %0, %cst_43 {dimension_numbers = #tpu.dot_dimension_numbers<[1], [0], [0], [1], [0, 0, 1, 1], [], []>} : vector<256x6xbf16>, vector<6x32xbf16>, vector<256x32xf32> -> vector<256x32xf32>
    %70 = vector.broadcast %1 : vector<1x32xf32> to vector<256x32xf32>
    %71 = arith.addf %69, %70 : vector<256x32xf32>
    %cst_44 = arith.constant 0.000000e+00 : f32
    %72 = vector.broadcast %cst_44 : f32 to vector<256x32xf32>
    %73 = arith.maximumf %71, %72 : vector<256x32xf32>
    %74 = arith.truncf %73 : vector<256x32xf32> to vector<256x32xbf16>
    %cst_45 = arith.constant dense<0.000000e+00> : vector<256x128xf32>
    %75 = tpu.matmul %74, %2, %cst_45 {dimension_numbers = #tpu.dot_dimension_numbers<[1], [0], [0], [1], [0, 0, 1, 1], [], []>} : vector<256x32xbf16>, vector<32x128xbf16>, vector<256x128xf32> -> vector<256x128xf32>
    %76 = vector.broadcast %3 : vector<1x128xf32> to vector<256x128xf32>
    %77 = arith.addf %75, %76 : vector<256x128xf32>
    %cst_46 = arith.constant 0.000000e+00 : f32
    %78 = vector.broadcast %cst_46 : f32 to vector<256x128xf32>
    %79 = arith.maximumf %77, %78 : vector<256x128xf32>
    %80 = vector.broadcast %68 : vector<256x1xf32> to vector<256x128xf32>
    %81 = arith.mulf %79, %80 : vector<256x128xf32>
    %82 = vector.shape_cast %81 : vector<256x128xf32> to vector<8x32x128xf32>
    %cst_47 = arith.constant dense<0xFF800000> : vector<32x128xf32>
    %83 = vector.multi_reduction <maximumf>, %82, %cst_47 [0] : vector<8x32x128xf32> to vector<32x128xf32>
    %84 = arith.maximumf %64, %83 : vector<32x128xf32>
    %c0_48 = arith.constant 0 : index
    %c0_49 = arith.constant 0 : index
    %85 = vector.load %arg7[%c0_48, %c0_49] : memref<32x128xf32, #tpu.memory_space<vmem>>, vector<32x128xf32>
    tpu.vector_store %arg7[%c0_48, %c0_49], %84 {strides = array<i32>} : memref<32x128xf32, #tpu.memory_space<vmem>>, vector<32x128xf32>,
    return
  }
  func.func @transform_0(%arg0: i32) -> (i32, i32, i32) {
    %c0_i32 = arith.constant 0 : i32
    %c0_i32_0 = arith.constant 0 : i32
    %c0_i32_1 = arith.constant 0 : i32
    return %c0_i32, %arg0, %c0_i32_0 : i32, i32, i32
  }
  func.func @transform_1(%arg0: i32) -> (i32, i32, i32) {
    %c0_i32 = arith.constant 0 : i32
    %c0_i32_0 = arith.constant 0 : i32
    %c0_i32_1 = arith.constant 0 : i32
    return %c0_i32, %arg0, %c0_i32_0 : i32, i32, i32
  }
  func.func @transform_2(%arg0: i32) -> (i32, i32) {
    %c0_i32 = arith.constant 0 : i32
    %c0_i32_0 = arith.constant 0 : i32
    %c0_i32_1 = arith.constant 0 : i32
    return %c0_i32, %c0_i32_0 : i32, i32
  }
  func.func @transform_3(%arg0: i32) -> (i32, i32) {
    %c0_i32 = arith.constant 0 : i32
    %c0_i32_0 = arith.constant 0 : i32
    %c0_i32_1 = arith.constant 0 : i32
    return %c0_i32, %c0_i32_0 : i32, i32
  }
  func.func @transform_4(%arg0: i32) -> (i32, i32) {
    %c0_i32 = arith.constant 0 : i32
    %c0_i32_0 = arith.constant 0 : i32
    %c0_i32_1 = arith.constant 0 : i32
    return %c0_i32, %c0_i32_0 : i32, i32
  }
  func.func @transform_5(%arg0: i32) -> (i32, i32) {
    %c0_i32 = arith.constant 0 : i32
    %c0_i32_0 = arith.constant 0 : i32
    %c0_i32_1 = arith.constant 0 : i32
    return %c0_i32, %c0_i32_0 : i32, i32
  }
  func.func @transform_6(%arg0: i32) -> (i32, i32) {
    %c0_i32 = arith.constant 0 : i32
    %c0_i32_0 = arith.constant 0 : i32
    return %arg0, %c0_i32 : i32, i32
  }
}

module attributes {stable_mosaic.version = 11 : i64} {
  func.func @_mlp_max_kernel(%arg0: i32, %arg1: memref<16x16x67xbf16, #tpu.memory_space<vmem>>, %arg2: memref<16x16x1xf32, #tpu.memory_space<vmem>>, %arg3: memref<67x128xbf16, #tpu.memory_space<vmem>>, %arg4: memref<1x128xf32, #tpu.memory_space<vmem>>, %arg5: memref<128x128xbf16, #tpu.memory_space<vmem>>, %arg6: memref<1x128xf32, #tpu.memory_space<vmem>>, %arg7: memref<16x128xf32, #tpu.memory_space<vmem>>) attributes {dimension_semantics = [#tpu.dimension_semantics<parallel>], iteration_bounds = array<i64: 1>, scalar_prefetch = 0 : i64, scratch_operands = 0 : i64, tpu.core_type = #tpu.core_type<tc>, window_params = [{transform_indices = @transform_0, window_bounds = array<i64: 16, 16, 67>}, {transform_indices = @transform_1, window_bounds = array<i64: 16, 16, 1>}, {pipeline_mode = #tpu.pipeline_mode<synchronous>, transform_indices = @transform_2, window_bounds = array<i64: 67, 128>}, {pipeline_mode = #tpu.pipeline_mode<synchronous>, transform_indices = @transform_3, window_bounds = array<i64: 1, 128>}, {pipeline_mode = #tpu.pipeline_mode<synchronous>, transform_indices = @transform_4, window_bounds = array<i64: 128, 128>}, {pipeline_mode = #tpu.pipeline_mode<synchronous>, transform_indices = @transform_5, window_bounds = array<i64: 1, 128>}, {transform_indices = @transform_6, window_bounds = array<i64: 16, 128>}]} {
    %c0 = arith.constant 0 : index
    %c0_0 = arith.constant 0 : index
    %0 = vector.load %arg3[%c0, %c0_0] : memref<67x128xbf16, #tpu.memory_space<vmem>>, vector<67x128xbf16>
    %c0_1 = arith.constant 0 : index
    %c0_2 = arith.constant 0 : index
    %1 = vector.load %arg4[%c0_1, %c0_2] : memref<1x128xf32, #tpu.memory_space<vmem>>, vector<1x128xf32>
    %c0_3 = arith.constant 0 : index
    %c0_4 = arith.constant 0 : index
    %2 = vector.load %arg5[%c0_3, %c0_4] : memref<128x128xbf16, #tpu.memory_space<vmem>>, vector<128x128xbf16>
    %c0_5 = arith.constant 0 : index
    %c0_6 = arith.constant 0 : index
    %3 = vector.load %arg6[%c0_5, %c0_6] : memref<1x128xf32, #tpu.memory_space<vmem>>, vector<1x128xf32>
    %cst = arith.constant 0.000000e+00 : f32
    %4 = vector.broadcast %cst : f32 to vector<16x128xf32>
    %c0_7 = arith.constant 0 : index
    %c0_8 = arith.constant 0 : index
    %c0_9 = arith.constant 0 : index
    %5 = vector.load %arg1[%c0_7, %c0_8, %c0_9] : memref<16x16x67xbf16, #tpu.memory_space<vmem>>, vector<8x16x67xbf16>
    %6 = vector.shape_cast %5 : vector<8x16x67xbf16> to vector<128x67xbf16>
    %c0_10 = arith.constant 0 : index
    %c0_11 = arith.constant 0 : index
    %c0_12 = arith.constant 0 : index
    %7 = vector.load %arg2[%c0_10, %c0_11, %c0_12] : memref<16x16x1xf32, #tpu.memory_space<vmem>>, vector<8x16x1xf32>
    %8 = vector.shape_cast %7 : vector<8x16x1xf32> to vector<128x1xf32>
    %cst_13 = arith.constant dense<0.000000e+00> : vector<128x128xf32>
    %9 = tpu.matmul %6, %0, %cst_13 {dimension_numbers = #tpu.dot_dimension_numbers<[1], [0], [0], [1], [0, 0, 1, 1], [], []>} : vector<128x67xbf16>, vector<67x128xbf16>, vector<128x128xf32> -> vector<128x128xf32>
    %10 = vector.broadcast %1 : vector<1x128xf32> to vector<128x128xf32>
    %11 = arith.addf %9, %10 : vector<128x128xf32>
    %cst_14 = arith.constant 0.000000e+00 : f32
    %12 = vector.broadcast %cst_14 : f32 to vector<128x128xf32>
    %13 = arith.maximumf %11, %12 : vector<128x128xf32>
    %14 = arith.truncf %13 : vector<128x128xf32> to vector<128x128xbf16>
    %cst_15 = arith.constant dense<0.000000e+00> : vector<128x128xf32>
    %15 = tpu.matmul %14, %2, %cst_15 {dimension_numbers = #tpu.dot_dimension_numbers<[1], [0], [0], [1], [0, 0, 1, 1], [], []>} : vector<128x128xbf16>, vector<128x128xbf16>, vector<128x128xf32> -> vector<128x128xf32>
    %16 = vector.broadcast %3 : vector<1x128xf32> to vector<128x128xf32>
    %17 = arith.addf %15, %16 : vector<128x128xf32>
    %cst_16 = arith.constant 0.000000e+00 : f32
    %18 = vector.broadcast %cst_16 : f32 to vector<128x128xf32>
    %19 = arith.maximumf %17, %18 : vector<128x128xf32>
    %20 = vector.broadcast %8 : vector<128x1xf32> to vector<128x128xf32>
    %21 = arith.mulf %19, %20 : vector<128x128xf32>
    %22 = vector.shape_cast %21 : vector<128x128xf32> to vector<8x16x128xf32>
    %cst_17 = arith.constant dense<0xFF800000> : vector<16x128xf32>
    %23 = vector.multi_reduction <maximumf>, %22, %cst_17 [0] : vector<8x16x128xf32> to vector<16x128xf32>
    %24 = arith.maximumf %4, %23 : vector<16x128xf32>
    %c8 = arith.constant 8 : index
    %c0_18 = arith.constant 0 : index
    %c0_19 = arith.constant 0 : index
    %25 = vector.load %arg1[%c8, %c0_18, %c0_19] : memref<16x16x67xbf16, #tpu.memory_space<vmem>>, vector<8x16x67xbf16>
    %26 = vector.shape_cast %25 : vector<8x16x67xbf16> to vector<128x67xbf16>
    %c8_20 = arith.constant 8 : index
    %c0_21 = arith.constant 0 : index
    %c0_22 = arith.constant 0 : index
    %27 = vector.load %arg2[%c8_20, %c0_21, %c0_22] : memref<16x16x1xf32, #tpu.memory_space<vmem>>, vector<8x16x1xf32>
    %28 = vector.shape_cast %27 : vector<8x16x1xf32> to vector<128x1xf32>
    %cst_23 = arith.constant dense<0.000000e+00> : vector<128x128xf32>
    %29 = tpu.matmul %26, %0, %cst_23 {dimension_numbers = #tpu.dot_dimension_numbers<[1], [0], [0], [1], [0, 0, 1, 1], [], []>} : vector<128x67xbf16>, vector<67x128xbf16>, vector<128x128xf32> -> vector<128x128xf32>
    %30 = vector.broadcast %1 : vector<1x128xf32> to vector<128x128xf32>
    %31 = arith.addf %29, %30 : vector<128x128xf32>
    %cst_24 = arith.constant 0.000000e+00 : f32
    %32 = vector.broadcast %cst_24 : f32 to vector<128x128xf32>
    %33 = arith.maximumf %31, %32 : vector<128x128xf32>
    %34 = arith.truncf %33 : vector<128x128xf32> to vector<128x128xbf16>
    %cst_25 = arith.constant dense<0.000000e+00> : vector<128x128xf32>
    %35 = tpu.matmul %34, %2, %cst_25 {dimension_numbers = #tpu.dot_dimension_numbers<[1], [0], [0], [1], [0, 0, 1, 1], [], []>} : vector<128x128xbf16>, vector<128x128xbf16>, vector<128x128xf32> -> vector<128x128xf32>
    %36 = vector.broadcast %3 : vector<1x128xf32> to vector<128x128xf32>
    %37 = arith.addf %35, %36 : vector<128x128xf32>
    %cst_26 = arith.constant 0.000000e+00 : f32
    %38 = vector.broadcast %cst_26 : f32 to vector<128x128xf32>
    %39 = arith.maximumf %37, %38 : vector<128x128xf32>
    %40 = vector.broadcast %28 : vector<128x1xf32> to vector<128x128xf32>
    %41 = arith.mulf %39, %40 : vector<128x128xf32>
    %42 = vector.shape_cast %41 : vector<128x128xf32> to vector<8x16x128xf32>
    %cst_27 = arith.constant dense<0xFF800000> : vector<16x128xf32>
    %43 = vector.multi_reduction <maximumf>, %42, %cst_27 [0] : vector<8x16x128xf32> to vector<16x128xf32>
    %44 = arith.maximumf %24, %43 : vector<16x128xf32>
    %c0_28 = arith.constant 0 : index
    %c0_29 = arith.constant 0 : index
    %45 = vector.load %arg7[%c0_28, %c0_29] : memref<16x128xf32, #tpu.memory_space<vmem>>, vector<16x128xf32>
    tpu.vector_store %arg7[%c0_28, %c0_29], %44 {strides = array<i32>} : memref<16x128xf32, #tpu.memory_space<vmem>>, vector<16x128xf32>,
    return
  }
  func.func @transform_0(%arg0: i32) -> (i32, i32, i32) {
    %c0_i32 = arith.constant 0 : i32
    %c0_i32_0 = arith.constant 0 : i32
    %c0_i32_1 = arith.constant 0 : i32
    return %c0_i32, %arg0, %c0_i32_0 : i32, i32, i32
  }
  func.func @transform_1(%arg0: i32) -> (i32, i32, i32) {
    %c0_i32 = arith.constant 0 : i32
    %c0_i32_0 = arith.constant 0 : i32
    %c0_i32_1 = arith.constant 0 : i32
    return %c0_i32, %arg0, %c0_i32_0 : i32, i32, i32
  }
  func.func @transform_2(%arg0: i32) -> (i32, i32) {
    %c0_i32 = arith.constant 0 : i32
    %c0_i32_0 = arith.constant 0 : i32
    %c0_i32_1 = arith.constant 0 : i32
    return %c0_i32, %c0_i32_0 : i32, i32
  }
  func.func @transform_3(%arg0: i32) -> (i32, i32) {
    %c0_i32 = arith.constant 0 : i32
    %c0_i32_0 = arith.constant 0 : i32
    %c0_i32_1 = arith.constant 0 : i32
    return %c0_i32, %c0_i32_0 : i32, i32
  }
  func.func @transform_4(%arg0: i32) -> (i32, i32) {
    %c0_i32 = arith.constant 0 : i32
    %c0_i32_0 = arith.constant 0 : i32
    %c0_i32_1 = arith.constant 0 : i32
    return %c0_i32, %c0_i32_0 : i32, i32
  }
  func.func @transform_5(%arg0: i32) -> (i32, i32) {
    %c0_i32 = arith.constant 0 : i32
    %c0_i32_0 = arith.constant 0 : i32
    %c0_i32_1 = arith.constant 0 : i32
    return %c0_i32, %c0_i32_0 : i32, i32
  }
  func.func @transform_6(%arg0: i32) -> (i32, i32) {
    %c0_i32 = arith.constant 0 : i32
    %c0_i32_0 = arith.constant 0 : i32
    return %arg0, %c0_i32 : i32, i32
  }
}

module attributes {stable_mosaic.version = 11 : i64} {
  func.func @_mlp_max_kernel(%arg0: i32, %arg1: memref<8x8x131xbf16, #tpu.memory_space<vmem>>, %arg2: memref<8x8x1xf32, #tpu.memory_space<vmem>>, %arg3: memref<131x256xbf16, #tpu.memory_space<vmem>>, %arg4: memref<1x256xf32, #tpu.memory_space<vmem>>, %arg5: memref<256x256xbf16, #tpu.memory_space<vmem>>, %arg6: memref<1x256xf32, #tpu.memory_space<vmem>>, %arg7: memref<8x256xf32, #tpu.memory_space<vmem>>) attributes {dimension_semantics = [#tpu.dimension_semantics<parallel>], iteration_bounds = array<i64: 1>, scalar_prefetch = 0 : i64, scratch_operands = 0 : i64, tpu.core_type = #tpu.core_type<tc>, window_params = [{transform_indices = @transform_0, window_bounds = array<i64: 8, 8, 131>}, {transform_indices = @transform_1, window_bounds = array<i64: 8, 8, 1>}, {pipeline_mode = #tpu.pipeline_mode<synchronous>, transform_indices = @transform_2, window_bounds = array<i64: 131, 256>}, {pipeline_mode = #tpu.pipeline_mode<synchronous>, transform_indices = @transform_3, window_bounds = array<i64: 1, 256>}, {pipeline_mode = #tpu.pipeline_mode<synchronous>, transform_indices = @transform_4, window_bounds = array<i64: 256, 256>}, {pipeline_mode = #tpu.pipeline_mode<synchronous>, transform_indices = @transform_5, window_bounds = array<i64: 1, 256>}, {transform_indices = @transform_6, window_bounds = array<i64: 8, 256>}]} {
    %c0 = arith.constant 0 : index
    %c0_0 = arith.constant 0 : index
    %0 = vector.load %arg3[%c0, %c0_0] : memref<131x256xbf16, #tpu.memory_space<vmem>>, vector<131x256xbf16>
    %c0_1 = arith.constant 0 : index
    %c0_2 = arith.constant 0 : index
    %1 = vector.load %arg4[%c0_1, %c0_2] : memref<1x256xf32, #tpu.memory_space<vmem>>, vector<1x256xf32>
    %c0_3 = arith.constant 0 : index
    %c0_4 = arith.constant 0 : index
    %2 = vector.load %arg5[%c0_3, %c0_4] : memref<256x256xbf16, #tpu.memory_space<vmem>>, vector<256x256xbf16>
    %c0_5 = arith.constant 0 : index
    %c0_6 = arith.constant 0 : index
    %3 = vector.load %arg6[%c0_5, %c0_6] : memref<1x256xf32, #tpu.memory_space<vmem>>, vector<1x256xf32>
    %cst = arith.constant 0.000000e+00 : f32
    %4 = vector.broadcast %cst : f32 to vector<8x256xf32>
    %c0_7 = arith.constant 0 : index
    %c0_8 = arith.constant 0 : index
    %c0_9 = arith.constant 0 : index
    %5 = vector.load %arg1[%c0_7, %c0_8, %c0_9] : memref<8x8x131xbf16, #tpu.memory_space<vmem>>, vector<8x8x131xbf16>
    %6 = vector.shape_cast %5 : vector<8x8x131xbf16> to vector<64x131xbf16>
    %c0_10 = arith.constant 0 : index
    %c0_11 = arith.constant 0 : index
    %c0_12 = arith.constant 0 : index
    %7 = vector.load %arg2[%c0_10, %c0_11, %c0_12] : memref<8x8x1xf32, #tpu.memory_space<vmem>>, vector<8x8x1xf32>
    %8 = vector.shape_cast %7 : vector<8x8x1xf32> to vector<64x1xf32>
    %cst_13 = arith.constant dense<0.000000e+00> : vector<64x256xf32>
    %9 = tpu.matmul %6, %0, %cst_13 {dimension_numbers = #tpu.dot_dimension_numbers<[1], [0], [0], [1], [0, 0, 1, 1], [], []>} : vector<64x131xbf16>, vector<131x256xbf16>, vector<64x256xf32> -> vector<64x256xf32>
    %10 = vector.broadcast %1 : vector<1x256xf32> to vector<64x256xf32>
    %11 = arith.addf %9, %10 : vector<64x256xf32>
    %cst_14 = arith.constant 0.000000e+00 : f32
    %12 = vector.broadcast %cst_14 : f32 to vector<64x256xf32>
    %13 = arith.maximumf %11, %12 : vector<64x256xf32>
    %14 = arith.truncf %13 : vector<64x256xf32> to vector<64x256xbf16>
    %cst_15 = arith.constant dense<0.000000e+00> : vector<64x256xf32>
    %15 = tpu.matmul %14, %2, %cst_15 {dimension_numbers = #tpu.dot_dimension_numbers<[1], [0], [0], [1], [0, 0, 1, 1], [], []>} : vector<64x256xbf16>, vector<256x256xbf16>, vector<64x256xf32> -> vector<64x256xf32>
    %16 = vector.broadcast %3 : vector<1x256xf32> to vector<64x256xf32>
    %17 = arith.addf %15, %16 : vector<64x256xf32>
    %cst_16 = arith.constant 0.000000e+00 : f32
    %18 = vector.broadcast %cst_16 : f32 to vector<64x256xf32>
    %19 = arith.maximumf %17, %18 : vector<64x256xf32>
    %20 = vector.broadcast %8 : vector<64x1xf32> to vector<64x256xf32>
    %21 = arith.mulf %19, %20 : vector<64x256xf32>
    %22 = vector.shape_cast %21 : vector<64x256xf32> to vector<8x8x256xf32>
    %cst_17 = arith.constant dense<0xFF800000> : vector<8x256xf32>
    %23 = vector.multi_reduction <maximumf>, %22, %cst_17 [0] : vector<8x8x256xf32> to vector<8x256xf32>
    %24 = arith.maximumf %4, %23 : vector<8x256xf32>
    %c0_18 = arith.constant 0 : index
    %c0_19 = arith.constant 0 : index
    %25 = vector.load %arg7[%c0_18, %c0_19] : memref<8x256xf32, #tpu.memory_space<vmem>>, vector<8x256xf32>
    tpu.vector_store %arg7[%c0_18, %c0_19], %24 {strides = array<i32>} : memref<8x256xf32, #tpu.memory_space<vmem>>, vector<8x256xf32>,
    return
  }
  func.func @transform_0(%arg0: i32) -> (i32, i32, i32) {
    %c0_i32 = arith.constant 0 : i32
    %c0_i32_0 = arith.constant 0 : i32
    %c0_i32_1 = arith.constant 0 : i32
    return %c0_i32, %arg0, %c0_i32_0 : i32, i32, i32
  }
  func.func @transform_1(%arg0: i32) -> (i32, i32, i32) {
    %c0_i32 = arith.constant 0 : i32
    %c0_i32_0 = arith.constant 0 : i32
    %c0_i32_1 = arith.constant 0 : i32
    return %c0_i32, %arg0, %c0_i32_0 : i32, i32, i32
  }
  func.func @transform_2(%arg0: i32) -> (i32, i32) {
    %c0_i32 = arith.constant 0 : i32
    %c0_i32_0 = arith.constant 0 : i32
    %c0_i32_1 = arith.constant 0 : i32
    return %c0_i32, %c0_i32_0 : i32, i32
  }
  func.func @transform_3(%arg0: i32) -> (i32, i32) {
    %c0_i32 = arith.constant 0 : i32
    %c0_i32_0 = arith.constant 0 : i32
    %c0_i32_1 = arith.constant 0 : i32
    return %c0_i32, %c0_i32_0 : i32, i32
  }
  func.func @transform_4(%arg0: i32) -> (i32, i32) {
    %c0_i32 = arith.constant 0 : i32
    %c0_i32_0 = arith.constant 0 : i32
    %c0_i32_1 = arith.constant 0 : i32
    return %c0_i32, %c0_i32_0 : i32, i32
  }
  func.func @transform_5(%arg0: i32) -> (i32, i32) {
    %c0_i32 = arith.constant 0 : i32
    %c0_i32_0 = arith.constant 0 : i32
    %c0_i32_1 = arith.constant 0 : i32
    return %c0_i32, %c0_i32_0 : i32, i32
  }
  func.func @transform_6(%arg0: i32) -> (i32, i32) {
    %c0_i32 = arith.constant 0 : i32
    %c0_i32_0 = arith.constant 0 : i32
    return %arg0, %c0_i32 : i32, i32
  }
}

module attributes {stable_mosaic.version = 11 : i64} {
  func.func @_ga_pool_kernel(%arg0: i32, %arg1: i32, %arg2: memref<1x8x259xbf16, #tpu.memory_space<vmem>>, %arg3: memref<259x512xbf16, #tpu.memory_space<vmem>>, %arg4: memref<1x512xf32, #tpu.memory_space<vmem>>, %arg5: memref<512x1024xbf16, #tpu.memory_space<vmem>>, %arg6: memref<1x1024xf32, #tpu.memory_space<vmem>>, %arg7: memref<1x1x1024xf32, #tpu.memory_space<vmem>>) attributes {dimension_semantics = [#tpu.dimension_semantics<parallel>, #tpu.dimension_semantics<arbitrary>], iteration_bounds = array<i64: 2, 1>, scalar_prefetch = 0 : i64, scratch_operands = 0 : i64, tpu.core_type = #tpu.core_type<tc>, window_params = [{transform_indices = @transform_0, window_bounds = array<i64: 1, 8, 259>}, {pipeline_mode = #tpu.pipeline_mode<synchronous>, transform_indices = @transform_1, window_bounds = array<i64: 259, 512>}, {pipeline_mode = #tpu.pipeline_mode<synchronous>, transform_indices = @transform_2, window_bounds = array<i64: 1, 512>}, {pipeline_mode = #tpu.pipeline_mode<synchronous>, transform_indices = @transform_3, window_bounds = array<i64: 512, 1024>}, {pipeline_mode = #tpu.pipeline_mode<synchronous>, transform_indices = @transform_4, window_bounds = array<i64: 1, 1024>}, {transform_indices = @transform_5, window_bounds = array<i64: 1, 1, 1024>}]} {
    %c0 = arith.constant 0 : index
    %c0_0 = arith.constant 0 : index
    %c0_1 = arith.constant 0 : index
    %0 = vector.load %arg2[%c0, %c0_0, %c0_1] : memref<1x8x259xbf16, #tpu.memory_space<vmem>>, vector<1x8x259xbf16>
    %1 = vector.shape_cast %0 : vector<1x8x259xbf16> to vector<8x259xbf16>
    %c0_2 = arith.constant 0 : index
    %c0_3 = arith.constant 0 : index
    %2 = vector.load %arg3[%c0_2, %c0_3] : memref<259x512xbf16, #tpu.memory_space<vmem>>, vector<259x512xbf16>
    %cst = arith.constant dense<0.000000e+00> : vector<8x512xf32>
    %3 = tpu.matmul %1, %2, %cst {dimension_numbers = #tpu.dot_dimension_numbers<[1], [0], [0], [1], [0, 0, 1, 1], [], []>} : vector<8x259xbf16>, vector<259x512xbf16>, vector<8x512xf32> -> vector<8x512xf32>
    %c0_4 = arith.constant 0 : index
    %c0_5 = arith.constant 0 : index
    %4 = vector.load %arg4[%c0_4, %c0_5] : memref<1x512xf32, #tpu.memory_space<vmem>>, vector<1x512xf32>
    %5 = vector.broadcast %4 : vector<1x512xf32> to vector<8x512xf32>
    %6 = arith.addf %3, %5 : vector<8x512xf32>
    %cst_6 = arith.constant 0.000000e+00 : f32
    %7 = vector.broadcast %cst_6 : f32 to vector<8x512xf32>
    %8 = arith.maximumf %6, %7 : vector<8x512xf32>
    %9 = arith.truncf %8 : vector<8x512xf32> to vector<8x512xbf16>
    %c0_7 = arith.constant 0 : index
    %c0_8 = arith.constant 0 : index
    %10 = vector.load %arg5[%c0_7, %c0_8] : memref<512x1024xbf16, #tpu.memory_space<vmem>>, vector<512x1024xbf16>
    %cst_9 = arith.constant dense<0.000000e+00> : vector<8x1024xf32>
    %11 = tpu.matmul %9, %10, %cst_9 {dimension_numbers = #tpu.dot_dimension_numbers<[1], [0], [0], [1], [0, 0, 1, 1], [], []>} : vector<8x512xbf16>, vector<512x1024xbf16>, vector<8x1024xf32> -> vector<8x1024xf32>
    %c0_10 = arith.constant 0 : index
    %c0_11 = arith.constant 0 : index
    %12 = vector.load %arg6[%c0_10, %c0_11] : memref<1x1024xf32, #tpu.memory_space<vmem>>, vector<1x1024xf32>
    %13 = vector.broadcast %12 : vector<1x1024xf32> to vector<8x1024xf32>
    %14 = arith.addf %11, %13 : vector<8x1024xf32>
    %cst_12 = arith.constant 0.000000e+00 : f32
    %15 = vector.broadcast %cst_12 : f32 to vector<8x1024xf32>
    %16 = arith.maximumf %14, %15 : vector<8x1024xf32>
    %cst_13 = arith.constant dense<0xFF800000> : vector<1024xf32>
    %17 = vector.multi_reduction <maximumf>, %16, %cst_13 [0] : vector<8x1024xf32> to vector<1024xf32>
    %18 = vector.shape_cast %17 : vector<1024xf32> to vector<1x1024xf32>
    %c0_i32 = arith.constant 0 : i32
    %19 = arith.cmpi eq, %arg1, %c0_i32 : i32
    %20 = arith.extui %19 : i1 to i32
    %c0_i32_14 = arith.constant 0 : i32
    %21 = arith.cmpi ne, %20, %c0_i32_14 : i32
    scf.if %21 {
      %c0_17 = arith.constant 0 : index
      %c0_18 = arith.constant 0 : index
      %c0_19 = arith.constant 0 : index
      %25 = vector.load %arg7[%c0_17, %c0_18, %c0_19] : memref<1x1x1024xf32, #tpu.memory_space<vmem>>, vector<1x1x1024xf32>
      %26 = vector.shape_cast %25 : vector<1x1x1024xf32> to vector<1x1024xf32>
      %27 = vector.shape_cast %18 : vector<1x1024xf32> to vector<1x1x1024xf32>
      tpu.vector_store %arg7[%c0_17, %c0_18, %c0_19], %27 {strides = array<i32>} : memref<1x1x1024xf32, #tpu.memory_space<vmem>>, vector<1x1x1024xf32>,
    } else {
    }
    %c0_i32_15 = arith.constant 0 : i32
    %22 = arith.cmpi sgt, %arg1, %c0_i32_15 : i32
    %23 = arith.extui %22 : i1 to i32
    %c0_i32_16 = arith.constant 0 : i32
    %24 = arith.cmpi ne, %23, %c0_i32_16 : i32
    scf.if %24 {
      %c0_17 = arith.constant 0 : index
      %c0_18 = arith.constant 0 : index
      %c0_19 = arith.constant 0 : index
      %25 = vector.load %arg7[%c0_17, %c0_18, %c0_19] : memref<1x1x1024xf32, #tpu.memory_space<vmem>>, vector<1x1x1024xf32>
      %26 = vector.shape_cast %25 : vector<1x1x1024xf32> to vector<1x1024xf32>
      %27 = arith.maximumf %26, %18 : vector<1x1024xf32>
      %c0_20 = arith.constant 0 : index
      %c0_21 = arith.constant 0 : index
      %c0_22 = arith.constant 0 : index
      %28 = vector.load %arg7[%c0_20, %c0_21, %c0_22] : memref<1x1x1024xf32, #tpu.memory_space<vmem>>, vector<1x1x1024xf32>
      %29 = vector.shape_cast %28 : vector<1x1x1024xf32> to vector<1x1024xf32>
      %30 = vector.shape_cast %27 : vector<1x1024xf32> to vector<1x1x1024xf32>
      tpu.vector_store %arg7[%c0_20, %c0_21, %c0_22], %30 {strides = array<i32>} : memref<1x1x1024xf32, #tpu.memory_space<vmem>>, vector<1x1x1024xf32>,
    } else {
    }
    return
  }
  func.func @transform_0(%arg0: i32, %arg1: i32) -> (i32, i32, i32) {
    %c0_i32 = arith.constant 0 : i32
    %c0_i32_0 = arith.constant 0 : i32
    return %arg0, %arg1, %c0_i32 : i32, i32, i32
  }
  func.func @transform_1(%arg0: i32, %arg1: i32) -> (i32, i32) {
    %c0_i32 = arith.constant 0 : i32
    %c0_i32_0 = arith.constant 0 : i32
    %c0_i32_1 = arith.constant 0 : i32
    return %c0_i32, %c0_i32_0 : i32, i32
  }
  func.func @transform_2(%arg0: i32, %arg1: i32) -> (i32, i32) {
    %c0_i32 = arith.constant 0 : i32
    %c0_i32_0 = arith.constant 0 : i32
    %c0_i32_1 = arith.constant 0 : i32
    return %c0_i32, %c0_i32_0 : i32, i32
  }
  func.func @transform_3(%arg0: i32, %arg1: i32) -> (i32, i32) {
    %c0_i32 = arith.constant 0 : i32
    %c0_i32_0 = arith.constant 0 : i32
    %c0_i32_1 = arith.constant 0 : i32
    return %c0_i32, %c0_i32_0 : i32, i32
  }
  func.func @transform_4(%arg0: i32, %arg1: i32) -> (i32, i32) {
    %c0_i32 = arith.constant 0 : i32
    %c0_i32_0 = arith.constant 0 : i32
    %c0_i32_1 = arith.constant 0 : i32
    return %c0_i32, %c0_i32_0 : i32, i32
  }
  func.func @transform_5(%arg0: i32, %arg1: i32) -> (i32, i32, i32) {
    %c0_i32 = arith.constant 0 : i32
    %c0_i32_0 = arith.constant 0 : i32
    %c0_i32_1 = arith.constant 0 : i32
    return %arg0, %c0_i32, %c0_i32_0 : i32, i32, i32
  }
}

module attributes {stable_mosaic.version = 11 : i64} {
  func.func @_head_kernel(%arg0: i32, %arg1: memref<2x1024xbf16, #tpu.memory_space<vmem>>, %arg2: memref<1024x512xbf16, #tpu.memory_space<vmem>>, %arg3: memref<1x512xf32, #tpu.memory_space<vmem>>, %arg4: memref<512x256xbf16, #tpu.memory_space<vmem>>, %arg5: memref<1x256xf32, #tpu.memory_space<vmem>>, %arg6: memref<256x128xbf16, #tpu.memory_space<vmem>>, %arg7: memref<1x128xf32, #tpu.memory_space<vmem>>, %arg8: memref<2x512xf32, #tpu.memory_space<vmem>>, %arg9: memref<2x256xf32, #tpu.memory_space<vmem>>, %arg10: memref<2x128xf32, #tpu.memory_space<vmem>>) attributes {dimension_semantics = [#tpu.dimension_semantics<arbitrary>], iteration_bounds = array<i64: 1>, scalar_prefetch = 0 : i64, scratch_operands = 0 : i64, tpu.core_type = #tpu.core_type<tc>, window_params = [{pipeline_mode = #tpu.pipeline_mode<synchronous>, transform_indices = @transform_0, window_bounds = array<i64: 2, 1024>}, {pipeline_mode = #tpu.pipeline_mode<synchronous>, transform_indices = @transform_1, window_bounds = array<i64: 1024, 512>}, {pipeline_mode = #tpu.pipeline_mode<synchronous>, transform_indices = @transform_2, window_bounds = array<i64: 1, 512>}, {pipeline_mode = #tpu.pipeline_mode<synchronous>, transform_indices = @transform_3, window_bounds = array<i64: 512, 256>}, {pipeline_mode = #tpu.pipeline_mode<synchronous>, transform_indices = @transform_4, window_bounds = array<i64: 1, 256>}, {pipeline_mode = #tpu.pipeline_mode<synchronous>, transform_indices = @transform_5, window_bounds = array<i64: 256, 128>}, {pipeline_mode = #tpu.pipeline_mode<synchronous>, transform_indices = @transform_6, window_bounds = array<i64: 1, 128>}, {pipeline_mode = #tpu.pipeline_mode<synchronous>, transform_indices = @transform_7, window_bounds = array<i64: 2, 512>}, {pipeline_mode = #tpu.pipeline_mode<synchronous>, transform_indices = @transform_8, window_bounds = array<i64: 2, 256>}, {pipeline_mode = #tpu.pipeline_mode<synchronous>, transform_indices = @transform_9, window_bounds = array<i64: 2, 128>}]} {
    %c0 = arith.constant 0 : index
    %c0_0 = arith.constant 0 : index
    %0 = vector.load %arg1[%c0, %c0_0] : memref<2x1024xbf16, #tpu.memory_space<vmem>>, vector<2x1024xbf16>
    %c0_1 = arith.constant 0 : index
    %c0_2 = arith.constant 0 : index
    %1 = vector.load %arg2[%c0_1, %c0_2] : memref<1024x512xbf16, #tpu.memory_space<vmem>>, vector<1024x512xbf16>
    %cst = arith.constant dense<0.000000e+00> : vector<2x512xf32>
    %2 = tpu.matmul %0, %1, %cst {dimension_numbers = #tpu.dot_dimension_numbers<[1], [0], [0], [1], [0, 0, 1, 1], [], []>} : vector<2x1024xbf16>, vector<1024x512xbf16>, vector<2x512xf32> -> vector<2x512xf32>
    %c0_3 = arith.constant 0 : index
    %c0_4 = arith.constant 0 : index
    %3 = vector.load %arg3[%c0_3, %c0_4] : memref<1x512xf32, #tpu.memory_space<vmem>>, vector<1x512xf32>
    %4 = vector.broadcast %3 : vector<1x512xf32> to vector<2x512xf32>
    %5 = arith.addf %2, %4 : vector<2x512xf32>
    %cst_5 = arith.constant 0.000000e+00 : f32
    %6 = vector.broadcast %cst_5 : f32 to vector<2x512xf32>
    %7 = arith.maximumf %5, %6 : vector<2x512xf32>
    %c0_6 = arith.constant 0 : index
    %c0_7 = arith.constant 0 : index
    %8 = vector.load %arg8[%c0_6, %c0_7] : memref<2x512xf32, #tpu.memory_space<vmem>>, vector<2x512xf32>
    tpu.vector_store %arg8[%c0_6, %c0_7], %7 {strides = array<i32>} : memref<2x512xf32, #tpu.memory_space<vmem>>, vector<2x512xf32>,
    %9 = arith.truncf %7 : vector<2x512xf32> to vector<2x512xbf16>
    %c0_8 = arith.constant 0 : index
    %c0_9 = arith.constant 0 : index
    %10 = vector.load %arg4[%c0_8, %c0_9] : memref<512x256xbf16, #tpu.memory_space<vmem>>, vector<512x256xbf16>
    %cst_10 = arith.constant dense<0.000000e+00> : vector<2x256xf32>
    %11 = tpu.matmul %9, %10, %cst_10 {dimension_numbers = #tpu.dot_dimension_numbers<[1], [0], [0], [1], [0, 0, 1, 1], [], []>} : vector<2x512xbf16>, vector<512x256xbf16>, vector<2x256xf32> -> vector<2x256xf32>
    %c0_11 = arith.constant 0 : index
    %c0_12 = arith.constant 0 : index
    %12 = vector.load %arg5[%c0_11, %c0_12] : memref<1x256xf32, #tpu.memory_space<vmem>>, vector<1x256xf32>
    %13 = vector.broadcast %12 : vector<1x256xf32> to vector<2x256xf32>
    %14 = arith.addf %11, %13 : vector<2x256xf32>
    %cst_13 = arith.constant 0.000000e+00 : f32
    %15 = vector.broadcast %cst_13 : f32 to vector<2x256xf32>
    %16 = arith.maximumf %14, %15 : vector<2x256xf32>
    %c0_14 = arith.constant 0 : index
    %c0_15 = arith.constant 0 : index
    %17 = vector.load %arg9[%c0_14, %c0_15] : memref<2x256xf32, #tpu.memory_space<vmem>>, vector<2x256xf32>
    tpu.vector_store %arg9[%c0_14, %c0_15], %16 {strides = array<i32>} : memref<2x256xf32, #tpu.memory_space<vmem>>, vector<2x256xf32>,
    %18 = arith.truncf %16 : vector<2x256xf32> to vector<2x256xbf16>
    %c0_16 = arith.constant 0 : index
    %c0_17 = arith.constant 0 : index
    %19 = vector.load %arg6[%c0_16, %c0_17] : memref<256x128xbf16, #tpu.memory_space<vmem>>, vector<256x128xbf16>
    %cst_18 = arith.constant dense<0.000000e+00> : vector<2x128xf32>
    %20 = tpu.matmul %18, %19, %cst_18 {dimension_numbers = #tpu.dot_dimension_numbers<[1], [0], [0], [1], [0, 0, 1, 1], [], []>} : vector<2x256xbf16>, vector<256x128xbf16>, vector<2x128xf32> -> vector<2x128xf32>
    %c0_19 = arith.constant 0 : index
    %c0_20 = arith.constant 0 : index
    %21 = vector.load %arg7[%c0_19, %c0_20] : memref<1x128xf32, #tpu.memory_space<vmem>>, vector<1x128xf32>
    %22 = vector.broadcast %21 : vector<1x128xf32> to vector<2x128xf32>
    %23 = arith.addf %20, %22 : vector<2x128xf32>
    %c0_21 = arith.constant 0 : index
    %c0_22 = arith.constant 0 : index
    %24 = vector.load %arg10[%c0_21, %c0_22] : memref<2x128xf32, #tpu.memory_space<vmem>>, vector<2x128xf32>
    tpu.vector_store %arg10[%c0_21, %c0_22], %23 {strides = array<i32>} : memref<2x128xf32, #tpu.memory_space<vmem>>, vector<2x128xf32>,
    return
  }
  func.func @transform_0(%arg0: i32) -> (i32, i32) {
    %c0_i32 = arith.constant 0 : i32
    %c0_i32_0 = arith.constant 0 : i32
    %c0_i32_1 = arith.constant 0 : i32
    return %c0_i32, %c0_i32_0 : i32, i32
  }
  func.func @transform_1(%arg0: i32) -> (i32, i32) {
    %c0_i32 = arith.constant 0 : i32
    %c0_i32_0 = arith.constant 0 : i32
    %c0_i32_1 = arith.constant 0 : i32
    return %c0_i32, %c0_i32_0 : i32, i32
  }
  func.func @transform_2(%arg0: i32) -> (i32, i32) {
    %c0_i32 = arith.constant 0 : i32
    %c0_i32_0 = arith.constant 0 : i32
    %c0_i32_1 = arith.constant 0 : i32
    return %c0_i32, %c0_i32_0 : i32, i32
  }
  func.func @transform_3(%arg0: i32) -> (i32, i32) {
    %c0_i32 = arith.constant 0 : i32
    %c0_i32_0 = arith.constant 0 : i32
    %c0_i32_1 = arith.constant 0 : i32
    return %c0_i32, %c0_i32_0 : i32, i32
  }
  func.func @transform_4(%arg0: i32) -> (i32, i32) {
    %c0_i32 = arith.constant 0 : i32
    %c0_i32_0 = arith.constant 0 : i32
    %c0_i32_1 = arith.constant 0 : i32
    return %c0_i32, %c0_i32_0 : i32, i32
  }
  func.func @transform_5(%arg0: i32) -> (i32, i32) {
    %c0_i32 = arith.constant 0 : i32
    %c0_i32_0 = arith.constant 0 : i32
    %c0_i32_1 = arith.constant 0 : i32
    return %c0_i32, %c0_i32_0 : i32, i32
  }
  func.func @transform_6(%arg0: i32) -> (i32, i32) {
    %c0_i32 = arith.constant 0 : i32
    %c0_i32_0 = arith.constant 0 : i32
    %c0_i32_1 = arith.constant 0 : i32
    return %c0_i32, %c0_i32_0 : i32, i32
  }
  func.func @transform_7(%arg0: i32) -> (i32, i32) {
    %c0_i32 = arith.constant 0 : i32
    %c0_i32_0 = arith.constant 0 : i32
    %c0_i32_1 = arith.constant 0 : i32
    return %c0_i32, %c0_i32_0 : i32, i32
  }
  func.func @transform_8(%arg0: i32) -> (i32, i32) {
    %c0_i32 = arith.constant 0 : i32
    %c0_i32_0 = arith.constant 0 : i32
    %c0_i32_1 = arith.constant 0 : i32
    return %c0_i32, %c0_i32_0 : i32, i32
  }
  func.func @transform_9(%arg0: i32) -> (i32, i32) {
    %c0_i32 = arith.constant 0 : i32
    %c0_i32_0 = arith.constant 0 : i32
    %c0_i32_1 = arith.constant 0 : i32
    return %c0_i32, %c0_i32_0 : i32, i32
  }
}

</mosaic_0001>

<llo_original>
// kernel: custom-call.24
$region0: #{custom-call.24}
  %s0 = inlined_call_operand.vmem [shape: f32[2,32], index: 0, kind: output, shape index: {}]

// kernel: custom-call.25
$region0: #{custom-call.25}
  %s0 = inlined_call_operand.vmem [shape: f32[2,16], index: 0, kind: output, shape index: {}]

// kernel: neg.8
$region0: #{neg.8}
  #allocation0 [shape = 's32[1]{0}', space=sflag, size = 0x4, scoped, tag = 'scoped memory for neg.8']
  %s0 = inlined_call_operand.vmem [shape: f32[2,8,16], index: 0, kind: input, shape index: {}]
  %s1 = inlined_call_operand.vmem [shape: f32[2,8,16], index: 1, kind: output, shape index: {}]
  %v2 = vld [vmem:[%s0] sm:$0xff]
  %3 = xla_tuple %v2
  %4 = xla_tuple %3
  %v5 = vxor.u32 %v2, 2147483648
  %6 = xla_tuple %v5
  %7 = vst [vmem:[%s1] sm:$0xff] %v5
  %s8 = scalar_lea.vmem %s0, 8
  %v9 = vld [vmem:[%s8] sm:$0xff]
  %10 = xla_tuple %v9
  %11 = xla_tuple %10
  %v12 = vxor.u32 %v9, 2147483648
  %13 = xla_tuple %v12
  %s14 = scalar_lea.vmem %s1, 8
  %15 = vst [vmem:[%s14] sm:$0xff] %v12

// kernel: neg.6
$region0: #{neg.6}
  #allocation0 [shape = 's32[1]{0}', space=sflag, size = 0x4, scoped, tag = 'scoped memory for neg.6']
  %s0 = inlined_call_operand.vmem [shape: f32[2,16,32], index: 0, kind: input, shape index: {}]
  %s1 = inlined_call_operand.vmem [shape: f32[2,16,32], index: 1, kind: output, shape index: {}]
  %v2 = vld [vmem:[%s0] sm:$0xff]
  %3 = xla_tuple %v2
  %4 = xla_tuple %3
  %v5 = vxor.u32 %v2, 2147483648
  %6 = xla_tuple %v5
  %7 = vst [vmem:[%s1] sm:$0xff] %v5
  %s8 = scalar_lea.vmem %s0, 16
  %v9 = vld [vmem:[%s8] sm:$0xff]
  %10 = xla_tuple %v9
  %11 = xla_tuple %10
  %v12 = vxor.u32 %v9, 2147483648
  %13 = xla_tuple %v12
  %s14 = scalar_lea.vmem %s1, 16
  %15 = vst [vmem:[%s14] sm:$0xff] %v12
  %s16 = scalar_lea.vmem %s0, 8
  %v17 = vld [vmem:[%s16] sm:$0xff]
  %18 = xla_tuple %v17
  %19 = xla_tuple %18
  %v20 = vxor.u32 %v17, 2147483648
  %21 = xla_tuple %v20
  %s22 = scalar_lea.vmem %s1, 8
  %23 = vst [vmem:[%s22] sm:$0xff] %v20
  %s24 = scalar_lea.vmem %s0, 24
  %v25 = vld [vmem:[%s24] sm:$0xff]
  %26 = xla_tuple %v25
  %27 = xla_tuple %26
  %v28 = vxor.u32 %v25, 2147483648
  %29 = xla_tuple %v28
  %s30 = scalar_lea.vmem %s1, 24
  %31 = vst [vmem:[%s30] sm:$0xff] %v28

// kernel: pointnet2_forward.5
$region0: #{pointnet2_forward.5}
  #allocation0 [shape = 'u32[]', space=smem, size = 0x4, offset = 0x4, fixed_abs, tag = 'smem constant byte address 0x4 - core index']
  #allocation1 [shape = 'u32[144,128]{1,0:T(1,128)}', space=vmem, size = 0x12000, scoped, tag = 'internal scratch']
  %s0 = inlined_call_operand.vmem [shape: bf16[32,32,6], index: 0, kind: input, shape index: {}]
  %s1 = inlined_call_operand.vmem [shape: f32[32,32,1], index: 1, kind: input, shape index: {}]
  %s2 = inlined_call_operand.vmem [shape: bf16[6,32], index: 2, kind: input, shape index: {}]
  %s3 = inlined_call_operand.vmem [shape: f32[1,32], index: 3, kind: input, shape index: {}]
  %s4 = inlined_call_operand.vmem [shape: bf16[32,128], index: 4, kind: input, shape index: {}]
  %s5 = inlined_call_operand.vmem [shape: f32[1,128], index: 5, kind: input, shape index: {}]
  %s6 = inlined_call_operand.vmem [shape: f32[32,128], index: 6, kind: output, shape index: {}]
  %s7 = sld [smem:[#allocation0]]
  $region34: #{pointnet2_forward.5} parent=0
    _
  %s9 = ssub.s32 1, %s7
  %s10 = scalar_select 0, %s9, %s7
  // Predicated region
  $region2: #{pointnet2_forward.5} parent=0 // pred_check
    _
  $region3: #{pointnet2_forward.5} parent=0 // pred_check_branch
    %12 = sbr.rel (0) target = $region5
  $region4: #{pointnet2_forward.5} parent=0 // pred_region
    _
  $region5: #{pointnet2_forward.5} parent=0 // pred_fallthru
    _
  // Predicated region
  $region6: #{pointnet2_forward.5} parent=0 // pred_check
    _
  $region7: #{pointnet2_forward.5} parent=0 // pred_check_branch
    %14 = sbr.rel (0) target = $region9
  $region8: #{pointnet2_forward.5} parent=0 // pred_region
    _
  $region9: #{pointnet2_forward.5} parent=0 // pred_fallthru
    _
  // Predicated region
  $region10: #{pointnet2_forward.5} parent=0 // pred_check
    _
  $region11: #{pointnet2_forward.5} parent=0 // pred_check_branch
    %16 = sbr.rel (0) target = $region13
  $region12: #{pointnet2_forward.5} parent=0 // pred_region
    _
  $region13: #{pointnet2_forward.5} parent=0 // pred_fallthru
    _
  // Predicated region
  $region14: #{pointnet2_forward.5} parent=0 // pred_check
    _
  $region15: #{pointnet2_forward.5} parent=0 // pred_check_branch
    %18 = sbr.rel (0) target = $region17
  $region16: #{pointnet2_forward.5} parent=0 // pred_region
    _
  $region17: #{pointnet2_forward.5} parent=0 // pred_fallthru
    _
  // Predicated region
  $region18: #{pointnet2_forward.5} parent=0 // pred_check
    _
  $region19: #{pointnet2_forward.5} parent=0 // pred_check_branch
    %20 = sbr.rel (0) target = $region21
  $region20: #{pointnet2_forward.5} parent=0 // pred_region
    _
  $region21: #{pointnet2_forward.5} parent=0 // pred_fallthru
    _
  // Predicated region
  $region22: #{pointnet2_forward.5} parent=0 // pred_check
    _
  $region23: #{pointnet2_forward.5} parent=0 // pred_check_branch
    %22 = sbr.rel (0) target = $region25
  $region24: #{pointnet2_forward.5} parent=0 // pred_region
    _
  $region25: #{pointnet2_forward.5} parent=0 // pred_fallthru
    _
  %v24 = vld [vmem:[%s2] sm:$0x7]
  %v25 = vld [vmem:[%s3] sm:$0x1]
  %v26 = vld [vmem:[%s4] sm:$0xf]
  %v27 = vld [vmem:[%s4 + $0x4] sm:$0xf]
  %v28 = vld [vmem:[%s4 + $0x8] sm:$0xf]
  %v29 = vld [vmem:[%s4 + $0xc] sm:$0xf]
  %v30 = vld [vmem:[%s5] sm:$0x1]
  %v31 = vld [vmem:[%s0] sm:$0xf]
  %v32 = vld [vmem:[%s0 + $0x4] sm:$0xf]
  %v33 = vld [vmem:[%s0 + $0x8] sm:$0xf]
  %v34 = vld [vmem:[%s0 + $0xc] sm:$0xf]
  %v35 = vld [vmem:[%s0 + $0x10] sm:$0xf]
  %v36 = vld [vmem:[%s0 + $0x14] sm:$0xf]
  %v37 = vld [vmem:[%s0 + $0x18] sm:$0xf]
  %v38 = vld [vmem:[%s0 + $0x1c] sm:$0xf]
  %v39 = vld [vmem:[%s0 + $0x20] sm:$0xf]
  %v40 = vld [vmem:[%s0 + $0x24] sm:$0xf]
  %v41 = vld [vmem:[%s0 + $0x28] sm:$0xf]
  %v42 = vld [vmem:[%s0 + $0x2c] sm:$0xf]
  %v43 = vld [vmem:[%s0 + $0x30] sm:$0xf]
  %v44 = vld [vmem:[%s0 + $0x34] sm:$0xf]
  %v45 = vld [vmem:[%s0 + $0x38] sm:$0xf]
  %v46 = vld [vmem:[%s0 + $0x3c] sm:$0xf]
  %v47 = vld [vmem:[%s0 + $0x40] sm:$0xf]
  %v48 = vld [vmem:[%s0 + $0x44] sm:$0xf]
  %v49 = vld [vmem:[%s0 + $0x48] sm:$0xf]
  %v50 = vld [vmem:[%s0 + $0x4c] sm:$0xf]
  %v51 = vld [vmem:[%s0 + $0x50] sm:$0xf]
  %v52 = vld [vmem:[%s0 + $0x54] sm:$0xf]
  %v53 = vld [vmem:[%s0 + $0x58] sm:$0xf]
  %v54 = vld [vmem:[%s0 + $0x5c] sm:$0xf]
  %v55 = vld [vmem:[%s0 + $0x60] sm:$0xf]
  %v56 = vld [vmem:[%s0 + $0x64] sm:$0xf]
  %v57 = vld [vmem:[%s0 + $0x68] sm:$0xf]
  %v58 = vld [vmem:[%s0 + $0x6c] sm:$0xf]
  %v59 = vld [vmem:[%s0 + $0x70] sm:$0xf]
  %v60 = vld [vmem:[%s0 + $0x74] sm:$0xf]
  %v61 = vld [vmem:[%s0 + $0x78] sm:$0xf]
  %v62 = vld [vmem:[%s0 + $0x7c] sm:$0xf]
  %v63 = vld [vmem:[%s1] sm:$0xff]
  %v64 = vld [vmem:[%s1 + $0x8] sm:$0xff]
  %v65 = vld [vmem:[%s1 + $0x10] sm:$0xff]
  %v66 = vld [vmem:[%s1 + $0x18] sm:$0xff]
  %v67 = vld [vmem:[%s1 + $0x20] sm:$0xff]
  %v68 = vld [vmem:[%s1 + $0x28] sm:$0xff]
  %v69 = vld [vmem:[%s1 + $0x30] sm:$0xff]
  %v70 = vld [vmem:[%s1 + $0x38] sm:$0xff]
  %v71 = vld [vmem:[%s1 + $0x40] sm:$0xff]
  %v72 = vld [vmem:[%s1 + $0x48] sm:$0xff]
  %v73 = vld [vmem:[%s1 + $0x50] sm:$0xff]
  %v74 = vld [vmem:[%s1 + $0x58] sm:$0xff]
  %v75 = vld [vmem:[%s1 + $0x60] sm:$0xff]
  %v76 = vld [vmem:[%s1 + $0x68] sm:$0xff]
  %v77 = vld [vmem:[%s1 + $0x70] sm:$0xff]
  %v78 = vld [vmem:[%s1 + $0x78] sm:$0xff]
  %v79 = vld [vmem:[%s1 + $0x80] sm:$0xff]
  %v80 = vld [vmem:[%s1 + $0x88] sm:$0xff]
  %v81 = vld [vmem:[%s1 + $0x90] sm:$0xff]
  %v82 = vld [vmem:[%s1 + $0x98] sm:$0xff]
  %v83 = vld [vmem:[%s1 + $0xa0] sm:$0xff]
  %v84 = vld [vmem:[%s1 + $0xa8] sm:$0xff]
  %v85 = vld [vmem:[%s1 + $0xb0] sm:$0xff]
  %v86 = vld [vmem:[%s1 + $0xb8] sm:$0xff]
  %v87 = vld [vmem:[%s1 + $0xc0] sm:$0xff]
  %v88 = vld [vmem:[%s1 + $0xc8] sm:$0xff]
  %v89 = vld [vmem:[%s1 + $0xd0] sm:$0xff]
  %v90 = vld [vmem:[%s1 + $0xd8] sm:$0xff]
  %v91 = vld [vmem:[%s1 + $0xe0] sm:$0xff]
  %v92 = vld [vmem:[%s1 + $0xe8] sm:$0xff]
  %v93 = vld [vmem:[%s1 + $0xf0] sm:$0xff]
  %v94 = vld [vmem:[%s1 + $0xf8] sm:$0xff]
  %v96 = vlaneseq
  %v97 = vshrl.u32 %v96, 7
  %v98 = vsub.s32 0, %v97
  %v99 = vrot.slane %v25, %v98
  %v133 = vunpack.c.l.b16 %v31
  %v134 = vunpack.c.l.b16 %v32
  %v135 = vunpack.c.l.b16 %v33
  %v136 = vunpack.c.l.b16 %v34
  %v137 = vunpack.c.l.b16 %v35
  %v138 = vunpack.c.l.b16 %v36
  %v139 = vunpack.c.l.b16 %v37
  %v140 = vunpack.c.l.b16 %v38
  %v141 = vunpack.c.l.b16 %v39
  %v142 = vunpack.c.l.b16 %v40
  %v143 = vunpack.c.l.b16 %v41
  %v144 = vunpack.c.l.b16 %v42
  %v145 = vunpack.c.l.b16 %v43
  %v146 = vunpack.c.l.b16 %v44
  %v147 = vunpack.c.l.b16 %v45
  %v148 = vunpack.c.l.b16 %v46
  %v149 = vunpack.c.l.b16 %v47
  %v150 = vunpack.c.l.b16 %v48
  %v151 = vunpack.c.l.b16 %v49
  %v152 = vunpack.c.l.b16 %v50
  %v153 = vunpack.c.l.b16 %v51
  %v154 = vunpack.c.l.b16 %v52
  %v155 = vunpack.c.l.b16 %v53
  %v156 = vunpack.c.l.b16 %v54
  %v157 = vunpack.c.l.b16 %v55
  %v158 = vunpack.c.l.b16 %v56
  %v159 = vunpack.c.l.b16 %v57
  %v160 = vunpack.c.l.b16 %v58
  %v161 = vunpack.c.l.b16 %v59
  %v162 = vunpack.c.l.b16 %v60
  %v163 = vunpack.c.l.b16 %v61
  %v164 = vunpack.c.l.b16 %v62
  %v165 = vpack.c.b16 %v134, %v133
  %v166 = vpack.c.b16 %v136, %v135
  %v167 = vpack.c.b16 %v138, %v137
  %v168 = vpack.c.b16 %v140, %v139
  %v169 = vpack.c.b16 %v142, %v141
  %v170 = vpack.c.b16 %v144, %v143
  %v171 = vpack.c.b16 %v146, %v145
  %v172 = vpack.c.b16 %v148, %v147
  %v173 = vpack.c.b16 %v150, %v149
  %v174 = vpack.c.b16 %v152, %v151
  %v175 = vpack.c.b16 %v154, %v153
  %v176 = vpack.c.b16 %v156, %v155
  %v177 = vpack.c.b16 %v158, %v157
  %v178 = vpack.c.b16 %v160, %v159
  %v179 = vpack.c.b16 %v162, %v161
  %v180 = vpack.c.b16 %v164, %v163
  %vm181 = vcmask 48128
  %v183 = vsel %vm181, %v165, 0
  %v186 = vsel %vm181, %v166, 0
  %v189 = vsel %vm181, %v167, 0
  %v192 = vsel %vm181, %v168, 0
  %v195 = vsel %vm181, %v169, 0
  %v198 = vsel %vm181, %v170, 0
  %v201 = vsel %vm181, %v171, 0
  %v204 = vsel %vm181, %v172, 0
  %v207 = vsel %vm181, %v173, 0
  %v210 = vsel %vm181, %v174, 0
  %v213 = vsel %vm181, %v175, 0
  %v216 = vsel %vm181, %v176, 0
  %v219 = vsel %vm181, %v177, 0
  %v222 = vsel %vm181, %v178, 0
  %v225 = vsel %vm181, %v179, 0
  %v228 = vsel %vm181, %v180, 0
  %vm230 = vcmask 1042432
  %v232 = vsel %vm230, %v24, 0
  %234 = vmatprep.subr.bf16.mxu0 0
  %235 = vmatpush1.bf16.msra.mxu0 %v232
  %236 = vmatprep.subr.bf16.mxu0 0
  %237 = vmatpush1.bf16.msra.mxu0 0
  %238 = vmatprep.subr.bf16.mxu0 0
  %239 = vmatpush1.bf16.msra.mxu0 0
  %240 = vmatprep.subr.bf16.mxu0 0
  %241 = vmatpush1.bf16.msra.mxu0 0
  %242 = vmatprep.subr.bf16.mxu0 0
  %243 = vmatpush1.bf16.msra.mxu0 0
  %244 = vmatprep.subr.bf16.mxu0 0
  %245 = vmatpush1.bf16.msra.mxu0 0
  %246 = vmatprep.subr.bf16.mxu0 0
  %247 = vmatpush1.bf16.msra.mxu0 0
  %248 = vmatprep.subr.bf16.mxu0 0
  %249 = vmatpush1.bf16.msra.mxu0 0
  %250 = vmatprep.subr.bf16.mxu0 0
  %251 = vmatpush1.bf16.msra.mxu0 0
  %252 = vmatprep.subr.bf16.mxu0 0
  %253 = vmatpush1.bf16.msra.mxu0 0
  %254 = vmatprep.subr.bf16.mxu0 0
  %255 = vmatpush1.bf16.msra.mxu0 0
  %256 = vmatprep.subr.bf16.mxu0 0
  %257 = vmatpush1.bf16.msra.mxu0 0
  %258 = vmatprep.subr.bf16.mxu0 0
  %259 = vmatpush1.bf16.msra.mxu0 0
  %260 = vmatprep.subr.bf16.mxu0 0
  %261 = vmatpush1.bf16.msra.mxu0 0
  %262 = vmatprep.subr.bf16.mxu0 0
  %263 = vmatpush1.bf16.msra.mxu0 0
  %264 = vmatprep.subr.bf16.mxu0 0
  %265 = vmatpush1.bf16.msra.mxu0 0
  %266 = vmatprep.mubr.bf16.mxu0 0
  %267 = vmatmul.mubr.bf16.gmra.mrb[0].mxu0 %v183
  %v268 = vpop.f32.mrb[0].mxu0
  %v269 = vadd.f32 %v99, %v268
  %v270 = vpop.f32.mrb[0].mxu0
  %v271 = vpop.f32.mrb[0].mxu0
  %v272 = vadd.f32 %v99, %v271
  %v273 = vpop.f32.mrb[0].mxu0
  %274 = vmatprep.mubr.bf16.mxu0 0
  %275 = vmatmul.mubr.bf16.gmra.mrb[0].mxu0 %v186
  %v276 = vpop.f32.mrb[0].mxu0
  %v277 = vadd.f32 %v99, %v276
  %v278 = vpop.f32.mrb[0].mxu0
  %v279 = vpop.f32.mrb[0].mxu0
  %v280 = vadd.f32 %v99, %v279
  %v281 = vpop.f32.mrb[0].mxu0
  %282 = vmatprep.mubr.bf16.mxu0 0
  %283 = vmatmul.mubr.bf16.gmra.mrb[0].mxu0 %v189
  %v284 = vpop.f32.mrb[0].mxu0
  %v285 = vadd.f32 %v99, %v284
  %v286 = vpop.f32.mrb[0].mxu0
  %v287 = vpop.f32.mrb[0].mxu0
  %v288 = vadd.f32 %v99, %v287
  %v289 = vpop.f32.mrb[0].mxu0
  %290 = vmatprep.mubr.bf16.mxu0 0
  %291 = vmatmul.mubr.bf16.gmra.mrb[0].mxu0 %v192
  %v292 = vpop.f32.mrb[0].mxu0
  %v293 = vadd.f32 %v99, %v292
  %v294 = vpop.f32.mrb[0].mxu0
  %v295 = vpop.f32.mrb[0].mxu0
  %v296 = vadd.f32 %v99, %v295
  %v297 = vpop.f32.mrb[0].mxu0
  %298 = vmatprep.mubr.bf16.mxu0 0
  %299 = vmatmul.mubr.bf16.gmra.mrb[0].mxu0 %v195
  %v300 = vpop.f32.mrb[0].mxu0
  %v301 = vadd.f32 %v99, %v300
  %v302 = vpop.f32.mrb[0].mxu0
  %v303 = vpop.f32.mrb[0].mxu0
  %v304 = vadd.f32 %v99, %v303
  %v305 = vpop.f32.mrb[0].mxu0
  %306 = vmatprep.mubr.bf16.mxu0 0
  %307 = vmatmul.mubr.bf16.gmra.mrb[0].mxu0 %v198
  %v308 = vpop.f32.mrb[0].mxu0
  %v309 = vadd.f32 %v99, %v308
  %v310 = vpop.f32.mrb[0].mxu0
  %v311 = vpop.f32.mrb[0].mxu0
  %v312 = vadd.f32 %v99, %v311
  %v313 = vpop.f32.mrb[0].mxu0
  %314 = vmatprep.mubr.bf16.mxu0 0
  %315 = vmatmul.mubr.bf16.gmra.mrb[0].mxu0 %v201
  %v316 = vpop.f32.mrb[0].mxu0
  %v317 = vadd.f32 %v99, %v316
  %v318 = vpop.f32.mrb[0].mxu0
  %v319 = vpop.f32.mrb[0].mxu0
  %v320 = vadd.f32 %v99, %v319
  %v321 = vpop.f32.mrb[0].mxu0
  %322 = vmatprep.mubr.bf16.mxu0 0
  %323 = vmatmul.mubr.bf16.gmra.mrb[0].mxu0 %v204
  %v324 = vpop.f32.mrb[0].mxu0
  %v325 = vadd.f32 %v99, %v324
  %v326 = vpop.f32.mrb[0].mxu0
  %v327 = vpop.f32.mrb[0].mxu0
  %v328 = vadd.f32 %v99, %v327
  %v329 = vpop.f32.mrb[0].mxu0
  %330 = vmatprep.mubr.bf16.mxu0 0
  %331 = vmatmul.mubr.bf16.gmra.mrb[0].mxu0 %v207
  %v332 = vpop.f32.mrb[0].mxu0
  %v333 = vadd.f32 %v99, %v332
  %v334 = vpop.f32.mrb[0].mxu0
  %v335 = vpop.f32.mrb[0].mxu0
  %v336 = vadd.f32 %v99, %v335
  %v337 = vpop.f32.mrb[0].mxu0
  %338 = vmatprep.mubr.bf16.mxu0 0
  %339 = vmatmul.mubr.bf16.gmra.mrb[0].mxu0 %v210
  %v340 = vpop.f32.mrb[0].mxu0
  %v341 = vadd.f32 %v99, %v340
  %v342 = vpop.f32.mrb[0].mxu0
  %v343 = vpop.f32.mrb[0].mxu0
  %v344 = vadd.f32 %v99, %v343
  %v345 = vpop.f32.mrb[0].mxu0
  %346 = vmatprep.mubr.bf16.mxu0 0
  %347 = vmatmul.mubr.bf16.gmra.mrb[0].mxu0 %v213
  %v348 = vpop.f32.mrb[0].mxu0
  %v349 = vadd.f32 %v99, %v348
  %v350 = vpop.f32.mrb[0].mxu0
  %v351 = vpop.f32.mrb[0].mxu0
  %v352 = vadd.f32 %v99, %v351
  %v353 = vpop.f32.mrb[0].mxu0
  %354 = vmatprep.mubr.bf16.mxu0 0
  %355 = vmatmul.mubr.bf16.gmra.mrb[0].mxu0 %v216
  %v356 = vpop.f32.mrb[0].mxu0
  %v357 = vadd.f32 %v99, %v356
  %v358 = vpop.f32.mrb[0].mxu0
  %v359 = vpop.f32.mrb[0].mxu0
  %v360 = vadd.f32 %v99, %v359
  %v361 = vpop.f32.mrb[0].mxu0
  %362 = vmatprep.mubr.bf16.mxu0 0
  %363 = vmatmul.mubr.bf16.gmra.mrb[0].mxu0 %v219
  %v364 = vpop.f32.mrb[0].mxu0
  %v365 = vadd.f32 %v99, %v364
  %v366 = vpop.f32.mrb[0].mxu0
  %v367 = vpop.f32.mrb[0].mxu0
  %v368 = vadd.f32 %v99, %v367
  %v369 = vpop.f32.mrb[0].mxu0
  %370 = vmatprep.mubr.bf16.mxu0 0
  %371 = vmatmul.mubr.bf16.gmra.mrb[0].mxu0 %v222
  %v372 = vpop.f32.mrb[0].mxu0
  %v373 = vadd.f32 %v99, %v372
  %v374 = vpop.f32.mrb[0].mxu0
  %v375 = vpop.f32.mrb[0].mxu0
  %v376 = vadd.f32 %v99, %v375
  %v377 = vpop.f32.mrb[0].mxu0
  %378 = vmatprep.mubr.bf16.mxu0 0
  %379 = vmatmul.mubr.bf16.gmra.mrb[0].mxu0 %v225
  %v380 = vpop.f32.mrb[0].mxu0
  %v381 = vadd.f32 %v99, %v380
  %v382 = vpop.f32.mrb[0].mxu0
  %v383 = vpop.f32.mrb[0].mxu0
  %v384 = vadd.f32 %v99, %v383
  %v385 = vpop.f32.mrb[0].mxu0
  %386 = vmatprep.mubr.bf16.mxu0 0
  %387 = vmatmul.mubr.bf16.gmra.mrb[0].mxu0 %v228
  %v388 = vpop.f32.mrb[0].mxu0
  %v389 = vadd.f32 %v99, %v388
  %v390 = vpop.f32.mrb[0].mxu0
  %v391 = vpop.f32.mrb[0].mxu0
  %v392 = vadd.f32 %v99, %v391
  %v393 = vpop.f32.mrb[0].mxu0
  %394 = vdwg.mxu0
  %v395 = vmax.f32 %v269, 0.0
  %v396 = vmax.f32 %v272, 0.0
  %v397 = vmax.f32 %v277, 0.0
  %v398 = vmax.f32 %v280, 0.0
  %v399 = vmax.f32 %v285, 0.0
  %v400 = vmax.f32 %v288, 0.0
  %v401 = vmax.f32 %v293, 0.0
  %v402 = vmax.f32 %v296, 0.0
  %v403 = vmax.f32 %v301, 0.0
  %v404 = vmax.f32 %v304, 0.0
  %v405 = vmax.f32 %v309, 0.0
  %v406 = vmax.f32 %v312, 0.0
  %v407 = vmax.f32 %v317, 0.0
  %v408 = vmax.f32 %v320, 0.0
  %v409 = vmax.f32 %v325, 0.0
  %v410 = vmax.f32 %v328, 0.0
  %v411 = vmax.f32 %v333, 0.0
  %v412 = vmax.f32 %v336, 0.0
  %v413 = vmax.f32 %v341, 0.0
  %v414 = vmax.f32 %v344, 0.0
  %v415 = vmax.f32 %v349, 0.0
  %v416 = vmax.f32 %v352, 0.0
  %v417 = vmax.f32 %v357, 0.0
  %v418 = vmax.f32 %v360, 0.0
  %v419 = vmax.f32 %v365, 0.0
  %v420 = vmax.f32 %v368, 0.0
  %v421 = vmax.f32 %v373, 0.0
  %v422 = vmax.f32 %v376, 0.0
  %v423 = vmax.f32 %v381, 0.0
  %v424 = vmax.f32 %v384, 0.0
  %v425 = vmax.f32 %v389, 0.0
  %v426 = vmax.f32 %v392, 0.0
  %v427 = vpack.c.bf16 %v396, %v395
  %v428 = vpack.c.bf16 %v398, %v397
  %v429 = vpack.c.bf16 %v400, %v399
  %v430 = vpack.c.bf16 %v402, %v401
  %v431 = vpack.c.bf16 %v404, %v403
  %v432 = vpack.c.bf16 %v406, %v405
  %v433 = vpack.c.bf16 %v408, %v407
  %v434 = vpack.c.bf16 %v410, %v409
  %v435 = vpack.c.bf16 %v412, %v411
  %v436 = vpack.c.bf16 %v414, %v413
  %v437 = vpack.c.bf16 %v416, %v415
  %v438 = vpack.c.bf16 %v418, %v417
  %v439 = vpack.c.bf16 %v420, %v419
  %v440 = vpack.c.bf16 %v422, %v421
  %v441 = vpack.c.bf16 %v424, %v423
  %v442 = vpack.c.bf16 %v426, %v425
  %v444 = vlaneseq
  %v445 = vshrl.u32 %v444, 7
  %v446 = vsub.s32 0, %v445
  %v447 = vrot.slane %v30, %v446
  %v453 = vunpack.c.l.b16 %v26
  %v454 = vunpack.c.l.b16 %v27
  %v455 = vunpack.c.l.b16 %v28
  %v456 = vunpack.c.l.b16 %v29
  %v457 = vpack.c.b16 %v454, %v453
  %v458 = vpack.c.b16 %v456, %v455
  %vm461 = vcmask 261120
  %v463 = vsel %vm461, %v427, 0
  %v466 = vsel %vm461, %v428, 0
  %v469 = vsel %vm461, %v429, 0
  %v472 = vsel %vm461, %v430, 0
  %v475 = vsel %vm461, %v431, 0
  %v478 = vsel %vm461, %v432, 0
  %v481 = vsel %vm461, %v433, 0
  %v484 = vsel %vm461, %v434, 0
  %v487 = vsel %vm461, %v435, 0
  %v490 = vsel %vm461, %v436, 0
  %v493 = vsel %vm461, %v437, 0
  %v496 = vsel %vm461, %v438, 0
  %v499 = vsel %vm461, %v439, 0
  %v502 = vsel %vm461, %v440, 0
  %v505 = vsel %vm461, %v441, 0
  %v508 = vsel %vm461, %v442, 0
  %510 = vmatprep.subr.bf16.mxu0 0
  %511 = vmatpush1.bf16.msra.mxu0 %v457
  %512 = vmatprep.subr.bf16.mxu0 0
  %513 = vmatpush1.bf16.msra.mxu0 %v458
  %514 = vmatprep.subr.bf16.mxu0 0
  %515 = vmatpush1.bf16.msra.mxu0 0
  %516 = vmatprep.subr.bf16.mxu0 0
  %517 = vmatpush1.bf16.msra.mxu0 0
  %518 = vmatprep.subr.bf16.mxu0 0
  %519 = vmatpush1.bf16.msra.mxu0 0
  %520 = vmatprep.subr.bf16.mxu0 0
  %521 = vmatpush1.bf16.msra.mxu0 0
  %522 = vmatprep.subr.bf16.mxu0 0
  %523 = vmatpush1.bf16.msra.mxu0 0
  %524 = vmatprep.subr.bf16.mxu0 0
  %525 = vmatpush1.bf16.msra.mxu0 0
  %526 = vmatprep.subr.bf16.mxu0 0
  %527 = vmatpush1.bf16.msra.mxu0 0
  %528 = vmatprep.subr.bf16.mxu0 0
  %529 = vmatpush1.bf16.msra.mxu0 0
  %530 = vmatprep.subr.bf16.mxu0 0
  %531 = vmatpush1.bf16.msra.mxu0 0
  %532 = vmatprep.subr.bf16.mxu0 0
  %533 = vmatpush1.bf16.msra.mxu0 0
  %534 = vmatprep.subr.bf16.mxu0 0
  %535 = vmatpush1.bf16.msra.mxu0 0
  %536 = vmatprep.subr.bf16.mxu0 0
  %537 = vmatpush1.bf16.msra.mxu0 0
  %538 = vmatprep.subr.bf16.mxu0 0
  %539 = vmatpush1.bf16.msra.mxu0 0
  %540 = vmatprep.subr.bf16.mxu0 0
  %541 = vmatpush1.bf16.msra.mxu0 0
  %542 = vmatprep.mubr.bf16.mxu0 0
  %543 = vmatmul.mubr.bf16.gmra.mrb[0].mxu0 %v463
  %v544 = vpop.f32.mrb[0].mxu0
  %v545 = vadd.f32 %v447, %v544
  %v546 = vpop.f32.mrb[0].mxu0
  %v547 = vpop.f32.mrb[0].mxu0
  %v548 = vadd.f32 %v447, %v547
  %v549 = vpop.f32.mrb[0].mxu0
  %550 = vmatprep.mubr.bf16.mxu0 0
  %551 = vmatmul.mubr.bf16.gmra.mrb[0].mxu0 %v466
  %v552 = vpop.f32.mrb[0].mxu0
  %v553 = vadd.f32 %v447, %v552
  %v554 = vpop.f32.mrb[0].mxu0
  %v555 = vpop.f32.mrb[0].mxu0
  %v556 = vadd.f32 %v447, %v555
  %v557 = vpop.f32.mrb[0].mxu0
  %558 = vmatprep.mubr.bf16.mxu0 0
  %559 = vmatmul.mubr.bf16.gmra.mrb[0].mxu0 %v469
  %v560 = vpop.f32.mrb[0].mxu0
  %v561 = vadd.f32 %v447, %v560
  %v562 = vpop.f32.mrb[0].mxu0
  %v563 = vpop.f32.mrb[0].mxu0
  %v564 = vadd.f32 %v447, %v563
  %v565 = vpop.f32.mrb[0].mxu0
  %566 = vmatprep.mubr.bf16.mxu0 0
  %567 = vmatmul.mubr.bf16.gmra.mrb[0].mxu0 %v472
  %v568 = vpop.f32.mrb[0].mxu0
  %v569 = vadd.f32 %v447, %v568
  %v570 = vpop.f32.mrb[0].mxu0
  %v571 = vpop.f32.mrb[0].mxu0
  %v572 = vadd.f32 %v447, %v571
  %v573 = vpop.f32.mrb[0].mxu0
  %574 = vmatprep.mubr.bf16.mxu0 0
  %575 = vmatmul.mubr.bf16.gmra.mrb[0].mxu0 %v475
  %v576 = vpop.f32.mrb[0].mxu0
  %v577 = vadd.f32 %v447, %v576
  %v578 = vpop.f32.mrb[0].mxu0
  %v579 = vpop.f32.mrb[0].mxu0
  %v580 = vadd.f32 %v447, %v579
  %v581 = vpop.f32.mrb[0].mxu0
  %582 = vmatprep.mubr.bf16.mxu0 0
  %583 = vmatmul.mubr.bf16.gmra.mrb[0].mxu0 %v478
  %v584 = vpop.f32.mrb[0].mxu0
  %v585 = vadd.f32 %v447, %v584
  %v586 = vpop.f32.mrb[0].mxu0
  %v587 = vpop.f32.mrb[0].mxu0
  %v588 = vadd.f32 %v447, %v587
  %v589 = vpop.f32.mrb[0].mxu0
  %590 = vmatprep.mubr.bf16.mxu0 0
  %591 = vmatmul.mubr.bf16.gmra.mrb[0].mxu0 %v481
  %v592 = vpop.f32.mrb[0].mxu0
  %v593 = vadd.f32 %v447, %v592
  %v594 = vpop.f32.mrb[0].mxu0
  %v595 = vpop.f32.mrb[0].mxu0
  %v596 = vadd.f32 %v447, %v595
  %v597 = vpop.f32.mrb[0].mxu0
  %598 = vmatprep.mubr.bf16.mxu0 0
  %599 = vmatmul.mubr.bf16.gmra.mrb[0].mxu0 %v484
  %v600 = vpop.f32.mrb[0].mxu0
  %v601 = vadd.f32 %v447, %v600
  %v602 = vpop.f32.mrb[0].mxu0
  %v603 = vpop.f32.mrb[0].mxu0
  %v604 = vadd.f32 %v447, %v603
  %v605 = vpop.f32.mrb[0].mxu0
  %606 = vmatprep.mubr.bf16.mxu0 0
  %607 = vmatmul.mubr.bf16.gmra.mrb[0].mxu0 %v487
  %v608 = vpop.f32.mrb[0].mxu0
  %v609 = vadd.f32 %v447, %v608
  %v610 = vpop.f32.mrb[0].mxu0
  %v611 = vpop.f32.mrb[0].mxu0
  %v612 = vadd.f32 %v447, %v611
  %v613 = vpop.f32.mrb[0].mxu0
  %614 = vmatprep.mubr.bf16.mxu0 0
  %615 = vmatmul.mubr.bf16.gmra.mrb[0].mxu0 %v490
  %v616 = vpop.f32.mrb[0].mxu0
  %v617 = vadd.f32 %v447, %v616
  %v618 = vpop.f32.mrb[0].mxu0
  %v619 = vpop.f32.mrb[0].mxu0
  %v620 = vadd.f32 %v447, %v619
  %v621 = vpop.f32.mrb[0].mxu0
  %622 = vmatprep.mubr.bf16.mxu0 0
  %623 = vmatmul.mubr.bf16.gmra.mrb[0].mxu0 %v493
  %v624 = vpop.f32.mrb[0].mxu0
  %v625 = vadd.f32 %v447, %v624
  %v626 = vpop.f32.mrb[0].mxu0
  %v627 = vpop.f32.mrb[0].mxu0
  %v628 = vadd.f32 %v447, %v627
  %v629 = vpop.f32.mrb[0].mxu0
  %630 = vmatprep.mubr.bf16.mxu0 0
  %631 = vmatmul.mubr.bf16.gmra.mrb[0].mxu0 %v496
  %v632 = vpop.f32.mrb[0].mxu0
  %v633 = vadd.f32 %v447, %v632
  %v634 = vpop.f32.mrb[0].mxu0
  %v635 = vpop.f32.mrb[0].mxu0
  %v636 = vadd.f32 %v447, %v635
  %v637 = vpop.f32.mrb[0].mxu0
  %638 = vmatprep.mubr.bf16.mxu0 0
  %639 = vmatmul.mubr.bf16.gmra.mrb[0].mxu0 %v499
  %v640 = vpop.f32.mrb[0].mxu0
  %v641 = vadd.f32 %v447, %v640
  %v642 = vpop.f32.mrb[0].mxu0
  %v643 = vpop.f32.mrb[0].mxu0
  %v644 = vadd.f32 %v447, %v643
  %v645 = vpop.f32.mrb[0].mxu0
  %646 = vmatprep.mubr.bf16.mxu0 0
  %647 = vmatmul.mubr.bf16.gmra.mrb[0].mxu0 %v502
  %v648 = vpop.f32.mrb[0].mxu0
  %v649 = vadd.f32 %v447, %v648
  %v650 = vpop.f32.mrb[0].mxu0
  %v651 = vpop.f32.mrb[0].mxu0
  %v652 = vadd.f32 %v447, %v651
  %v653 = vpop.f32.mrb[0].mxu0
  %654 = vmatprep.mubr.bf16.mxu0 0
  %655 = vmatmul.mubr.bf16.gmra.mrb[0].mxu0 %v505
  %v656 = vpop.f32.mrb[0].mxu0
  %v657 = vadd.f32 %v447, %v656
  %v658 = vpop.f32.mrb[0].mxu0
  %v659 = vpop.f32.mrb[0].mxu0
  %v660 = vadd.f32 %v447, %v659
  %v661 = vpop.f32.mrb[0].mxu0
  %662 = vmatprep.mubr.bf16.mxu0 0
  %663 = vmatmul.mubr.bf16.gmra.mrb[0].mxu0 %v508
  %v664 = vpop.f32.mrb[0].mxu0
  %v665 = vadd.f32 %v447, %v664
  %v666 = vpop.f32.mrb[0].mxu0
  %v667 = vpop.f32.mrb[0].mxu0
  %v668 = vadd.f32 %v447, %v667
  %v669 = vpop.f32.mrb[0].mxu0
  %670 = vdwg.mxu0
  %v671 = vmax.f32 %v545, 0.0
  %v672 = vmax.f32 %v548, 0.0
  %v673 = vmax.f32 %v553, 0.0
  %v674 = vmax.f32 %v556, 0.0
  %v675 = vmax.f32 %v561, 0.0
  %v676 = vmax.f32 %v564, 0.0
  %v677 = vmax.f32 %v569, 0.0
  %v678 = vmax.f32 %v572, 0.0
  %v679 = vmax.f32 %v577, 0.0
  %v680 = vmax.f32 %v580, 0.0
  %v681 = vmax.f32 %v585, 0.0
  %v682 = vmax.f32 %v588, 0.0
  %v683 = vmax.f32 %v593, 0.0
  %v684 = vmax.f32 %v596, 0.0
  %v685 = vmax.f32 %v601, 0.0
  %v686 = vmax.f32 %v604, 0.0
  %v687 = vmax.f32 %v609, 0.0
  %v688 = vmax.f32 %v612, 0.0
  %v689 = vmax.f32 %v617, 0.0
  %v690 = vmax.f32 %v620, 0.0
  %v691 = vmax.f32 %v625, 0.0
  %v692 = vmax.f32 %v628, 0.0
  %v693 = vmax.f32 %v633, 0.0
  %v694 = vmax.f32 %v636, 0.0
  %v695 = vmax.f32 %v641, 0.0
  %v696 = vmax.f32 %v644, 0.0
  %v697 = vmax.f32 %v649, 0.0
  %v698 = vmax.f32 %v652, 0.0
  %v699 = vmax.f32 %v657, 0.0
  %v700 = vmax.f32 %v660, 0.0
  %v701 = vmax.f32 %v665, 0.0
  %v702 = vmax.f32 %v668, 0.0
  %704 = vset.pattern.permute.xlu0 0
  %705 = vperm.xlu0 %704, %v63
  %v706 = vpop.permute.xlu0 %705
  %709 = vset.pattern.permute.xlu0 0
  %710 = vperm.xlu0 %709, %v64
  %v711 = vpop.permute.xlu0 %710
  %714 = vset.pattern.permute.xlu0 0
  %715 = vperm.xlu0 %714, %v65
  %v716 = vpop.permute.xlu0 %715
  %719 = vset.pattern.permute.xlu0 0
  %720 = vperm.xlu0 %719, %v66
  %v721 = vpop.permute.xlu0 %720
  %724 = vset.pattern.permute.xlu0 0
  %725 = vperm.xlu0 %724, %v67
  %v726 = vpop.permute.xlu0 %725
  %729 = vset.pattern.permute.xlu0 0
  %730 = vperm.xlu0 %729, %v68
  %v731 = vpop.permute.xlu0 %730
  %734 = vset.pattern.permute.xlu0 0
  %735 = vperm.xlu0 %734, %v69
  %v736 = vpop.permute.xlu0 %735
  %739 = vset.pattern.permute.xlu0 0
  %740 = vperm.xlu0 %739, %v70
  %v741 = vpop.permute.xlu0 %740
  %744 = vset.pattern.permute.xlu0 0
  %745 = vperm.xlu0 %744, %v71
  %v746 = vpop.permute.xlu0 %745
  %749 = vset.pattern.permute.xlu0 0
  %750 = vperm.xlu0 %749, %v72
  %v751 = vpop.permute.xlu0 %750
  %754 = vset.pattern.permute.xlu0 0
  %755 = vperm.xlu0 %754, %v73
  %v756 = vpop.permute.xlu0 %755
  %759 = vset.pattern.permute.xlu0 0
  %760 = vperm.xlu0 %759, %v74
  %v761 = vpop.permute.xlu0 %760
  %764 = vset.pattern.permute.xlu0 0
  %765 = vperm.xlu0 %764, %v75
  %v766 = vpop.permute.xlu0 %765
  %769 = vset.pattern.permute.xlu0 0
  %770 = vperm.xlu0 %769, %v76
  %v771 = vpop.permute.xlu0 %770
  %774 = vset.pattern.permute.xlu0 0
  %775 = vperm.xlu0 %774, %v77
  %v776 = vpop.permute.xlu0 %775
  %779 = vset.pattern.permute.xlu0 0
  %780 = vperm.xlu0 %779, %v78
  %v781 = vpop.permute.xlu0 %780
  %784 = vset.pattern.permute.xlu0 0
  %785 = vperm.xlu0 %784, %v79
  %v786 = vpop.permute.xlu0 %785
  %789 = vset.pattern.permute.xlu0 0
  %790 = vperm.xlu0 %789, %v80
  %v791 = vpop.permute.xlu0 %790
  %794 = vset.pattern.permute.xlu0 0
  %795 = vperm.xlu0 %794, %v81
  %v796 = vpop.permute.xlu0 %795
  %799 = vset.pattern.permute.xlu0 0
  %800 = vperm.xlu0 %799, %v82
  %v801 = vpop.permute.xlu0 %800
  %804 = vset.pattern.permute.xlu0 0
  %805 = vperm.xlu0 %804, %v83
  %v806 = vpop.permute.xlu0 %805
  %809 = vset.pattern.permute.xlu0 0
  %810 = vperm.xlu0 %809, %v84
  %v811 = vpop.permute.xlu0 %810
  %814 = vset.pattern.permute.xlu0 0
  %815 = vperm.xlu0 %814, %v85
  %v816 = vpop.permute.xlu0 %815
  %819 = vset.pattern.permute.xlu0 0
  %820 = vperm.xlu0 %819, %v86
  %v821 = vpop.permute.xlu0 %820
  %824 = vset.pattern.permute.xlu0 0
  %825 = vperm.xlu0 %824, %v87
  %v826 = vpop.permute.xlu0 %825
  %829 = vset.pattern.permute.xlu0 0
  %830 = vperm.xlu0 %829, %v88
  %v831 = vpop.permute.xlu0 %830
  %834 = vset.pattern.permute.xlu0 0
  %835 = vperm.xlu0 %834, %v89
  %v836 = vpop.permute.xlu0 %835
  %839 = vset.pattern.permute.xlu0 0
  %840 = vperm.xlu0 %839, %v90
  %v841 = vpop.permute.xlu0 %840
  %844 = vset.pattern.permute.xlu0 0
  %845 = vperm.xlu0 %844, %v91
  %v846 = vpop.permute.xlu0 %845
  %849 = vset.pattern.permute.xlu0 0
  %850 = vperm.xlu0 %849, %v92
  %v851 = vpop.permute.xlu0 %850
  %854 = vset.pattern.permute.xlu0 0
  %855 = vperm.xlu0 %854, %v93
  %v856 = vpop.permute.xlu0 %855
  %859 = vset.pattern.permute.xlu0 0
  %860 = vperm.xlu0 %859, %v94
  %v861 = vpop.permute.xlu0 %860
  %v863 = vmul.f32 %v671, %v706
  %v864 = vmul.f32 %v672, %v711
  %v865 = vmul.f32 %v673, %v716
  %v866 = vmul.f32 %v674, %v721
  %v867 = vmul.f32 %v675, %v726
  %v868 = vmul.f32 %v676, %v731
  %v869 = vmul.f32 %v677, %v736
  %v870 = vmul.f32 %v678, %v741
  %v871 = vmul.f32 %v679, %v746
  %v872 = vmul.f32 %v680, %v751
  %v873 = vmul.f32 %v681, %v756
  %v874 = vmul.f32 %v682, %v761
  %v875 = vmul.f32 %v683, %v766
  %v876 = vmul.f32 %v684, %v771
  %v877 = vmul.f32 %v685, %v776
  %v878 = vmul.f32 %v686, %v781
  %v879 = vmul.f32 %v687, %v786
  %v880 = vmul.f32 %v688, %v791
  %v881 = vmul.f32 %v689, %v796
  %v882 = vmul.f32 %v690, %v801
  %v883 = vmul.f32 %v691, %v806
  %v884 = vmul.f32 %v692, %v811
  %v885 = vmul.f32 %v693, %v816
  %v886 = vmul.f32 %v694, %v821
  %v887 = vmul.f32 %v695, %v826
  %v888 = vmul.f32 %v696, %v831
  %v889 = vmul.f32 %v697, %v836
  %v890 = vmul.f32 %v698, %v841
  %v891 = vmul.f32 %v699, %v846
  %v892 = vmul.f32 %v700, %v851
  %v893 = vmul.f32 %v701, %v856
  %v894 = vmul.f32 %v702, %v861
  %v895 = vmax.f32 %v863, %v867
  %v896 = vmax.f32 %v895, %v871
  %v897 = vmax.f32 %v896, %v875
  %v898 = vmax.f32 %v897, %v879
  %v899 = vmax.f32 %v898, %v883
  %v900 = vmax.f32 %v899, %v887
  %v901 = vmax.f32 %v900, %v891
  %v902 = vmax.f32 %v864, %v868
  %v903 = vmax.f32 %v902, %v872
  %v904 = vmax.f32 %v903, %v876
  %v905 = vmax.f32 %v904, %v880
  %v906 = vmax.f32 %v905, %v884
  %v907 = vmax.f32 %v906, %v888
  %v908 = vmax.f32 %v907, %v892
  %v909 = vmax.f32 %v865, %v869
  %v910 = vmax.f32 %v909, %v873
  %v911 = vmax.f32 %v910, %v877
  %v912 = vmax.f32 %v911, %v881
  %v913 = vmax.f32 %v912, %v885
  %v914 = vmax.f32 %v913, %v889
  %v915 = vmax.f32 %v914, %v893
  %v916 = vmax.f32 %v866, %v870
  %v917 = vmax.f32 %v916, %v874
  %v918 = vmax.f32 %v917, %v878
  %v919 = vmax.f32 %v918, %v882
  %v920 = vmax.f32 %v919, %v886
  %v921 = vmax.f32 %v920, %v890
  %v922 = vmax.f32 %v921, %v894
  %v923 = vmax.f32 %v901, 0.0
  %v924 = vmax.f32 %v908, 0.0
  %v925 = vmax.f32 %v915, 0.0
  %v926 = vmax.f32 %v922, 0.0
  %s927 = scalar_lea.vmem %s0, 128
  %v928 = vld [vmem:[%s927] sm:$0xf]
  %v929 = vld [vmem:[%s927 + $0x4] sm:$0xf]
  %v930 = vld [vmem:[%s927 + $0x8] sm:$0xf]
  %v931 = vld [vmem:[%s927 + $0xc] sm:$0xf]
  %v932 = vld [vmem:[%s927 + $0x10] sm:$0xf]
  %v933 = vld [vmem:[%s927 + $0x14] sm:$0xf]
  %v934 = vld [vmem:[%s927 + $0x18] sm:$0xf]
  %v935 = vld [vmem:[%s927 + $0x1c] sm:$0xf]
  %v936 = vld [vmem:[%s927 + $0x20] sm:$0xf]
  %v937 = vld [vmem:[%s927 + $0x24] sm:$0xf]
  %v938 = vld [vmem:[%s927 + $0x28] sm:$0xf]
  %v939 = vld [vmem:[%s927 + $0x2c] sm:$0xf]
  %v940 = vld [vmem:[%s927 + $0x30] sm:$0xf]
  %v941 = vld [vmem:[%s927 + $0x34] sm:$0xf]
  %v942 = vld [vmem:[%s927 + $0x38] sm:$0xf]
  %v943 = vld [vmem:[%s927 + $0x3c] sm:$0xf]
  %v944 = vld [vmem:[%s927 + $0x40] sm:$0xf]
  %v945 = vld [vmem:[%s927 + $0x44] sm:$0xf]
  %v946 = vld [vmem:[%s927 + $0x48] sm:$0xf]
  %v947 = vld [vmem:[%s927 + $0x4c] sm:$0xf]
  %v948 = vld [vmem:[%s927 + $0x50] sm:$0xf]
  %v949 = vld [vmem:[%s927 + $0x54] sm:$0xf]
  %v950 = vld [vmem:[%s927 + $0x58] sm:$0xf]
  %v951 = vld [vmem:[%s927 + $0x5c] sm:$0xf]
  %v952 = vld [vmem:[%s927 + $0x60] sm:$0xf]
  %v953 = vld [vmem:[%s927 + $0x64] sm:$0xf]
  %v954 = vld [vmem:[%s927 + $0x68] sm:$0xf]
  %v955 = vld [vmem:[%s927 + $0x6c] sm:$0xf]
  %v956 = vld [vmem:[%s927 + $0x70] sm:$0xf]
  %v957 = vld [vmem:[%s927 + $0x74] sm:$0xf]
  %v958 = vld [vmem:[%s927 + $0x78] sm:$0xf]
  %v959 = vld [vmem:[%s927 + $0x7c] sm:$0xf]
  %s960 = scalar_lea.vmem %s1, 256
  %v961 = vld [vmem:[%s960] sm:$0xff]
  %v962 = vld [vmem:[%s960 + $0x8] sm:$0xff]
  %v963 = vld [vmem:[%s960 + $0x10] sm:$0xff]
  %v964 = vld [vmem:[%s960 + $0x18] sm:$0xff]
  %v965 = vld [vmem:[%s960 + $0x20] sm:$0xff]
  %v966 = vld [vmem:[%s960 + $0x28] sm:$0xff]
  %v967 = vld [vmem:[%s960 + $0x30] sm:$0xff]
  %v968 = vld [vmem:[%s960 + $0x38] sm:$0xff]
  %v969 = vld [vmem:[%s960 + $0x40] sm:$0xff]
  %v970 = vld [vmem:[%s960 + $0x48] sm:$0xff]
  %v971 = vld [vmem:[%s960 + $0x50] sm:$0xff]
  %v972 = vld [vmem:[%s960 + $0x58] sm:$0xff]
  %v973 = vld [vmem:[%s960 + $0x60] sm:$0xff]
  %v974 = vld [vmem:[%s960 + $0x68] sm:$0xff]
  %v975 = vld [vmem:[%s960 + $0x70] sm:$0xff]
  %v976 = vld [vmem:[%s960 + $0x78] sm:$0xff]
  %v977 = vld [vmem:[%s960 + $0x80] sm:$0xff]
  %v978 = vld [vmem:[%s960 + $0x88] sm:$0xff]
  %v979 = vld [vmem:[%s960 + $0x90] sm:$0xff]
  %v980 = vld [vmem:[%s960 + $0x98] sm:$0xff]
  %v981 = vld [vmem:[%s960 + $0xa0] sm:$0xff]
  %v982 = vld [vmem:[%s960 + $0xa8] sm:$0xff]
  %v983 = vld [vmem:[%s960 + $0xb0] sm:$0xff]
  %v984 = vld [vmem:[%s960 + $0xb8] sm:$0xff]
  %v985 = vld [vmem:[%s960 + $0xc0] sm:$0xff]
  %v986 = vld [vmem:[%s960 + $0xc8] sm:$0xff]
  %v987 = vld [vmem:[%s960 + $0xd0] sm:$0xff]
  %v988 = vld [vmem:[%s960 + $0xd8] sm:$0xff]
  %v989 = vld [vmem:[%s960 + $0xe0] sm:$0xff]
  %v990 = vld [vmem:[%s960 + $0xe8] sm:$0xff]
  %v991 = vld [vmem:[%s960 + $0xf0] sm:$0xff]
  %v992 = vld [vmem:[%s960 + $0xf8] sm:$0xff]
  %v1025 = vunpack.c.l.b16 %v928
  %v1026 = vunpack.c.l.b16 %v929
  %v1027 = vunpack.c.l.b16 %v930
  %v1028 = vunpack.c.l.b16 %v931
  %v1029 = vunpack.c.l.b16 %v932
  %v1030 = vunpack.c.l.b16 %v933
  %v1031 = vunpack.c.l.b16 %v934
  %v1032 = vunpack.c.l.b16 %v935
  %v1033 = vunpack.c.l.b16 %v936
  %v1034 = vunpack.c.l.b16 %v937
  %v1035 = vunpack.c.l.b16 %v938
  %v1036 = vunpack.c.l.b16 %v939
  %v1037 = vunpack.c.l.b16 %v940
  %v1038 = vunpack.c.l.b16 %v941
  %v1039 = vunpack.c.l.b16 %v942
  %v1040 = vunpack.c.l.b16 %v943
  %v1041 = vunpack.c.l.b16 %v944
  %v1042 = vunpack.c.l.b16 %v945
  %v1043 = vunpack.c.l.b16 %v946
  %v1044 = vunpack.c.l.b16 %v947
  %v1045 = vunpack.c.l.b16 %v948
  %v1046 = vunpack.c.l.b16 %v949
  %v1047 = vunpack.c.l.b16 %v950
  %v1048 = vunpack.c.l.b16 %v951
  %v1049 = vunpack.c.l.b16 %v952
  %v1050 = vunpack.c.l.b16 %v953
  %v1051 = vunpack.c.l.b16 %v954
  %v1052 = vunpack.c.l.b16 %v955
  %v1053 = vunpack.c.l.b16 %v956
  %v1054 = vunpack.c.l.b16 %v957
  %v1055 = vunpack.c.l.b16 %v958
  %v1056 = vunpack.c.l.b16 %v959
  %v1057 = vpack.c.b16 %v1026, %v1025
  %v1058 = vpack.c.b16 %v1028, %v1027
  %v1059 = vpack.c.b16 %v1030, %v1029
  %v1060 = vpack.c.b16 %v1032, %v1031
  %v1061 = vpack.c.b16 %v1034, %v1033
  %v1062 = vpack.c.b16 %v1036, %v1035
  %v1063 = vpack.c.b16 %v1038, %v1037
  %v1064 = vpack.c.b16 %v1040, %v1039
  %v1065 = vpack.c.b16 %v1042, %v1041
  %v1066 = vpack.c.b16 %v1044, %v1043
  %v1067 = vpack.c.b16 %v1046, %v1045
  %v1068 = vpack.c.b16 %v1048, %v1047
  %v1069 = vpack.c.b16 %v1050, %v1049
  %v1070 = vpack.c.b16 %v1052, %v1051
  %v1071 = vpack.c.b16 %v1054, %v1053
  %v1072 = vpack.c.b16 %v1056, %v1055
  %v1074 = vsel %vm181, %v1057, 0
  %v1077 = vsel %vm181, %v1058, 0
  %v1080 = vsel %vm181, %v1059, 0
  %v1083 = vsel %vm181, %v1060, 0
  %v1086 = vsel %vm181, %v1061, 0
  %v1089 = vsel %vm181, %v1062, 0
  %v1092 = vsel %vm181, %v1063, 0
  %v1095 = vsel %vm181, %v1064, 0
  %v1098 = vsel %vm181, %v1065, 0
  %v1101 = vsel %vm181, %v1066, 0
  %v1104 = vsel %vm181, %v1067, 0
  %v1107 = vsel %vm181, %v1068, 0
  %v1110 = vsel %vm181, %v1069, 0
  %v1113 = vsel %vm181, %v1070, 0
  %v1116 = vsel %vm181, %v1071, 0
  %v1119 = vsel %vm181, %v1072, 0
  %1121 = vmatprep.subr.bf16.mxu0 0
  %1122 = vmatpush1.bf16.msra.mxu0 %v232
  %1123 = vmatprep.subr.bf16.mxu0 0
  %1124 = vmatpush1.bf16.msra.mxu0 0
  %1125 = vmatprep.subr.bf16.mxu0 0
  %1126 = vmatpush1.bf16.msra.mxu0 0
  %1127 = vmatprep.subr.bf16.mxu0 0
  %1128 = vmatpush1.bf16.msra.mxu0 0
  %1129 = vmatprep.subr.bf16.mxu0 0
  %1130 = vmatpush1.bf16.msra.mxu0 0
  %1131 = vmatprep.subr.bf16.mxu0 0
  %1132 = vmatpush1.bf16.msra.mxu0 0
  %1133 = vmatprep.subr.bf16.mxu0 0
  %1134 = vmatpush1.bf16.msra.mxu0 0
  %1135 = vmatprep.subr.bf16.mxu0 0
  %1136 = vmatpush1.bf16.msra.mxu0 0
  %1137 = vmatprep.subr.bf16.mxu0 0
  %1138 = vmatpush1.bf16.msra.mxu0 0
  %1139 = vmatprep.subr.bf16.mxu0 0
  %1140 = vmatpush1.bf16.msra.mxu0 0
  %1141 = vmatprep.subr.bf16.mxu0 0
  %1142 = vmatpush1.bf16.msra.mxu0 0
  %1143 = vmatprep.subr.bf16.mxu0 0
  %1144 = vmatpush1.bf16.msra.mxu0 0
  %1145 = vmatprep.subr.bf16.mxu0 0
  %1146 = vmatpush1.bf16.msra.mxu0 0
  %1147 = vmatprep.subr.bf16.mxu0 0
  %1148 = vmatpush1.bf16.msra.mxu0 0
  %1149 = vmatprep.subr.bf16.mxu0 0
  %1150 = vmatpush1.bf16.msra.mxu0 0
  %1151 = vmatprep.subr.bf16.mxu0 0
  %1152 = vmatpush1.bf16.msra.mxu0 0
  %1153 = vmatprep.mubr.bf16.mxu0 0
  %1154 = vmatmul.mubr.bf16.gmra.mrb[0].mxu0 %v1074
  %v1155 = vpop.f32.mrb[0].mxu0
  %v1156 = vadd.f32 %v99, %v1155
  %v1157 = vpop.f32.mrb[0].mxu0
  %v1158 = vpop.f32.mrb[0].mxu0
  %v1159 = vadd.f32 %v99, %v1158
  %v1160 = vpop.f32.mrb[0].mxu0
  %1161 = vmatprep.mubr.bf16.mxu0 0
  %1162 = vmatmul.mubr.bf16.gmra.mrb[0].mxu0 %v1077
  %v1163 = vpop.f32.mrb[0].mxu0
  %v1164 = vadd.f32 %v99, %v1163
  %v1165 = vpop.f32.mrb[0].mxu0
  %v1166 = vpop.f32.mrb[0].mxu0
  %v1167 = vadd.f32 %v99, %v1166
  %v1168 = vpop.f32.mrb[0].mxu0
  %1169 = vmatprep.mubr.bf16.mxu0 0
  %1170 = vmatmul.mubr.bf16.gmra.mrb[0].mxu0 %v1080
  %v1171 = vpop.f32.mrb[0].mxu0
  %v1172 = vadd.f32 %v99, %v1171
  %v1173 = vpop.f32.mrb[0].mxu0
  %v1174 = vpop.f32.mrb[0].mxu0
  %v1175 = vadd.f32 %v99, %v1174
  %v1176 = vpop.f32.mrb[0].mxu0
  %1177 = vmatprep.mubr.bf16.mxu0 0
  %1178 = vmatmul.mubr.bf16.gmra.mrb[0].mxu0 %v1083
  %v1179 = vpop.f32.mrb[0].mxu0
  %v1180 = vadd.f32 %v99, %v1179
  %v1181 = vpop.f32.mrb[0].mxu0
  %v1182 = vpop.f32.mrb[0].mxu0
  %v1183 = vadd.f32 %v99, %v1182
  %v1184 = vpop.f32.mrb[0].mxu0
  %1185 = vmatprep.mubr.bf16.mxu0 0
  %1186 = vmatmul.mubr.bf16.gmra.mrb[0].mxu0 %v1086
  %v1187 = vpop.f32.mrb[0].mxu0
  %v1188 = vadd.f32 %v99, %v1187
  %v1189 = vpop.f32.mrb[0].mxu0
  %v1190 = vpop.f32.mrb[0].mxu0
  %v1191 = vadd.f32 %v99, %v1190
  %v1192 = vpop.f32.mrb[0].mxu0
  %1193 = vmatprep.mubr.bf16.mxu0 0
  %1194 = vmatmul.mubr.bf16.gmra.mrb[0].mxu0 %v1089
  %v1195 = vpop.f32.mrb[0].mxu0
  %v1196 = vadd.f32 %v99, %v1195
  %v1197 = vpop.f32.mrb[0].mxu0
  %v1198 = vpop.f32.mrb[0].mxu0
  %v1199 = vadd.f32 %v99, %v1198
  %v1200 = vpop.f32.mrb[0].mxu0
  %1201 = vmatprep.mubr.bf16.mxu0 0
  %1202 = vmatmul.mubr.bf16.gmra.mrb[0].mxu0 %v1092
  %v1203 = vpop.f32.mrb[0].mxu0
  %v1204 = vadd.f32 %v99, %v1203
  %v1205 = vpop.f32.mrb[0].mxu0
  %v1206 = vpop.f32.mrb[0].mxu0
  %v1207 = vadd.f32 %v99, %v1206
  %v1208 = vpop.f32.mrb[0].mxu0
  %1209 = vmatprep.mubr.bf16.mxu0 0
  %1210 = vmatmul.mubr.bf16.gmra.mrb[0].mxu0 %v1095
  %v1211 = vpop.f32.mrb[0].mxu0
  %v1212 = vadd.f32 %v99, %v1211
  %v1213 = vpop.f32.mrb[0].mxu0
  %v1214 = vpop.f32.mrb[0].mxu0
  %v1215 = vadd.f32 %v99, %v1214
  %v1216 = vpop.f32.mrb[0].mxu0
  %1217 = vmatprep.mubr.bf16.mxu0 0
  %1218 = vmatmul.mubr.bf16.gmra.mrb[0].mxu0 %v1098
  %v1219 = vpop.f32.mrb[0].mxu0
  %v1220 = vadd.f32 %v99, %v1219
  %v1221 = vpop.f32.mrb[0].mxu0
  %v1222 = vpop.f32.mrb[0].mxu0
  %v1223 = vadd.f32 %v99, %v1222
  %v1224 = vpop.f32.mrb[0].mxu0
  %1225 = vmatprep.mubr.bf16.mxu0 0
  %1226 = vmatmul.mubr.bf16.gmra.mrb[0].mxu0 %v1101
  %v1227 = vpop.f32.mrb[0].mxu0
  %v1228 = vadd.f32 %v99, %v1227
  %v1229 = vpop.f32.mrb[0].mxu0
  %v1230 = vpop.f32.mrb[0].mxu0
  %v1231 = vadd.f32 %v99, %v1230
  %v1232 = vpop.f32.mrb[0].mxu0
  %1233 = vmatprep.mubr.bf16.mxu0 0
  %1234 = vmatmul.mubr.bf16.gmra.mrb[0].mxu0 %v1104
  %v1235 = vpop.f32.mrb[0].mxu0
  %v1236 = vadd.f32 %v99, %v1235
  %v1237 = vpop.f32.mrb[0].mxu0
  %v1238 = vpop.f32.mrb[0].mxu0
  %v1239 = vadd.f32 %v99, %v1238
  %v1240 = vpop.f32.mrb[0].mxu0
  %1241 = vmatprep.mubr.bf16.mxu0 0
  %1242 = vmatmul.mubr.bf16.gmra.mrb[0].mxu0 %v1107
  %v1243 = vpop.f32.mrb[0].mxu0
  %v1244 = vadd.f32 %v99, %v1243
  %v1245 = vpop.f32.mrb[0].mxu0
  %v1246 = vpop.f32.mrb[0].mxu0
  %v1247 = vadd.f32 %v99, %v1246
  %v1248 = vpop.f32.mrb[0].mxu0
  %1249 = vmatprep.mubr.bf16.mxu0 0
  %1250 = vmatmul.mubr.bf16.gmra.mrb[0].mxu0 %v1110
  %v1251 = vpop.f32.mrb[0].mxu0
  %v1252 = vadd.f32 %v99, %v1251
  %v1253 = vpop.f32.mrb[0].mxu0
  %v1254 = vpop.f32.mrb[0].mxu0
  %v1255 = vadd.f32 %v99, %v1254
  %v1256 = vpop.f32.mrb[0].mxu0
  %1257 = vmatprep.mubr.bf16.mxu0 0
  %1258 = vmatmul.mubr.bf16.gmra.mrb[0].mxu0 %v1113
  %v1259 = vpop.f32.mrb[0].mxu0
  %v1260 = vadd.f32 %v99, %v1259
  %v1261 = vpop.f32.mrb[0].mxu0
  %v1262 = vpop.f32.mrb[0].mxu0
  %v1263 = vadd.f32 %v99, %v1262
  %v1264 = vpop.f32.mrb[0].mxu0
  %1265 = vmatprep.mubr.bf16.mxu0 0
  %1266 = vmatmul.mubr.bf16.gmra.mrb[0].mxu0 %v1116
  %v1267 = vpop.f32.mrb[0].mxu0
  %v1268 = vadd.f32 %v99, %v1267
  %v1269 = vpop.f32.mrb[0].mxu0
  %v1270 = vpop.f32.mrb[0].mxu0
  %v1271 = vadd.f32 %v99, %v1270
  %v1272 = vpop.f32.mrb[0].mxu0
  %1273 = vmatprep.mubr.bf16.mxu0 0
  %1274 = vmatmul.mubr.bf16.gmra.mrb[0].mxu0 %v1119
  %v1275 = vpop.f32.mrb[0].mxu0
  %v1276 = vadd.f32 %v99, %v1275
  %v1277 = vpop.f32.mrb[0].mxu0
  %v1278 = vpop.f32.mrb[0].mxu0
  %v1279 = vadd.f32 %v99, %v1278
  %v1280 = vpop.f32.mrb[0].mxu0
  %1281 = vdwg.mxu0
  %v1282 = vmax.f32 %v1156, 0.0
  %v1283 = vmax.f32 %v1159, 0.0
  %v1284 = vmax.f32 %v1164, 0.0
  %v1285 = vmax.f32 %v1167, 0.0
  %v1286 = vmax.f32 %v1172, 0.0
  %v1287 = vmax.f32 %v1175, 0.0
  %v1288 = vmax.f32 %v1180, 0.0
  %v1289 = vmax.f32 %v1183, 0.0
  %v1290 = vmax.f32 %v1188, 0.0
  %v1291 = vmax.f32 %v1191, 0.0
  %v1292 = vmax.f32 %v1196, 0.0
  %v1293 = vmax.f32 %v1199, 0.0
  %v1294 = vmax.f32 %v1204, 0.0
  %v1295 = vmax.f32 %v1207, 0.0
  %v1296 = vmax.f32 %v1212, 0.0
  %v1297 = vmax.f32 %v1215, 0.0
  %v1298 = vmax.f32 %v1220, 0.0
  %v1299 = vmax.f32 %v1223, 0.0
  %v1300 = vmax.f32 %v1228, 0.0
  %v1301 = vmax.f32 %v1231, 0.0
  %v1302 = vmax.f32 %v1236, 0.0
  %v1303 = vmax.f32 %v1239, 0.0
  %v1304 = vmax.f32 %v1244, 0.0
  %v1305 = vmax.f32 %v1247, 0.0
  %v1306 = vmax.f32 %v1252, 0.0
  %v1307 = vmax.f32 %v1255, 0.0
  %v1308 = vmax.f32 %v1260, 0.0
  %v1309 = vmax.f32 %v1263, 0.0
  %v1310 = vmax.f32 %v1268, 0.0
  %v1311 = vmax.f32 %v1271, 0.0
  %v1312 = vmax.f32 %v1276, 0.0
  %v1313 = vmax.f32 %v1279, 0.0
  %v1314 = vpack.c.bf16 %v1283, %v1282
  %v1315 = vpack.c.bf16 %v1285, %v1284
  %v1316 = vpack.c.bf16 %v1287, %v1286
  %v1317 = vpack.c.bf16 %v1289, %v1288
  %v1318 = vpack.c.bf16 %v1291, %v1290
  %v1319 = vpack.c.bf16 %v1293, %v1292
  %v1320 = vpack.c.bf16 %v1295, %v1294
  %v1321 = vpack.c.bf16 %v1297, %v1296
  %v1322 = vpack.c.bf16 %v1299, %v1298
  %v1323 = vpack.c.bf16 %v1301, %v1300
  %v1324 = vpack.c.bf16 %v1303, %v1302
  %v1325 = vpack.c.bf16 %v1305, %v1304
  %v1326 = vpack.c.bf16 %v1307, %v1306
  %v1327 = vpack.c.bf16 %v1309, %v1308
  %v1328 = vpack.c.bf16 %v1311, %v1310
  %v1329 = vpack.c.bf16 %v1313, %v1312
  %v1331 = vsel %vm461, %v1314, 0
  %v1334 = vsel %vm461, %v1315, 0
  %v1337 = vsel %vm461, %v1316, 0
  %v1340 = vsel %vm461, %v1317, 0
  %v1343 = vsel %vm461, %v1318, 0
  %v1346 = vsel %vm461, %v1319, 0
  %v1349 = vsel %vm461, %v1320, 0
  %v1352 = vsel %vm461, %v1321, 0
  %v1355 = vsel %vm461, %v1322, 0
  %v1358 = vsel %vm461, %v1323, 0
  %v1361 = vsel %vm461, %v1324, 0
  %v1364 = vsel %vm461, %v1325, 0
  %v1367 = vsel %vm461, %v1326, 0
  %v1370 = vsel %vm461, %v1327, 0
  %v1373 = vsel %vm461, %v1328, 0
  %v1376 = vsel %vm461, %v1329, 0
  %1378 = vmatprep.subr.bf16.mxu0 0
  %1379 = vmatpush1.bf16.msra.mxu0 %v457
  %1380 = vmatprep.subr.bf16.mxu0 0
  %1381 = vmatpush1.bf16.msra.mxu0 %v458
  %1382 = vmatprep.subr.bf16.mxu0 0
  %1383 = vmatpush1.bf16.msra.mxu0 0
  %1384 = vmatprep.subr.bf16.mxu0 0
  %1385 = vmatpush1.bf16.msra.mxu0 0
  %1386 = vmatprep.subr.bf16.mxu0 0
  %1387 = vmatpush1.bf16.msra.mxu0 0
  %1388 = vmatprep.subr.bf16.mxu0 0
  %1389 = vmatpush1.bf16.msra.mxu0 0
  %1390 = vmatprep.subr.bf16.mxu0 0
  %1391 = vmatpush1.bf16.msra.mxu0 0
  %1392 = vmatprep.subr.bf16.mxu0 0
  %1393 = vmatpush1.bf16.msra.mxu0 0
  %1394 = vmatprep.subr.bf16.mxu0 0
  %1395 = vmatpush1.bf16.msra.mxu0 0
  %1396 = vmatprep.subr.bf16.mxu0 0
  %1397 = vmatpush1.bf16.msra.mxu0 0
  %1398 = vmatprep.subr.bf16.mxu0 0
  %1399 = vmatpush1.bf16.msra.mxu0 0
  %1400 = vmatprep.subr.bf16.mxu0 0
  %1401 = vmatpush1.bf16.msra.mxu0 0
  %1402 = vmatprep.subr.bf16.mxu0 0
  %1403 = vmatpush1.bf16.msra.mxu0 0
  %1404 = vmatprep.subr.bf16.mxu0 0
  %1405 = vmatpush1.bf16.msra.mxu0 0
  %1406 = vmatprep.subr.bf16.mxu0 0
  %1407 = vmatpush1.bf16.msra.mxu0 0
  %1408 = vmatprep.subr.bf16.mxu0 0
  %1409 = vmatpush1.bf16.msra.mxu0 0
  %1410 = vmatprep.mubr.bf16.mxu0 0
  %1411 = vmatmul.mubr.bf16.gmra.mrb[0].mxu0 %v1331
  %v1412 = vpop.f32.mrb[0].mxu0
  %v1413 = vadd.f32 %v447, %v1412
  %v1414 = vpop.f32.mrb[0].mxu0
  %v1415 = vpop.f32.mrb[0].mxu0
  %v1416 = vadd.f32 %v447, %v1415
  %v1417 = vpop.f32.mrb[0].mxu0
  %1418 = vmatprep.mubr.bf16.mxu0 0
  %1419 = vmatmul.mubr.bf16.gmra.mrb[0].mxu0 %v1334
  %v1420 = vpop.f32.mrb[0].mxu0
  %v1421 = vadd.f32 %v447, %v1420
  %v1422 = vpop.f32.mrb[0].mxu0
  %v1423 = vpop.f32.mrb[0].mxu0
  %v1424 = vadd.f32 %v447, %v1423
  %v1425 = vpop.f32.mrb[0].mxu0
  %1426 = vmatprep.mubr.bf16.mxu0 0
  %1427 = vmatmul.mubr.bf16.gmra.mrb[0].mxu0 %v1337
  %v1428 = vpop.f32.mrb[0].mxu0
  %v1429 = vadd.f32 %v447, %v1428
  %v1430 = vpop.f32.mrb[0].mxu0
  %v1431 = vpop.f32.mrb[0].mxu0
  %v1432 = vadd.f32 %v447, %v1431
  %v1433 = vpop.f32.mrb[0].mxu0
  %1434 = vmatprep.mubr.bf16.mxu0 0
  %1435 = vmatmul.mubr.bf16.gmra.mrb[0].mxu0 %v1340
  %v1436 = vpop.f32.mrb[0].mxu0
  %v1437 = vadd.f32 %v447, %v1436
  %v1438 = vpop.f32.mrb[0].mxu0
  %v1439 = vpop.f32.mrb[0].mxu0
  %v1440 = vadd.f32 %v447, %v1439
  %v1441 = vpop.f32.mrb[0].mxu0
  %1442 = vmatprep.mubr.bf16.mxu0 0
  %1443 = vmatmul.mubr.bf16.gmra.mrb[0].mxu0 %v1343
  %v1444 = vpop.f32.mrb[0].mxu0
  %v1445 = vadd.f32 %v447, %v1444
  %v1446 = vpop.f32.mrb[0].mxu0
  %v1447 = vpop.f32.mrb[0].mxu0
  %v1448 = vadd.f32 %v447, %v1447
  %v1449 = vpop.f32.mrb[0].mxu0
  %1450 = vmatprep.mubr.bf16.mxu0 0
  %1451 = vmatmul.mubr.bf16.gmra.mrb[0].mxu0 %v1346
  %v1452 = vpop.f32.mrb[0].mxu0
  %v1453 = vadd.f32 %v447, %v1452
  %v1454 = vpop.f32.mrb[0].mxu0
  %v1455 = vpop.f32.mrb[0].mxu0
  %v1456 = vadd.f32 %v447, %v1455
  %v1457 = vpop.f32.mrb[0].mxu0
  %1458 = vmatprep.mubr.bf16.mxu0 0
  %1459 = vmatmul.mubr.bf16.gmra.mrb[0].mxu0 %v1349
  %v1460 = vpop.f32.mrb[0].mxu0
  %v1461 = vadd.f32 %v447, %v1460
  %v1462 = vpop.f32.mrb[0].mxu0
  %v1463 = vpop.f32.mrb[0].mxu0
  %v1464 = vadd.f32 %v447, %v1463
  %v1465 = vpop.f32.mrb[0].mxu0
  %1466 = vmatprep.mubr.bf16.mxu0 0
  %1467 = vmatmul.mubr.bf16.gmra.mrb[0].mxu0 %v1352
  %v1468 = vpop.f32.mrb[0].mxu0
  %v1469 = vadd.f32 %v447, %v1468
  %v1470 = vpop.f32.mrb[0].mxu0
  %v1471 = vpop.f32.mrb[0].mxu0
  %v1472 = vadd.f32 %v447, %v1471
  %v1473 = vpop.f32.mrb[0].mxu0
  %1474 = vmatprep.mubr.bf16.mxu0 0
  %1475 = vmatmul.mubr.bf16.gmra.mrb[0].mxu0 %v1355
  %v1476 = vpop.f32.mrb[0].mxu0
  %v1477 = vadd.f32 %v447, %v1476
  %v1478 = vpop.f32.mrb[0].mxu0
  %v1479 = vpop.f32.mrb[0].mxu0
  %v1480 = vadd.f32 %v447, %v1479
  %v1481 = vpop.f32.mrb[0].mxu0
  %1482 = vmatprep.mubr.bf16.mxu0 0
  %1483 = vmatmul.mubr.bf16.gmra.mrb[0].mxu0 %v1358
  %v1484 = vpop.f32.mrb[0].mxu0
  %v1485 = vadd.f32 %v447, %v1484
  %v1486 = vpop.f32.mrb[0].mxu0
  %v1487 = vpop.f32.mrb[0].mxu0
  %v1488 = vadd.f32 %v447, %v1487
  %v1489 = vpop.f32.mrb[0].mxu0
  %1490 = vmatprep.mubr.bf16.mxu0 0
  %1491 = vmatmul.mubr.bf16.gmra.mrb[0].mxu0 %v1361
  %v1492 = vpop.f32.mrb[0].mxu0
  %v1493 = vadd.f32 %v447, %v1492
  %v1494 = vpop.f32.mrb[0].mxu0
  %v1495 = vpop.f32.mrb[0].mxu0
  %v1496 = vadd.f32 %v447, %v1495
  %v1497 = vpop.f32.mrb[0].mxu0
  %1498 = vmatprep.mubr.bf16.mxu0 0
  %1499 = vmatmul.mubr.bf16.gmra.mrb[0].mxu0 %v1364
  %v1500 = vpop.f32.mrb[0].mxu0
  %v1501 = vadd.f32 %v447, %v1500
  %v1502 = vpop.f32.mrb[0].mxu0
  %v1503 = vpop.f32.mrb[0].mxu0
  %v1504 = vadd.f32 %v447, %v1503
  %v1505 = vpop.f32.mrb[0].mxu0
  %1506 = vmatprep.mubr.bf16.mxu0 0
  %1507 = vmatmul.mubr.bf16.gmra.mrb[0].mxu0 %v1367
  %v1508 = vpop.f32.mrb[0].mxu0
  %v1509 = vadd.f32 %v447, %v1508
  %v1510 = vpop.f32.mrb[0].mxu0
  %v1511 = vpop.f32.mrb[0].mxu0
  %v1512 = vadd.f32 %v447, %v1511
  %v1513 = vpop.f32.mrb[0].mxu0
  %1514 = vmatprep.mubr.bf16.mxu0 0
  %1515 = vmatmul.mubr.bf16.gmra.mrb[0].mxu0 %v1370
  %v1516 = vpop.f32.mrb[0].mxu0
  %v1517 = vadd.f32 %v447, %v1516
  %v1518 = vpop.f32.mrb[0].mxu0
  %v1519 = vpop.f32.mrb[0].mxu0
  %v1520 = vadd.f32 %v447, %v1519
  %v1521 = vpop.f32.mrb[0].mxu0
  %1522 = vmatprep.mubr.bf16.mxu0 0
  %1523 = vmatmul.mubr.bf16.gmra.mrb[0].mxu0 %v1373
  %v1524 = vpop.f32.mrb[0].mxu0
  %v1525 = vadd.f32 %v447, %v1524
  %v1526 = vpop.f32.mrb[0].mxu0
  %v1527 = vpop.f32.mrb[0].mxu0
  %v1528 = vadd.f32 %v447, %v1527
  %v1529 = vpop.f32.mrb[0].mxu0
  %1530 = vmatprep.mubr.bf16.mxu0 0
  %1531 = vmatmul.mubr.bf16.gmra.mrb[0].mxu0 %v1376
  %v1532 = vpop.f32.mrb[0].mxu0
  %v1533 = vadd.f32 %v447, %v1532
  %v1534 = vpop.f32.mrb[0].mxu0
  %v1535 = vpop.f32.mrb[0].mxu0
  %v1536 = vadd.f32 %v447, %v1535
  %v1537 = vpop.f32.mrb[0].mxu0
  %1538 = vdwg.mxu0
  %v1539 = vmax.f32 %v1413, 0.0
  %v1540 = vmax.f32 %v1416, 0.0
  %v1541 = vmax.f32 %v1421, 0.0
  %v1542 = vmax.f32 %v1424, 0.0
  %v1543 = vmax.f32 %v1429, 0.0
  %v1544 = vmax.f32 %v1432, 0.0
  %v1545 = vmax.f32 %v1437, 0.0
  %v1546 = vmax.f32 %v1440, 0.0
  %v1547 = vmax.f32 %v1445, 0.0
  %v1548 = vmax.f32 %v1448, 0.0
  %v1549 = vmax.f32 %v1453, 0.0
  %v1550 = vmax.f32 %v1456, 0.0
  %v1551 = vmax.f32 %v1461, 0.0
  %v1552 = vmax.f32 %v1464, 0.0
  %v1553 = vmax.f32 %v1469, 0.0
  %v1554 = vmax.f32 %v1472, 0.0
  %v1555 = vmax.f32 %v1477, 0.0
  %v1556 = vmax.f32 %v1480, 0.0
  %v1557 = vmax.f32 %v1485, 0.0
  %v1558 = vmax.f32 %v1488, 0.0
  %v1559 = vmax.f32 %v1493, 0.0
  %v1560 = vmax.f32 %v1496, 0.0
  %v1561 = vmax.f32 %v1501, 0.0
  %v1562 = vmax.f32 %v1504, 0.0
  %v1563 = vmax.f32 %v1509, 0.0
  %v1564 = vmax.f32 %v1512, 0.0
  %v1565 = vmax.f32 %v1517, 0.0
  %v1566 = vmax.f32 %v1520, 0.0
  %v1567 = vmax.f32 %v1525, 0.0
  %v1568 = vmax.f32 %v1528, 0.0
  %v1569 = vmax.f32 %v1533, 0.0
  %v1570 = vmax.f32 %v1536, 0.0
  %1572 = vset.pattern.permute.xlu0 0
  %1573 = vperm.xlu0 %1572, %v961
  %v1574 = vpop.permute.xlu0 %1573
  %1577 = vset.pattern.permute.xlu0 0
  %1578 = vperm.xlu0 %1577, %v962
  %v1579 = vpop.permute.xlu0 %1578
  %1582 = vset.pattern.permute.xlu0 0
  %1583 = vperm.xlu0 %1582, %v963
  %v1584 = vpop.permute.xlu0 %1583
  %1587 = vset.pattern.permute.xlu0 0
  %1588 = vperm.xlu0 %1587, %v964
  %v1589 = vpop.permute.xlu0 %1588
  %1592 = vset.pattern.permute.xlu0 0
  %1593 = vperm.xlu0 %1592, %v965
  %v1594 = vpop.permute.xlu0 %1593
  %1597 = vset.pattern.permute.xlu0 0
  %1598 = vperm.xlu0 %1597, %v966
  %v1599 = vpop.permute.xlu0 %1598
  %1602 = vset.pattern.permute.xlu0 0
  %1603 = vperm.xlu0 %1602, %v967
  %v1604 = vpop.permute.xlu0 %1603
  %1607 = vset.pattern.permute.xlu0 0
  %1608 = vperm.xlu0 %1607, %v968
  %v1609 = vpop.permute.xlu0 %1608
  %1612 = vset.pattern.permute.xlu0 0
  %1613 = vperm.xlu0 %1612, %v969
  %v1614 = vpop.permute.xlu0 %1613
  %1617 = vset.pattern.permute.xlu0 0
  %1618 = vperm.xlu0 %1617, %v970
  %v1619 = vpop.permute.xlu0 %1618
  %1622 = vset.pattern.permute.xlu0 0
  %1623 = vperm.xlu0 %1622, %v971
  %v1624 = vpop.permute.xlu0 %1623
  %1627 = vset.pattern.permute.xlu0 0
  %1628 = vperm.xlu0 %1627, %v972
  %v1629 = vpop.permute.xlu0 %1628
  %1632 = vset.pattern.permute.xlu0 0
  %1633 = vperm.xlu0 %1632, %v973
  %v1634 = vpop.permute.xlu0 %1633
  %1637 = vset.pattern.permute.xlu0 0
  %1638 = vperm.xlu0 %1637, %v974
  %v1639 = vpop.permute.xlu0 %1638
  %1642 = vset.pattern.permute.xlu0 0
  %1643 = vperm.xlu0 %1642, %v975
  %v1644 = vpop.permute.xlu0 %1643
  %1647 = vset.pattern.permute.xlu0 0
  %1648 = vperm.xlu0 %1647, %v976
  %v1649 = vpop.permute.xlu0 %1648
  %1652 = vset.pattern.permute.xlu0 0
  %1653 = vperm.xlu0 %1652, %v977
  %v1654 = vpop.permute.xlu0 %1653
  %1657 = vset.pattern.permute.xlu0 0
  %1658 = vperm.xlu0 %1657, %v978
  %v1659 = vpop.permute.xlu0 %1658
  %1662 = vset.pattern.permute.xlu0 0
  %1663 = vperm.xlu0 %1662, %v979
  %v1664 = vpop.permute.xlu0 %1663
  %1667 = vset.pattern.permute.xlu0 0
  %1668 = vperm.xlu0 %1667, %v980
  %v1669 = vpop.permute.xlu0 %1668
  %1672 = vset.pattern.permute.xlu0 0
  %1673 = vperm.xlu0 %1672, %v981
  %v1674 = vpop.permute.xlu0 %1673
  %1677 = vset.pattern.permute.xlu0 0
  %1678 = vperm.xlu0 %1677, %v982
  %v1679 = vpop.permute.xlu0 %1678
  %1682 = vset.pattern.permute.xlu0 0
  %1683 = vperm.xlu0 %1682, %v983
  %v1684 = vpop.permute.xlu0 %1683
  %1687 = vset.pattern.permute.xlu0 0
  %1688 = vperm.xlu0 %1687, %v984
  %v1689 = vpop.permute.xlu0 %1688
  %1692 = vset.pattern.permute.xlu0 0
  %1693 = vperm.xlu0 %1692, %v985
  %v1694 = vpop.permute.xlu0 %1693
  %1697 = vset.pattern.permute.xlu0 0
  %1698 = vperm.xlu0 %1697, %v986
  %v1699 = vpop.permute.xlu0 %1698
  %1702 = vset.pattern.permute.xlu0 0
  %1703 = vperm.xlu0 %1702, %v987
  %v1704 = vpop.permute.xlu0 %1703
  %1707 = vset.pattern.permute.xlu0 0
  %1708 = vperm.xlu0 %1707, %v988
  %v1709 = vpop.permute.xlu0 %1708
  %1712 = vset.pattern.permute.xlu0 0
  %1713 = vperm.xlu0 %1712, %v989
  %v1714 = vpop.permute.xlu0 %1713
  %1717 = vset.pattern.permute.xlu0 0
  %1718 = vperm.xlu0 %1717, %v990
  %v1719 = vpop.permute.xlu0 %1718
  %1722 = vset.pattern.permute.xlu0 0
  %1723 = vperm.xlu0 %1722, %v991
  %v1724 = vpop.permute.xlu0 %1723
  %1727 = vset.pattern.permute.xlu0 0
  %1728 = vperm.xlu0 %1727, %v992
  %v1729 = vpop.permute.xlu0 %1728
  %v1731 = vmul.f32 %v1539, %v1574
  %v1732 = vmul.f32 %v1540, %v1579
  %v1733 = vmul.f32 %v1541, %v1584
  %v1734 = vmul.f32 %v1542, %v1589
  %v1735 = vmul.f32 %v1543, %v1594
  %v1736 = vmul.f32 %v1544, %v1599
  %v1737 = vmul.f32 %v1545, %v1604
  %v1738 = vmul.f32 %v1546, %v1609
  %v1739 = vmul.f32 %v1547, %v1614
  %v1740 = vmul.f32 %v1548, %v1619
  %v1741 = vmul.f32 %v1549, %v1624
  %v1742 = vmul.f32 %v1550, %v1629
  %v1743 = vmul.f32 %v1551, %v1634
  %v1744 = vmul.f32 %v1552, %v1639
  %v1745 = vmul.f32 %v1553, %v1644
  %v1746 = vmul.f32 %v1554, %v1649
  %v1747 = vmul.f32 %v1555, %v1654
  %v1748 = vmul.f32 %v1556, %v1659
  %v1749 = vmul.f32 %v1557, %v1664
  %v1750 = vmul.f32 %v1558, %v1669
  %v1751 = vmul.f32 %v1559, %v1674
  %v1752 = vmul.f32 %v1560, %v1679
  %v1753 = vmul.f32 %v1561, %v1684
  %v1754 = vmul.f32 %v1562, %v1689
  %v1755 = vmul.f32 %v1563, %v1694
  %v1756 = vmul.f32 %v1564, %v1699
  %v1757 = vmul.f32 %v1565, %v1704
  %v1758 = vmul.f32 %v1566, %v1709
  %v1759 = vmul.f32 %v1567, %v1714
  %v1760 = vmul.f32 %v1568, %v1719
  %v1761 = vmul.f32 %v1569, %v1724
  %v1762 = vmul.f32 %v1570, %v1729
  %v1763 = vmax.f32 %v1731, %v1735
  %v1764 = vmax.f32 %v1763, %v1739
  %v1765 = vmax.f32 %v1764, %v1743
  %v1766 = vmax.f32 %v1765, %v1747
  %v1767 = vmax.f32 %v1766, %v1751
  %v1768 = vmax.f32 %v1767, %v1755
  %v1769 = vmax.f32 %v1768, %v1759
  %v1770 = vmax.f32 %v1732, %v1736
  %v1771 = vmax.f32 %v1770, %v1740
  %v1772 = vmax.f32 %v1771, %v1744
  %v1773 = vmax.f32 %v1772, %v1748
  %v1774 = vmax.f32 %v1773, %v1752
  %v1775 = vmax.f32 %v1774, %v1756
  %v1776 = vmax.f32 %v1775, %v1760
  %v1777 = vmax.f32 %v1733, %v1737
  %v1778 = vmax.f32 %v1777, %v1741
  %v1779 = vmax.f32 %v1778, %v1745
  %v1780 = vmax.f32 %v1779, %v1749
  %v1781 = vmax.f32 %v1780, %v1753
  %v1782 = vmax.f32 %v1781, %v1757
  %v1783 = vmax.f32 %v1782, %v1761
  %v1784 = vmax.f32 %v1734, %v1738
  %v1785 = vmax.f32 %v1784, %v1742
  %v1786 = vmax.f32 %v1785, %v1746
  %v1787 = vmax.f32 %v1786, %v1750
  %v1788 = vmax.f32 %v1787, %v1754
  %v1789 = vmax.f32 %v1788, %v1758
  %v1790 = vmax.f32 %v1789, %v1762
  %v1791 = vmax.f32 %v923, %v1769
  %v1792 = vmax.f32 %v924, %v1776
  %v1793 = vmax.f32 %v925, %v1783
  %v1794 = vmax.f32 %v926, %v1790
  %s1795 = scalar_lea.vmem %s0, 256
  %v1796 = vld [vmem:[%s1795] sm:$0xf]
  %v1797 = vld [vmem:[%s1795 + $0x4] sm:$0xf]
  %v1798 = vld [vmem:[%s1795 + $0x8] sm:$0xf]
  %v1799 = vld [vmem:[%s1795 + $0xc] sm:$0xf]
  %v1800 = vld [vmem:[%s1795 + $0x10] sm:$0xf]
  %v1801 = vld [vmem:[%s1795 + $0x14] sm:$0xf]
  %v1802 = vld [vmem:[%s1795 + $0x18] sm:$0xf]
  %v1803 = vld [vmem:[%s1795 + $0x1c] sm:$0xf]
  %v1804 = vld [vmem:[%s1795 + $0x20] sm:$0xf]
  %v1805 = vld [vmem:[%s1795 + $0x24] sm:$0xf]
  %v1806 = vld [vmem:[%s1795 + $0x28] sm:$0xf]
  %v1807 = vld [vmem:[%s1795 + $0x2c] sm:$0xf]
  %v1808 = vld [vmem:[%s1795 + $0x30] sm:$0xf]
  %v1809 = vld [vmem:[%s1795 + $0x34] sm:$0xf]
  %v1810 = vld [vmem:[%s1795 + $0x38] sm:$0xf]
  %v1811 = vld [vmem:[%s1795 + $0x3c] sm:$0xf]
  %v1812 = vld [vmem:[%s1795 + $0x40] sm:$0xf]
  %v1813 = vld [vmem:[%s1795 + $0x44] sm:$0xf]
  %v1814 = vld [vmem:[%s1795 + $0x48] sm:$0xf]
  %v1815 = vld [vmem:[%s1795 + $0x4c] sm:$0xf]
  %v1816 = vld [vmem:[%s1795 + $0x50] sm:$0xf]
  %v1817 = vld [vmem:[%s1795 + $0x54] sm:$0xf]
  %v1818 = vld [vmem:[%s1795 + $0x58] sm:$0xf]
  %v1819 = vld [vmem:[%s1795 + $0x5c] sm:$0xf]
  %v1820 = vld [vmem:[%s1795 + $0x60] sm:$0xf]
  %v1821 = vld [vmem:[%s1795 + $0x64] sm:$0xf]
  %v1822 = vld [vmem:[%s1795 + $0x68] sm:$0xf]
  %v1823 = vld [vmem:[%s1795 + $0x6c] sm:$0xf]
  %v1824 = vld [vmem:[%s1795 + $0x70] sm:$0xf]
  %v1825 = vld [vmem:[%s1795 + $0x74] sm:$0xf]
  %v1826 = vld [vmem:[%s1795 + $0x78] sm:$0xf]
  %v1827 = vld [vmem:[%s1795 + $0x7c] sm:$0xf]
  %s1828 = scalar_lea.vmem %s1, 512
  %v1829 = vld [vmem:[%s1828] sm:$0xff]
  %v1830 = vld [vmem:[%s1828 + $0x8] sm:$0xff]
  %v1831 = vld [vmem:[%s1828 + $0x10] sm:$0xff]
  %v1832 = vld [vmem:[%s1828 + $0x18] sm:$0xff]
  %v1833 = vld [vmem:[%s1828 + $0x20] sm:$0xff]
  %v1834 = vld [vmem:[%s1828 + $0x28] sm:$0xff]
  %v1835 = vld [vmem:[%s1828 + $0x30] sm:$0xff]
  %v1836 = vld [vmem:[%s1828 + $0x38] sm:$0xff]
  %v1837 = vld [vmem:[%s1828 + $0x40] sm:$0xff]
  %v1838 = vld [vmem:[%s1828 + $0x48] sm:$0xff]
  %v1839 = vld [vmem:[%s1828 + $0x50] sm:$0xff]
  %v1840 = vld [vmem:[%s1828 + $0x58] sm:$0xff]
  %v1841 = vld [vmem:[%s1828 + $0x60] sm:$0xff]
  %v1842 = vld [vmem:[%s1828 + $0x68] sm:$0xff]
  %v1843 = vld [vmem:[%s1828 + $0x70] sm:$0xff]
  %v1844 = vld [vmem:[%s1828 + $0x78] sm:$0xff]
  %v1845 = vld [vmem:[%s1828 + $0x80] sm:$0xff]
  %v1846 = vld [vmem:[%s1828 + $0x88] sm:$0xff]
  %v1847 = vld [vmem:[%s1828 + $0x90] sm:$0xff]
  %v1848 = vld [vmem:[%s1828 + $0x98] sm:$0xff]
  %v1849 = vld [vmem:[%s1828 + $0xa0] sm:$0xff]
  %v1850 = vld [vmem:[%s1828 + $0xa8] sm:$0xff]
  %v1851 = vld [vmem:[%s1828 + $0xb0] sm:$0xff]
  %v1852 = vld [vmem:[%s1828 + $0xb8] sm:$0xff]
  %v1853 = vld [vmem:[%s1828 + $0xc0] sm:$0xff]
  %v1854 = vld [vmem:[%s1828 + $0xc8] sm:$0xff]
  %v1855 = vld [vmem:[%s1828 + $0xd0] sm:$0xff]
  %v1856 = vld [vmem:[%s1828 + $0xd8] sm:$0xff]
  %v1857 = vld [vmem:[%s1828 + $0xe0] sm:$0xff]
  %v1858 = vld [vmem:[%s1828 + $0xe8] sm:$0xff]
  %v1859 = vld [vmem:[%s1828 + $0xf0] sm:$0xff]
  %v1860 = vld [vmem:[%s1828 + $0xf8] sm:$0xff]
  %v1893 = vunpack.c.l.b16 %v1796
  %v1894 = vunpack.c.l.b16 %v1797
  %v1895 = vunpack.c.l.b16 %v1798
  %v1896 = vunpack.c.l.b16 %v1799
  %v1897 = vunpack.c.l.b16 %v1800
  %v1898 = vunpack.c.l.b16 %v1801
  %v1899 = vunpack.c.l.b16 %v1802
  %v1900 = vunpack.c.l.b16 %v1803
  %v1901 = vunpack.c.l.b16 %v1804
  %v1902 = vunpack.c.l.b16 %v1805
  %v1903 = vunpack.c.l.b16 %v1806
  %v1904 = vunpack.c.l.b16 %v1807
  %v1905 = vunpack.c.l.b16 %v1808
  %v1906 = vunpack.c.l.b16 %v1809
  %v1907 = vunpack.c.l.b16 %v1810
  %v1908 = vunpack.c.l.b16 %v1811
  %v1909 = vunpack.c.l.b16 %v1812
  %v1910 = vunpack.c.l.b16 %v1813
  %v1911 = vunpack.c.l.b16 %v1814
  %v1912 = vunpack.c.l.b16 %v1815
  %v1913 = vunpack.c.l.b16 %v1816
  %v1914 = vunpack.c.l.b16 %v1817
  %v1915 = vunpack.c.l.b16 %v1818
  %v1916 = vunpack.c.l.b16 %v1819
  %v1917 = vunpack.c.l.b16 %v1820
  %v1918 = vunpack.c.l.b16 %v1821
  %v1919 = vunpack.c.l.b16 %v1822
  %v1920 = vunpack.c.l.b16 %v1823
  %v1921 = vunpack.c.l.b16 %v1824
  %v1922 = vunpack.c.l.b16 %v1825
  %v1923 = vunpack.c.l.b16 %v1826
  %v1924 = vunpack.c.l.b16 %v1827
  %v1925 = vpack.c.b16 %v1894, %v1893
  %v1926 = vpack.c.b16 %v1896, %v1895
  %v1927 = vpack.c.b16 %v1898, %v1897
  %v1928 = vpack.c.b16 %v1900, %v1899
  %v1929 = vpack.c.b16 %v1902, %v1901
  %v1930 = vpack.c.b16 %v1904, %v1903
  %v1931 = vpack.c.b16 %v1906, %v1905
  %v1932 = vpack.c.b16 %v1908, %v1907
  %v1933 = vpack.c.b16 %v1910, %v1909
  %v1934 = vpack.c.b16 %v1912, %v1911
  %v1935 = vpack.c.b16 %v1914, %v1913
  %v1936 = vpack.c.b16 %v1916, %v1915
  %v1937 = vpack.c.b16 %v1918, %v1917
  %v1938 = vpack.c.b16 %v1920, %v1919
  %v1939 = vpack.c.b16 %v1922, %v1921
  %v1940 = vpack.c.b16 %v1924, %v1923
  %v1942 = vsel %vm181, %v1925, 0
  %v1945 = vsel %vm181, %v1926, 0
  %v1948 = vsel %vm181, %v1927, 0
  %v1951 = vsel %vm181, %v1928, 0
  %v1954 = vsel %vm181, %v1929, 0
  %v1957 = vsel %vm181, %v1930, 0
  %v1960 = vsel %vm181, %v1931, 0
  %v1963 = vsel %vm181, %v1932, 0
  %v1966 = vsel %vm181, %v1933, 0
  %v1969 = vsel %vm181, %v1934, 0
  %v1972 = vsel %vm181, %v1935, 0
  %v1975 = vsel %vm181, %v1936, 0
  %v1978 = vsel %vm181, %v1937, 0
  %v1981 = vsel %vm181, %v1938, 0
  %v1984 = vsel %vm181, %v1939, 0
  %v1987 = vsel %vm181, %v1940, 0
  %1989 = vmatprep.subr.bf16.mxu0 0
  %1990 = vmatpush1.bf16.msra.mxu0 %v232
  %1991 = vmatprep.subr.bf16.mxu0 0
  %1992 = vmatpush1.bf16.msra.mxu0 0
  %1993 = vmatprep.subr.bf16.mxu0 0
  %1994 = vmatpush1.bf16.msra.mxu0 0
  %1995 = vmatprep.subr.bf16.mxu0 0
  %1996 = vmatpush1.bf16.msra.mxu0 0
  %1997 = vmatprep.subr.bf16.mxu0 0
  %1998 = vmatpush1.bf16.msra.mxu0 0
  %1999 = vmatprep.subr.bf16.mxu0 0
  %2000 = vmatpush1.bf16.msra.mxu0 0
  %2001 = vmatprep.subr.bf16.mxu0 0
  %2002 = vmatpush1.bf16.msra.mxu0 0
  %2003 = vmatprep.subr.bf16.mxu0 0
  %2004 = vmatpush1.bf16.msra.mxu0 0
  %2005 = vmatprep.subr.bf16.mxu0 0
  %2006 = vmatpush1.bf16.msra.mxu0 0
  %2007 = vmatprep.subr.bf16.mxu0 0
  %2008 = vmatpush1.bf16.msra.mxu0 0
  %2009 = vmatprep.subr.bf16.mxu0 0
  %2010 = vmatpush1.bf16.msra.mxu0 0
  %2011 = vmatprep.subr.bf16.mxu0 0
  %2012 = vmatpush1.bf16.msra.mxu0 0
  %2013 = vmatprep.subr.bf16.mxu0 0
  %2014 = vmatpush1.bf16.msra.mxu0 0
  %2015 = vmatprep.subr.bf16.mxu0 0
  %2016 = vmatpush1.bf16.msra.mxu0 0
  %2017 = vmatprep.subr.bf16.mxu0 0
  %2018 = vmatpush1.bf16.msra.mxu0 0
  %2019 = vmatprep.subr.bf16.mxu0 0
  %2020 = vmatpush1.bf16.msra.mxu0 0
  %2021 = vmatprep.mubr.bf16.mxu0 0
  %2022 = vmatmul.mubr.bf16.gmra.mrb[0].mxu0 %v1942
  %v2023 = vpop.f32.mrb[0].mxu0
  %v2024 = vadd.f32 %v99, %v2023
  %v2025 = vpop.f32.mrb[0].mxu0
  %v2026 = vpop.f32.mrb[0].mxu0
  %v2027 = vadd.f32 %v99, %v2026
  %v2028 = vpop.f32.mrb[0].mxu0
  %2029 = vmatprep.mubr.bf16.mxu0 0
  %2030 = vmatmul.mubr.bf16.gmra.mrb[0].mxu0 %v1945
  %v2031 = vpop.f32.mrb[0].mxu0
  %v2032 = vadd.f32 %v99, %v2031
  %v2033 = vpop.f32.mrb[0].mxu0
  %v2034 = vpop.f32.mrb[0].mxu0
  %v2035 = vadd.f32 %v99, %v2034
  %v2036 = vpop.f32.mrb[0].mxu0
  %2037 = vmatprep.mubr.bf16.mxu0 0
  %2038 = vmatmul.mubr.bf16.gmra.mrb[0].mxu0 %v1948
  %v2039 = vpop.f32.mrb[0].mxu0
  %v2040 = vadd.f32 %v99, %v2039
  %v2041 = vpop.f32.mrb[0].mxu0
  %v2042 = vpop.f32.mrb[0].mxu0
  %v2043 = vadd.f32 %v99, %v2042
  %v2044 = vpop.f32.mrb[0].mxu0
  %2045 = vmatprep.mubr.bf16.mxu0 0
  %2046 = vmatmul.mubr.bf16.gmra.mrb[0].mxu0 %v1951
  %v2047 = vpop.f32.mrb[0].mxu0
  %v2048 = vadd.f32 %v99, %v2047
  %v2049 = vpop.f32.mrb[0].mxu0
  %v2050 = vpop.f32.mrb[0].mxu0
  %v2051 = vadd.f32 %v99, %v2050
  %v2052 = vpop.f32.mrb[0].mxu0
  %2053 = vmatprep.mubr.bf16.mxu0 0
  %2054 = vmatmul.mubr.bf16.gmra.mrb[0].mxu0 %v1954
  %v2055 = vpop.f32.mrb[0].mxu0
  %v2056 = vadd.f32 %v99, %v2055
  %v2057 = vpop.f32.mrb[0].mxu0
  %v2058 = vpop.f32.mrb[0].mxu0
  %v2059 = vadd.f32 %v99, %v2058
  %v2060 = vpop.f32.mrb[0].mxu0
  %2061 = vmatprep.mubr.bf16.mxu0 0
  %2062 = vmatmul.mubr.bf16.gmra.mrb[0].mxu0 %v1957
  %v2063 = vpop.f32.mrb[0].mxu0
  %v2064 = vadd.f32 %v99, %v2063
  %v2065 = vpop.f32.mrb[0].mxu0
  %v2066 = vpop.f32.mrb[0].mxu0
  %v2067 = vadd.f32 %v99, %v2066
  %v2068 = vpop.f32.mrb[0].mxu0
  %2069 = vmatprep.mubr.bf16.mxu0 0
  %2070 = vmatmul.mubr.bf16.gmra.mrb[0].mxu0 %v1960
  %v2071 = vpop.f32.mrb[0].mxu0
  %v2072 = vadd.f32 %v99, %v2071
  %v2073 = vpop.f32.mrb[0].mxu0
  %v2074 = vpop.f32.mrb[0].mxu0
  %v2075 = vadd.f32 %v99, %v2074
  %v2076 = vpop.f32.mrb[0].mxu0
  %2077 = vmatprep.mubr.bf16.mxu0 0
  %2078 = vmatmul.mubr.bf16.gmra.mrb[0].mxu0 %v1963
  %v2079 = vpop.f32.mrb[0].mxu0
  %v2080 = vadd.f32 %v99, %v2079
  %v2081 = vpop.f32.mrb[0].mxu0
  %v2082 = vpop.f32.mrb[0].mxu0
  %v2083 = vadd.f32 %v99, %v2082
  %v2084 = vpop.f32.mrb[0].mxu0
  %2085 = vmatprep.mubr.bf16.mxu0 0
  %2086 = vmatmul.mubr.bf16.gmra.mrb[0].mxu0 %v1966
  %v2087 = vpop.f32.mrb[0].mxu0
  %v2088 = vadd.f32 %v99, %v2087
  %v2089 = vpop.f32.mrb[0].mxu0
  %v2090 = vpop.f32.mrb[0].mxu0
  %v2091 = vadd.f32 %v99, %v2090
  %v2092 = vpop.f32.mrb[0].mxu0
  %2093 = vmatprep.mubr.bf16.mxu0 0
  %2094 = vmatmul.mubr.bf16.gmra.mrb[0].mxu0 %v1969
  %v2095 = vpop.f32.mrb[0].mxu0
  %v2096 = vadd.f32 %v99, %v2095
  %v2097 = vpop.f32.mrb[0].mxu0
  %v2098 = vpop.f32.mrb[0].mxu0
  %v2099 = vadd.f32 %v99, %v2098
  %v2100 = vpop.f32.mrb[0].mxu0
  %2101 = vmatprep.mubr.bf16.mxu0 0
  %2102 = vmatmul.mubr.bf16.gmra.mrb[0].mxu0 %v1972
  %v2103 = vpop.f32.mrb[0].mxu0
  %v2104 = vadd.f32 %v99, %v2103
  %v2105 = vpop.f32.mrb[0].mxu0
  %v2106 = vpop.f32.mrb[0].mxu0
  %v2107 = vadd.f32 %v99, %v2106
  %v2108 = vpop.f32.mrb[0].mxu0
  %2109 = vmatprep.mubr.bf16.mxu0 0
  %2110 = vmatmul.mubr.bf16.gmra.mrb[0].mxu0 %v1975
  %v2111 = vpop.f32.mrb[0].mxu0
  %v2112 = vadd.f32 %v99, %v2111
  %v2113 = vpop.f32.mrb[0].mxu0
  %v2114 = vpop.f32.mrb[0].mxu0
  %v2115 = vadd.f32 %v99, %v2114
  %v2116 = vpop.f32.mrb[0].mxu0
  %2117 = vmatprep.mubr.bf16.mxu0 0
  %2118 = vmatmul.mubr.bf16.gmra.mrb[0].mxu0 %v1978
  %v2119 = vpop.f32.mrb[0].mxu0
  %v2120 = vadd.f32 %v99, %v2119
  %v2121 = vpop.f32.mrb[0].mxu0
  %v2122 = vpop.f32.mrb[0].mxu0
  %v2123 = vadd.f32 %v99, %v2122
  %v2124 = vpop.f32.mrb[0].mxu0
  %2125 = vmatprep.mubr.bf16.mxu0 0
  %2126 = vmatmul.mubr.bf16.gmra.mrb[0].mxu0 %v1981
  %v2127 = vpop.f32.mrb[0].mxu0
  %v2128 = vadd.f32 %v99, %v2127
  %v2129 = vpop.f32.mrb[0].mxu0
  %v2130 = vpop.f32.mrb[0].mxu0
  %v2131 = vadd.f32 %v99, %v2130
  %v2132 = vpop.f32.mrb[0].mxu0
  %2133 = vmatprep.mubr.bf16.mxu0 0
  %2134 = vmatmul.mubr.bf16.gmra.mrb[0].mxu0 %v1984
  %v2135 = vpop.f32.mrb[0].mxu0
  %v2136 = vadd.f32 %v99, %v2135
  %v2137 = vpop.f32.mrb[0].mxu0
  %v2138 = vpop.f32.mrb[0].mxu0
  %v2139 = vadd.f32 %v99, %v2138
  %v2140 = vpop.f32.mrb[0].mxu0
  %2141 = vmatprep.mubr.bf16.mxu0 0
  %2142 = vmatmul.mubr.bf16.gmra.mrb[0].mxu0 %v1987
  %v2143 = vpop.f32.mrb[0].mxu0
  %v2144 = vadd.f32 %v99, %v2143
  %v2145 = vpop.f32.mrb[0].mxu0
  %v2146 = vpop.f32.mrb[0].mxu0
  %v2147 = vadd.f32 %v99, %v2146
  %v2148 = vpop.f32.mrb[0].mxu0
  %2149 = vdwg.mxu0
  %v2150 = vmax.f32 %v2024, 0.0
  %v2151 = vmax.f32 %v2027, 0.0
  %v2152 = vmax.f32 %v2032, 0.0
  %v2153 = vmax.f32 %v2035, 0.0
  %v2154 = vmax.f32 %v2040, 0.0
  %v2155 = vmax.f32 %v2043, 0.0
  %v2156 = vmax.f32 %v2048, 0.0
  %v2157 = vmax.f32 %v2051, 0.0
  %v2158 = vmax.f32 %v2056, 0.0
  %v2159 = vmax.f32 %v2059, 0.0
  %v2160 = vmax.f32 %v2064, 0.0
  %v2161 = vmax.f32 %v2067, 0.0
  %v2162 = vmax.f32 %v2072, 0.0
  %v2163 = vmax.f32 %v2075, 0.0
  %v2164 = vmax.f32 %v2080, 0.0
  %v2165 = vmax.f32 %v2083, 0.0
  %v2166 = vmax.f32 %v2088, 0.0
  %v2167 = vmax.f32 %v2091, 0.0
  %v2168 = vmax.f32 %v2096, 0.0
  %v2169 = vmax.f32 %v2099, 0.0
  %v2170 = vmax.f32 %v2104, 0.0
  %v2171 = vmax.f32 %v2107, 0.0
  %v2172 = vmax.f32 %v2112, 0.0
  %v2173 = vmax.f32 %v2115, 0.0
  %v2174 = vmax.f32 %v2120, 0.0
  %v2175 = vmax.f32 %v2123, 0.0
  %v2176 = vmax.f32 %v2128, 0.0
  %v2177 = vmax.f32 %v2131, 0.0
  %v2178 = vmax.f32 %v2136, 0.0
  %v2179 = vmax.f32 %v2139, 0.0
  %v2180 = vmax.f32 %v2144, 0.0
  %v2181 = vmax.f32 %v2147, 0.0
  %v2182 = vpack.c.bf16 %v2151, %v2150
  %v2183 = vpack.c.bf16 %v2153, %v2152
  %v2184 = vpack.c.bf16 %v2155, %v2154
  %v2185 = vpack.c.bf16 %v2157, %v2156
  %v2186 = vpack.c.bf16 %v2159, %v2158
  %v2187 = vpack.c.bf16 %v2161, %v2160
  %v2188 = vpack.c.bf16 %v2163, %v2162
  %v2189 = vpack.c.bf16 %v2165, %v2164
  %v2190 = vpack.c.bf16 %v2167, %v2166
  %v2191 = vpack.c.bf16 %v2169, %v2168
  %v2192 = vpack.c.bf16 %v2171, %v2170
  %v2193 = vpack.c.bf16 %v2173, %v2172
  %v2194 = vpack.c.bf16 %v2175, %v2174
  %v2195 = vpack.c.bf16 %v2177, %v2176
  %v2196 = vpack.c.bf16 %v2179, %v2178
  %v2197 = vpack.c.bf16 %v2181, %v2180
  %v2199 = vsel %vm461, %v2182, 0
  %v2202 = vsel %vm461, %v2183, 0
  %v2205 = vsel %vm461, %v2184, 0
  %v2208 = vsel %vm461, %v2185, 0
  %v2211 = vsel %vm461, %v2186, 0
  %v2214 = vsel %vm461, %v2187, 0
  %v2217 = vsel %vm461, %v2188, 0
  %v2220 = vsel %vm461, %v2189, 0
  %v2223 = vsel %vm461, %v2190, 0
  %v2226 = vsel %vm461, %v2191, 0
  %v2229 = vsel %vm461, %v2192, 0
  %v2232 = vsel %vm461, %v2193, 0
  %v2235 = vsel %vm461, %v2194, 0
  %v2238 = vsel %vm461, %v2195, 0
  %v2241 = vsel %vm461, %v2196, 0
  %v2244 = vsel %vm461, %v2197, 0
  %2246 = vmatprep.subr.bf16.mxu0 0
  %2247 = vmatpush1.bf16.msra.mxu0 %v457
  %2248 = vmatprep.subr.bf16.mxu0 0
  %2249 = vmatpush1.bf16.msra.mxu0 %v458
  %2250 = vmatprep.subr.bf16.mxu0 0
  %2251 = vmatpush1.bf16.msra.mxu0 0
  %2252 = vmatprep.subr.bf16.mxu0 0
  %2253 = vmatpush1.bf16.msra.mxu0 0
  %2254 = vmatprep.subr.bf16.mxu0 0
  %2255 = vmatpush1.bf16.msra.mxu0 0
  %2256 = vmatprep.subr.bf16.mxu0 0
  %2257 = vmatpush1.bf16.msra.mxu0 0
  %2258 = vmatprep.subr.bf16.mxu0 0
  %2259 = vmatpush1.bf16.msra.mxu0 0
  %2260 = vmatprep.subr.bf16.mxu0 0
  %2261 = vmatpush1.bf16.msra.mxu0 0
  %2262 = vmatprep.subr.bf16.mxu0 0
  %2263 = vmatpush1.bf16.msra.mxu0 0
  %2264 = vmatprep.subr.bf16.mxu0 0
  %2265 = vmatpush1.bf16.msra.mxu0 0
  %2266 = vmatprep.subr.bf16.mxu0 0
  %2267 = vmatpush1.bf16.msra.mxu0 0
  %2268 = vmatprep.subr.bf16.mxu0 0
  %2269 = vmatpush1.bf16.msra.mxu0 0
  %2270 = vmatprep.subr.bf16.mxu0 0
  %2271 = vmatpush1.bf16.msra.mxu0 0
  %2272 = vmatprep.subr.bf16.mxu0 0
  %2273 = vmatpush1.bf16.msra.mxu0 0
  %2274 = vmatprep.subr.bf16.mxu0 0
  %2275 = vmatpush1.bf16.msra.mxu0 0
  %2276 = vmatprep.subr.bf16.mxu0 0
  %2277 = vmatpush1.bf16.msra.mxu0 0
  %2278 = vmatprep.mubr.bf16.mxu0 0
  %2279 = vmatmul.mubr.bf16.gmra.mrb[0].mxu0 %v2199
  %v2280 = vpop.f32.mrb[0].mxu0
  %v2281 = vadd.f32 %v447, %v2280
  %v2282 = vpop.f32.mrb[0].mxu0
  %v2283 = vpop.f32.mrb[0].mxu0
  %v2284 = vadd.f32 %v447, %v2283
  %v2285 = vpop.f32.mrb[0].mxu0
  %2286 = vmatprep.mubr.bf16.mxu0 0
  %2287 = vmatmul.mubr.bf16.gmra.mrb[0].mxu0 %v2202
  %v2288 = vpop.f32.mrb[0].mxu0
  %v2289 = vadd.f32 %v447, %v2288
  %v2290 = vpop.f32.mrb[0].mxu0
  %v2291 = vpop.f32.mrb[0].mxu0
  %v2292 = vadd.f32 %v447, %v2291
  %v2293 = vpop.f32.mrb[0].mxu0
  %2294 = vmatprep.mubr.bf16.mxu0 0
  %2295 = vmatmul.mubr.bf16.gmra.mrb[0].mxu0 %v2205
  %v2296 = vpop.f32.mrb[0].mxu0
  %v2297 = vadd.f32 %v447, %v2296
  %v2298 = vpop.f32.mrb[0].mxu0
  %v2299 = vpop.f32.mrb[0].mxu0
  %v2300 = vadd.f32 %v447, %v2299
  %v2301 = vpop.f32.mrb[0].mxu0
  %2302 = vmatprep.mubr.bf16.mxu0 0
  %2303 = vmatmul.mubr.bf16.gmra.mrb[0].mxu0 %v2208
  %v2304 = vpop.f32.mrb[0].mxu0
  %v2305 = vadd.f32 %v447, %v2304
  %v2306 = vpop.f32.mrb[0].mxu0
  %v2307 = vpop.f32.mrb[0].mxu0
  %v2308 = vadd.f32 %v447, %v2307
  %v2309 = vpop.f32.mrb[0].mxu0
  %2310 = vmatprep.mubr.bf16.mxu0 0
  %2311 = vmatmul.mubr.bf16.gmra.mrb[0].mxu0 %v2211
  %v2312 = vpop.f32.mrb[0].mxu0
  %v2313 = vadd.f32 %v447, %v2312
  %v2314 = vpop.f32.mrb[0].mxu0
  %v2315 = vpop.f32.mrb[0].mxu0
  %v2316 = vadd.f32 %v447, %v2315
  %v2317 = vpop.f32.mrb[0].mxu0
  %2318 = vmatprep.mubr.bf16.mxu0 0
  %2319 = vmatmul.mubr.bf16.gmra.mrb[0].mxu0 %v2214
  %v2320 = vpop.f32.mrb[0].mxu0
  %v2321 = vadd.f32 %v447, %v2320
  %v2322 = vpop.f32.mrb[0].mxu0
  %v2323 = vpop.f32.mrb[0].mxu0
  %v2324 = vadd.f32 %v447, %v2323
  %v2325 = vpop.f32.mrb[0].mxu0
  %2326 = vmatprep.mubr.bf16.mxu0 0
  %2327 = vmatmul.mubr.bf16.gmra.mrb[0].mxu0 %v2217
  %v2328 = vpop.f32.mrb[0].mxu0
  %v2329 = vadd.f32 %v447, %v2328
  %v2330 = vpop.f32.mrb[0].mxu0
  %v2331 = vpop.f32.mrb[0].mxu0
  %v2332 = vadd.f32 %v447, %v2331
  %v2333 = vpop.f32.mrb[0].mxu0
  %2334 = vmatprep.mubr.bf16.mxu0 0
  %2335 = vmatmul.mubr.bf16.gmra.mrb[0].mxu0 %v2220
  %v2336 = vpop.f32.mrb[0].mxu0
  %v2337 = vadd.f32 %v447, %v2336
  %v2338 = vpop.f32.mrb[0].mxu0
  %v2339 = vpop.f32.mrb[0].mxu0
  %v2340 = vadd.f32 %v447, %v2339
  %v2341 = vpop.f32.mrb[0].mxu0
  %2342 = vmatprep.mubr.bf16.mxu0 0
  %2343 = vmatmul.mubr.bf16.gmra.mrb[0].mxu0 %v2223
  %v2344 = vpop.f32.mrb[0].mxu0
  %v2345 = vadd.f32 %v447, %v2344
  %v2346 = vpop.f32.mrb[0].mxu0
  %v2347 = vpop.f32.mrb[0].mxu0
  %v2348 = vadd.f32 %v447, %v2347
  %v2349 = vpop.f32.mrb[0].mxu0
  %2350 = vmatprep.mubr.bf16.mxu0 0
  %2351 = vmatmul.mubr.bf16.gmra.mrb[0].mxu0 %v2226
  %v2352 = vpop.f32.mrb[0].mxu0
  %v2353 = vadd.f32 %v447, %v2352
  %v2354 = vpop.f32.mrb[0].mxu0
  %v2355 = vpop.f32.mrb[0].mxu0
  %v2356 = vadd.f32 %v447, %v2355
  %v2357 = vpop.f32.mrb[0].mxu0
  %2358 = vmatprep.mubr.bf16.mxu0 0
  %2359 = vmatmul.mubr.bf16.gmra.mrb[0].mxu0 %v2229
  %v2360 = vpop.f32.mrb[0].mxu0
  %v2361 = vadd.f32 %v447, %v2360
  %v2362 = vpop.f32.mrb[0].mxu0
  %v2363 = vpop.f32.mrb[0].mxu0
  %v2364 = vadd.f32 %v447, %v2363
  %v2365 = vpop.f32.mrb[0].mxu0
  %2366 = vmatprep.mubr.bf16.mxu0 0
  %2367 = vmatmul.mubr.bf16.gmra.mrb[0].mxu0 %v2232
  %v2368 = vpop.f32.mrb[0].mxu0
  %v2369 = vadd.f32 %v447, %v2368
  %v2370 = vpop.f32.mrb[0].mxu0
  %v2371 = vpop.f32.mrb[0].mxu0
  %v2372 = vadd.f32 %v447, %v2371
  %v2373 = vpop.f32.mrb[0].mxu0
  %2374 = vmatprep.mubr.bf16.mxu0 0
  %2375 = vmatmul.mubr.bf16.gmra.mrb[0].mxu0 %v2235
  %v2376 = vpop.f32.mrb[0].mxu0
  %v2377 = vadd.f32 %v447, %v2376
  %v2378 = vpop.f32.mrb[0].mxu0
  %v2379 = vpop.f32.mrb[0].mxu0
  %v2380 = vadd.f32 %v447, %v2379
  %v2381 = vpop.f32.mrb[0].mxu0
  %2382 = vmatprep.mubr.bf16.mxu0 0
  %2383 = vmatmul.mubr.bf16.gmra.mrb[0].mxu0 %v2238
  %v2384 = vpop.f32.mrb[0].mxu0
  %v2385 = vadd.f32 %v447, %v2384
  %v2386 = vpop.f32.mrb[0].mxu0
  %v2387 = vpop.f32.mrb[0].mxu0
  %v2388 = vadd.f32 %v447, %v2387
  %v2389 = vpop.f32.mrb[0].mxu0
  %2390 = vmatprep.mubr.bf16.mxu0 0
  %2391 = vmatmul.mubr.bf16.gmra.mrb[0].mxu0 %v2241
  %v2392 = vpop.f32.mrb[0].mxu0
  %v2393 = vadd.f32 %v447, %v2392
  %v2394 = vpop.f32.mrb[0].mxu0
  %v2395 = vpop.f32.mrb[0].mxu0
  %v2396 = vadd.f32 %v447, %v2395
  %v2397 = vpop.f32.mrb[0].mxu0
  %2398 = vmatprep.mubr.bf16.mxu0 0
  %2399 = vmatmul.mubr.bf16.gmra.mrb[0].mxu0 %v2244
  %v2400 = vpop.f32.mrb[0].mxu0
  %v2401 = vadd.f32 %v447, %v2400
  %v2402 = vpop.f32.mrb[0].mxu0
  %v2403 = vpop.f32.mrb[0].mxu0
  %v2404 = vadd.f32 %v447, %v2403
  %v2405 = vpop.f32.mrb[0].mxu0
  %2406 = vdwg.mxu0
  %v2407 = vmax.f32 %v2281, 0.0
  %v2408 = vmax.f32 %v2284, 0.0
  %v2409 = vmax.f32 %v2289, 0.0
  %v2410 = vmax.f32 %v2292, 0.0
  %v2411 = vmax.f32 %v2297, 0.0
  %v2412 = vmax.f32 %v2300, 0.0
  %v2413 = vmax.f32 %v2305, 0.0
  %v2414 = vmax.f32 %v2308, 0.0
  %v2415 = vmax.f32 %v2313, 0.0
  %v2416 = vmax.f32 %v2316, 0.0
  %v2417 = vmax.f32 %v2321, 0.0
  %v2418 = vmax.f32 %v2324, 0.0
  %v2419 = vmax.f32 %v2329, 0.0
  %v2420 = vmax.f32 %v2332, 0.0
  %v2421 = vmax.f32 %v2337, 0.0
  %v2422 = vmax.f32 %v2340, 0.0
  %v2423 = vmax.f32 %v2345, 0.0
  %v2424 = vmax.f32 %v2348, 0.0
  %v2425 = vmax.f32 %v2353, 0.0
  %v2426 = vmax.f32 %v2356, 0.0
  %v2427 = vmax.f32 %v2361, 0.0
  %v2428 = vmax.f32 %v2364, 0.0
  %v2429 = vmax.f32 %v2369, 0.0
  %v2430 = vmax.f32 %v2372, 0.0
  %v2431 = vmax.f32 %v2377, 0.0
  %v2432 = vmax.f32 %v2380, 0.0
  %v2433 = vmax.f32 %v2385, 0.0
  %v2434 = vmax.f32 %v2388, 0.0
  %v2435 = vmax.f32 %v2393, 0.0
  %v2436 = vmax.f32 %v2396, 0.0
  %v2437 = vmax.f32 %v2401, 0.0
  %v2438 = vmax.f32 %v2404, 0.0
  %2440 = vset.pattern.permute.xlu0 0
  %2441 = vperm.xlu0 %2440, %v1829
  %v2442 = vpop.permute.xlu0 %2441
  %2445 = vset.pattern.permute.xlu0 0
  %2446 = vperm.xlu0 %2445, %v1830
  %v2447 = vpop.permute.xlu0 %2446
  %2450 = vset.pattern.permute.xlu0 0
  %2451 = vperm.xlu0 %2450, %v1831
  %v2452 = vpop.permute.xlu0 %2451
  %2455 = vset.pattern.permute.xlu0 0
  %2456 = vperm.xlu0 %2455, %v1832
  %v2457 = vpop.permute.xlu0 %2456
  %2460 = vset.pattern.permute.xlu0 0
  %2461 = vperm.xlu0 %2460, %v1833
  %v2462 = vpop.permute.xlu0 %2461
  %2465 = vset.pattern.permute.xlu0 0
  %2466 = vperm.xlu0 %2465, %v1834
  %v2467 = vpop.permute.xlu0 %2466
  %2470 = vset.pattern.permute.xlu0 0
  %2471 = vperm.xlu0 %2470, %v1835
  %v2472 = vpop.permute.xlu0 %2471
  %2475 = vset.pattern.permute.xlu0 0
  %2476 = vperm.xlu0 %2475, %v1836
  %v2477 = vpop.permute.xlu0 %2476
  %2480 = vset.pattern.permute.xlu0 0
  %2481 = vperm.xlu0 %2480, %v1837
  %v2482 = vpop.permute.xlu0 %2481
  %2485 = vset.pattern.permute.xlu0 0
  %2486 = vperm.xlu0 %2485, %v1838
  %v2487 = vpop.permute.xlu0 %2486
  %2490 = vset.pattern.permute.xlu0 0
  %2491 = vperm.xlu0 %2490, %v1839
  %v2492 = vpop.permute.xlu0 %2491
  %2495 = vset.pattern.permute.xlu0 0
  %2496 = vperm.xlu0 %2495, %v1840
  %v2497 = vpop.permute.xlu0 %2496
  %2500 = vset.pattern.permute.xlu0 0
  %2501 = vperm.xlu0 %2500, %v1841
  %v2502 = vpop.permute.xlu0 %2501
  %2505 = vset.pattern.permute.xlu0 0
  %2506 = vperm.xlu0 %2505, %v1842
  %v2507 = vpop.permute.xlu0 %2506
  %2510 = vset.pattern.permute.xlu0 0
  %2511 = vperm.xlu0 %2510, %v1843
  %v2512 = vpop.permute.xlu0 %2511
  %2515 = vset.pattern.permute.xlu0 0
  %2516 = vperm.xlu0 %2515, %v1844
  %v2517 = vpop.permute.xlu0 %2516
  %2520 = vset.pattern.permute.xlu0 0
  %2521 = vperm.xlu0 %2520, %v1845
  %v2522 = vpop.permute.xlu0 %2521
  %2525 = vset.pattern.permute.xlu0 0
  %2526 = vperm.xlu0 %2525, %v1846
  %v2527 = vpop.permute.xlu0 %2526
  %2530 = vset.pattern.permute.xlu0 0
  %2531 = vperm.xlu0 %2530, %v1847
  %v2532 = vpop.permute.xlu0 %2531
  %2535 = vset.pattern.permute.xlu0 0
  %2536 = vperm.xlu0 %2535, %v1848
  %v2537 = vpop.permute.xlu0 %2536
  %2540 = vset.pattern.permute.xlu0 0
  %2541 = vperm.xlu0 %2540, %v1849
  %v2542 = vpop.permute.xlu0 %2541
  %2545 = vset.pattern.permute.xlu0 0
  %2546 = vperm.xlu0 %2545, %v1850
  %v2547 = vpop.permute.xlu0 %2546
  %2550 = vset.pattern.permute.xlu0 0
  %2551 = vperm.xlu0 %2550, %v1851
  %v2552 = vpop.permute.xlu0 %2551
  %2555 = vset.pattern.permute.xlu0 0
  %2556 = vperm.xlu0 %2555, %v1852
  %v2557 = vpop.permute.xlu0 %2556
  %2560 = vset.pattern.permute.xlu0 0
  %2561 = vperm.xlu0 %2560, %v1853
  %v2562 = vpop.permute.xlu0 %2561
  %2565 = vset.pattern.permute.xlu0 0
  %2566 = vperm.xlu0 %2565, %v1854
  %v2567 = vpop.permute.xlu0 %2566
  %2570 = vset.pattern.permute.xlu0 0
  %2571 = vperm.xlu0 %2570, %v1855
  %v2572 = vpop.permute.xlu0 %2571
  %2575 = vset.pattern.permute.xlu0 0
  %2576 = vperm.xlu0 %2575, %v1856
  %v2577 = vpop.permute.xlu0 %2576
  %2580 = vset.pattern.permute.xlu0 0
  %2581 = vperm.xlu0 %2580, %v1857
  %v2582 = vpop.permute.xlu0 %2581
  %2585 = vset.pattern.permute.xlu0 0
  %2586 = vperm.xlu0 %2585, %v1858
  %v2587 = vpop.permute.xlu0 %2586
  %2590 = vset.pattern.permute.xlu0 0
  %2591 = vperm.xlu0 %2590, %v1859
  %v2592 = vpop.permute.xlu0 %2591
  %2595 = vset.pattern.permute.xlu0 0
  %2596 = vperm.xlu0 %2595, %v1860
  %v2597 = vpop.permute.xlu0 %2596
  %v2599 = vmul.f32 %v2407, %v2442
  %v2600 = vmul.f32 %v2408, %v2447
  %v2601 = vmul.f32 %v2409, %v2452
  %v2602 = vmul.f32 %v2410, %v2457
  %v2603 = vmul.f32 %v2411, %v2462
  %v2604 = vmul.f32 %v2412, %v2467
  %v2605 = vmul.f32 %v2413, %v2472
  %v2606 = vmul.f32 %v2414, %v2477
  %v2607 = vmul.f32 %v2415, %v2482
  %v2608 = vmul.f32 %v2416, %v2487
  %v2609 = vmul.f32 %v2417, %v2492
  %v2610 = vmul.f32 %v2418, %v2497
  %v2611 = vmul.f32 %v2419, %v2502
  %v2612 = vmul.f32 %v2420, %v2507
  %v2613 = vmul.f32 %v2421, %v2512
  %v2614 = vmul.f32 %v2422, %v2517
  %v2615 = vmul.f32 %v2423, %v2522
  %v2616 = vmul.f32 %v2424, %v2527
  %v2617 = vmul.f32 %v2425, %v2532
  %v2618 = vmul.f32 %v2426, %v2537
  %v2619 = vmul.f32 %v2427, %v2542
  %v2620 = vmul.f32 %v2428, %v2547
  %v2621 = vmul.f32 %v2429, %v2552
  %v2622 = vmul.f32 %v2430, %v2557
  %v2623 = vmul.f32 %v2431, %v2562
  %v2624 = vmul.f32 %v2432, %v2567
  %v2625 = vmul.f32 %v2433, %v2572
  %v2626 = vmul.f32 %v2434, %v2577
  %v2627 = vmul.f32 %v2435, %v2582
  %v2628 = vmul.f32 %v2436, %v2587
  %v2629 = vmul.f32 %v2437, %v2592
  %v2630 = vmul.f32 %v2438, %v2597
  %v2631 = vmax.f32 %v2599, %v2603
  %v2632 = vmax.f32 %v2631, %v2607
  %v2633 = vmax.f32 %v2632, %v2611
  %v2634 = vmax.f32 %v2633, %v2615
  %v2635 = vmax.f32 %v2634, %v2619
  %v2636 = vmax.f32 %v2635, %v2623
  %v2637 = vmax.f32 %v2636, %v2627
  %v2638 = vmax.f32 %v2600, %v2604
  %v2639 = vmax.f32 %v2638, %v2608
  %v2640 = vmax.f32 %v2639, %v2612
  %v2641 = vmax.f32 %v2640, %v2616
  %v2642 = vmax.f32 %v2641, %v2620
  %v2643 = vmax.f32 %v2642, %v2624
  %v2644 = vmax.f32 %v2643, %v2628
  %v2645 = vmax.f32 %v2601, %v2605
  %v2646 = vmax.f32 %v2645, %v2609
  %v2647 = vmax.f32 %v2646, %v2613
  %v2648 = vmax.f32 %v2647, %v2617
  %v2649 = vmax.f32 %v2648, %v2621
  %v2650 = vmax.f32 %v2649, %v2625
  %v2651 = vmax.f32 %v2650, %v2629
  %v2652 = vmax.f32 %v2602, %v2606
  %v2653 = vmax.f32 %v2652, %v2610
  %v2654 = vmax.f32 %v2653, %v2614
  %v2655 = vmax.f32 %v2654, %v2618
  %v2656 = vmax.f32 %v2655, %v2622
  %v2657 = vmax.f32 %v2656, %v2626
  %v2658 = vmax.f32 %v2657, %v2630
  %v2659 = vmax.f32 %v1791, %v2637
  %v2660 = vmax.f32 %v1792, %v2644
  %v2661 = vmax.f32 %v1793, %v2651
  %v2662 = vmax.f32 %v1794, %v2658
  %s2663 = scalar_lea.vmem %s0, 384
  %v2664 = vld [vmem:[%s2663] sm:$0xf]
  %v2665 = vld [vmem:[%s2663 + $0x4] sm:$0xf]
  %v2666 = vld [vmem:[%s2663 + $0x8] sm:$0xf]
  %v2667 = vld [vmem:[%s2663 + $0xc] sm:$0xf]
  %v2668 = vld [vmem:[%s2663 + $0x10] sm:$0xf]
  %v2669 = vld [vmem:[%s2663 + $0x14] sm:$0xf]
  %v2670 = vld [vmem:[%s2663 + $0x18] sm:$0xf]
  %v2671 = vld [vmem:[%s2663 + $0x1c] sm:$0xf]
  %v2672 = vld [vmem:[%s2663 + $0x20] sm:$0xf]
  %v2673 = vld [vmem:[%s2663 + $0x24] sm:$0xf]
  %v2674 = vld [vmem:[%s2663 + $0x28] sm:$0xf]
  %v2675 = vld [vmem:[%s2663 + $0x2c] sm:$0xf]
  %v2676 = vld [vmem:[%s2663 + $0x30] sm:$0xf]
  %v2677 = vld [vmem:[%s2663 + $0x34] sm:$0xf]
  %v2678 = vld [vmem:[%s2663 + $0x38] sm:$0xf]
  %v2679 = vld [vmem:[%s2663 + $0x3c] sm:$0xf]
  %v2680 = vld [vmem:[%s2663 + $0x40] sm:$0xf]
  %v2681 = vld [vmem:[%s2663 + $0x44] sm:$0xf]
  %v2682 = vld [vmem:[%s2663 + $0x48] sm:$0xf]
  %v2683 = vld [vmem:[%s2663 + $0x4c] sm:$0xf]
  %v2684 = vld [vmem:[%s2663 + $0x50] sm:$0xf]
  %v2685 = vld [vmem:[%s2663 + $0x54] sm:$0xf]
  %v2686 = vld [vmem:[%s2663 + $0x58] sm:$0xf]
  %v2687 = vld [vmem:[%s2663 + $0x5c] sm:$0xf]
  %v2688 = vld [vmem:[%s2663 + $0x60] sm:$0xf]
  %v2689 = vld [vmem:[%s2663 + $0x64] sm:$0xf]
  %v2690 = vld [vmem:[%s2663 + $0x68] sm:$0xf]
  %v2691 = vld [vmem:[%s2663 + $0x6c] sm:$0xf]
  %v2692 = vld [vmem:[%s2663 + $0x70] sm:$0xf]
  %v2693 = vld [vmem:[%s2663 + $0x74] sm:$0xf]
  %v2694 = vld [vmem:[%s2663 + $0x78] sm:$0xf]
  %v2695 = vld [vmem:[%s2663 + $0x7c] sm:$0xf]
  %s2696 = scalar_lea.vmem %s1, 768
  %v2697 = vld [vmem:[%s2696] sm:$0xff]
  %v2698 = vld [vmem:[%s2696 + $0x8] sm:$0xff]
  %v2699 = vld [vmem:[%s2696 + $0x10] sm:$0xff]
  %v2700 = vld [vmem:[%s2696 + $0x18] sm:$0xff]
  %v2701 = vld [vmem:[%s2696 + $0x20] sm:$0xff]
  %v2702 = vld [vmem:[%s2696 + $0x28] sm:$0xff]
  %v2703 = vld [vmem:[%s2696 + $0x30] sm:$0xff]
  %v2704 = vld [vmem:[%s2696 + $0x38] sm:$0xff]
  %v2705 = vld [vmem:[%s2696 + $0x40] sm:$0xff]
  %v2706 = vld [vmem:[%s2696 + $0x48] sm:$0xff]
  %v2707 = vld [vmem:[%s2696 + $0x50] sm:$0xff]
  %v2708 = vld [vmem:[%s2696 + $0x58] sm:$0xff]
  %v2709 = vld [vmem:[%s2696 + $0x60] sm:$0xff]
  %v2710 = vld [vmem:[%s2696 + $0x68] sm:$0xff]
  %v2711 = vld [vmem:[%s2696 + $0x70] sm:$0xff]
  %v2712 = vld [vmem:[%s2696 + $0x78] sm:$0xff]
  %v2713 = vld [vmem:[%s2696 + $0x80] sm:$0xff]
  %v2714 = vld [vmem:[%s2696 + $0x88] sm:$0xff]
  %v2715 = vld [vmem:[%s2696 + $0x90] sm:$0xff]
  %v2716 = vld [vmem:[%s2696 + $0x98] sm:$0xff]
  %v2717 = vld [vmem:[%s2696 + $0xa0] sm:$0xff]
  %v2718 = vld [vmem:[%s2696 + $0xa8] sm:$0xff]
  %v2719 = vld [vmem:[%s2696 + $0xb0] sm:$0xff]
  %v2720 = vld [vmem:[%s2696 + $0xb8] sm:$0xff]
  %v2721 = vld [vmem:[%s2696 + $0xc0] sm:$0xff]
  %v2722 = vld [vmem:[%s2696 + $0xc8] sm:$0xff]
  %v2723 = vld [vmem:[%s2696 + $0xd0] sm:$0xff]
  %v2724 = vld [vmem:[%s2696 + $0xd8] sm:$0xff]
  %v2725 = vld [vmem:[%s2696 + $0xe0] sm:$0xff]
  %v2726 = vld [vmem:[%s2696 + $0xe8] sm:$0xff]
  %v2727 = vld [vmem:[%s2696 + $0xf0] sm:$0xff]
  %v2728 = vld [vmem:[%s2696 + $0xf8] sm:$0xff]
  %v2761 = vunpack.c.l.b16 %v2664
  %v2762 = vunpack.c.l.b16 %v2665
  %v2763 = vunpack.c.l.b16 %v2666
  %v2764 = vunpack.c.l.b16 %v2667
  %v2765 = vunpack.c.l.b16 %v2668
  %v2766 = vunpack.c.l.b16 %v2669
  %v2767 = vunpack.c.l.b16 %v2670
  %v2768 = vunpack.c.l.b16 %v2671
  %v2769 = vunpack.c.l.b16 %v2672
  %v2770 = vunpack.c.l.b16 %v2673
  %v2771 = vunpack.c.l.b16 %v2674
  %v2772 = vunpack.c.l.b16 %v2675
  %v2773 = vunpack.c.l.b16 %v2676
  %v2774 = vunpack.c.l.b16 %v2677
  %v2775 = vunpack.c.l.b16 %v2678
  %v2776 = vunpack.c.l.b16 %v2679
  %v2777 = vunpack.c.l.b16 %v2680
  %v2778 = vunpack.c.l.b16 %v2681
  %v2779 = vunpack.c.l.b16 %v2682
  %v2780 = vunpack.c.l.b16 %v2683
  %v2781 = vunpack.c.l.b16 %v2684
  %v2782 = vunpack.c.l.b16 %v2685
  %v2783 = vunpack.c.l.b16 %v2686
  %v2784 = vunpack.c.l.b16 %v2687
  %v2785 = vunpack.c.l.b16 %v2688
  %v2786 = vunpack.c.l.b16 %v2689
  %v2787 = vunpack.c.l.b16 %v2690
  %v2788 = vunpack.c.l.b16 %v2691
  %v2789 = vunpack.c.l.b16 %v2692
  %v2790 = vunpack.c.l.b16 %v2693
  %v2791 = vunpack.c.l.b16 %v2694
  %v2792 = vunpack.c.l.b16 %v2695
  %v2793 = vpack.c.b16 %v2762, %v2761
  %v2794 = vpack.c.b16 %v2764, %v2763
  %v2795 = vpack.c.b16 %v2766, %v2765
  %v2796 = vpack.c.b16 %v2768, %v2767
  %v2797 = vpack.c.b16 %v2770, %v2769
  %v2798 = vpack.c.b16 %v2772, %v2771
  %v2799 = vpack.c.b16 %v2774, %v2773
  %v2800 = vpack.c.b16 %v2776, %v2775
  %v2801 = vpack.c.b16 %v2778, %v2777
  %v2802 = vpack.c.b16 %v2780, %v2779
  %v2803 = vpack.c.b16 %v2782, %v2781
  %v2804 = vpack.c.b16 %v2784, %v2783
  %v2805 = vpack.c.b16 %v2786, %v2785
  %v2806 = vpack.c.b16 %v2788, %v2787
  %v2807 = vpack.c.b16 %v2790, %v2789
  %v2808 = vpack.c.b16 %v2792, %v2791
  %v2810 = vsel %vm181, %v2793, 0
  %v2813 = vsel %vm181, %v2794, 0
  %v2816 = vsel %vm181, %v2795, 0
  %v2819 = vsel %vm181, %v2796, 0
  %v2822 = vsel %vm181, %v2797, 0
  %v2825 = vsel %vm181, %v2798, 0
  %v2828 = vsel %vm181, %v2799, 0
  %v2831 = vsel %vm181, %v2800, 0
  %v2834 = vsel %vm181, %v2801, 0
  %v2837 = vsel %vm181, %v2802, 0
  %v2840 = vsel %vm181, %v2803, 0
  %v2843 = vsel %vm181, %v2804, 0
  %v2846 = vsel %vm181, %v2805, 0
  %v2849 = vsel %vm181, %v2806, 0
  %v2852 = vsel %vm181, %v2807, 0
  %v2855 = vsel %vm181, %v2808, 0
  %2857 = vmatprep.subr.bf16.mxu0 0
  %2858 = vmatpush1.bf16.msra.mxu0 %v232
  %2859 = vmatprep.subr.bf16.mxu0 0
  %2860 = vmatpush1.bf16.msra.mxu0 0
  %2861 = vmatprep.subr.bf16.mxu0 0
  %2862 = vmatpush1.bf16.msra.mxu0 0
  %2863 = vmatprep.subr.bf16.mxu0 0
  %2864 = vmatpush1.bf16.msra.mxu0 0
  %2865 = vmatprep.subr.bf16.mxu0 0
  %2866 = vmatpush1.bf16.msra.mxu0 0
  %2867 = vmatprep.subr.bf16.mxu0 0
  %2868 = vmatpush1.bf16.msra.mxu0 0
  %2869 = vmatprep.subr.bf16.mxu0 0
  %2870 = vmatpush1.bf16.msra.mxu0 0
  %2871 = vmatprep.subr.bf16.mxu0 0
  %2872 = vmatpush1.bf16.msra.mxu0 0
  %2873 = vmatprep.subr.bf16.mxu0 0
  %2874 = vmatpush1.bf16.msra.mxu0 0
  %2875 = vmatprep.subr.bf16.mxu0 0
  %2876 = vmatpush1.bf16.msra.mxu0 0
  %2877 = vmatprep.subr.bf16.mxu0 0
  %2878 = vmatpush1.bf16.msra.mxu0 0
  %2879 = vmatprep.subr.bf16.mxu0 0
  %2880 = vmatpush1.bf16.msra.mxu0 0
  %2881 = vmatprep.subr.bf16.mxu0 0
  %2882 = vmatpush1.bf16.msra.mxu0 0
  %2883 = vmatprep.subr.bf16.mxu0 0
  %2884 = vmatpush1.bf16.msra.mxu0 0
  %2885 = vmatprep.subr.bf16.mxu0 0
  %2886 = vmatpush1.bf16.msra.mxu0 0
  %2887 = vmatprep.subr.bf16.mxu0 0
  %2888 = vmatpush1.bf16.msra.mxu0 0
  %2889 = vmatprep.mubr.bf16.mxu0 0
  %2890 = vmatmul.mubr.bf16.gmra.mrb[0].mxu0 %v2810
  %v2891 = vpop.f32.mrb[0].mxu0
  %v2892 = vadd.f32 %v99, %v2891
  %v2893 = vpop.f32.mrb[0].mxu0
  %v2894 = vpop.f32.mrb[0].mxu0
  %v2895 = vadd.f32 %v99, %v2894
  %v2896 = vpop.f32.mrb[0].mxu0
  %2897 = vmatprep.mubr.bf16.mxu0 0
  %2898 = vmatmul.mubr.bf16.gmra.mrb[0].mxu0 %v2813
  %v2899 = vpop.f32.mrb[0].mxu0
  %v2900 = vadd.f32 %v99, %v2899
  %v2901 = vpop.f32.mrb[0].mxu0
  %v2902 = vpop.f32.mrb[0].mxu0
  %v2903 = vadd.f32 %v99, %v2902
  %v2904 = vpop.f32.mrb[0].mxu0
  %2905 = vmatprep.mubr.bf16.mxu0 0
  %2906 = vmatmul.mubr.bf16.gmra.mrb[0].mxu0 %v2816
  %v2907 = vpop.f32.mrb[0].mxu0
  %v2908 = vadd.f32 %v99, %v2907
  %v2909 = vpop.f32.mrb[0].mxu0
  %v2910 = vpop.f32.mrb[0].mxu0
  %v2911 = vadd.f32 %v99, %v2910
  %v2912 = vpop.f32.mrb[0].mxu0
  %2913 = vmatprep.mubr.bf16.mxu0 0
  %2914 = vmatmul.mubr.bf16.gmra.mrb[0].mxu0 %v2819
  %v2915 = vpop.f32.mrb[0].mxu0
  %v2916 = vadd.f32 %v99, %v2915
  %v2917 = vpop.f32.mrb[0].mxu0
  %v2918 = vpop.f32.mrb[0].mxu0
  %v2919 = vadd.f32 %v99, %v2918
  %v2920 = vpop.f32.mrb[0].mxu0
  %2921 = vmatprep.mubr.bf16.mxu0 0
  %2922 = vmatmul.mubr.bf16.gmra.mrb[0].mxu0 %v2822
  %v2923 = vpop.f32.mrb[0].mxu0
  %v2924 = vadd.f32 %v99, %v2923
  %v2925 = vpop.f32.mrb[0].mxu0
  %v2926 = vpop.f32.mrb[0].mxu0
  %v2927 = vadd.f32 %v99, %v2926
  %v2928 = vpop.f32.mrb[0].mxu0
  %2929 = vmatprep.mubr.bf16.mxu0 0
  %2930 = vmatmul.mubr.bf16.gmra.mrb[0].mxu0 %v2825
  %v2931 = vpop.f32.mrb[0].mxu0
  %v2932 = vadd.f32 %v99, %v2931
  %v2933 = vpop.f32.mrb[0].mxu0
  %v2934 = vpop.f32.mrb[0].mxu0
  %v2935 = vadd.f32 %v99, %v2934
  %v2936 = vpop.f32.mrb[0].mxu0
  %2937 = vmatprep.mubr.bf16.mxu0 0
  %2938 = vmatmul.mubr.bf16.gmra.mrb[0].mxu0 %v2828
  %v2939 = vpop.f32.mrb[0].mxu0
  %v2940 = vadd.f32 %v99, %v2939
  %v2941 = vpop.f32.mrb[0].mxu0
  %v2942 = vpop.f32.mrb[0].mxu0
  %v2943 = vadd.f32 %v99, %v2942
  %v2944 = vpop.f32.mrb[0].mxu0
  %2945 = vmatprep.mubr.bf16.mxu0 0
  %2946 = vmatmul.mubr.bf16.gmra.mrb[0].mxu0 %v2831
  %v2947 = vpop.f32.mrb[0].mxu0
  %v2948 = vadd.f32 %v99, %v2947
  %v2949 = vpop.f32.mrb[0].mxu0
  %v2950 = vpop.f32.mrb[0].mxu0
  %v2951 = vadd.f32 %v99, %v2950
  %v2952 = vpop.f32.mrb[0].mxu0
  %2953 = vmatprep.mubr.bf16.mxu0 0
  %2954 = vmatmul.mubr.bf16.gmra.mrb[0].mxu0 %v2834
  %v2955 = vpop.f32.mrb[0].mxu0
  %v2956 = vadd.f32 %v99, %v2955
  %v2957 = vpop.f32.mrb[0].mxu0
  %v2958 = vpop.f32.mrb[0].mxu0
  %v2959 = vadd.f32 %v99, %v2958
  %v2960 = vpop.f32.mrb[0].mxu0
  %2961 = vmatprep.mubr.bf16.mxu0 0
  %2962 = vmatmul.mubr.bf16.gmra.mrb[0].mxu0 %v2837
  %v2963 = vpop.f32.mrb[0].mxu0
  %v2964 = vadd.f32 %v99, %v2963
  %v2965 = vpop.f32.mrb[0].mxu0
  %v2966 = vpop.f32.mrb[0].mxu0
  %v2967 = vadd.f32 %v99, %v2966
  %v2968 = vpop.f32.mrb[0].mxu0
  %2969 = vmatprep.mubr.bf16.mxu0 0
  %2970 = vmatmul.mubr.bf16.gmra.mrb[0].mxu0 %v2840
  %v2971 = vpop.f32.mrb[0].mxu0
  %v2972 = vadd.f32 %v99, %v2971
  %v2973 = vpop.f32.mrb[0].mxu0
  %v2974 = vpop.f32.mrb[0].mxu0
  %v2975 = vadd.f32 %v99, %v2974
  %v2976 = vpop.f32.mrb[0].mxu0
  %2977 = vmatprep.mubr.bf16.mxu0 0
  %2978 = vmatmul.mubr.bf16.gmra.mrb[0].mxu0 %v2843
  %v2979 = vpop.f32.mrb[0].mxu0
  %v2980 = vadd.f32 %v99, %v2979
  %v2981 = vpop.f32.mrb[0].mxu0
  %v2982 = vpop.f32.mrb[0].mxu0
  %v2983 = vadd.f32 %v99, %v2982
  %v2984 = vpop.f32.mrb[0].mxu0
  %2985 = vmatprep.mubr.bf16.mxu0 0
  %2986 = vmatmul.mubr.bf16.gmra.mrb[0].mxu0 %v2846
  %v2987 = vpop.f32.mrb[0].mxu0
  %v2988 = vadd.f32 %v99, %v2987
  %v2989 = vpop.f32.mrb[0].mxu0
  %v2990 = vpop.f32.mrb[0].mxu0
  %v2991 = vadd.f32 %v99, %v2990
  %v2992 = vpop.f32.mrb[0].mxu0
  %2993 = vmatprep.mubr.bf16.mxu0 0
  %2994 = vmatmul.mubr.bf16.gmra.mrb[0].mxu0 %v2849
  %v2995 = vpop.f32.mrb[0].mxu0
  %v2996 = vadd.f32 %v99, %v2995
  %v2997 = vpop.f32.mrb[0].mxu0
  %v2998 = vpop.f32.mrb[0].mxu0
  %v2999 = vadd.f32 %v99, %v2998
  %v3000 = vpop.f32.mrb[0].mxu0
  %3001 = vmatprep.mubr.bf16.mxu0 0
  %3002 = vmatmul.mubr.bf16.gmra.mrb[0].mxu0 %v2852
  %v3003 = vpop.f32.mrb[0].mxu0
  %v3004 = vadd.f32 %v99, %v3003
  %v3005 = vpop.f32.mrb[0].mxu0
  %v3006 = vpop.f32.mrb[0].mxu0
  %v3007 = vadd.f32 %v99, %v3006
  %v3008 = vpop.f32.mrb[0].mxu0
  %3009 = vmatprep.mubr.bf16.mxu0 0
  %3010 = vmatmul.mubr.bf16.gmra.mrb[0].mxu0 %v2855
  %v3011 = vpop.f32.mrb[0].mxu0
  %v3012 = vadd.f32 %v99, %v3011
  %v3013 = vpop.f32.mrb[0].mxu0
  %v3014 = vpop.f32.mrb[0].mxu0
  %v3015 = vadd.f32 %v99, %v3014
  %v3016 = vpop.f32.mrb[0].mxu0
  %3017 = vdwg.mxu0
  %v3018 = vmax.f32 %v2892, 0.0
  %v3019 = vmax.f32 %v2895, 0.0
  %v3020 = vmax.f32 %v2900, 0.0
  %v3021 = vmax.f32 %v2903, 0.0
  %v3022 = vmax.f32 %v2908, 0.0
  %v3023 = vmax.f32 %v2911, 0.0
  %v3024 = vmax.f32 %v2916, 0.0
  %v3025 = vmax.f32 %v2919, 0.0
  %v3026 = vmax.f32 %v2924, 0.0
  %v3027 = vmax.f32 %v2927, 0.0
  %v3028 = vmax.f32 %v2932, 0.0
  %v3029 = vmax.f32 %v2935, 0.0
  %v3030 = vmax.f32 %v2940, 0.0
  %v3031 = vmax.f32 %v2943, 0.0
  %v3032 = vmax.f32 %v2948, 0.0
  %v3033 = vmax.f32 %v2951, 0.0
  %v3034 = vmax.f32 %v2956, 0.0
  %v3035 = vmax.f32 %v2959, 0.0
  %v3036 = vmax.f32 %v2964, 0.0
  %v3037 = vmax.f32 %v2967, 0.0
  %v3038 = vmax.f32 %v2972, 0.0
  %v3039 = vmax.f32 %v2975, 0.0
  %v3040 = vmax.f32 %v2980, 0.0
  %v3041 = vmax.f32 %v2983, 0.0
  %v3042 = vmax.f32 %v2988, 0.0
  %v3043 = vmax.f32 %v2991, 0.0
  %v3044 = vmax.f32 %v2996, 0.0
  %v3045 = vmax.f32 %v2999, 0.0
  %v3046 = vmax.f32 %v3004, 0.0
  %v3047 = vmax.f32 %v3007, 0.0
  %v3048 = vmax.f32 %v3012, 0.0
  %v3049 = vmax.f32 %v3015, 0.0
  %v3050 = vpack.c.bf16 %v3019, %v3018
  %v3051 = vpack.c.bf16 %v3021, %v3020
  %v3052 = vpack.c.bf16 %v3023, %v3022
  %v3053 = vpack.c.bf16 %v3025, %v3024
  %v3054 = vpack.c.bf16 %v3027, %v3026
  %v3055 = vpack.c.bf16 %v3029, %v3028
  %v3056 = vpack.c.bf16 %v3031, %v3030
  %v3057 = vpack.c.bf16 %v3033, %v3032
  %v3058 = vpack.c.bf16 %v3035, %v3034
  %v3059 = vpack.c.bf16 %v3037, %v3036
  %v3060 = vpack.c.bf16 %v3039, %v3038
  %v3061 = vpack.c.bf16 %v3041, %v3040
  %v3062 = vpack.c.bf16 %v3043, %v3042
  %v3063 = vpack.c.bf16 %v3045, %v3044
  %v3064 = vpack.c.bf16 %v3047, %v3046
  %v3065 = vpack.c.bf16 %v3049, %v3048
  %v3067 = vsel %vm461, %v3050, 0
  %v3070 = vsel %vm461, %v3051, 0
  %v3073 = vsel %vm461, %v3052, 0
  %v3076 = vsel %vm461, %v3053, 0
  %v3079 = vsel %vm461, %v3054, 0
  %v3082 = vsel %vm461, %v3055, 0
  %v3085 = vsel %vm461, %v3056, 0
  %v3088 = vsel %vm461, %v3057, 0
  %v3091 = vsel %vm461, %v3058, 0
  %v3094 = vsel %vm461, %v3059, 0
  %v3097 = vsel %vm461, %v3060, 0
  %v3100 = vsel %vm461, %v3061, 0
  %v3103 = vsel %vm461, %v3062, 0
  %v3106 = vsel %vm461, %v3063, 0
  %v3109 = vsel %vm461, %v3064, 0
  %v3112 = vsel %vm461, %v3065, 0
  %3114 = vmatprep.subr.bf16.mxu0 0
  %3115 = vmatpush1.bf16.msra.mxu0 %v457
  %3116 = vmatprep.subr.bf16.mxu0 0
  %3117 = vmatpush1.bf16.msra.mxu0 %v458
  %3118 = vmatprep.subr.bf16.mxu0 0
  %3119 = vmatpush1.bf16.msra.mxu0 0
  %3120 = vmatprep.subr.bf16.mxu0 0
  %3121 = vmatpush1.bf16.msra.mxu0 0
  %3122 = vmatprep.subr.bf16.mxu0 0
  %3123 = vmatpush1.bf16.msra.mxu0 0
  %3124 = vmatprep.subr.bf16.mxu0 0
  %3125 = vmatpush1.bf16.msra.mxu0 0
  %3126 = vmatprep.subr.bf16.mxu0 0
  %3127 = vmatpush1.bf16.msra.mxu0 0
  %3128 = vmatprep.subr.bf16.mxu0 0
  %3129 = vmatpush1.bf16.msra.mxu0 0
  %3130 = vmatprep.subr.bf16.mxu0 0
  %3131 = vmatpush1.bf16.msra.mxu0 0
  %3132 = vmatprep.subr.bf16.mxu0 0
  %3133 = vmatpush1.bf16.msra.mxu0 0
  %3134 = vmatprep.subr.bf16.mxu0 0
  %3135 = vmatpush1.bf16.msra.mxu0 0
  %3136 = vmatprep.subr.bf16.mxu0 0
  %3137 = vmatpush1.bf16.msra.mxu0 0
  %3138 = vmatprep.subr.bf16.mxu0 0
  %3139 = vmatpush1.bf16.msra.mxu0 0
  %3140 = vmatprep.subr.bf16.mxu0 0
  %3141 = vmatpush1.bf16.msra.mxu0 0
  %3142 = vmatprep.subr.bf16.mxu0 0
  %3143 = vmatpush1.bf16.msra.mxu0 0
  %3144 = vmatprep.subr.bf16.mxu0 0
  %3145 = vmatpush1.bf16.msra.mxu0 0
  %3146 = vmatprep.mubr.bf16.mxu0 0
  %3147 = vmatmul.mubr.bf16.gmra.mrb[0].mxu0 %v3067
  %v3148 = vpop.f32.mrb[0].mxu0
  %v3149 = vadd.f32 %v447, %v3148
  %v3150 = vpop.f32.mrb[0].mxu0
  %v3151 = vpop.f32.mrb[0].mxu0
  %v3152 = vadd.f32 %v447, %v3151
  %v3153 = vpop.f32.mrb[0].mxu0
  %3154 = vmatprep.mubr.bf16.mxu0 0
  %3155 = vmatmul.mubr.bf16.gmra.mrb[0].mxu0 %v3070
  %v3156 = vpop.f32.mrb[0].mxu0
  %v3157 = vadd.f32 %v447, %v3156
  %v3158 = vpop.f32.mrb[0].mxu0
  %v3159 = vpop.f32.mrb[0].mxu0
  %v3160 = vadd.f32 %v447, %v3159
  %v3161 = vpop.f32.mrb[0].mxu0
  %3162 = vmatprep.mubr.bf16.mxu0 0
  %3163 = vmatmul.mubr.bf16.gmra.mrb[0].mxu0 %v3073
  %v3164 = vpop.f32.mrb[0].mxu0
  %v3165 = vadd.f32 %v447, %v3164
  %v3166 = vpop.f32.mrb[0].mxu0
  %v3167 = vpop.f32.mrb[0].mxu0
  %v3168 = vadd.f32 %v447, %v3167
  %v3169 = vpop.f32.mrb[0].mxu0
  %3170 = vmatprep.mubr.bf16.mxu0 0
  %3171 = vmatmul.mubr.bf16.gmra.mrb[0].mxu0 %v3076
  %v3172 = vpop.f32.mrb[0].mxu0
  %v3173 = vadd.f32 %v447, %v3172
  %v3174 = vpop.f32.mrb[0].mxu0
  %v3175 = vpop.f32.mrb[0].mxu0
  %v3176 = vadd.f32 %v447, %v3175
  %v3177 = vpop.f32.mrb[0].mxu0
  %3178 = vmatprep.mubr.bf16.mxu0 0
  %3179 = vmatmul.mubr.bf16.gmra.mrb[0].mxu0 %v3079
  %v3180 = vpop.f32.mrb[0].mxu0
  %v3181 = vadd.f32 %v447, %v3180
  %v3182 = vpop.f32.mrb[0].mxu0
  %v3183 = vpop.f32.mrb[0].mxu0
  %v3184 = vadd.f32 %v447, %v3183
  %v3185 = vpop.f32.mrb[0].mxu0
  %3186 = vmatprep.mubr.bf16.mxu0 0
  %3187 = vmatmul.mubr.bf16.gmra.mrb[0].mxu0 %v3082
  %v3188 = vpop.f32.mrb[0].mxu0
  %v3189 = vadd.f32 %v447, %v3188
  %v3190 = vpop.f32.mrb[0].mxu0
  %v3191 = vpop.f32.mrb[0].mxu0
  %v3192 = vadd.f32 %v447, %v3191
  %v3193 = vpop.f32.mrb[0].mxu0
  %3194 = vmatprep.mubr.bf16.mxu0 0
  %3195 = vmatmul.mubr.bf16.gmra.mrb[0].mxu0 %v3085
  %v3196 = vpop.f32.mrb[0].mxu0
  %v3197 = vadd.f32 %v447, %v3196
  %v3198 = vpop.f32.mrb[0].mxu0
  %v3199 = vpop.f32.mrb[0].mxu0
  %v3200 = vadd.f32 %v447, %v3199
  %v3201 = vpop.f32.mrb[0].mxu0
  %3202 = vmatprep.mubr.bf16.mxu0 0
  %3203 = vmatmul.mubr.bf16.gmra.mrb[0].mxu0 %v3088
  %v3204 = vpop.f32.mrb[0].mxu0
  %v3205 = vadd.f32 %v447, %v3204
  %v3206 = vpop.f32.mrb[0].mxu0
  %v3207 = vpop.f32.mrb[0].mxu0
  %v3208 = vadd.f32 %v447, %v3207
  %v3209 = vpop.f32.mrb[0].mxu0
  %3210 = vmatprep.mubr.bf16.mxu0 0
  %3211 = vmatmul.mubr.bf16.gmra.mrb[0].mxu0 %v3091
  %v3212 = vpop.f32.mrb[0].mxu0
  %v3213 = vadd.f32 %v447, %v3212
  %v3214 = vpop.f32.mrb[0].mxu0
  %v3215 = vpop.f32.mrb[0].mxu0
  %v3216 = vadd.f32 %v447, %v3215
  %v3217 = vpop.f32.mrb[0].mxu0
  %3218 = vmatprep.mubr.bf16.mxu0 0
  %3219 = vmatmul.mubr.bf16.gmra.mrb[0].mxu0 %v3094
  %v3220 = vpop.f32.mrb[0].mxu0
  %v3221 = vadd.f32 %v447, %v3220
  %v3222 = vpop.f32.mrb[0].mxu0
  %v3223 = vpop.f32.mrb[0].mxu0
  %v3224 = vadd.f32 %v447, %v3223
  %v3225 = vpop.f32.mrb[0].mxu0
  %3226 = vmatprep.mubr.bf16.mxu0 0
  %3227 = vmatmul.mubr.bf16.gmra.mrb[0].mxu0 %v3097
  %v3228 = vpop.f32.mrb[0].mxu0
  %v3229 = vadd.f32 %v447, %v3228
  %v3230 = vpop.f32.mrb[0].mxu0
  %v3231 = vpop.f32.mrb[0].mxu0
  %v3232 = vadd.f32 %v447, %v3231
  %v3233 = vpop.f32.mrb[0].mxu0
  %3234 = vmatprep.mubr.bf16.mxu0 0
  %3235 = vmatmul.mubr.bf16.gmra.mrb[0].mxu0 %v3100
  %v3236 = vpop.f32.mrb[0].mxu0
  %v3237 = vadd.f32 %v447, %v3236
  %v3238 = vpop.f32.mrb[0].mxu0
  %v3239 = vpop.f32.mrb[0].mxu0
  %v3240 = vadd.f32 %v447, %v3239
  %v3241 = vpop.f32.mrb[0].mxu0
  %3242 = vmatprep.mubr.bf16.mxu0 0
  %3243 = vmatmul.mubr.bf16.gmra.mrb[0].mxu0 %v3103
  %v3244 = vpop.f32.mrb[0].mxu0
  %v3245 = vadd.f32 %v447, %v3244
  %v3246 = vpop.f32.mrb[0].mxu0
  %v3247 = vpop.f32.mrb[0].mxu0
  %v3248 = vadd.f32 %v447, %v3247
  %v3249 = vpop.f32.mrb[0].mxu0
  %3250 = vmatprep.mubr.bf16.mxu0 0
  %3251 = vmatmul.mubr.bf16.gmra.mrb[0].mxu0 %v3106
  %v3252 = vpop.f32.mrb[0].mxu0
  %v3253 = vadd.f32 %v447, %v3252
  %v3254 = vpop.f32.mrb[0].mxu0
  %v3255 = vpop.f32.mrb[0].mxu0
  %v3256 = vadd.f32 %v447, %v3255
  %v3257 = vpop.f32.mrb[0].mxu0
  %3258 = vmatprep.mubr.bf16.mxu0 0
  %3259 = vmatmul.mubr.bf16.gmra.mrb[0].mxu0 %v3109
  %v3260 = vpop.f32.mrb[0].mxu0
  %v3261 = vadd.f32 %v447, %v3260
  %v3262 = vpop.f32.mrb[0].mxu0
  %v3263 = vpop.f32.mrb[0].mxu0
  %v3264 = vadd.f32 %v447, %v3263
  %v3265 = vpop.f32.mrb[0].mxu0
  %3266 = vmatprep.mubr.bf16.mxu0 0
  %3267 = vmatmul.mubr.bf16.gmra.mrb[0].mxu0 %v3112
  %v3268 = vpop.f32.mrb[0].mxu0
  %v3269 = vadd.f32 %v447, %v3268
  %v3270 = vpop.f32.mrb[0].mxu0
  %v3271 = vpop.f32.mrb[0].mxu0
  %v3272 = vadd.f32 %v447, %v3271
  %v3273 = vpop.f32.mrb[0].mxu0
  %3274 = vdwg.mxu0
  %v3275 = vmax.f32 %v3149, 0.0
  %v3276 = vmax.f32 %v3152, 0.0
  %v3277 = vmax.f32 %v3157, 0.0
  %v3278 = vmax.f32 %v3160, 0.0
  %v3279 = vmax.f32 %v3165, 0.0
  %v3280 = vmax.f32 %v3168, 0.0
  %v3281 = vmax.f32 %v3173, 0.0
  %v3282 = vmax.f32 %v3176, 0.0
  %v3283 = vmax.f32 %v3181, 0.0
  %v3284 = vmax.f32 %v3184, 0.0
  %v3285 = vmax.f32 %v3189, 0.0
  %v3286 = vmax.f32 %v3192, 0.0
  %v3287 = vmax.f32 %v3197, 0.0
  %v3288 = vmax.f32 %v3200, 0.0
  %v3289 = vmax.f32 %v3205, 0.0
  %v3290 = vmax.f32 %v3208, 0.0
  %v3291 = vmax.f32 %v3213, 0.0
  %v3292 = vmax.f32 %v3216, 0.0
  %v3293 = vmax.f32 %v3221, 0.0
  %v3294 = vmax.f32 %v3224, 0.0
  %v3295 = vmax.f32 %v3229, 0.0
  %v3296 = vmax.f32 %v3232, 0.0
  %v3297 = vmax.f32 %v3237, 0.0
  %v3298 = vmax.f32 %v3240, 0.0
  %v3299 = vmax.f32 %v3245, 0.0
  %v3300 = vmax.f32 %v3248, 0.0
  %v3301 = vmax.f32 %v3253, 0.0
  %v3302 = vmax.f32 %v3256, 0.0
  %v3303 = vmax.f32 %v3261, 0.0
  %v3304 = vmax.f32 %v3264, 0.0
  %v3305 = vmax.f32 %v3269, 0.0
  %v3306 = vmax.f32 %v3272, 0.0
  %3308 = vset.pattern.permute.xlu0 0
  %3309 = vperm.xlu0 %3308, %v2697
  %v3310 = vpop.permute.xlu0 %3309
  %3313 = vset.pattern.permute.xlu0 0
  %3314 = vperm.xlu0 %3313, %v2698
  %v3315 = vpop.permute.xlu0 %3314
  %3318 = vset.pattern.permute.xlu0 0
  %3319 = vperm.xlu0 %3318, %v2699
  %v3320 = vpop.permute.xlu0 %3319
  %3323 = vset.pattern.permute.xlu0 0
  %3324 = vperm.xlu0 %3323, %v2700
  %v3325 = vpop.permute.xlu0 %3324
  %3328 = vset.pattern.permute.xlu0 0
  %3329 = vperm.xlu0 %3328, %v2701
  %v3330 = vpop.permute.xlu0 %3329
  %3333 = vset.pattern.permute.xlu0 0
  %3334 = vperm.xlu0 %3333, %v2702
  %v3335 = vpop.permute.xlu0 %3334
  %3338 = vset.pattern.permute.xlu0 0
  %3339 = vperm.xlu0 %3338, %v2703
  %v3340 = vpop.permute.xlu0 %3339
  %3343 = vset.pattern.permute.xlu0 0
  %3344 = vperm.xlu0 %3343, %v2704
  %v3345 = vpop.permute.xlu0 %3344
  %3348 = vset.pattern.permute.xlu0 0
  %3349 = vperm.xlu0 %3348, %v2705
  %v3350 = vpop.permute.xlu0 %3349
  %3353 = vset.pattern.permute.xlu0 0
  %3354 = vperm.xlu0 %3353, %v2706
  %v3355 = vpop.permute.xlu0 %3354
  %3358 = vset.pattern.permute.xlu0 0
  %3359 = vperm.xlu0 %3358, %v2707
  %v3360 = vpop.permute.xlu0 %3359
  %3363 = vset.pattern.permute.xlu0 0
  %3364 = vperm.xlu0 %3363, %v2708
  %v3365 = vpop.permute.xlu0 %3364
  %3368 = vset.pattern.permute.xlu0 0
  %3369 = vperm.xlu0 %3368, %v2709
  %v3370 = vpop.permute.xlu0 %3369
  %3373 = vset.pattern.permute.xlu0 0
  %3374 = vperm.xlu0 %3373, %v2710
  %v3375 = vpop.permute.xlu0 %3374
  %3378 = vset.pattern.permute.xlu0 0
  %3379 = vperm.xlu0 %3378, %v2711
  %v3380 = vpop.permute.xlu0 %3379
  %3383 = vset.pattern.permute.xlu0 0
  %3384 = vperm.xlu0 %3383, %v2712
  %v3385 = vpop.permute.xlu0 %3384
  %3388 = vset.pattern.permute.xlu0 0
  %3389 = vperm.xlu0 %3388, %v2713
  %v3390 = vpop.permute.xlu0 %3389
  %3393 = vset.pattern.permute.xlu0 0
  %3394 = vperm.xlu0 %3393, %v2714
  %v3395 = vpop.permute.xlu0 %3394
  %3398 = vset.pattern.permute.xlu0 0
  %3399 = vperm.xlu0 %3398, %v2715
  %v3400 = vpop.permute.xlu0 %3399
  %3403 = vset.pattern.permute.xlu0 0
  %3404 = vperm.xlu0 %3403, %v2716
  %v3405 = vpop.permute.xlu0 %3404
  %3408 = vset.pattern.permute.xlu0 0
  %3409 = vperm.xlu0 %3408, %v2717
  %v3410 = vpop.permute.xlu0 %3409
  %3413 = vset.pattern.permute.xlu0 0
  %3414 = vperm.xlu0 %3413, %v2718
  %v3415 = vpop.permute.xlu0 %3414
  %3418 = vset.pattern.permute.xlu0 0
  %3419 = vperm.xlu0 %3418, %v2719
  %v3420 = vpop.permute.xlu0 %3419
  %3423 = vset.pattern.permute.xlu0 0
  %3424 = vperm.xlu0 %3423, %v2720
  %v3425 = vpop.permute.xlu0 %3424
  %3428 = vset.pattern.permute.xlu0 0
  %3429 = vperm.xlu0 %3428, %v2721
  %v3430 = vpop.permute.xlu0 %3429
  %3433 = vset.pattern.permute.xlu0 0
  %3434 = vperm.xlu0 %3433, %v2722
  %v3435 = vpop.permute.xlu0 %3434
  %3438 = vset.pattern.permute.xlu0 0
  %3439 = vperm.xlu0 %3438, %v2723
  %v3440 = vpop.permute.xlu0 %3439
  %3443 = vset.pattern.permute.xlu0 0
  %3444 = vperm.xlu0 %3443, %v2724
  %v3445 = vpop.permute.xlu0 %3444
  %3448 = vset.pattern.permute.xlu0 0
  %3449 = vperm.xlu0 %3448, %v2725
  %v3450 = vpop.permute.xlu0 %3449
  %3453 = vset.pattern.permute.xlu0 0
  %3454 = vperm.xlu0 %3453, %v2726
  %v3455 = vpop.permute.xlu0 %3454
  %3458 = vset.pattern.permute.xlu0 0
  %3459 = vperm.xlu0 %3458, %v2727
  %v3460 = vpop.permute.xlu0 %3459
  %3463 = vset.pattern.permute.xlu0 0
  %3464 = vperm.xlu0 %3463, %v2728
  %v3465 = vpop.permute.xlu0 %3464
  %v3467 = vmul.f32 %v3275, %v3310
  %v3468 = vmul.f32 %v3276, %v3315
  %v3469 = vmul.f32 %v3277, %v3320
  %v3470 = vmul.f32 %v3278, %v3325
  %v3471 = vmul.f32 %v3279, %v3330
  %v3472 = vmul.f32 %v3280, %v3335
  %v3473 = vmul.f32 %v3281, %v3340
  %v3474 = vmul.f32 %v3282, %v3345
  %v3475 = vmul.f32 %v3283, %v3350
  %v3476 = vmul.f32 %v3284, %v3355
  %v3477 = vmul.f32 %v3285, %v3360
  %v3478 = vmul.f32 %v3286, %v3365
  %v3479 = vmul.f32 %v3287, %v3370
  %v3480 = vmul.f32 %v3288, %v3375
  %v3481 = vmul.f32 %v3289, %v3380
  %v3482 = vmul.f32 %v3290, %v3385
  %v3483 = vmul.f32 %v3291, %v3390
  %v3484 = vmul.f32 %v3292, %v3395
  %v3485 = vmul.f32 %v3293, %v3400
  %v3486 = vmul.f32 %v3294, %v3405
  %v3487 = vmul.f32 %v3295, %v3410
  %v3488 = vmul.f32 %v3296, %v3415
  %v3489 = vmul.f32 %v3297, %v3420
  %v3490 = vmul.f32 %v3298, %v3425
  %v3491 = vmul.f32 %v3299, %v3430
  %v3492 = vmul.f32 %v3300, %v3435
  %v3493 = vmul.f32 %v3301, %v3440
  %v3494 = vmul.f32 %v3302, %v3445
  %v3495 = vmul.f32 %v3303, %v3450
  %v3496 = vmul.f32 %v3304, %v3455
  %v3497 = vmul.f32 %v3305, %v3460
  %v3498 = vmul.f32 %v3306, %v3465
  %v3499 = vmax.f32 %v3467, %v3471
  %v3500 = vmax.f32 %v3499, %v3475
  %v3501 = vmax.f32 %v3500, %v3479
  %v3502 = vmax.f32 %v3501, %v3483
  %v3503 = vmax.f32 %v3502, %v3487
  %v3504 = vmax.f32 %v3503, %v3491
  %v3505 = vmax.f32 %v3504, %v3495
  %v3506 = vmax.f32 %v3468, %v3472
  %v3507 = vmax.f32 %v3506, %v3476
  %v3508 = vmax.f32 %v3507, %v3480
  %v3509 = vmax.f32 %v3508, %v3484
  %v3510 = vmax.f32 %v3509, %v3488
  %v3511 = vmax.f32 %v3510, %v3492
  %v3512 = vmax.f32 %v3511, %v3496
  %v3513 = vmax.f32 %v3469, %v3473
  %v3514 = vmax.f32 %v3513, %v3477
  %v3515 = vmax.f32 %v3514, %v3481
  %v3516 = vmax.f32 %v3515, %v3485
  %v3517 = vmax.f32 %v3516, %v3489
  %v3518 = vmax.f32 %v3517, %v3493
  %v3519 = vmax.f32 %v3518, %v3497
  %v3520 = vmax.f32 %v3470, %v3474
  %v3521 = vmax.f32 %v3520, %v3478
  %v3522 = vmax.f32 %v3521, %v3482
  %v3523 = vmax.f32 %v3522, %v3486
  %v3524 = vmax.f32 %v3523, %v3490
  %v3525 = vmax.f32 %v3524, %v3494
  %v3526 = vmax.f32 %v3525, %v3498
  %v3527 = vmax.f32 %v2659, %v3505
  %v3528 = vmax.f32 %v2660, %v3512
  %v3529 = vmax.f32 %v2661, %v3519
  %v3530 = vmax.f32 %v2662, %v3526
  %3531 = vst [vmem:[%s6] sm:$0xff] %v3527
  %3532 = vst [vmem:[%s6 + $0x8] sm:$0xff] %v3528
  %3533 = vst [vmem:[%s6 + $0x10] sm:$0xff] %v3529
  %3534 = vst [vmem:[%s6 + $0x18] sm:$0xff] %v3530
  // Predicated region
  $region26: #{pointnet2_forward.5} parent=0 // pred_check
    _
  $region27: #{pointnet2_forward.5} parent=0 // pred_check_branch
    %3536 = sbr.rel (0) target = $region29
  $region28: #{pointnet2_forward.5} parent=0 // pred_region
    _
  $region29: #{pointnet2_forward.5} parent=0 // pred_fallthru
    _
  // Predicated region
  $region30: #{pointnet2_forward.5} parent=0 // pred_check
    _
  $region31: #{pointnet2_forward.5} parent=0 // pred_check_branch
    %3538 = sbr.rel (0) target = $region33
  $region32: #{pointnet2_forward.5} parent=0 // pred_region
    _
  $region33: #{pointnet2_forward.5} parent=0 // pred_fallthru
    _

// kernel: custom-call.26
$region0: #{custom-call.26}
  %s0 = inlined_call_operand.vmem [shape: f32[2,8], index: 0, kind: output, shape index: {}]

// kernel: neg.10
$region0: #{neg.10}
  #allocation0 [shape = 's32[1]{0}', space=sflag, size = 0x4, scoped, tag = 'scoped memory for neg.10']
  %s0 = inlined_call_operand.vmem [shape: f32[2,4,8], index: 0, kind: input, shape index: {}]
  %s1 = inlined_call_operand.vmem [shape: f32[2,4,8], index: 1, kind: output, shape index: {}]
  %v2 = vld [vmem:[%s0] sm:$0xf]
  %3 = xla_tuple %v2
  %4 = xla_tuple %3
  %v5 = vxor.u32 %v2, 2147483648
  %6 = xla_tuple %v5
  %7 = vst [vmem:[%s1] sm:$0xf] %v5
  %s8 = scalar_lea.vmem %s0, 4
  %v9 = vld [vmem:[%s8] sm:$0xf]
  %10 = xla_tuple %v9
  %11 = xla_tuple %10
  %v12 = vxor.u32 %v9, 2147483648
  %13 = xla_tuple %v12
  %s14 = scalar_lea.vmem %s1, 4
  %15 = vst [vmem:[%s14] sm:$0xf] %v12

// kernel: pointnet2_forward.6
$region0: #{pointnet2_forward.6}
  #allocation0 [shape = 'u32[]', space=smem, size = 0x4, offset = 0x4, fixed_abs, tag = 'smem constant byte address 0x4 - core index']
  #allocation1 [shape = 'u32[144,128]{1,0:T(1,128)}', space=vmem, size = 0x12000, scoped, tag = 'internal scratch']
  %s0 = inlined_call_operand.vmem [shape: bf16[16,16,67], index: 0, kind: input, shape index: {}]
  %s1 = inlined_call_operand.vmem [shape: f32[16,16,1], index: 1, kind: input, shape index: {}]
  %s2 = inlined_call_operand.vmem [shape: bf16[67,128], index: 2, kind: input, shape index: {}]
  %s3 = inlined_call_operand.vmem [shape: f32[1,128], index: 3, kind: input, shape index: {}]
  %s4 = inlined_call_operand.vmem [shape: bf16[128,128], index: 4, kind: input, shape index: {}]
  %s5 = inlined_call_operand.vmem [shape: f32[1,128], index: 5, kind: input, shape index: {}]
  %s6 = inlined_call_operand.vmem [shape: f32[16,128], index: 6, kind: output, shape index: {}]
  %s7 = sld [smem:[#allocation0]]
  $region34: #{pointnet2_forward.6} parent=0
    _
  %s9 = ssub.s32 1, %s7
  %s10 = scalar_select 0, %s9, %s7
  // Predicated region
  $region2: #{pointnet2_forward.6} parent=0 // pred_check
    _
  $region3: #{pointnet2_forward.6} parent=0 // pred_check_branch
    %12 = sbr.rel (0) target = $region5
  $region4: #{pointnet2_forward.6} parent=0 // pred_region
    _
  $region5: #{pointnet2_forward.6} parent=0 // pred_fallthru
    _
  // Predicated region
  $region6: #{pointnet2_forward.6} parent=0 // pred_check
    _
  $region7: #{pointnet2_forward.6} parent=0 // pred_check_branch
    %14 = sbr.rel (0) target = $region9
  $region8: #{pointnet2_forward.6} parent=0 // pred_region
    _
  $region9: #{pointnet2_forward.6} parent=0 // pred_fallthru
    _
  // Predicated region
  $region10: #{pointnet2_forward.6} parent=0 // pred_check
    _
  $region11: #{pointnet2_forward.6} parent=0 // pred_check_branch
    %16 = sbr.rel (0) target = $region13
  $region12: #{pointnet2_forward.6} parent=0 // pred_region
    _
  $region13: #{pointnet2_forward.6} parent=0 // pred_fallthru
    _
  // Predicated region
  $region14: #{pointnet2_forward.6} parent=0 // pred_check
    _
  $region15: #{pointnet2_forward.6} parent=0 // pred_check_branch
    %18 = sbr.rel (0) target = $region17
  $region16: #{pointnet2_forward.6} parent=0 // pred_region
    _
  $region17: #{pointnet2_forward.6} parent=0 // pred_fallthru
    _
  // Predicated region
  $region18: #{pointnet2_forward.6} parent=0 // pred_check
    _
  $region19: #{pointnet2_forward.6} parent=0 // pred_check_branch
    %20 = sbr.rel (0) target = $region21
  $region20: #{pointnet2_forward.6} parent=0 // pred_region
    _
  $region21: #{pointnet2_forward.6} parent=0 // pred_fallthru
    _
  // Predicated region
  $region22: #{pointnet2_forward.6} parent=0 // pred_check
    _
  $region23: #{pointnet2_forward.6} parent=0 // pred_check_branch
    %22 = sbr.rel (0) target = $region25
  $region24: #{pointnet2_forward.6} parent=0 // pred_region
    _
  $region25: #{pointnet2_forward.6} parent=0 // pred_fallthru
    _
  %v24 = vld [vmem:[%s2] sm:$0xf]
  %v25 = vld [vmem:[%s2 + $0x4] sm:$0xf]
  %v26 = vld [vmem:[%s2 + $0x8] sm:$0xf]
  %v27 = vld [vmem:[%s2 + $0xc] sm:$0xf]
  %v28 = vld [vmem:[%s2 + $0x10] sm:$0xf]
  %v29 = vld [vmem:[%s2 + $0x14] sm:$0xf]
  %v30 = vld [vmem:[%s2 + $0x18] sm:$0xf]
  %v31 = vld [vmem:[%s2 + $0x1c] sm:$0xf]
  %v32 = vld [vmem:[%s2 + $0x20] sm:$0x3]
  %v33 = vld [vmem:[%s3] sm:$0x1]
  %v34 = vld [vmem:[%s4] sm:$0xf]
  %v35 = vld [vmem:[%s4 + $0x4] sm:$0xf]
  %v36 = vld [vmem:[%s4 + $0x8] sm:$0xf]
  %v37 = vld [vmem:[%s4 + $0xc] sm:$0xf]
  %v38 = vld [vmem:[%s4 + $0x10] sm:$0xf]
  %v39 = vld [vmem:[%s4 + $0x14] sm:$0xf]
  %v40 = vld [vmem:[%s4 + $0x18] sm:$0xf]
  %v41 = vld [vmem:[%s4 + $0x1c] sm:$0xf]
  %v42 = vld [vmem:[%s4 + $0x20] sm:$0xf]
  %v43 = vld [vmem:[%s4 + $0x24] sm:$0xf]
  %v44 = vld [vmem:[%s4 + $0x28] sm:$0xf]
  %v45 = vld [vmem:[%s4 + $0x2c] sm:$0xf]
  %v46 = vld [vmem:[%s4 + $0x30] sm:$0xf]
  %v47 = vld [vmem:[%s4 + $0x34] sm:$0xf]
  %v48 = vld [vmem:[%s4 + $0x38] sm:$0xf]
  %v49 = vld [vmem:[%s4 + $0x3c] sm:$0xf]
  %v50 = vld [vmem:[%s5] sm:$0x1]
  %v51 = vld [vmem:[%s0] sm:$0xf]
  %v52 = vld [vmem:[%s0 + $0x4] sm:$0xf]
  %v53 = vld [vmem:[%s0 + $0x8] sm:$0xf]
  %v54 = vld [vmem:[%s0 + $0xc] sm:$0xf]
  %v55 = vld [vmem:[%s0 + $0x10] sm:$0xf]
  %v56 = vld [vmem:[%s0 + $0x14] sm:$0xf]
  %v57 = vld [vmem:[%s0 + $0x18] sm:$0xf]
  %v58 = vld [vmem:[%s0 + $0x1c] sm:$0xf]
  %v59 = vld [vmem:[%s0 + $0x20] sm:$0xf]
  %v60 = vld [vmem:[%s0 + $0x24] sm:$0xf]
  %v61 = vld [vmem:[%s0 + $0x28] sm:$0xf]
  %v62 = vld [vmem:[%s0 + $0x2c] sm:$0xf]
  %v63 = vld [vmem:[%s0 + $0x30] sm:$0xf]
  %v64 = vld [vmem:[%s0 + $0x34] sm:$0xf]
  %v65 = vld [vmem:[%s0 + $0x38] sm:$0xf]
  %v66 = vld [vmem:[%s0 + $0x3c] sm:$0xf]
  %v67 = vld [vmem:[%s1] sm:$0xff]
  %v68 = vld [vmem:[%s1 + $0x8] sm:$0xff]
  %v69 = vld [vmem:[%s1 + $0x10] sm:$0xff]
  %v70 = vld [vmem:[%s1 + $0x18] sm:$0xff]
  %v71 = vld [vmem:[%s1 + $0x20] sm:$0xff]
  %v72 = vld [vmem:[%s1 + $0x28] sm:$0xff]
  %v73 = vld [vmem:[%s1 + $0x30] sm:$0xff]
  %v74 = vld [vmem:[%s1 + $0x38] sm:$0xff]
  %v75 = vld [vmem:[%s1 + $0x40] sm:$0xff]
  %v76 = vld [vmem:[%s1 + $0x48] sm:$0xff]
  %v77 = vld [vmem:[%s1 + $0x50] sm:$0xff]
  %v78 = vld [vmem:[%s1 + $0x58] sm:$0xff]
  %v79 = vld [vmem:[%s1 + $0x60] sm:$0xff]
  %v80 = vld [vmem:[%s1 + $0x68] sm:$0xff]
  %v81 = vld [vmem:[%s1 + $0x70] sm:$0xff]
  %v82 = vld [vmem:[%s1 + $0x78] sm:$0xff]
  %v84 = vlaneseq
  %v85 = vshrl.u32 %v84, 7
  %v86 = vsub.s32 0, %v85
  %v87 = vrot.slane %v33, %v86
  %v105 = vunpack.c.l.b16 %v51
  %v106 = vunpack.c.l.b16 %v52
  %v107 = vunpack.c.l.b16 %v53
  %v108 = vunpack.c.l.b16 %v54
  %v109 = vunpack.c.l.b16 %v55
  %v110 = vunpack.c.l.b16 %v56
  %v111 = vunpack.c.l.b16 %v57
  %v112 = vunpack.c.l.b16 %v58
  %v113 = vunpack.c.l.b16 %v59
  %v114 = vunpack.c.l.b16 %v60
  %v115 = vunpack.c.l.b16 %v61
  %v116 = vunpack.c.l.b16 %v62
  %v117 = vunpack.c.l.b16 %v63
  %v118 = vunpack.c.l.b16 %v64
  %v119 = vunpack.c.l.b16 %v65
  %v120 = vunpack.c.l.b16 %v66
  %v121 = vpack.c.b16 %v106, %v105
  %v122 = vpack.c.b16 %v108, %v107
  %v123 = vpack.c.b16 %v110, %v109
  %v124 = vpack.c.b16 %v112, %v111
  %v125 = vpack.c.b16 %v114, %v113
  %v126 = vpack.c.b16 %v116, %v115
  %v127 = vpack.c.b16 %v118, %v117
  %v128 = vpack.c.b16 %v120, %v119
  %v138 = vunpack.c.l.b16 %v24
  %v139 = vunpack.c.l.b16 %v25
  %v140 = vunpack.c.l.b16 %v26
  %v141 = vunpack.c.l.b16 %v27
  %v142 = vunpack.c.l.b16 %v28
  %v143 = vunpack.c.l.b16 %v29
  %v144 = vunpack.c.l.b16 %v30
  %v145 = vunpack.c.l.b16 %v31
  %v146 = vunpack.c.l.b16 %v32
  %v147 = vpack.c.b16 %v139, %v138
  %v148 = vpack.c.b16 %v141, %v140
  %v149 = vpack.c.b16 %v143, %v142
  %v150 = vpack.c.b16 %v145, %v144
  %v151 = vpack.c.b16 %v146, %v146
  %vm156 = vcmask 547840
  %v158 = vsel %vm156, %v121, 0
  %v161 = vsel %vm156, %v122, 0
  %v164 = vsel %vm156, %v123, 0
  %v167 = vsel %vm156, %v124, 0
  %v170 = vsel %vm156, %v125, 0
  %v173 = vsel %vm156, %v126, 0
  %v176 = vsel %vm156, %v127, 0
  %v179 = vsel %vm156, %v128, 0
  %vm181 = vcmask 1040384
  %vm182 = vcmask 1041408
  %v183 = vsel %vm181, 4294967295, 65535
  %v184 = vsel %vm182, %v183, 0
  %v186 = vand.u32 %v151, %v184
  %188 = vmatprep.subr.bf16.mxu0 0
  %189 = vmatpush1.bf16.msra.mxu0 %v147
  %190 = vmatprep.subr.bf16.mxu0 0
  %191 = vmatpush1.bf16.msra.mxu0 %v148
  %192 = vmatprep.subr.bf16.mxu0 0
  %193 = vmatpush1.bf16.msra.mxu0 %v149
  %194 = vmatprep.subr.bf16.mxu0 0
  %195 = vmatpush1.bf16.msra.mxu0 %v150
  %196 = vmatprep.subr.bf16.mxu0 0
  %197 = vmatpush1.bf16.msra.mxu0 %v186
  %198 = vmatprep.subr.bf16.mxu0 0
  %199 = vmatpush1.bf16.msra.mxu0 0
  %200 = vmatprep.subr.bf16.mxu0 0
  %201 = vmatpush1.bf16.msra.mxu0 0
  %202 = vmatprep.subr.bf16.mxu0 0
  %203 = vmatpush1.bf16.msra.mxu0 0
  %204 = vmatprep.subr.bf16.mxu0 0
  %205 = vmatpush1.bf16.msra.mxu0 0
  %206 = vmatprep.subr.bf16.mxu0 0
  %207 = vmatpush1.bf16.msra.mxu0 0
  %208 = vmatprep.subr.bf16.mxu0 0
  %209 = vmatpush1.bf16.msra.mxu0 0
  %210 = vmatprep.subr.bf16.mxu0 0
  %211 = vmatpush1.bf16.msra.mxu0 0
  %212 = vmatprep.subr.bf16.mxu0 0
  %213 = vmatpush1.bf16.msra.mxu0 0
  %214 = vmatprep.subr.bf16.mxu0 0
  %215 = vmatpush1.bf16.msra.mxu0 0
  %216 = vmatprep.subr.bf16.mxu0 0
  %217 = vmatpush1.bf16.msra.mxu0 0
  %218 = vmatprep.subr.bf16.mxu0 0
  %219 = vmatpush1.bf16.msra.mxu0 0
  %220 = vmatprep.mubr.bf16.mxu0 0
  %221 = vmatmul.mubr.bf16.gmra.mrb[0].mxu0 %v158
  %v222 = vpop.f32.mrb[0].mxu0
  %v223 = vadd.f32 %v87, %v222
  %v224 = vpop.f32.mrb[0].mxu0
  %v225 = vpop.f32.mrb[0].mxu0
  %v226 = vadd.f32 %v87, %v225
  %v227 = vpop.f32.mrb[0].mxu0
  %228 = vmatprep.mubr.bf16.mxu0 0
  %229 = vmatmul.mubr.bf16.gmra.mrb[0].mxu0 %v161
  %v230 = vpop.f32.mrb[0].mxu0
  %v231 = vadd.f32 %v87, %v230
  %v232 = vpop.f32.mrb[0].mxu0
  %v233 = vpop.f32.mrb[0].mxu0
  %v234 = vadd.f32 %v87, %v233
  %v235 = vpop.f32.mrb[0].mxu0
  %236 = vmatprep.mubr.bf16.mxu0 0
  %237 = vmatmul.mubr.bf16.gmra.mrb[0].mxu0 %v164
  %v238 = vpop.f32.mrb[0].mxu0
  %v239 = vadd.f32 %v87, %v238
  %v240 = vpop.f32.mrb[0].mxu0
  %v241 = vpop.f32.mrb[0].mxu0
  %v242 = vadd.f32 %v87, %v241
  %v243 = vpop.f32.mrb[0].mxu0
  %244 = vmatprep.mubr.bf16.mxu0 0
  %245 = vmatmul.mubr.bf16.gmra.mrb[0].mxu0 %v167
  %v246 = vpop.f32.mrb[0].mxu0
  %v247 = vadd.f32 %v87, %v246
  %v248 = vpop.f32.mrb[0].mxu0
  %v249 = vpop.f32.mrb[0].mxu0
  %v250 = vadd.f32 %v87, %v249
  %v251 = vpop.f32.mrb[0].mxu0
  %252 = vmatprep.mubr.bf16.mxu0 0
  %253 = vmatmul.mubr.bf16.gmra.mrb[0].mxu0 %v170
  %v254 = vpop.f32.mrb[0].mxu0
  %v255 = vadd.f32 %v87, %v254
  %v256 = vpop.f32.mrb[0].mxu0
  %v257 = vpop.f32.mrb[0].mxu0
  %v258 = vadd.f32 %v87, %v257
  %v259 = vpop.f32.mrb[0].mxu0
  %260 = vmatprep.mubr.bf16.mxu0 0
  %261 = vmatmul.mubr.bf16.gmra.mrb[0].mxu0 %v173
  %v262 = vpop.f32.mrb[0].mxu0
  %v263 = vadd.f32 %v87, %v262
  %v264 = vpop.f32.mrb[0].mxu0
  %v265 = vpop.f32.mrb[0].mxu0
  %v266 = vadd.f32 %v87, %v265
  %v267 = vpop.f32.mrb[0].mxu0
  %268 = vmatprep.mubr.bf16.mxu0 0
  %269 = vmatmul.mubr.bf16.gmra.mrb[0].mxu0 %v176
  %v270 = vpop.f32.mrb[0].mxu0
  %v271 = vadd.f32 %v87, %v270
  %v272 = vpop.f32.mrb[0].mxu0
  %v273 = vpop.f32.mrb[0].mxu0
  %v274 = vadd.f32 %v87, %v273
  %v275 = vpop.f32.mrb[0].mxu0
  %276 = vmatprep.mubr.bf16.mxu0 0
  %277 = vmatmul.mubr.bf16.gmra.mrb[0].mxu0 %v179
  %v278 = vpop.f32.mrb[0].mxu0
  %v279 = vadd.f32 %v87, %v278
  %v280 = vpop.f32.mrb[0].mxu0
  %v281 = vpop.f32.mrb[0].mxu0
  %v282 = vadd.f32 %v87, %v281
  %v283 = vpop.f32.mrb[0].mxu0
  %284 = vdwg.mxu0
  %v285 = vmax.f32 %v223, 0.0
  %v286 = vmax.f32 %v226, 0.0
  %v287 = vmax.f32 %v231, 0.0
  %v288 = vmax.f32 %v234, 0.0
  %v289 = vmax.f32 %v239, 0.0
  %v290 = vmax.f32 %v242, 0.0
  %v291 = vmax.f32 %v247, 0.0
  %v292 = vmax.f32 %v250, 0.0
  %v293 = vmax.f32 %v255, 0.0
  %v294 = vmax.f32 %v258, 0.0
  %v295 = vmax.f32 %v263, 0.0
  %v296 = vmax.f32 %v266, 0.0
  %v297 = vmax.f32 %v271, 0.0
  %v298 = vmax.f32 %v274, 0.0
  %v299 = vmax.f32 %v279, 0.0
  %v300 = vmax.f32 %v282, 0.0
  %v301 = vpack.c.bf16 %v286, %v285
  %v302 = vpack.c.bf16 %v288, %v287
  %v303 = vpack.c.bf16 %v290, %v289
  %v304 = vpack.c.bf16 %v292, %v291
  %v305 = vpack.c.bf16 %v294, %v293
  %v306 = vpack.c.bf16 %v296, %v295
  %v307 = vpack.c.bf16 %v298, %v297
  %v308 = vpack.c.bf16 %v300, %v299
  %v310 = vlaneseq
  %v311 = vshrl.u32 %v310, 7
  %v312 = vsub.s32 0, %v311
  %v313 = vrot.slane %v50, %v312
  %v331 = vunpack.c.l.b16 %v34
  %v332 = vunpack.c.l.b16 %v35
  %v333 = vunpack.c.l.b16 %v36
  %v334 = vunpack.c.l.b16 %v37
  %v335 = vunpack.c.l.b16 %v38
  %v336 = vunpack.c.l.b16 %v39
  %v337 = vunpack.c.l.b16 %v40
  %v338 = vunpack.c.l.b16 %v41
  %v339 = vunpack.c.l.b16 %v42
  %v340 = vunpack.c.l.b16 %v43
  %v341 = vunpack.c.l.b16 %v44
  %v342 = vunpack.c.l.b16 %v45
  %v343 = vunpack.c.l.b16 %v46
  %v344 = vunpack.c.l.b16 %v47
  %v345 = vunpack.c.l.b16 %v48
  %v346 = vunpack.c.l.b16 %v49
  %v347 = vpack.c.b16 %v332, %v331
  %v348 = vpack.c.b16 %v334, %v333
  %v349 = vpack.c.b16 %v336, %v335
  %v350 = vpack.c.b16 %v338, %v337
  %v351 = vpack.c.b16 %v340, %v339
  %v352 = vpack.c.b16 %v342, %v341
  %v353 = vpack.c.b16 %v344, %v343
  %v354 = vpack.c.b16 %v346, %v345
  %363 = vmatprep.subr.bf16.mxu0 0
  %364 = vmatpush1.bf16.msra.mxu0 %v347
  %365 = vmatprep.subr.bf16.mxu0 0
  %366 = vmatpush1.bf16.msra.mxu0 %v348
  %367 = vmatprep.subr.bf16.mxu0 0
  %368 = vmatpush1.bf16.msra.mxu0 %v349
  %369 = vmatprep.subr.bf16.mxu0 0
  %370 = vmatpush1.bf16.msra.mxu0 %v350
  %371 = vmatprep.subr.bf16.mxu0 0
  %372 = vmatpush1.bf16.msra.mxu0 %v351
  %373 = vmatprep.subr.bf16.mxu0 0
  %374 = vmatpush1.bf16.msra.mxu0 %v352
  %375 = vmatprep.subr.bf16.mxu0 0
  %376 = vmatpush1.bf16.msra.mxu0 %v353
  %377 = vmatprep.subr.bf16.mxu0 0
  %378 = vmatpush1.bf16.msra.mxu0 %v354
  %379 = vmatprep.subr.bf16.mxu0 0
  %380 = vmatpush1.bf16.msra.mxu0 0
  %381 = vmatprep.subr.bf16.mxu0 0
  %382 = vmatpush1.bf16.msra.mxu0 0
  %383 = vmatprep.subr.bf16.mxu0 0
  %384 = vmatpush1.bf16.msra.mxu0 0
  %385 = vmatprep.subr.bf16.mxu0 0
  %386 = vmatpush1.bf16.msra.mxu0 0
  %387 = vmatprep.subr.bf16.mxu0 0
  %388 = vmatpush1.bf16.msra.mxu0 0
  %389 = vmatprep.subr.bf16.mxu0 0
  %390 = vmatpush1.bf16.msra.mxu0 0
  %391 = vmatprep.subr.bf16.mxu0 0
  %392 = vmatpush1.bf16.msra.mxu0 0
  %393 = vmatprep.subr.bf16.mxu0 0
  %394 = vmatpush1.bf16.msra.mxu0 0
  %395 = vmatprep.mubr.bf16.mxu0 0
  %396 = vmatmul.mubr.bf16.gmra.mrb[0].mxu0 %v301
  %v397 = vpop.f32.mrb[0].mxu0
  %v398 = vadd.f32 %v313, %v397
  %v399 = vpop.f32.mrb[0].mxu0
  %v400 = vpop.f32.mrb[0].mxu0
  %v401 = vadd.f32 %v313, %v400
  %v402 = vpop.f32.mrb[0].mxu0
  %403 = vmatprep.mubr.bf16.mxu0 0
  %404 = vmatmul.mubr.bf16.gmra.mrb[0].mxu0 %v302
  %v405 = vpop.f32.mrb[0].mxu0
  %v406 = vadd.f32 %v313, %v405
  %v407 = vpop.f32.mrb[0].mxu0
  %v408 = vpop.f32.mrb[0].mxu0
  %v409 = vadd.f32 %v313, %v408
  %v410 = vpop.f32.mrb[0].mxu0
  %411 = vmatprep.mubr.bf16.mxu0 0
  %412 = vmatmul.mubr.bf16.gmra.mrb[0].mxu0 %v303
  %v413 = vpop.f32.mrb[0].mxu0
  %v414 = vadd.f32 %v313, %v413
  %v415 = vpop.f32.mrb[0].mxu0
  %v416 = vpop.f32.mrb[0].mxu0
  %v417 = vadd.f32 %v313, %v416
  %v418 = vpop.f32.mrb[0].mxu0
  %419 = vmatprep.mubr.bf16.mxu0 0
  %420 = vmatmul.mubr.bf16.gmra.mrb[0].mxu0 %v304
  %v421 = vpop.f32.mrb[0].mxu0
  %v422 = vadd.f32 %v313, %v421
  %v423 = vpop.f32.mrb[0].mxu0
  %v424 = vpop.f32.mrb[0].mxu0
  %v425 = vadd.f32 %v313, %v424
  %v426 = vpop.f32.mrb[0].mxu0
  %427 = vmatprep.mubr.bf16.mxu0 0
  %428 = vmatmul.mubr.bf16.gmra.mrb[0].mxu0 %v305
  %v429 = vpop.f32.mrb[0].mxu0
  %v430 = vadd.f32 %v313, %v429
  %v431 = vpop.f32.mrb[0].mxu0
  %v432 = vpop.f32.mrb[0].mxu0
  %v433 = vadd.f32 %v313, %v432
  %v434 = vpop.f32.mrb[0].mxu0
  %435 = vmatprep.mubr.bf16.mxu0 0
  %436 = vmatmul.mubr.bf16.gmra.mrb[0].mxu0 %v306
  %v437 = vpop.f32.mrb[0].mxu0
  %v438 = vadd.f32 %v313, %v437
  %v439 = vpop.f32.mrb[0].mxu0
  %v440 = vpop.f32.mrb[0].mxu0
  %v441 = vadd.f32 %v313, %v440
  %v442 = vpop.f32.mrb[0].mxu0
  %443 = vmatprep.mubr.bf16.mxu0 0
  %444 = vmatmul.mubr.bf16.gmra.mrb[0].mxu0 %v307
  %v445 = vpop.f32.mrb[0].mxu0
  %v446 = vadd.f32 %v313, %v445
  %v447 = vpop.f32.mrb[0].mxu0
  %v448 = vpop.f32.mrb[0].mxu0
  %v449 = vadd.f32 %v313, %v448
  %v450 = vpop.f32.mrb[0].mxu0
  %451 = vmatprep.mubr.bf16.mxu0 0
  %452 = vmatmul.mubr.bf16.gmra.mrb[0].mxu0 %v308
  %v453 = vpop.f32.mrb[0].mxu0
  %v454 = vadd.f32 %v313, %v453
  %v455 = vpop.f32.mrb[0].mxu0
  %v456 = vpop.f32.mrb[0].mxu0
  %v457 = vadd.f32 %v313, %v456
  %v458 = vpop.f32.mrb[0].mxu0
  %459 = vdwg.mxu0
  %v460 = vmax.f32 %v398, 0.0
  %v461 = vmax.f32 %v401, 0.0
  %v462 = vmax.f32 %v406, 0.0
  %v463 = vmax.f32 %v409, 0.0
  %v464 = vmax.f32 %v414, 0.0
  %v465 = vmax.f32 %v417, 0.0
  %v466 = vmax.f32 %v422, 0.0
  %v467 = vmax.f32 %v425, 0.0
  %v468 = vmax.f32 %v430, 0.0
  %v469 = vmax.f32 %v433, 0.0
  %v470 = vmax.f32 %v438, 0.0
  %v471 = vmax.f32 %v441, 0.0
  %v472 = vmax.f32 %v446, 0.0
  %v473 = vmax.f32 %v449, 0.0
  %v474 = vmax.f32 %v454, 0.0
  %v475 = vmax.f32 %v457, 0.0
  %477 = vset.pattern.permute.xlu0 0
  %478 = vperm.xlu0 %477, %v67
  %v479 = vpop.permute.xlu0 %478
  %482 = vset.pattern.permute.xlu0 0
  %483 = vperm.xlu0 %482, %v68
  %v484 = vpop.permute.xlu0 %483
  %487 = vset.pattern.permute.xlu0 0
  %488 = vperm.xlu0 %487, %v69
  %v489 = vpop.permute.xlu0 %488
  %492 = vset.pattern.permute.xlu0 0
  %493 = vperm.xlu0 %492, %v70
  %v494 = vpop.permute.xlu0 %493
  %497 = vset.pattern.permute.xlu0 0
  %498 = vperm.xlu0 %497, %v71
  %v499 = vpop.permute.xlu0 %498
  %502 = vset.pattern.permute.xlu0 0
  %503 = vperm.xlu0 %502, %v72
  %v504 = vpop.permute.xlu0 %503
  %507 = vset.pattern.permute.xlu0 0
  %508 = vperm.xlu0 %507, %v73
  %v509 = vpop.permute.xlu0 %508
  %512 = vset.pattern.permute.xlu0 0
  %513 = vperm.xlu0 %512, %v74
  %v514 = vpop.permute.xlu0 %513
  %517 = vset.pattern.permute.xlu0 0
  %518 = vperm.xlu0 %517, %v75
  %v519 = vpop.permute.xlu0 %518
  %522 = vset.pattern.permute.xlu0 0
  %523 = vperm.xlu0 %522, %v76
  %v524 = vpop.permute.xlu0 %523
  %527 = vset.pattern.permute.xlu0 0
  %528 = vperm.xlu0 %527, %v77
  %v529 = vpop.permute.xlu0 %528
  %532 = vset.pattern.permute.xlu0 0
  %533 = vperm.xlu0 %532, %v78
  %v534 = vpop.permute.xlu0 %533
  %537 = vset.pattern.permute.xlu0 0
  %538 = vperm.xlu0 %537, %v79
  %v539 = vpop.permute.xlu0 %538
  %542 = vset.pattern.permute.xlu0 0
  %543 = vperm.xlu0 %542, %v80
  %v544 = vpop.permute.xlu0 %543
  %547 = vset.pattern.permute.xlu0 0
  %548 = vperm.xlu0 %547, %v81
  %v549 = vpop.permute.xlu0 %548
  %552 = vset.pattern.permute.xlu0 0
  %553 = vperm.xlu0 %552, %v82
  %v554 = vpop.permute.xlu0 %553
  %v556 = vmul.f32 %v460, %v479
  %v557 = vmul.f32 %v461, %v484
  %v558 = vmul.f32 %v462, %v489
  %v559 = vmul.f32 %v463, %v494
  %v560 = vmul.f32 %v464, %v499
  %v561 = vmul.f32 %v465, %v504
  %v562 = vmul.f32 %v466, %v509
  %v563 = vmul.f32 %v467, %v514
  %v564 = vmul.f32 %v468, %v519
  %v565 = vmul.f32 %v469, %v524
  %v566 = vmul.f32 %v470, %v529
  %v567 = vmul.f32 %v471, %v534
  %v568 = vmul.f32 %v472, %v539
  %v569 = vmul.f32 %v473, %v544
  %v570 = vmul.f32 %v474, %v549
  %v571 = vmul.f32 %v475, %v554
  %v572 = vmax.f32 %v556, %v560
  %v573 = vmax.f32 %v558, %v562
  %v574 = vmax.f32 %v572, %v564
  %v575 = vmax.f32 %v573, %v566
  %v576 = vmax.f32 %v574, %v568
  %v577 = vmax.f32 %v575, %v570
  %v578 = vmax.f32 %v576, %v577
  %v579 = vmax.f32 %v557, %v561
  %v580 = vmax.f32 %v559, %v563
  %v581 = vmax.f32 %v579, %v565
  %v582 = vmax.f32 %v580, %v567
  %v583 = vmax.f32 %v581, %v569
  %v584 = vmax.f32 %v582, %v571
  %v585 = vmax.f32 %v583, %v584
  %v586 = vmax.f32 %v578, 0.0
  %v587 = vmax.f32 %v585, 0.0
  %s588 = scalar_lea.vmem %s0, 64
  %v589 = vld [vmem:[%s588] sm:$0xf]
  %v590 = vld [vmem:[%s588 + $0x4] sm:$0xf]
  %v591 = vld [vmem:[%s588 + $0x8] sm:$0xf]
  %v592 = vld [vmem:[%s588 + $0xc] sm:$0xf]
  %v593 = vld [vmem:[%s588 + $0x10] sm:$0xf]
  %v594 = vld [vmem:[%s588 + $0x14] sm:$0xf]
  %v595 = vld [vmem:[%s588 + $0x18] sm:$0xf]
  %v596 = vld [vmem:[%s588 + $0x1c] sm:$0xf]
  %v597 = vld [vmem:[%s588 + $0x20] sm:$0xf]
  %v598 = vld [vmem:[%s588 + $0x24] sm:$0xf]
  %v599 = vld [vmem:[%s588 + $0x28] sm:$0xf]
  %v600 = vld [vmem:[%s588 + $0x2c] sm:$0xf]
  %v601 = vld [vmem:[%s588 + $0x30] sm:$0xf]
  %v602 = vld [vmem:[%s588 + $0x34] sm:$0xf]
  %v603 = vld [vmem:[%s588 + $0x38] sm:$0xf]
  %v604 = vld [vmem:[%s588 + $0x3c] sm:$0xf]
  %s605 = scalar_lea.vmem %s1, 128
  %v606 = vld [vmem:[%s605] sm:$0xff]
  %v607 = vld [vmem:[%s605 + $0x8] sm:$0xff]
  %v608 = vld [vmem:[%s605 + $0x10] sm:$0xff]
  %v609 = vld [vmem:[%s605 + $0x18] sm:$0xff]
  %v610 = vld [vmem:[%s605 + $0x20] sm:$0xff]
  %v611 = vld [vmem:[%s605 + $0x28] sm:$0xff]
  %v612 = vld [vmem:[%s605 + $0x30] sm:$0xff]
  %v613 = vld [vmem:[%s605 + $0x38] sm:$0xff]
  %v614 = vld [vmem:[%s605 + $0x40] sm:$0xff]
  %v615 = vld [vmem:[%s605 + $0x48] sm:$0xff]
  %v616 = vld [vmem:[%s605 + $0x50] sm:$0xff]
  %v617 = vld [vmem:[%s605 + $0x58] sm:$0xff]
  %v618 = vld [vmem:[%s605 + $0x60] sm:$0xff]
  %v619 = vld [vmem:[%s605 + $0x68] sm:$0xff]
  %v620 = vld [vmem:[%s605 + $0x70] sm:$0xff]
  %v621 = vld [vmem:[%s605 + $0x78] sm:$0xff]
  %v638 = vunpack.c.l.b16 %v589
  %v639 = vunpack.c.l.b16 %v590
  %v640 = vunpack.c.l.b16 %v591
  %v641 = vunpack.c.l.b16 %v592
  %v642 = vunpack.c.l.b16 %v593
  %v643 = vunpack.c.l.b16 %v594
  %v644 = vunpack.c.l.b16 %v595
  %v645 = vunpack.c.l.b16 %v596
  %v646 = vunpack.c.l.b16 %v597
  %v647 = vunpack.c.l.b16 %v598
  %v648 = vunpack.c.l.b16 %v599
  %v649 = vunpack.c.l.b16 %v600
  %v650 = vunpack.c.l.b16 %v601
  %v651 = vunpack.c.l.b16 %v602
  %v652 = vunpack.c.l.b16 %v603
  %v653 = vunpack.c.l.b16 %v604
  %v654 = vpack.c.b16 %v639, %v638
  %v655 = vpack.c.b16 %v641, %v640
  %v656 = vpack.c.b16 %v643, %v642
  %v657 = vpack.c.b16 %v645, %v644
  %v658 = vpack.c.b16 %v647, %v646
  %v659 = vpack.c.b16 %v649, %v648
  %v660 = vpack.c.b16 %v651, %v650
  %v661 = vpack.c.b16 %v653, %v652
  %v663 = vsel %vm156, %v654, 0
  %v666 = vsel %vm156, %v655, 0
  %v669 = vsel %vm156, %v656, 0
  %v672 = vsel %vm156, %v657, 0
  %v675 = vsel %vm156, %v658, 0
  %v678 = vsel %vm156, %v659, 0
  %v681 = vsel %vm156, %v660, 0
  %v684 = vsel %vm156, %v661, 0
  %686 = vmatprep.subr.bf16.mxu0 0
  %687 = vmatpush1.bf16.msra.mxu0 %v147
  %688 = vmatprep.subr.bf16.mxu0 0
  %689 = vmatpush1.bf16.msra.mxu0 %v148
  %690 = vmatprep.subr.bf16.mxu0 0
  %691 = vmatpush1.bf16.msra.mxu0 %v149
  %692 = vmatprep.subr.bf16.mxu0 0
  %693 = vmatpush1.bf16.msra.mxu0 %v150
  %694 = vmatprep.subr.bf16.mxu0 0
  %695 = vmatpush1.bf16.msra.mxu0 %v186
  %696 = vmatprep.subr.bf16.mxu0 0
  %697 = vmatpush1.bf16.msra.mxu0 0
  %698 = vmatprep.subr.bf16.mxu0 0
  %699 = vmatpush1.bf16.msra.mxu0 0
  %700 = vmatprep.subr.bf16.mxu0 0
  %701 = vmatpush1.bf16.msra.mxu0 0
  %702 = vmatprep.subr.bf16.mxu0 0
  %703 = vmatpush1.bf16.msra.mxu0 0
  %704 = vmatprep.subr.bf16.mxu0 0
  %705 = vmatpush1.bf16.msra.mxu0 0
  %706 = vmatprep.subr.bf16.mxu0 0
  %707 = vmatpush1.bf16.msra.mxu0 0
  %708 = vmatprep.subr.bf16.mxu0 0
  %709 = vmatpush1.bf16.msra.mxu0 0
  %710 = vmatprep.subr.bf16.mxu0 0
  %711 = vmatpush1.bf16.msra.mxu0 0
  %712 = vmatprep.subr.bf16.mxu0 0
  %713 = vmatpush1.bf16.msra.mxu0 0
  %714 = vmatprep.subr.bf16.mxu0 0
  %715 = vmatpush1.bf16.msra.mxu0 0
  %716 = vmatprep.subr.bf16.mxu0 0
  %717 = vmatpush1.bf16.msra.mxu0 0
  %718 = vmatprep.mubr.bf16.mxu0 0
  %719 = vmatmul.mubr.bf16.gmra.mrb[0].mxu0 %v663
  %v720 = vpop.f32.mrb[0].mxu0
  %v721 = vadd.f32 %v87, %v720
  %v722 = vpop.f32.mrb[0].mxu0
  %v723 = vpop.f32.mrb[0].mxu0
  %v724 = vadd.f32 %v87, %v723
  %v725 = vpop.f32.mrb[0].mxu0
  %726 = vmatprep.mubr.bf16.mxu0 0
  %727 = vmatmul.mubr.bf16.gmra.mrb[0].mxu0 %v666
  %v728 = vpop.f32.mrb[0].mxu0
  %v729 = vadd.f32 %v87, %v728
  %v730 = vpop.f32.mrb[0].mxu0
  %v731 = vpop.f32.mrb[0].mxu0
  %v732 = vadd.f32 %v87, %v731
  %v733 = vpop.f32.mrb[0].mxu0
  %734 = vmatprep.mubr.bf16.mxu0 0
  %735 = vmatmul.mubr.bf16.gmra.mrb[0].mxu0 %v669
  %v736 = vpop.f32.mrb[0].mxu0
  %v737 = vadd.f32 %v87, %v736
  %v738 = vpop.f32.mrb[0].mxu0
  %v739 = vpop.f32.mrb[0].mxu0
  %v740 = vadd.f32 %v87, %v739
  %v741 = vpop.f32.mrb[0].mxu0
  %742 = vmatprep.mubr.bf16.mxu0 0
  %743 = vmatmul.mubr.bf16.gmra.mrb[0].mxu0 %v672
  %v744 = vpop.f32.mrb[0].mxu0
  %v745 = vadd.f32 %v87, %v744
  %v746 = vpop.f32.mrb[0].mxu0
  %v747 = vpop.f32.mrb[0].mxu0
  %v748 = vadd.f32 %v87, %v747
  %v749 = vpop.f32.mrb[0].mxu0
  %750 = vmatprep.mubr.bf16.mxu0 0
  %751 = vmatmul.mubr.bf16.gmra.mrb[0].mxu0 %v675
  %v752 = vpop.f32.mrb[0].mxu0
  %v753 = vadd.f32 %v87, %v752
  %v754 = vpop.f32.mrb[0].mxu0
  %v755 = vpop.f32.mrb[0].mxu0
  %v756 = vadd.f32 %v87, %v755
  %v757 = vpop.f32.mrb[0].mxu0
  %758 = vmatprep.mubr.bf16.mxu0 0
  %759 = vmatmul.mubr.bf16.gmra.mrb[0].mxu0 %v678
  %v760 = vpop.f32.mrb[0].mxu0
  %v761 = vadd.f32 %v87, %v760
  %v762 = vpop.f32.mrb[0].mxu0
  %v763 = vpop.f32.mrb[0].mxu0
  %v764 = vadd.f32 %v87, %v763
  %v765 = vpop.f32.mrb[0].mxu0
  %766 = vmatprep.mubr.bf16.mxu0 0
  %767 = vmatmul.mubr.bf16.gmra.mrb[0].mxu0 %v681
  %v768 = vpop.f32.mrb[0].mxu0
  %v769 = vadd.f32 %v87, %v768
  %v770 = vpop.f32.mrb[0].mxu0
  %v771 = vpop.f32.mrb[0].mxu0
  %v772 = vadd.f32 %v87, %v771
  %v773 = vpop.f32.mrb[0].mxu0
  %774 = vmatprep.mubr.bf16.mxu0 0
  %775 = vmatmul.mubr.bf16.gmra.mrb[0].mxu0 %v684
  %v776 = vpop.f32.mrb[0].mxu0
  %v777 = vadd.f32 %v87, %v776
  %v778 = vpop.f32.mrb[0].mxu0
  %v779 = vpop.f32.mrb[0].mxu0
  %v780 = vadd.f32 %v87, %v779
  %v781 = vpop.f32.mrb[0].mxu0
  %782 = vdwg.mxu0
  %v783 = vmax.f32 %v721, 0.0
  %v784 = vmax.f32 %v724, 0.0
  %v785 = vmax.f32 %v729, 0.0
  %v786 = vmax.f32 %v732, 0.0
  %v787 = vmax.f32 %v737, 0.0
  %v788 = vmax.f32 %v740, 0.0
  %v789 = vmax.f32 %v745, 0.0
  %v790 = vmax.f32 %v748, 0.0
  %v791 = vmax.f32 %v753, 0.0
  %v792 = vmax.f32 %v756, 0.0
  %v793 = vmax.f32 %v761, 0.0
  %v794 = vmax.f32 %v764, 0.0
  %v795 = vmax.f32 %v769, 0.0
  %v796 = vmax.f32 %v772, 0.0
  %v797 = vmax.f32 %v777, 0.0
  %v798 = vmax.f32 %v780, 0.0
  %v799 = vpack.c.bf16 %v784, %v783
  %v800 = vpack.c.bf16 %v786, %v785
  %v801 = vpack.c.bf16 %v788, %v787
  %v802 = vpack.c.bf16 %v790, %v789
  %v803 = vpack.c.bf16 %v792, %v791
  %v804 = vpack.c.bf16 %v794, %v793
  %v805 = vpack.c.bf16 %v796, %v795
  %v806 = vpack.c.bf16 %v798, %v797
  %807 = vmatprep.subr.bf16.mxu0 0
  %808 = vmatpush1.bf16.msra.mxu0 %v347
  %809 = vmatprep.subr.bf16.mxu0 0
  %810 = vmatpush1.bf16.msra.mxu0 %v348
  %811 = vmatprep.subr.bf16.mxu0 0
  %812 = vmatpush1.bf16.msra.mxu0 %v349
  %813 = vmatprep.subr.bf16.mxu0 0
  %814 = vmatpush1.bf16.msra.mxu0 %v350
  %815 = vmatprep.subr.bf16.mxu0 0
  %816 = vmatpush1.bf16.msra.mxu0 %v351
  %817 = vmatprep.subr.bf16.mxu0 0
  %818 = vmatpush1.bf16.msra.mxu0 %v352
  %819 = vmatprep.subr.bf16.mxu0 0
  %820 = vmatpush1.bf16.msra.mxu0 %v353
  %821 = vmatprep.subr.bf16.mxu0 0
  %822 = vmatpush1.bf16.msra.mxu0 %v354
  %823 = vmatprep.subr.bf16.mxu0 0
  %824 = vmatpush1.bf16.msra.mxu0 0
  %825 = vmatprep.subr.bf16.mxu0 0
  %826 = vmatpush1.bf16.msra.mxu0 0
  %827 = vmatprep.subr.bf16.mxu0 0
  %828 = vmatpush1.bf16.msra.mxu0 0
  %829 = vmatprep.subr.bf16.mxu0 0
  %830 = vmatpush1.bf16.msra.mxu0 0
  %831 = vmatprep.subr.bf16.mxu0 0
  %832 = vmatpush1.bf16.msra.mxu0 0
  %833 = vmatprep.subr.bf16.mxu0 0
  %834 = vmatpush1.bf16.msra.mxu0 0
  %835 = vmatprep.subr.bf16.mxu0 0
  %836 = vmatpush1.bf16.msra.mxu0 0
  %837 = vmatprep.subr.bf16.mxu0 0
  %838 = vmatpush1.bf16.msra.mxu0 0
  %839 = vmatprep.mubr.bf16.mxu0 0
  %840 = vmatmul.mubr.bf16.gmra.mrb[0].mxu0 %v799
  %v841 = vpop.f32.mrb[0].mxu0
  %v842 = vadd.f32 %v313, %v841
  %v843 = vpop.f32.mrb[0].mxu0
  %v844 = vpop.f32.mrb[0].mxu0
  %v845 = vadd.f32 %v313, %v844
  %v846 = vpop.f32.mrb[0].mxu0
  %847 = vmatprep.mubr.bf16.mxu0 0
  %848 = vmatmul.mubr.bf16.gmra.mrb[0].mxu0 %v800
  %v849 = vpop.f32.mrb[0].mxu0
  %v850 = vadd.f32 %v313, %v849
  %v851 = vpop.f32.mrb[0].mxu0
  %v852 = vpop.f32.mrb[0].mxu0
  %v853 = vadd.f32 %v313, %v852
  %v854 = vpop.f32.mrb[0].mxu0
  %855 = vmatprep.mubr.bf16.mxu0 0
  %856 = vmatmul.mubr.bf16.gmra.mrb[0].mxu0 %v801
  %v857 = vpop.f32.mrb[0].mxu0
  %v858 = vadd.f32 %v313, %v857
  %v859 = vpop.f32.mrb[0].mxu0
  %v860 = vpop.f32.mrb[0].mxu0
  %v861 = vadd.f32 %v313, %v860
  %v862 = vpop.f32.mrb[0].mxu0
  %863 = vmatprep.mubr.bf16.mxu0 0
  %864 = vmatmul.mubr.bf16.gmra.mrb[0].mxu0 %v802
  %v865 = vpop.f32.mrb[0].mxu0
  %v866 = vadd.f32 %v313, %v865
  %v867 = vpop.f32.mrb[0].mxu0
  %v868 = vpop.f32.mrb[0].mxu0
  %v869 = vadd.f32 %v313, %v868
  %v870 = vpop.f32.mrb[0].mxu0
  %871 = vmatprep.mubr.bf16.mxu0 0
  %872 = vmatmul.mubr.bf16.gmra.mrb[0].mxu0 %v803
  %v873 = vpop.f32.mrb[0].mxu0
  %v874 = vadd.f32 %v313, %v873
  %v875 = vpop.f32.mrb[0].mxu0
  %v876 = vpop.f32.mrb[0].mxu0
  %v877 = vadd.f32 %v313, %v876
  %v878 = vpop.f32.mrb[0].mxu0
  %879 = vmatprep.mubr.bf16.mxu0 0
  %880 = vmatmul.mubr.bf16.gmra.mrb[0].mxu0 %v804
  %v881 = vpop.f32.mrb[0].mxu0
  %v882 = vadd.f32 %v313, %v881
  %v883 = vpop.f32.mrb[0].mxu0
  %v884 = vpop.f32.mrb[0].mxu0
  %v885 = vadd.f32 %v313, %v884
  %v886 = vpop.f32.mrb[0].mxu0
  %887 = vmatprep.mubr.bf16.mxu0 0
  %888 = vmatmul.mubr.bf16.gmra.mrb[0].mxu0 %v805
  %v889 = vpop.f32.mrb[0].mxu0
  %v890 = vadd.f32 %v313, %v889
  %v891 = vpop.f32.mrb[0].mxu0
  %v892 = vpop.f32.mrb[0].mxu0
  %v893 = vadd.f32 %v313, %v892
  %v894 = vpop.f32.mrb[0].mxu0
  %895 = vmatprep.mubr.bf16.mxu0 0
  %896 = vmatmul.mubr.bf16.gmra.mrb[0].mxu0 %v806
  %v897 = vpop.f32.mrb[0].mxu0
  %v898 = vadd.f32 %v313, %v897
  %v899 = vpop.f32.mrb[0].mxu0
  %v900 = vpop.f32.mrb[0].mxu0
  %v901 = vadd.f32 %v313, %v900
  %v902 = vpop.f32.mrb[0].mxu0
  %903 = vdwg.mxu0
  %v904 = vmax.f32 %v842, 0.0
  %v905 = vmax.f32 %v845, 0.0
  %v906 = vmax.f32 %v850, 0.0
  %v907 = vmax.f32 %v853, 0.0
  %v908 = vmax.f32 %v858, 0.0
  %v909 = vmax.f32 %v861, 0.0
  %v910 = vmax.f32 %v866, 0.0
  %v911 = vmax.f32 %v869, 0.0
  %v912 = vmax.f32 %v874, 0.0
  %v913 = vmax.f32 %v877, 0.0
  %v914 = vmax.f32 %v882, 0.0
  %v915 = vmax.f32 %v885, 0.0
  %v916 = vmax.f32 %v890, 0.0
  %v917 = vmax.f32 %v893, 0.0
  %v918 = vmax.f32 %v898, 0.0
  %v919 = vmax.f32 %v901, 0.0
  %921 = vset.pattern.permute.xlu0 0
  %922 = vperm.xlu0 %921, %v606
  %v923 = vpop.permute.xlu0 %922
  %926 = vset.pattern.permute.xlu0 0
  %927 = vperm.xlu0 %926, %v607
  %v928 = vpop.permute.xlu0 %927
  %931 = vset.pattern.permute.xlu0 0
  %932 = vperm.xlu0 %931, %v608
  %v933 = vpop.permute.xlu0 %932
  %936 = vset.pattern.permute.xlu0 0
  %937 = vperm.xlu0 %936, %v609
  %v938 = vpop.permute.xlu0 %937
  %941 = vset.pattern.permute.xlu0 0
  %942 = vperm.xlu0 %941, %v610
  %v943 = vpop.permute.xlu0 %942
  %946 = vset.pattern.permute.xlu0 0
  %947 = vperm.xlu0 %946, %v611
  %v948 = vpop.permute.xlu0 %947
  %951 = vset.pattern.permute.xlu0 0
  %952 = vperm.xlu0 %951, %v612
  %v953 = vpop.permute.xlu0 %952
  %956 = vset.pattern.permute.xlu0 0
  %957 = vperm.xlu0 %956, %v613
  %v958 = vpop.permute.xlu0 %957
  %961 = vset.pattern.permute.xlu0 0
  %962 = vperm.xlu0 %961, %v614
  %v963 = vpop.permute.xlu0 %962
  %966 = vset.pattern.permute.xlu0 0
  %967 = vperm.xlu0 %966, %v615
  %v968 = vpop.permute.xlu0 %967
  %971 = vset.pattern.permute.xlu0 0
  %972 = vperm.xlu0 %971, %v616
  %v973 = vpop.permute.xlu0 %972
  %976 = vset.pattern.permute.xlu0 0
  %977 = vperm.xlu0 %976, %v617
  %v978 = vpop.permute.xlu0 %977
  %981 = vset.pattern.permute.xlu0 0
  %982 = vperm.xlu0 %981, %v618
  %v983 = vpop.permute.xlu0 %982
  %986 = vset.pattern.permute.xlu0 0
  %987 = vperm.xlu0 %986, %v619
  %v988 = vpop.permute.xlu0 %987
  %991 = vset.pattern.permute.xlu0 0
  %992 = vperm.xlu0 %991, %v620
  %v993 = vpop.permute.xlu0 %992
  %996 = vset.pattern.permute.xlu0 0
  %997 = vperm.xlu0 %996, %v621
  %v998 = vpop.permute.xlu0 %997
  %v1000 = vmul.f32 %v904, %v923
  %v1001 = vmul.f32 %v905, %v928
  %v1002 = vmul.f32 %v906, %v933
  %v1003 = vmul.f32 %v907, %v938
  %v1004 = vmul.f32 %v908, %v943
  %v1005 = vmul.f32 %v909, %v948
  %v1006 = vmul.f32 %v910, %v953
  %v1007 = vmul.f32 %v911, %v958
  %v1008 = vmul.f32 %v912, %v963
  %v1009 = vmul.f32 %v913, %v968
  %v1010 = vmul.f32 %v914, %v973
  %v1011 = vmul.f32 %v915, %v978
  %v1012 = vmul.f32 %v916, %v983
  %v1013 = vmul.f32 %v917, %v988
  %v1014 = vmul.f32 %v918, %v993
  %v1015 = vmul.f32 %v919, %v998
  %v1016 = vmax.f32 %v1000, %v1004
  %v1017 = vmax.f32 %v1002, %v1006
  %v1018 = vmax.f32 %v1016, %v1008
  %v1019 = vmax.f32 %v1017, %v1010
  %v1020 = vmax.f32 %v1018, %v1012
  %v1021 = vmax.f32 %v1019, %v1014
  %v1022 = vmax.f32 %v1020, %v1021
  %v1023 = vmax.f32 %v1001, %v1005
  %v1024 = vmax.f32 %v1003, %v1007
  %v1025 = vmax.f32 %v1023, %v1009
  %v1026 = vmax.f32 %v1024, %v1011
  %v1027 = vmax.f32 %v1025, %v1013
  %v1028 = vmax.f32 %v1026, %v1015
  %v1029 = vmax.f32 %v1027, %v1028
  %v1030 = vmax.f32 %v586, %v1022
  %v1031 = vmax.f32 %v587, %v1029
  %1032 = vst [vmem:[%s6] sm:$0xff] %v1030
  %1033 = vst [vmem:[%s6 + $0x8] sm:$0xff] %v1031
  // Predicated region
  $region26: #{pointnet2_forward.6} parent=0 // pred_check
    _
  $region27: #{pointnet2_forward.6} parent=0 // pred_check_branch
    %1035 = sbr.rel (0) target = $region29
  $region28: #{pointnet2_forward.6} parent=0 // pred_region
    _
  $region29: #{pointnet2_forward.6} parent=0 // pred_fallthru
    _
  // Predicated region
  $region30: #{pointnet2_forward.6} parent=0 // pred_check
    _
  $region31: #{pointnet2_forward.6} parent=0 // pred_check_branch
    %1037 = sbr.rel (0) target = $region33
  $region32: #{pointnet2_forward.6} parent=0 // pred_region
    _
  $region33: #{pointnet2_forward.6} parent=0 // pred_fallthru
    _

// kernel: pointnet2_forward.7
$region0: #{pointnet2_forward.7}
  #allocation0 [shape = 'u32[]', space=smem, size = 0x4, offset = 0x4, fixed_abs, tag = 'smem constant byte address 0x4 - core index']
  #allocation1 [shape = 'u32[144,128]{1,0:T(1,128)}', space=vmem, size = 0x12000, scoped, tag = 'internal scratch']
  %s0 = inlined_call_operand.vmem [shape: bf16[8,8,131], index: 0, kind: input, shape index: {}]
  %s1 = inlined_call_operand.vmem [shape: f32[8,8,1], index: 1, kind: input, shape index: {}]
  %s2 = inlined_call_operand.vmem [shape: bf16[131,256], index: 2, kind: input, shape index: {}]
  %s3 = inlined_call_operand.vmem [shape: f32[1,256], index: 3, kind: input, shape index: {}]
  %s4 = inlined_call_operand.vmem [shape: bf16[256,256], index: 4, kind: input, shape index: {}]
  %s5 = inlined_call_operand.vmem [shape: f32[1,256], index: 5, kind: input, shape index: {}]
  %s6 = inlined_call_operand.vmem [shape: f32[8,256], index: 6, kind: output, shape index: {}]
  %s7 = sld [smem:[#allocation0]]
  $region34: #{pointnet2_forward.7} parent=0
    _
  %s9 = ssub.s32 1, %s7
  %s10 = scalar_select 0, %s9, %s7
  // Predicated region
  $region2: #{pointnet2_forward.7} parent=0 // pred_check
    _
  $region3: #{pointnet2_forward.7} parent=0 // pred_check_branch
    %12 = sbr.rel (0) target = $region5
  $region4: #{pointnet2_forward.7} parent=0 // pred_region
    _
  $region5: #{pointnet2_forward.7} parent=0 // pred_fallthru
    _
  // Predicated region
  $region6: #{pointnet2_forward.7} parent=0 // pred_check
    _
  $region7: #{pointnet2_forward.7} parent=0 // pred_check_branch
    %14 = sbr.rel (0) target = $region9
  $region8: #{pointnet2_forward.7} parent=0 // pred_region
    _
  $region9: #{pointnet2_forward.7} parent=0 // pred_fallthru
    _
  // Predicated region
  $region10: #{pointnet2_forward.7} parent=0 // pred_check
    _
  $region11: #{pointnet2_forward.7} parent=0 // pred_check_branch
    %16 = sbr.rel (0) target = $region13
  $region12: #{pointnet2_forward.7} parent=0 // pred_region
    _
  $region13: #{pointnet2_forward.7} parent=0 // pred_fallthru
    _
  // Predicated region
  $region14: #{pointnet2_forward.7} parent=0 // pred_check
    _
  $region15: #{pointnet2_forward.7} parent=0 // pred_check_branch
    %18 = sbr.rel (0) target = $region17
  $region16: #{pointnet2_forward.7} parent=0 // pred_region
    _
  $region17: #{pointnet2_forward.7} parent=0 // pred_fallthru
    _
  // Predicated region
  $region18: #{pointnet2_forward.7} parent=0 // pred_check
    _
  $region19: #{pointnet2_forward.7} parent=0 // pred_check_branch
    %20 = sbr.rel (0) target = $region21
  $region20: #{pointnet2_forward.7} parent=0 // pred_region
    _
  $region21: #{pointnet2_forward.7} parent=0 // pred_fallthru
    _
  // Predicated region
  $region22: #{pointnet2_forward.7} parent=0 // pred_check
    _
  $region23: #{pointnet2_forward.7} parent=0 // pred_check_branch
    %22 = sbr.rel (0) target = $region25
  $region24: #{pointnet2_forward.7} parent=0 // pred_region
    _
  $region25: #{pointnet2_forward.7} parent=0 // pred_fallthru
    _
  %v24 = vld [vmem:[%s2] sm:$0xff]
  %v25 = vld [vmem:[%s2 + $0x8] sm:$0xff]
  %v26 = vld [vmem:[%s2 + $0x10] sm:$0xff]
  %v27 = vld [vmem:[%s2 + $0x18] sm:$0xff]
  %v28 = vld [vmem:[%s2 + $0x20] sm:$0xff]
  %v29 = vld [vmem:[%s2 + $0x28] sm:$0xff]
  %v30 = vld [vmem:[%s2 + $0x30] sm:$0xff]
  %v31 = vld [vmem:[%s2 + $0x38] sm:$0xff]
  %v32 = vld [vmem:[%s2 + $0x40] sm:$0xff]
  %v33 = vld [vmem:[%s2 + $0x48] sm:$0xff]
  %v34 = vld [vmem:[%s2 + $0x50] sm:$0xff]
  %v35 = vld [vmem:[%s2 + $0x58] sm:$0xff]
  %v36 = vld [vmem:[%s2 + $0x60] sm:$0xff]
  %v37 = vld [vmem:[%s2 + $0x68] sm:$0xff]
  %v38 = vld [vmem:[%s2 + $0x70] sm:$0xff]
  %v39 = vld [vmem:[%s2 + $0x78] sm:$0xff]
  %v40 = vld [vmem:[%s2 + $0x80] sm:$0x33]
  %v41 = vld [vmem:[%s3] sm:$0x3]
  %v42 = vld [vmem:[%s4] sm:$0xff]
  %v43 = vld [vmem:[%s4 + $0x8] sm:$0xff]
  %v44 = vld [vmem:[%s4 + $0x10] sm:$0xff]
  %v45 = vld [vmem:[%s4 + $0x18] sm:$0xff]
  %v46 = vld [vmem:[%s4 + $0x20] sm:$0xff]
  %v47 = vld [vmem:[%s4 + $0x28] sm:$0xff]
  %v48 = vld [vmem:[%s4 + $0x30] sm:$0xff]
  %v49 = vld [vmem:[%s4 + $0x38] sm:$0xff]
  %v50 = vld [vmem:[%s4 + $0x40] sm:$0xff]
  %v51 = vld [vmem:[%s4 + $0x48] sm:$0xff]
  %v52 = vld [vmem:[%s4 + $0x50] sm:$0xff]
  %v53 = vld [vmem:[%s4 + $0x58] sm:$0xff]
  %v54 = vld [vmem:[%s4 + $0x60] sm:$0xff]
  %v55 = vld [vmem:[%s4 + $0x68] sm:$0xff]
  %v56 = vld [vmem:[%s4 + $0x70] sm:$0xff]
  %v57 = vld [vmem:[%s4 + $0x78] sm:$0xff]
  %v58 = vld [vmem:[%s4 + $0x80] sm:$0xff]
  %v59 = vld [vmem:[%s4 + $0x88] sm:$0xff]
  %v60 = vld [vmem:[%s4 + $0x90] sm:$0xff]
  %v61 = vld [vmem:[%s4 + $0x98] sm:$0xff]
  %v62 = vld [vmem:[%s4 + $0xa0] sm:$0xff]
  %v63 = vld [vmem:[%s4 + $0xa8] sm:$0xff]
  %v64 = vld [vmem:[%s4 + $0xb0] sm:$0xff]
  %v65 = vld [vmem:[%s4 + $0xb8] sm:$0xff]
  %v66 = vld [vmem:[%s4 + $0xc0] sm:$0xff]
  %v67 = vld [vmem:[%s4 + $0xc8] sm:$0xff]
  %v68 = vld [vmem:[%s4 + $0xd0] sm:$0xff]
  %v69 = vld [vmem:[%s4 + $0xd8] sm:$0xff]
  %v70 = vld [vmem:[%s4 + $0xe0] sm:$0xff]
  %v71 = vld [vmem:[%s4 + $0xe8] sm:$0xff]
  %v72 = vld [vmem:[%s4 + $0xf0] sm:$0xff]
  %v73 = vld [vmem:[%s4 + $0xf8] sm:$0xff]
  %v74 = vld [vmem:[%s5] sm:$0x3]
  %v75 = vld [vmem:[%s0] sm:$0xff]
  %v76 = vld [vmem:[%s0 + $0x8] sm:$0xff]
  %v77 = vld [vmem:[%s0 + $0x10] sm:$0xff]
  %v78 = vld [vmem:[%s0 + $0x18] sm:$0xff]
  %v79 = vld [vmem:[%s0 + $0x20] sm:$0xff]
  %v80 = vld [vmem:[%s0 + $0x28] sm:$0xff]
  %v81 = vld [vmem:[%s0 + $0x30] sm:$0xff]
  %v82 = vld [vmem:[%s0 + $0x38] sm:$0xff]
  %v83 = vld [vmem:[%s1] sm:$0xff]
  %v84 = vld [vmem:[%s1 + $0x8] sm:$0xff]
  %v85 = vld [vmem:[%s1 + $0x10] sm:$0xff]
  %v86 = vld [vmem:[%s1 + $0x18] sm:$0xff]
  %v87 = vld [vmem:[%s1 + $0x20] sm:$0xff]
  %v88 = vld [vmem:[%s1 + $0x28] sm:$0xff]
  %v89 = vld [vmem:[%s1 + $0x30] sm:$0xff]
  %v90 = vld [vmem:[%s1 + $0x38] sm:$0xff]
  %v92 = vlaneseq
  %v93 = vshrl.u32 %v92, 7
  %v94 = vsub.s32 0, %v93
  %v95 = vrot.slane %v41, %v94
  %v96 = vlaneseq
  %v97 = vshrl.u32 %v96, 7
  %v98 = vsub.s32 1, %v97
  %v99 = vrot.slane %v41, %v98
  %v110 = vunpack.c.l.b16 %v75
  %v111 = vunpack.c.h.b16 %v75
  %v112 = vunpack.c.l.b16 %v76
  %v113 = vunpack.c.h.b16 %v76
  %v114 = vunpack.c.l.b16 %v77
  %v115 = vunpack.c.h.b16 %v77
  %v116 = vunpack.c.l.b16 %v78
  %v117 = vunpack.c.h.b16 %v78
  %v118 = vunpack.c.l.b16 %v79
  %v119 = vunpack.c.h.b16 %v79
  %v120 = vunpack.c.l.b16 %v80
  %v121 = vunpack.c.h.b16 %v80
  %v122 = vunpack.c.l.b16 %v81
  %v123 = vunpack.c.h.b16 %v81
  %v124 = vunpack.c.l.b16 %v82
  %v125 = vunpack.c.h.b16 %v82
  %v126 = vpack.c.b16 %v112, %v110
  %v127 = vpack.c.b16 %v113, %v111
  %v128 = vpack.c.b16 %v116, %v114
  %v129 = vpack.c.b16 %v117, %v115
  %v130 = vpack.c.b16 %v120, %v118
  %v131 = vpack.c.b16 %v121, %v119
  %v132 = vpack.c.b16 %v124, %v122
  %v133 = vpack.c.b16 %v125, %v123
  %v155 = vunpack.c.l.b16 %v24
  %v156 = vunpack.c.h.b16 %v24
  %v157 = vunpack.c.l.b16 %v25
  %v158 = vunpack.c.h.b16 %v25
  %v159 = vunpack.c.l.b16 %v26
  %v160 = vunpack.c.h.b16 %v26
  %v161 = vunpack.c.l.b16 %v27
  %v162 = vunpack.c.h.b16 %v27
  %v163 = vunpack.c.l.b16 %v28
  %v164 = vunpack.c.h.b16 %v28
  %v165 = vunpack.c.l.b16 %v29
  %v166 = vunpack.c.h.b16 %v29
  %v167 = vunpack.c.l.b16 %v30
  %v168 = vunpack.c.h.b16 %v30
  %v169 = vunpack.c.l.b16 %v31
  %v170 = vunpack.c.h.b16 %v31
  %v171 = vunpack.c.l.b16 %v32
  %v172 = vunpack.c.h.b16 %v32
  %v173 = vunpack.c.l.b16 %v33
  %v174 = vunpack.c.h.b16 %v33
  %v175 = vunpack.c.l.b16 %v34
  %v176 = vunpack.c.h.b16 %v34
  %v177 = vunpack.c.l.b16 %v35
  %v178 = vunpack.c.h.b16 %v35
  %v179 = vunpack.c.l.b16 %v36
  %v180 = vunpack.c.h.b16 %v36
  %v181 = vunpack.c.l.b16 %v37
  %v182 = vunpack.c.h.b16 %v37
  %v183 = vunpack.c.l.b16 %v38
  %v184 = vunpack.c.h.b16 %v38
  %v185 = vunpack.c.l.b16 %v39
  %v186 = vunpack.c.h.b16 %v39
  %v187 = vunpack.c.l.b16 %v40
  %v188 = vunpack.c.h.b16 %v40
  %v189 = vpack.c.b16 %v157, %v155
  %v190 = vpack.c.b16 %v158, %v156
  %v191 = vpack.c.b16 %v161, %v159
  %v192 = vpack.c.b16 %v162, %v160
  %v193 = vpack.c.b16 %v165, %v163
  %v194 = vpack.c.b16 %v166, %v164
  %v195 = vpack.c.b16 %v169, %v167
  %v196 = vpack.c.b16 %v170, %v168
  %v197 = vpack.c.b16 %v173, %v171
  %v198 = vpack.c.b16 %v174, %v172
  %v199 = vpack.c.b16 %v177, %v175
  %v200 = vpack.c.b16 %v178, %v176
  %v201 = vpack.c.b16 %v181, %v179
  %v202 = vpack.c.b16 %v182, %v180
  %v203 = vpack.c.b16 %v185, %v183
  %v204 = vpack.c.b16 %v186, %v184
  %v205 = vpack.c.b16 %v187, %v187
  %v206 = vpack.c.b16 %v188, %v188
  %vm223 = vcmask 23552
  %v225 = vsel %vm223, %v127, 0
  %v228 = vsel %vm223, %v129, 0
  %v231 = vsel %vm223, %v131, 0
  %v234 = vsel %vm223, %v133, 0
  %vm236 = vcmask 1040384
  %vm237 = vcmask 1041408
  %v238 = vsel %vm236, 4294967295, 65535
  %v239 = vsel %vm237, %v238, 0
  %v241 = vand.u32 %v205, %v239
  %v244 = vand.u32 %v206, %v239
  %246 = vmatprep.subr.bf16.mxu0 %v190
  %247 = vmatpush1.bf16.msra.mxu0 %v189
  %248 = vmatprep.subr.bf16.mxu0 %v192
  %249 = vmatpush1.bf16.msra.mxu0 %v191
  %250 = vmatprep.subr.bf16.mxu0 %v194
  %251 = vmatpush1.bf16.msra.mxu0 %v193
  %252 = vmatprep.subr.bf16.mxu0 %v196
  %253 = vmatpush1.bf16.msra.mxu0 %v195
  %254 = vmatprep.subr.bf16.mxu0 %v198
  %255 = vmatpush1.bf16.msra.mxu0 %v197
  %256 = vmatprep.subr.bf16.mxu0 %v200
  %257 = vmatpush1.bf16.msra.mxu0 %v199
  %258 = vmatprep.subr.bf16.mxu0 %v202
  %259 = vmatpush1.bf16.msra.mxu0 %v201
  %260 = vmatprep.subr.bf16.mxu0 %v204
  %261 = vmatpush1.bf16.msra.mxu0 %v203
  %262 = vmatprep.subr.bf16.mxu0 %v244
  %263 = vmatpush1.bf16.msra.mxu0 %v241
  %264 = vmatprep.subr.bf16.mxu0 0
  %265 = vmatpush1.bf16.msra.mxu0 0
  %266 = vmatprep.subr.bf16.mxu0 0
  %267 = vmatpush1.bf16.msra.mxu0 0
  %268 = vmatprep.subr.bf16.mxu0 0
  %269 = vmatpush1.bf16.msra.mxu0 0
  %270 = vmatprep.subr.bf16.mxu0 0
  %271 = vmatpush1.bf16.msra.mxu0 0
  %272 = vmatprep.subr.bf16.mxu0 0
  %273 = vmatpush1.bf16.msra.mxu0 0
  %274 = vmatprep.subr.bf16.mxu0 0
  %275 = vmatpush1.bf16.msra.mxu0 0
  %276 = vmatprep.subr.bf16.mxu0 0
  %277 = vmatpush1.bf16.msra.mxu0 0
  %278 = vmatprep.mubr.bf16.mxu0 %v225
  %279 = vmatmul.mubr.bf16.gmra.mrb[0].mxu0 %v126
  %v280 = vpop.f32.mrb[0].mxu0
  %v281 = vadd.f32 %v95, %v280
  %v282 = vpop.f32.mrb[0].mxu0
  %v283 = vadd.f32 %v99, %v282
  %v284 = vpop.f32.mrb[0].mxu0
  %v285 = vadd.f32 %v95, %v284
  %v286 = vpop.f32.mrb[0].mxu0
  %v287 = vadd.f32 %v99, %v286
  %288 = vmatprep.mubr.bf16.mxu0 %v228
  %289 = vmatmul.mubr.bf16.gmra.mrb[0].mxu0 %v128
  %v290 = vpop.f32.mrb[0].mxu0
  %v291 = vadd.f32 %v95, %v290
  %v292 = vpop.f32.mrb[0].mxu0
  %v293 = vadd.f32 %v99, %v292
  %v294 = vpop.f32.mrb[0].mxu0
  %v295 = vadd.f32 %v95, %v294
  %v296 = vpop.f32.mrb[0].mxu0
  %v297 = vadd.f32 %v99, %v296
  %298 = vmatprep.mubr.bf16.mxu0 %v231
  %299 = vmatmul.mubr.bf16.gmra.mrb[0].mxu0 %v130
  %v300 = vpop.f32.mrb[0].mxu0
  %v301 = vadd.f32 %v95, %v300
  %v302 = vpop.f32.mrb[0].mxu0
  %v303 = vadd.f32 %v99, %v302
  %v304 = vpop.f32.mrb[0].mxu0
  %v305 = vadd.f32 %v95, %v304
  %v306 = vpop.f32.mrb[0].mxu0
  %v307 = vadd.f32 %v99, %v306
  %308 = vmatprep.mubr.bf16.mxu0 %v234
  %309 = vmatmul.mubr.bf16.gmra.mrb[0].mxu0 %v132
  %v310 = vpop.f32.mrb[0].mxu0
  %v311 = vadd.f32 %v95, %v310
  %v312 = vpop.f32.mrb[0].mxu0
  %v313 = vadd.f32 %v99, %v312
  %v314 = vpop.f32.mrb[0].mxu0
  %v315 = vadd.f32 %v95, %v314
  %v316 = vpop.f32.mrb[0].mxu0
  %v317 = vadd.f32 %v99, %v316
  %318 = vdwg.mxu0
  %v319 = vmax.f32 %v281, 0.0
  %v320 = vmax.f32 %v283, 0.0
  %v321 = vmax.f32 %v285, 0.0
  %v322 = vmax.f32 %v287, 0.0
  %v323 = vmax.f32 %v291, 0.0
  %v324 = vmax.f32 %v293, 0.0
  %v325 = vmax.f32 %v295, 0.0
  %v326 = vmax.f32 %v297, 0.0
  %v327 = vmax.f32 %v301, 0.0
  %v328 = vmax.f32 %v303, 0.0
  %v329 = vmax.f32 %v305, 0.0
  %v330 = vmax.f32 %v307, 0.0
  %v331 = vmax.f32 %v311, 0.0
  %v332 = vmax.f32 %v313, 0.0
  %v333 = vmax.f32 %v315, 0.0
  %v334 = vmax.f32 %v317, 0.0
  %v335 = vpack.c.bf16 %v321, %v319
  %v336 = vpack.c.bf16 %v322, %v320
  %v337 = vpack.c.bf16 %v325, %v323
  %v338 = vpack.c.bf16 %v326, %v324
  %v339 = vpack.c.bf16 %v329, %v327
  %v340 = vpack.c.bf16 %v330, %v328
  %v341 = vpack.c.bf16 %v333, %v331
  %v342 = vpack.c.bf16 %v334, %v332
  %v344 = vlaneseq
  %v345 = vshrl.u32 %v344, 7
  %v346 = vsub.s32 0, %v345
  %v347 = vrot.slane %v74, %v346
  %v348 = vlaneseq
  %v349 = vshrl.u32 %v348, 7
  %v350 = vsub.s32 1, %v349
  %v351 = vrot.slane %v74, %v350
  %v386 = vunpack.c.l.b16 %v42
  %v387 = vunpack.c.h.b16 %v42
  %v388 = vunpack.c.l.b16 %v43
  %v389 = vunpack.c.h.b16 %v43
  %v390 = vunpack.c.l.b16 %v44
  %v391 = vunpack.c.h.b16 %v44
  %v392 = vunpack.c.l.b16 %v45
  %v393 = vunpack.c.h.b16 %v45
  %v394 = vunpack.c.l.b16 %v46
  %v395 = vunpack.c.h.b16 %v46
  %v396 = vunpack.c.l.b16 %v47
  %v397 = vunpack.c.h.b16 %v47
  %v398 = vunpack.c.l.b16 %v48
  %v399 = vunpack.c.h.b16 %v48
  %v400 = vunpack.c.l.b16 %v49
  %v401 = vunpack.c.h.b16 %v49
  %v402 = vunpack.c.l.b16 %v50
  %v403 = vunpack.c.h.b16 %v50
  %v404 = vunpack.c.l.b16 %v51
  %v405 = vunpack.c.h.b16 %v51
  %v406 = vunpack.c.l.b16 %v52
  %v407 = vunpack.c.h.b16 %v52
  %v408 = vunpack.c.l.b16 %v53
  %v409 = vunpack.c.h.b16 %v53
  %v410 = vunpack.c.l.b16 %v54
  %v411 = vunpack.c.h.b16 %v54
  %v412 = vunpack.c.l.b16 %v55
  %v413 = vunpack.c.h.b16 %v55
  %v414 = vunpack.c.l.b16 %v56
  %v415 = vunpack.c.h.b16 %v56
  %v416 = vunpack.c.l.b16 %v57
  %v417 = vunpack.c.h.b16 %v57
  %v418 = vunpack.c.l.b16 %v58
  %v419 = vunpack.c.h.b16 %v58
  %v420 = vunpack.c.l.b16 %v59
  %v421 = vunpack.c.h.b16 %v59
  %v422 = vunpack.c.l.b16 %v60
  %v423 = vunpack.c.h.b16 %v60
  %v424 = vunpack.c.l.b16 %v61
  %v425 = vunpack.c.h.b16 %v61
  %v426 = vunpack.c.l.b16 %v62
  %v427 = vunpack.c.h.b16 %v62
  %v428 = vunpack.c.l.b16 %v63
  %v429 = vunpack.c.h.b16 %v63
  %v430 = vunpack.c.l.b16 %v64
  %v431 = vunpack.c.h.b16 %v64
  %v432 = vunpack.c.l.b16 %v65
  %v433 = vunpack.c.h.b16 %v65
  %v434 = vunpack.c.l.b16 %v66
  %v435 = vunpack.c.h.b16 %v66
  %v436 = vunpack.c.l.b16 %v67
  %v437 = vunpack.c.h.b16 %v67
  %v438 = vunpack.c.l.b16 %v68
  %v439 = vunpack.c.h.b16 %v68
  %v440 = vunpack.c.l.b16 %v69
  %v441 = vunpack.c.h.b16 %v69
  %v442 = vunpack.c.l.b16 %v70
  %v443 = vunpack.c.h.b16 %v70
  %v444 = vunpack.c.l.b16 %v71
  %v445 = vunpack.c.h.b16 %v71
  %v446 = vunpack.c.l.b16 %v72
  %v447 = vunpack.c.h.b16 %v72
  %v448 = vunpack.c.l.b16 %v73
  %v449 = vunpack.c.h.b16 %v73
  %v450 = vpack.c.b16 %v388, %v386
  %v451 = vpack.c.b16 %v389, %v387
  %v452 = vpack.c.b16 %v392, %v390
  %v453 = vpack.c.b16 %v393, %v391
  %v454 = vpack.c.b16 %v396, %v394
  %v455 = vpack.c.b16 %v397, %v395
  %v456 = vpack.c.b16 %v400, %v398
  %v457 = vpack.c.b16 %v401, %v399
  %v458 = vpack.c.b16 %v404, %v402
  %v459 = vpack.c.b16 %v405, %v403
  %v460 = vpack.c.b16 %v408, %v406
  %v461 = vpack.c.b16 %v409, %v407
  %v462 = vpack.c.b16 %v412, %v410
  %v463 = vpack.c.b16 %v413, %v411
  %v464 = vpack.c.b16 %v416, %v414
  %v465 = vpack.c.b16 %v417, %v415
  %v466 = vpack.c.b16 %v420, %v418
  %v467 = vpack.c.b16 %v421, %v419
  %v468 = vpack.c.b16 %v424, %v422
  %v469 = vpack.c.b16 %v425, %v423
  %v470 = vpack.c.b16 %v428, %v426
  %v471 = vpack.c.b16 %v429, %v427
  %v472 = vpack.c.b16 %v432, %v430
  %v473 = vpack.c.b16 %v433, %v431
  %v474 = vpack.c.b16 %v436, %v434
  %v475 = vpack.c.b16 %v437, %v435
  %v476 = vpack.c.b16 %v440, %v438
  %v477 = vpack.c.b16 %v441, %v439
  %v478 = vpack.c.b16 %v444, %v442
  %v479 = vpack.c.b16 %v445, %v443
  %v480 = vpack.c.b16 %v448, %v446
  %v481 = vpack.c.b16 %v449, %v447
  %514 = vmatprep.subr.bf16.mxu0 %v451
  %515 = vmatpush1.bf16.msra.mxu0 %v450
  %516 = vmatprep.subr.bf16.mxu0 %v453
  %517 = vmatpush1.bf16.msra.mxu0 %v452
  %518 = vmatprep.subr.bf16.mxu0 %v455
  %519 = vmatpush1.bf16.msra.mxu0 %v454
  %520 = vmatprep.subr.bf16.mxu0 %v457
  %521 = vmatpush1.bf16.msra.mxu0 %v456
  %522 = vmatprep.subr.bf16.mxu0 %v459
  %523 = vmatpush1.bf16.msra.mxu0 %v458
  %524 = vmatprep.subr.bf16.mxu0 %v461
  %525 = vmatpush1.bf16.msra.mxu0 %v460
  %526 = vmatprep.subr.bf16.mxu0 %v463
  %527 = vmatpush1.bf16.msra.mxu0 %v462
  %528 = vmatprep.subr.bf16.mxu0 %v465
  %529 = vmatpush1.bf16.msra.mxu0 %v464
  %530 = vmatprep.subr.bf16.mxu0 %v467
  %531 = vmatpush1.bf16.msra.mxu0 %v466
  %532 = vmatprep.subr.bf16.mxu0 %v469
  %533 = vmatpush1.bf16.msra.mxu0 %v468
  %534 = vmatprep.subr.bf16.mxu0 %v471
  %535 = vmatpush1.bf16.msra.mxu0 %v470
  %536 = vmatprep.subr.bf16.mxu0 %v473
  %537 = vmatpush1.bf16.msra.mxu0 %v472
  %538 = vmatprep.subr.bf16.mxu0 %v475
  %539 = vmatpush1.bf16.msra.mxu0 %v474
  %540 = vmatprep.subr.bf16.mxu0 %v477
  %541 = vmatpush1.bf16.msra.mxu0 %v476
  %542 = vmatprep.subr.bf16.mxu0 %v479
  %543 = vmatpush1.bf16.msra.mxu0 %v478
  %544 = vmatprep.subr.bf16.mxu0 %v481
  %545 = vmatpush1.bf16.msra.mxu0 %v480
  %546 = vmatprep.mubr.bf16.mxu0 %v336
  %547 = vmatmul.mubr.bf16.gmra.mrb[0].mxu0 %v335
  %v548 = vpop.f32.mrb[0].mxu0
  %v549 = vadd.f32 %v347, %v548
  %v550 = vpop.f32.mrb[0].mxu0
  %v551 = vadd.f32 %v351, %v550
  %v552 = vpop.f32.mrb[0].mxu0
  %v553 = vadd.f32 %v347, %v552
  %v554 = vpop.f32.mrb[0].mxu0
  %v555 = vadd.f32 %v351, %v554
  %556 = vmatprep.mubr.bf16.mxu0 %v338
  %557 = vmatmul.mubr.bf16.gmra.mrb[0].mxu0 %v337
  %v558 = vpop.f32.mrb[0].mxu0
  %v559 = vadd.f32 %v347, %v558
  %v560 = vpop.f32.mrb[0].mxu0
  %v561 = vadd.f32 %v351, %v560
  %v562 = vpop.f32.mrb[0].mxu0
  %v563 = vadd.f32 %v347, %v562
  %v564 = vpop.f32.mrb[0].mxu0
  %v565 = vadd.f32 %v351, %v564
  %566 = vmatprep.mubr.bf16.mxu0 %v340
  %567 = vmatmul.mubr.bf16.gmra.mrb[0].mxu0 %v339
  %v568 = vpop.f32.mrb[0].mxu0
  %v569 = vadd.f32 %v347, %v568
  %v570 = vpop.f32.mrb[0].mxu0
  %v571 = vadd.f32 %v351, %v570
  %v572 = vpop.f32.mrb[0].mxu0
  %v573 = vadd.f32 %v347, %v572
  %v574 = vpop.f32.mrb[0].mxu0
  %v575 = vadd.f32 %v351, %v574
  %576 = vmatprep.mubr.bf16.mxu0 %v342
  %577 = vmatmul.mubr.bf16.gmra.mrb[0].mxu0 %v341
  %v578 = vpop.f32.mrb[0].mxu0
  %v579 = vadd.f32 %v347, %v578
  %v580 = vpop.f32.mrb[0].mxu0
  %v581 = vadd.f32 %v351, %v580
  %v582 = vpop.f32.mrb[0].mxu0
  %v583 = vadd.f32 %v347, %v582
  %v584 = vpop.f32.mrb[0].mxu0
  %v585 = vadd.f32 %v351, %v584
  %586 = vdwg.mxu0
  %v587 = vmax.f32 %v549, 0.0
  %v588 = vmax.f32 %v551, 0.0
  %v589 = vmax.f32 %v553, 0.0
  %v590 = vmax.f32 %v555, 0.0
  %v591 = vmax.f32 %v559, 0.0
  %v592 = vmax.f32 %v561, 0.0
  %v593 = vmax.f32 %v563, 0.0
  %v594 = vmax.f32 %v565, 0.0
  %v595 = vmax.f32 %v569, 0.0
  %v596 = vmax.f32 %v571, 0.0
  %v597 = vmax.f32 %v573, 0.0
  %v598 = vmax.f32 %v575, 0.0
  %v599 = vmax.f32 %v579, 0.0
  %v600 = vmax.f32 %v581, 0.0
  %v601 = vmax.f32 %v583, 0.0
  %v602 = vmax.f32 %v585, 0.0
  %604 = vset.pattern.permute.xlu0 0
  %605 = vperm.xlu0 %604, %v83
  %v606 = vpop.permute.xlu0 %605
  %609 = vset.pattern.permute.xlu0 0
  %610 = vperm.xlu0 %609, %v84
  %v611 = vpop.permute.xlu0 %610
  %614 = vset.pattern.permute.xlu0 0
  %615 = vperm.xlu0 %614, %v85
  %v616 = vpop.permute.xlu0 %615
  %619 = vset.pattern.permute.xlu0 0
  %620 = vperm.xlu0 %619, %v86
  %v621 = vpop.permute.xlu0 %620
  %624 = vset.pattern.permute.xlu0 0
  %625 = vperm.xlu0 %624, %v87
  %v626 = vpop.permute.xlu0 %625
  %629 = vset.pattern.permute.xlu0 0
  %630 = vperm.xlu0 %629, %v88
  %v631 = vpop.permute.xlu0 %630
  %634 = vset.pattern.permute.xlu0 0
  %635 = vperm.xlu0 %634, %v89
  %v636 = vpop.permute.xlu0 %635
  %639 = vset.pattern.permute.xlu0 0
  %640 = vperm.xlu0 %639, %v90
  %v641 = vpop.permute.xlu0 %640
  %v643 = vmul.f32 %v587, %v606
  %v644 = vmul.f32 %v588, %v606
  %v645 = vmul.f32 %v589, %v611
  %v646 = vmul.f32 %v590, %v611
  %v647 = vmul.f32 %v591, %v616
  %v648 = vmul.f32 %v592, %v616
  %v649 = vmul.f32 %v593, %v621
  %v650 = vmul.f32 %v594, %v621
  %v651 = vmul.f32 %v595, %v626
  %v652 = vmul.f32 %v596, %v626
  %v653 = vmul.f32 %v597, %v631
  %v654 = vmul.f32 %v598, %v631
  %v655 = vmul.f32 %v599, %v636
  %v656 = vmul.f32 %v600, %v636
  %v657 = vmul.f32 %v601, %v641
  %v658 = vmul.f32 %v602, %v641
  %v659 = vmax.f32 %v643, %v647
  %v660 = vmax.f32 %v645, %v649
  %v661 = vmax.f32 %v659, %v651
  %v662 = vmax.f32 %v660, %v653
  %v663 = vmax.f32 %v661, %v655
  %v664 = vmax.f32 %v662, %v657
  %v665 = vmax.f32 %v663, %v664
  %v666 = vmax.f32 %v644, %v648
  %v667 = vmax.f32 %v646, %v650
  %v668 = vmax.f32 %v666, %v652
  %v669 = vmax.f32 %v667, %v654
  %v670 = vmax.f32 %v668, %v656
  %v671 = vmax.f32 %v669, %v658
  %v672 = vmax.f32 %v670, %v671
  %v673 = vmax.f32 %v665, 0.0
  %v674 = vmax.f32 %v672, 0.0
  %675 = vst [vmem:[%s6] sm:$0xff] %v673
  %676 = vst [vmem:[%s6 + $0x8] sm:$0xff] %v674
  // Predicated region
  $region26: #{pointnet2_forward.7} parent=0 // pred_check
    _
  $region27: #{pointnet2_forward.7} parent=0 // pred_check_branch
    %678 = sbr.rel (0) target = $region29
  $region28: #{pointnet2_forward.7} parent=0 // pred_region
    _
  $region29: #{pointnet2_forward.7} parent=0 // pred_fallthru
    _
  // Predicated region
  $region30: #{pointnet2_forward.7} parent=0 // pred_check
    _
  $region31: #{pointnet2_forward.7} parent=0 // pred_check_branch
    %680 = sbr.rel (0) target = $region33
  $region32: #{pointnet2_forward.7} parent=0 // pred_region
    _
  $region33: #{pointnet2_forward.7} parent=0 // pred_fallthru
    _

// kernel: pointnet2_forward.8
$region0: #{pointnet2_forward.8}
  #allocation0 [shape = 'u32[]', space=smem, size = 0x4, offset = 0x4, fixed_abs, tag = 'smem constant byte address 0x4 - core index']
  #allocation1 [shape = 'u32[144,128]{1,0:T(1,128)}', space=vmem, size = 0x12000, scoped, tag = 'internal scratch']
  %s0 = inlined_call_operand.vmem [shape: bf16[2,8,259], index: 0, kind: input, shape index: {}]
  %s1 = inlined_call_operand.vmem [shape: bf16[259,512], index: 1, kind: input, shape index: {}]
  %s2 = inlined_call_operand.vmem [shape: f32[1,512], index: 2, kind: input, shape index: {}]
  %s3 = inlined_call_operand.vmem [shape: bf16[512,1024], index: 3, kind: input, shape index: {}]
  %s4 = inlined_call_operand.vmem [shape: f32[1,1024], index: 4, kind: input, shape index: {}]
  %s5 = inlined_call_operand.vmem [shape: f32[2,1,1024], index: 5, kind: output, shape index: {}]
  %s6 = sld [smem:[#allocation0]]
  $region61: #{pointnet2_forward.8} parent=0
    _
  %s8 = ssub.s32 1, %s6
  %s9 = scalar_select 0, %s8, %s6
  loop: start=0, step=1, limit=4
  $region2: #{pointnet2_forward.8} parent=0 // loop_pre_header
    _
  $region3: #{pointnet2_forward.8} parent=0 // loop_header
    %s11 = sphi 0, %s15
    %p12 = scmp.ge.s32.totalorder %s11, 4
    %s18 = sphi 0, %s30
    %s19 = sphi 0, %s26
    %s20 = sphi 0, %s18
    %s21 = sphi 0, %s19
    %s22 = sphi 0, %s20
    %s23 = sphi 0, %s21
    %s35 = sphi 0, %s37
    %s38 = sphi 0, %s35
    %s39 = sphi 0, %s38
    %s55 = sphi 0, %s39
    %s59 = sphi 0, %s59
    %s61 = sphi 0, %s59
    %s62 = sphi 0, %s61
    %s76 = sphi 0, %s62
    %s80 = sphi 0, %s80
    %s82 = sphi 0, %s80
    %s83 = sphi 0, %s82
    %s97 = sphi 0, %s83
    %s101 = sphi 0, %s101
    %s103 = sphi 0, %s101
    %s104 = sphi 0, %s103
    %s118 = sphi 0, %s104
    %s122 = sphi 0, %s122
    %s124 = sphi 0, %s122
    %s125 = sphi 0, %s124
    %s139 = sphi 0, %s125
    %s145 = sphi 0, %s147
    %s148 = sphi 0, %s145
    %s149 = sphi 0, %s148
    %s165 = sphi 0, %s149
  $region4: #{pointnet2_forward.8} parent=0 // loop_header_branch
    %14 = sbr.rel (%p12) target = $region8
  $region5: #{pointnet2_forward.8} parent=0 // loop_body
    %s16 = ssub.s32 %s11, 1
    %s17 = ssub.s32 %s11, 2
    %s24 = sadd.s32 1, %s19
    %p25 = scmp.ge.s32.totalorder %s24, 1
    %s26 = scalar_select %p25, 0, %s24
    %s27 = sadd.s32 1, %s18
    %s28 = scalar_select %p25, %s27, %s18
    %p29 = scmp.ge.s32.totalorder %s28, 2
    %s30 = scalar_select %p29, 0, %s28
    %s31 = ssub.s32 %s18, %s30
    %s32 = ssub.s32 %s19, %s26
    %s33 = sor.u32 %s31, %s32
    %p34 = scmp.eq.s32.totalorder %s33, 0
    %s36 = sadd.s32 %s35, 1
    %s37 = scalar_select %p34, %s35, %s36
    %p40 = pneg %p34
    %p41 = scmp.eq.s32.totalorder %s11, 1
    %p42 = por %p40, %p41
    %p43 = scmp.ne.s32.totalorder %s35, %s38
    %p44 = scmp.eq.s32.totalorder %s11, 0
    %p45 = por %p43, %p44
    %p46 = scmp.ne.s32.totalorder %s35, %s38
    %p47 = scmp.eq.s32.totalorder %s16, 1
    %p48 = por %p46, %p47
    %p49 = scmp.ne.s32.totalorder %s38, %s39
    %p50 = scmp.eq.s32.totalorder %s16, 0
    %p51 = por %p49, %p50
    %p52 = scmp.ne.s32.totalorder %s38, %s39
    %p53 = scmp.eq.s32.totalorder %s17, 1
    %p54 = por %p52, %p53
    %p56 = scmp.ne.s32.totalorder %s39, %s55
    %p57 = scmp.eq.s32.totalorder %s17, 0
    %p58 = por %p56, %p57
    %s60 = sadd.s32 %s59, 1
    %p63 = scmp.eq.s32.totalorder %s11, 1
    %p64 = scmp.ne.s32.totalorder %s59, %s61
    %p65 = scmp.eq.s32.totalorder %s11, 0
    %p66 = por %p64, %p65
    %p67 = scmp.ne.s32.totalorder %s59, %s61
    %p68 = scmp.eq.s32.totalorder %s16, 1
    %p69 = por %p67, %p68
    %p70 = scmp.ne.s32.totalorder %s61, %s62
    %p71 = scmp.eq.s32.totalorder %s16, 0
    %p72 = por %p70, %p71
    %p73 = scmp.ne.s32.totalorder %s61, %s62
    %p74 = scmp.eq.s32.totalorder %s17, 1
    %p75 = por %p73, %p74
    %p77 = scmp.ne.s32.totalorder %s62, %s76
    %p78 = scmp.eq.s32.totalorder %s17, 0
    %p79 = por %p77, %p78
    %s81 = sadd.s32 %s80, 1
    %p84 = scmp.eq.s32.totalorder %s11, 1
    %p85 = scmp.ne.s32.totalorder %s80, %s82
    %p86 = scmp.eq.s32.totalorder %s11, 0
    %p87 = por %p85, %p86
    %p88 = scmp.ne.s32.totalorder %s80, %s82
    %p89 = scmp.eq.s32.totalorder %s16, 1
    %p90 = por %p88, %p89
    %p91 = scmp.ne.s32.totalorder %s82, %s83
    %p92 = scmp.eq.s32.totalorder %s16, 0
    %p93 = por %p91, %p92
    %p94 = scmp.ne.s32.totalorder %s82, %s83
    %p95 = scmp.eq.s32.totalorder %s17, 1
    %p96 = por %p94, %p95
    %p98 = scmp.ne.s32.totalorder %s83, %s97
    %p99 = scmp.eq.s32.totalorder %s17, 0
    %p100 = por %p98, %p99
    %s102 = sadd.s32 %s101, 1
    %p105 = scmp.eq.s32.totalorder %s11, 1
    %p106 = scmp.ne.s32.totalorder %s101, %s103
    %p107 = scmp.eq.s32.totalorder %s11, 0
    %p108 = por %p106, %p107
    %p109 = scmp.ne.s32.totalorder %s101, %s103
    %p110 = scmp.eq.s32.totalorder %s16, 1
    %p111 = por %p109, %p110
    %p112 = scmp.ne.s32.totalorder %s103, %s104
    %p113 = scmp.eq.s32.totalorder %s16, 0
    %p114 = por %p112, %p113
    %p115 = scmp.ne.s32.totalorder %s103, %s104
    %p116 = scmp.eq.s32.totalorder %s17, 1
    %p117 = por %p115, %p116
    %p119 = scmp.ne.s32.totalorder %s104, %s118
    %p120 = scmp.eq.s32.totalorder %s17, 0
    %p121 = por %p119, %p120
    %s123 = sadd.s32 %s122, 1
    %p126 = scmp.eq.s32.totalorder %s11, 1
    %p127 = scmp.ne.s32.totalorder %s122, %s124
    %p128 = scmp.eq.s32.totalorder %s11, 0
    %p129 = por %p127, %p128
    %p130 = scmp.ne.s32.totalorder %s122, %s124
    %p131 = scmp.eq.s32.totalorder %s16, 1
    %p132 = por %p130, %p131
    %p133 = scmp.ne.s32.totalorder %s124, %s125
    %p134 = scmp.eq.s32.totalorder %s16, 0
    %p135 = por %p133, %p134
    %p136 = scmp.ne.s32.totalorder %s124, %s125
    %p137 = scmp.eq.s32.totalorder %s17, 1
    %p138 = por %p136, %p137
    %p140 = scmp.ne.s32.totalorder %s125, %s139
    %p141 = scmp.eq.s32.totalorder %s17, 0
    %p142 = por %p140, %p141
    %s143 = ssub.s32 %s18, %s30
    %p144 = scmp.eq.s32.totalorder %s143, 0
    %s146 = sadd.s32 %s145, 1
    %s147 = scalar_select %p144, %s145, %s146
    %p150 = pneg %p144
    %p151 = scmp.eq.s32.totalorder %s11, 1
    %p152 = por %p150, %p151
    %p153 = scmp.ne.s32.totalorder %s145, %s148
    %p154 = scmp.eq.s32.totalorder %s11, 0
    %p155 = por %p153, %p154
    %p156 = scmp.ne.s32.totalorder %s145, %s148
    %p157 = scmp.eq.s32.totalorder %s16, 1
    %p158 = por %p156, %p157
    %p159 = scmp.ne.s32.totalorder %s148, %s149
    %p160 = scmp.eq.s32.totalorder %s16, 0
    %p161 = por %p159, %p160
    %p162 = scmp.ne.s32.totalorder %s148, %s149
    %p163 = scmp.eq.s32.totalorder %s17, 1
    %p164 = por %p162, %p163
    %p166 = scmp.ne.s32.totalorder %s149, %s165
    %p167 = scmp.eq.s32.totalorder %s17, 0
    %p168 = por %p166, %p167
    %p169 = scmp.le.s32.totalorder 1, %s11
    %p170 = scmp.lt.s32.totalorder %s11, 3
    %p171 = pnand %p169, %p170
    %p172 = pneg %p171
    // Predicated region
    $region9: #{pointnet2_forward.8} parent=5 // pred_check
      _
    $region10: #{pointnet2_forward.8} parent=5 // pred_check_branch
      %174 = sbr.rel (%p171) target = $region12
    $region11: #{pointnet2_forward.8} parent=5 // pred_region
      %s175 = ssub.s32 %s11, 1
      // Predicated region
      $region13: #{pointnet2_forward.8} parent=11 // pred_check
        %p176 = pneg %p72
      $region14: #{pointnet2_forward.8} parent=11 // pred_check_branch
        %178 = sbr.rel (%p176) target = $region16
      $region15: #{pointnet2_forward.8} parent=11 // pred_region
        _
      $region16: #{pointnet2_forward.8} parent=11 // pred_fallthru
        _
      // Predicated region
      $region17: #{pointnet2_forward.8} parent=11 // pred_check
        %p179 = pneg %p93
      $region18: #{pointnet2_forward.8} parent=11 // pred_check_branch
        %181 = sbr.rel (%p179) target = $region20
      $region19: #{pointnet2_forward.8} parent=11 // pred_region
        _
      $region20: #{pointnet2_forward.8} parent=11 // pred_fallthru
        _
      // Predicated region
      $region21: #{pointnet2_forward.8} parent=11 // pred_check
        %p182 = pneg %p114
      $region22: #{pointnet2_forward.8} parent=11 // pred_check_branch
        %184 = sbr.rel (%p182) target = $region24
      $region23: #{pointnet2_forward.8} parent=11 // pred_region
        _
      $region24: #{pointnet2_forward.8} parent=11 // pred_fallthru
        _
      // Predicated region
      $region25: #{pointnet2_forward.8} parent=11 // pred_check
        %p185 = pneg %p135
      $region26: #{pointnet2_forward.8} parent=11 // pred_check_branch
        %187 = sbr.rel (%p185) target = $region28
      $region27: #{pointnet2_forward.8} parent=11 // pred_region
        _
      $region28: #{pointnet2_forward.8} parent=11 // pred_fallthru
        _
    $region12: #{pointnet2_forward.8} parent=5 // pred_fallthru
      _
    %p188 = scmp.lt.s32.totalorder %s11, 2
    // Predicated region
    $region29: #{pointnet2_forward.8} parent=5 // pred_check
      %p189 = pneg %p188
    $region30: #{pointnet2_forward.8} parent=5 // pred_check_branch
      %191 = sbr.rel (%p189) target = $region32
    $region31: #{pointnet2_forward.8} parent=5 // pred_region
      // Predicated region
      $region33: #{pointnet2_forward.8} parent=31 // pred_check
        %p192 = pneg %p45
      $region34: #{pointnet2_forward.8} parent=31 // pred_check_branch
        %194 = sbr.rel (%p192) target = $region36
      $region35: #{pointnet2_forward.8} parent=31 // pred_region
        %p195 = scmp.lt.s32.totalorder %s18, 1
        %s196 = scalar_select %p195, %s18, 1
        %p197 = scmp.lt.s32.totalorder %s19, 0
        %s198 = scalar_select %p197, %s19, 0
        %s199 = smul.addr %s198, 3
        %s200 = smul.addr %s196, 3
        %s201 = sadd.s32 %s199, %s200
        %s202 = smul.addr %s201, 4
        %s203 = scalar_lea.vmem %s0, %s202
      $region36: #{pointnet2_forward.8} parent=31 // pred_fallthru
        _
    $region32: #{pointnet2_forward.8} parent=5 // pred_fallthru
      _
    %p204 = scmp.le.s32.totalorder 1, %s11
    %p205 = scmp.lt.s32.totalorder %s11, 3
    %p206 = pnand %p204, %p205
    %p207 = pneg %p206
    // Predicated region
    $region37: #{pointnet2_forward.8} parent=5 // pred_check
      _
    $region38: #{pointnet2_forward.8} parent=5 // pred_check_branch
      %209 = sbr.rel (%p206) target = $region40
    $region39: #{pointnet2_forward.8} parent=5 // pred_region
      %s210 = ssub.s32 %s11, 1
      %p211 = scmp.lt.s32.totalorder %s20, 1
      %s212 = scalar_select %p211, %s20, 1
      %p213 = scmp.lt.s32.totalorder %s21, 0
      %s214 = scalar_select %p213, %s21, 0
      %s215 = smul.addr %s214, 3
      %s216 = smul.addr %s212, 3
      %s217 = sadd.s32 %s215, %s216
      %s218 = smul.addr %s217, 4
      %s219 = scalar_lea.vmem %s0, %s218
      %p220 = pneg %p51
      %p221 = pneg %p48
      %p222 = pneg %p72
      %p223 = pneg %p69
      %p224 = pneg %p93
      %p225 = pneg %p90
      %p226 = pneg %p114
      %p227 = pneg %p111
      %p228 = pneg %p135
      %p229 = pneg %p132
      %p230 = pneg %p161
      %p231 = pneg %p158
      %p232 = scmp.lt.s32.totalorder %s20, 1
      %s233 = scalar_select %p232, %s20, 1
      %s234 = smul.addr %s233, 8
      %s235 = scalar_lea.vmem %s5, %s234
      %p236 = scmp.lt.s32.totalorder %s20, 1
      %s237 = scalar_select %p236, %s20, 1
      %p238 = scmp.lt.s32.totalorder %s21, 0
      %s239 = scalar_select %p238, %s21, 0
      %s240 = smul.addr %s239, 3
      %s241 = smul.addr %s237, 3
      %s242 = sadd.s32 %s240, %s241
      %s243 = smul.addr %s242, 4
      %s244 = scalar_lea.vmem %s0, %s243
      %p245 = scmp.lt.s32.totalorder %s20, 1
      %s246 = scalar_select %p245, %s20, 1
      %s247 = smul.addr %s246, 8
      %s248 = scalar_lea.vmem %s5, %s247
      %v250 = vld [vmem:[%s244] sm:$0xff]
      %v251 = vld [vmem:[%s244 + $0x8] sm:$0xf]
      %v252 = vld [vmem:[%s1] sm:$0xff]
      %v253 = vld [vmem:[%s1 + $0x8] sm:$0xff]
      %v254 = vld [vmem:[%s1 + $0x10] sm:$0xff]
      %v255 = vld [vmem:[%s1 + $0x18] sm:$0xff]
      %v256 = vld [vmem:[%s1 + $0x20] sm:$0xff]
      %v257 = vld [vmem:[%s1 + $0x28] sm:$0xff]
      %v258 = vld [vmem:[%s1 + $0x30] sm:$0xff]
      %v259 = vld [vmem:[%s1 + $0x38] sm:$0xff]
      %v260 = vld [vmem:[%s1 + $0x40] sm:$0xff]
      %v261 = vld [vmem:[%s1 + $0x48] sm:$0xff]
      %v262 = vld [vmem:[%s1 + $0x50] sm:$0xff]
      %v263 = vld [vmem:[%s1 + $0x58] sm:$0xff]
      %v264 = vld [vmem:[%s1 + $0x60] sm:$0xff]
      %v265 = vld [vmem:[%s1 + $0x68] sm:$0xff]
      %v266 = vld [vmem:[%s1 + $0x70] sm:$0xff]
      %v267 = vld [vmem:[%s1 + $0x78] sm:$0xff]
      %v268 = vld [vmem:[%s1 + $0x80] sm:$0xff]
      %v269 = vld [vmem:[%s1 + $0x88] sm:$0xff]
      %v270 = vld [vmem:[%s1 + $0x90] sm:$0xff]
      %v271 = vld [vmem:[%s1 + $0x98] sm:$0xff]
      %v272 = vld [vmem:[%s1 + $0xa0] sm:$0xff]
      %v273 = vld [vmem:[%s1 + $0xa8] sm:$0xff]
      %v274 = vld [vmem:[%s1 + $0xb0] sm:$0xff]
      %v275 = vld [vmem:[%s1 + $0xb8] sm:$0xff]
      %v276 = vld [vmem:[%s1 + $0xc0] sm:$0xff]
      %v277 = vld [vmem:[%s1 + $0xc8] sm:$0xff]
      %v278 = vld [vmem:[%s1 + $0xd0] sm:$0xff]
      %v279 = vld [vmem:[%s1 + $0xd8] sm:$0xff]
      %v280 = vld [vmem:[%s1 + $0xe0] sm:$0xff]
      %v281 = vld [vmem:[%s1 + $0xe8] sm:$0xff]
      %v282 = vld [vmem:[%s1 + $0xf0] sm:$0xff]
      %v283 = vld [vmem:[%s1 + $0xf8] sm:$0xff]
      %v284 = vld [vmem:[%s1 + $0x100] sm:$0xff]
      %v285 = vld [vmem:[%s1 + $0x108] sm:$0xff]
      %v286 = vld [vmem:[%s1 + $0x110] sm:$0xff]
      %v287 = vld [vmem:[%s1 + $0x118] sm:$0xff]
      %v288 = vld [vmem:[%s1 + $0x120] sm:$0xff]
      %v289 = vld [vmem:[%s1 + $0x128] sm:$0xff]
      %v290 = vld [vmem:[%s1 + $0x130] sm:$0xff]
      %v291 = vld [vmem:[%s1 + $0x138] sm:$0xff]
      %v292 = vld [vmem:[%s1 + $0x140] sm:$0xff]
      %v293 = vld [vmem:[%s1 + $0x148] sm:$0xff]
      %v294 = vld [vmem:[%s1 + $0x150] sm:$0xff]
      %v295 = vld [vmem:[%s1 + $0x158] sm:$0xff]
      %v296 = vld [vmem:[%s1 + $0x160] sm:$0xff]
      %v297 = vld [vmem:[%s1 + $0x168] sm:$0xff]
      %v298 = vld [vmem:[%s1 + $0x170] sm:$0xff]
      %v299 = vld [vmem:[%s1 + $0x178] sm:$0xff]
      %v300 = vld [vmem:[%s1 + $0x180] sm:$0xff]
      %v301 = vld [vmem:[%s1 + $0x188] sm:$0xff]
      %v302 = vld [vmem:[%s1 + $0x190] sm:$0xff]
      %v303 = vld [vmem:[%s1 + $0x198] sm:$0xff]
      %v304 = vld [vmem:[%s1 + $0x1a0] sm:$0xff]
      %v305 = vld [vmem:[%s1 + $0x1a8] sm:$0xff]
      %v306 = vld [vmem:[%s1 + $0x1b0] sm:$0xff]
      %v307 = vld [vmem:[%s1 + $0x1b8] sm:$0xff]
      %v308 = vld [vmem:[%s1 + $0x1c0] sm:$0xff]
      %v309 = vld [vmem:[%s1 + $0x1c8] sm:$0xff]
      %v310 = vld [vmem:[%s1 + $0x1d0] sm:$0xff]
      %v311 = vld [vmem:[%s1 + $0x1d8] sm:$0xff]
      %v312 = vld [vmem:[%s1 + $0x1e0] sm:$0xff]
      %v313 = vld [vmem:[%s1 + $0x1e8] sm:$0xff]
      %v314 = vld [vmem:[%s1 + $0x1f0] sm:$0xff]
      %v315 = vld [vmem:[%s1 + $0x1f8] sm:$0xff]
      %v316 = vld [vmem:[%s1 + $0x200] sm:$0x33]
      %v317 = vld [vmem:[%s1 + $0x208] sm:$0x33]
      %v318 = vld [vmem:[%s2] sm:$0xf]
      %v320 = vlaneseq
      %v321 = vshrl.u32 %v320, 7
      %v322 = vsub.s32 0, %v321
      %v323 = vrot.slane %v318, %v322
      %v324 = vlaneseq
      %v325 = vshrl.u32 %v324, 7
      %v326 = vsub.s32 1, %v325
      %v327 = vrot.slane %v318, %v326
      %v328 = vlaneseq
      %v329 = vshrl.u32 %v328, 7
      %v330 = vsub.s32 2, %v329
      %v331 = vrot.slane %v318, %v330
      %v332 = vlaneseq
      %v333 = vshrl.u32 %v332, 7
      %v334 = vsub.s32 3, %v333
      %v335 = vrot.slane %v318, %v334
      %v342 = vunpack.c.l.b16 %v250
      %v343 = vunpack.c.h.b16 %v250
      %v344 = vunpack.c.l.b16 %v251
      %v345 = vpack.c.b16 %v342, %v342
      %v346 = vpack.c.b16 %v343, %v343
      %v347 = vpack.c.b16 %v344, %v344
      %v416 = vunpack.c.l.b16 %v252
      %v417 = vunpack.c.h.b16 %v252
      %v418 = vunpack.c.l.b16 %v253
      %v419 = vunpack.c.h.b16 %v253
      %v420 = vunpack.c.l.b16 %v254
      %v421 = vunpack.c.h.b16 %v254
      %v422 = vunpack.c.l.b16 %v255
      %v423 = vunpack.c.h.b16 %v255
      %v424 = vunpack.c.l.b16 %v256
      %v425 = vunpack.c.h.b16 %v256
      %v426 = vunpack.c.l.b16 %v257
      %v427 = vunpack.c.h.b16 %v257
      %v428 = vunpack.c.l.b16 %v258
      %v429 = vunpack.c.h.b16 %v258
      %v430 = vunpack.c.l.b16 %v259
      %v431 = vunpack.c.h.b16 %v259
      %v432 = vunpack.c.l.b16 %v260
      %v433 = vunpack.c.h.b16 %v260
      %v434 = vunpack.c.l.b16 %v261
      %v435 = vunpack.c.h.b16 %v261
      %v436 = vunpack.c.l.b16 %v262
      %v437 = vunpack.c.h.b16 %v262
      %v438 = vunpack.c.l.b16 %v263
      %v439 = vunpack.c.h.b16 %v263
      %v440 = vunpack.c.l.b16 %v264
      %v441 = vunpack.c.h.b16 %v264
      %v442 = vunpack.c.l.b16 %v265
      %v443 = vunpack.c.h.b16 %v265
      %v444 = vunpack.c.l.b16 %v266
      %v445 = vunpack.c.h.b16 %v266
      %v446 = vunpack.c.l.b16 %v267
      %v447 = vunpack.c.h.b16 %v267
      %v448 = vunpack.c.l.b16 %v268
      %v449 = vunpack.c.h.b16 %v268
      %v450 = vunpack.c.l.b16 %v269
      %v451 = vunpack.c.h.b16 %v269
      %v452 = vunpack.c.l.b16 %v270
      %v453 = vunpack.c.h.b16 %v270
      %v454 = vunpack.c.l.b16 %v271
      %v455 = vunpack.c.h.b16 %v271
      %v456 = vunpack.c.l.b16 %v272
      %v457 = vunpack.c.h.b16 %v272
      %v458 = vunpack.c.l.b16 %v273
      %v459 = vunpack.c.h.b16 %v273
      %v460 = vunpack.c.l.b16 %v274
      %v461 = vunpack.c.h.b16 %v274
      %v462 = vunpack.c.l.b16 %v275
      %v463 = vunpack.c.h.b16 %v275
      %v464 = vunpack.c.l.b16 %v276
      %v465 = vunpack.c.h.b16 %v276
      %v466 = vunpack.c.l.b16 %v277
      %v467 = vunpack.c.h.b16 %v277
      %v468 = vunpack.c.l.b16 %v278
      %v469 = vunpack.c.h.b16 %v278
      %v470 = vunpack.c.l.b16 %v279
      %v471 = vunpack.c.h.b16 %v279
      %v472 = vunpack.c.l.b16 %v280
      %v473 = vunpack.c.h.b16 %v280
      %v474 = vunpack.c.l.b16 %v281
      %v475 = vunpack.c.h.b16 %v281
      %v476 = vunpack.c.l.b16 %v282
      %v477 = vunpack.c.h.b16 %v282
      %v478 = vunpack.c.l.b16 %v283
      %v479 = vunpack.c.h.b16 %v283
      %v480 = vunpack.c.l.b16 %v284
      %v481 = vunpack.c.h.b16 %v284
      %v482 = vunpack.c.l.b16 %v285
      %v483 = vunpack.c.h.b16 %v285
      %v484 = vunpack.c.l.b16 %v286
      %v485 = vunpack.c.h.b16 %v286
      %v486 = vunpack.c.l.b16 %v287
      %v487 = vunpack.c.h.b16 %v287
      %v488 = vunpack.c.l.b16 %v288
      %v489 = vunpack.c.h.b16 %v288
      %v490 = vunpack.c.l.b16 %v289
      %v491 = vunpack.c.h.b16 %v289
      %v492 = vunpack.c.l.b16 %v290
      %v493 = vunpack.c.h.b16 %v290
      %v494 = vunpack.c.l.b16 %v291
      %v495 = vunpack.c.h.b16 %v291
      %v496 = vunpack.c.l.b16 %v292
      %v497 = vunpack.c.h.b16 %v292
      %v498 = vunpack.c.l.b16 %v293
      %v499 = vunpack.c.h.b16 %v293
      %v500 = vunpack.c.l.b16 %v294
      %v501 = vunpack.c.h.b16 %v294
      %v502 = vunpack.c.l.b16 %v295
      %v503 = vunpack.c.h.b16 %v295
      %v504 = vunpack.c.l.b16 %v296
      %v505 = vunpack.c.h.b16 %v296
      %v506 = vunpack.c.l.b16 %v297
      %v507 = vunpack.c.h.b16 %v297
      %v508 = vunpack.c.l.b16 %v298
      %v509 = vunpack.c.h.b16 %v298
      %v510 = vunpack.c.l.b16 %v299
      %v511 = vunpack.c.h.b16 %v299
      %v512 = vunpack.c.l.b16 %v300
      %v513 = vunpack.c.h.b16 %v300
      %v514 = vunpack.c.l.b16 %v301
      %v515 = vunpack.c.h.b16 %v301
      %v516 = vunpack.c.l.b16 %v302
      %v517 = vunpack.c.h.b16 %v302
      %v518 = vunpack.c.l.b16 %v303
      %v519 = vunpack.c.h.b16 %v303
      %v520 = vunpack.c.l.b16 %v304
      %v521 = vunpack.c.h.b16 %v304
      %v522 = vunpack.c.l.b16 %v305
      %v523 = vunpack.c.h.b16 %v305
      %v524 = vunpack.c.l.b16 %v306
      %v525 = vunpack.c.h.b16 %v306
      %v526 = vunpack.c.l.b16 %v307
      %v527 = vunpack.c.h.b16 %v307
      %v528 = vunpack.c.l.b16 %v308
      %v529 = vunpack.c.h.b16 %v308
      %v530 = vunpack.c.l.b16 %v309
      %v531 = vunpack.c.h.b16 %v309
      %v532 = vunpack.c.l.b16 %v310
      %v533 = vunpack.c.h.b16 %v310
      %v534 = vunpack.c.l.b16 %v311
      %v535 = vunpack.c.h.b16 %v311
      %v536 = vunpack.c.l.b16 %v312
      %v537 = vunpack.c.h.b16 %v312
      %v538 = vunpack.c.l.b16 %v313
      %v539 = vunpack.c.h.b16 %v313
      %v540 = vunpack.c.l.b16 %v314
      %v541 = vunpack.c.h.b16 %v314
      %v542 = vunpack.c.l.b16 %v315
      %v543 = vunpack.c.h.b16 %v315
      %v544 = vunpack.c.l.b16 %v316
      %v545 = vunpack.c.h.b16 %v316
      %v546 = vunpack.c.l.b16 %v317
      %v547 = vunpack.c.h.b16 %v317
      %v548 = vpack.c.b16 %v420, %v416
      %v549 = vpack.c.b16 %v421, %v417
      %v550 = vpack.c.b16 %v422, %v418
      %v551 = vpack.c.b16 %v423, %v419
      %v552 = vpack.c.b16 %v428, %v424
      %v553 = vpack.c.b16 %v429, %v425
      %v554 = vpack.c.b16 %v430, %v426
      %v555 = vpack.c.b16 %v431, %v427
      %v556 = vpack.c.b16 %v436, %v432
      %v557 = vpack.c.b16 %v437, %v433
      %v558 = vpack.c.b16 %v438, %v434
      %v559 = vpack.c.b16 %v439, %v435
      %v560 = vpack.c.b16 %v444, %v440
      %v561 = vpack.c.b16 %v445, %v441
      %v562 = vpack.c.b16 %v446, %v442
      %v563 = vpack.c.b16 %v447, %v443
      %v564 = vpack.c.b16 %v452, %v448
      %v565 = vpack.c.b16 %v453, %v449
      %v566 = vpack.c.b16 %v454, %v450
      %v567 = vpack.c.b16 %v455, %v451
      %v568 = vpack.c.b16 %v460, %v456
      %v569 = vpack.c.b16 %v461, %v457
      %v570 = vpack.c.b16 %v462, %v458
      %v571 = vpack.c.b16 %v463, %v459
      %v572 = vpack.c.b16 %v468, %v464
      %v573 = vpack.c.b16 %v469, %v465
      %v574 = vpack.c.b16 %v470, %v466
      %v575 = vpack.c.b16 %v471, %v467
      %v576 = vpack.c.b16 %v476, %v472
      %v577 = vpack.c.b16 %v477, %v473
      %v578 = vpack.c.b16 %v478, %v474
      %v579 = vpack.c.b16 %v479, %v475
      %v580 = vpack.c.b16 %v484, %v480
      %v581 = vpack.c.b16 %v485, %v481
      %v582 = vpack.c.b16 %v486, %v482
      %v583 = vpack.c.b16 %v487, %v483
      %v584 = vpack.c.b16 %v492, %v488
      %v585 = vpack.c.b16 %v493, %v489
      %v586 = vpack.c.b16 %v494, %v490
      %v587 = vpack.c.b16 %v495, %v491
      %v588 = vpack.c.b16 %v500, %v496
      %v589 = vpack.c.b16 %v501, %v497
      %v590 = vpack.c.b16 %v502, %v498
      %v591 = vpack.c.b16 %v503, %v499
      %v592 = vpack.c.b16 %v508, %v504
      %v593 = vpack.c.b16 %v509, %v505
      %v594 = vpack.c.b16 %v510, %v506
      %v595 = vpack.c.b16 %v511, %v507
      %v596 = vpack.c.b16 %v516, %v512
      %v597 = vpack.c.b16 %v517, %v513
      %v598 = vpack.c.b16 %v518, %v514
      %v599 = vpack.c.b16 %v519, %v515
      %v600 = vpack.c.b16 %v524, %v520
      %v601 = vpack.c.b16 %v525, %v521
      %v602 = vpack.c.b16 %v526, %v522
      %v603 = vpack.c.b16 %v527, %v523
      %v604 = vpack.c.b16 %v532, %v528
      %v605 = vpack.c.b16 %v533, %v529
      %v606 = vpack.c.b16 %v534, %v530
      %v607 = vpack.c.b16 %v535, %v531
      %v608 = vpack.c.b16 %v540, %v536
      %v609 = vpack.c.b16 %v541, %v537
      %v610 = vpack.c.b16 %v542, %v538
      %v611 = vpack.c.b16 %v543, %v539
      %v612 = vpack.c.b16 %v544, %v544
      %v613 = vpack.c.b16 %v545, %v545
      %v614 = vpack.c.b16 %v546, %v546
      %v615 = vpack.c.b16 %v547, %v547
      %vm680 = vcmask 23552
      %v682 = vsel %vm680, %v347, 0
      %vm684 = vcmask 1040384
      %vm685 = vcmask 1041408
      %v686 = vsel %vm684, 4294967295, 65535
      %v687 = vsel %vm685, %v686, 0
      %v689 = vand.u32 %v612, %v687
      %v692 = vand.u32 %v613, %v687
      %v695 = vand.u32 %v614, %v687
      %v698 = vand.u32 %v615, %v687
      %700 = vmatprep.subr.bf16.mxu0 %v549
      %701 = vmatpush1.bf16.msra.mxu0 %v548
      %702 = vmatprep.subr.bf16.mxu0 %v553
      %703 = vmatpush1.bf16.msra.mxu0 %v552
      %704 = vmatprep.subr.bf16.mxu0 %v557
      %705 = vmatpush1.bf16.msra.mxu0 %v556
      %706 = vmatprep.subr.bf16.mxu0 %v561
      %707 = vmatpush1.bf16.msra.mxu0 %v560
      %708 = vmatprep.subr.bf16.mxu0 %v565
      %709 = vmatpush1.bf16.msra.mxu0 %v564
      %710 = vmatprep.subr.bf16.mxu0 %v569
      %711 = vmatpush1.bf16.msra.mxu0 %v568
      %712 = vmatprep.subr.bf16.mxu0 %v573
      %713 = vmatpush1.bf16.msra.mxu0 %v572
      %714 = vmatprep.subr.bf16.mxu0 %v577
      %715 = vmatpush1.bf16.msra.mxu0 %v576
      %716 = vmatprep.subr.bf16.mxu0 %v581
      %717 = vmatpush1.bf16.msra.mxu0 %v580
      %718 = vmatprep.subr.bf16.mxu0 %v585
      %719 = vmatpush1.bf16.msra.mxu0 %v584
      %720 = vmatprep.subr.bf16.mxu0 %v589
      %721 = vmatpush1.bf16.msra.mxu0 %v588
      %722 = vmatprep.subr.bf16.mxu0 %v593
      %723 = vmatpush1.bf16.msra.mxu0 %v592
      %724 = vmatprep.subr.bf16.mxu0 %v597
      %725 = vmatpush1.bf16.msra.mxu0 %v596
      %726 = vmatprep.subr.bf16.mxu0 %v601
      %727 = vmatpush1.bf16.msra.mxu0 %v600
      %728 = vmatprep.subr.bf16.mxu0 %v605
      %729 = vmatpush1.bf16.msra.mxu0 %v604
      %730 = vmatprep.subr.bf16.mxu0 %v609
      %731 = vmatpush1.bf16.msra.mxu0 %v608
      %732 = vmatprep.mubr.bf16.mxu0 %v346
      %733 = vmatmul.mubr.bf16.gmra.mrb[0].mxu0 %v345
      %v734 = vpop.f32.mrb[0].mxu0
      %v735 = vadd.f32 %v323, %v734
      %v736 = vpop.f32.mrb[0].mxu0
      %v737 = vadd.f32 %v327, %v736
      %v738 = vpop.f32.mrb[0].mxu0
      %v739 = vpop.f32.mrb[0].mxu0
      %740 = vdwg.mxu0
      %741 = vmatprep.subr.bf16.mxu0 %v692
      %742 = vmatpush1.bf16.msra.mxu0 %v689
      %743 = vmatprep.subr.bf16.mxu0 0
      %744 = vmatpush1.bf16.msra.mxu0 0
      %745 = vmatprep.subr.bf16.mxu0 0
      %746 = vmatpush1.bf16.msra.mxu0 0
      %747 = vmatprep.subr.bf16.mxu0 0
      %748 = vmatpush1.bf16.msra.mxu0 0
      %749 = vmatprep.subr.bf16.mxu0 0
      %750 = vmatpush1.bf16.msra.mxu0 0
      %751 = vmatprep.subr.bf16.mxu0 0
      %752 = vmatpush1.bf16.msra.mxu0 0
      %753 = vmatprep.subr.bf16.mxu0 0
      %754 = vmatpush1.bf16.msra.mxu0 0
      %755 = vmatprep.subr.bf16.mxu0 0
      %756 = vmatpush1.bf16.msra.mxu0 0
      %757 = vmatprep.subr.bf16.mxu0 0
      %758 = vmatpush1.bf16.msra.mxu0 0
      %759 = vmatprep.subr.bf16.mxu0 0
      %760 = vmatpush1.bf16.msra.mxu0 0
      %761 = vmatprep.subr.bf16.mxu0 0
      %762 = vmatpush1.bf16.msra.mxu0 0
      %763 = vmatprep.subr.bf16.mxu0 0
      %764 = vmatpush1.bf16.msra.mxu0 0
      %765 = vmatprep.subr.bf16.mxu0 0
      %766 = vmatpush1.bf16.msra.mxu0 0
      %767 = vmatprep.subr.bf16.mxu0 0
      %768 = vmatpush1.bf16.msra.mxu0 0
      %769 = vmatprep.subr.bf16.mxu0 0
      %770 = vmatpush1.bf16.msra.mxu0 0
      %771 = vmatprep.subr.bf16.mxu0 0
      %772 = vmatpush1.bf16.msra.mxu0 0
      %773 = vmatprep.mubr.bf16.mxu0 0
      %774 = vmatmul.mubr.bf16.gmra.mrb[0].mxu0 %v682
      %v775 = vpop.f32.mrb[0].mxu0
      %v776 = vadd.f32 %v735, %v775
      %v777 = vpop.f32.mrb[0].mxu0
      %v778 = vadd.f32 %v737, %v777
      %v779 = vpop.f32.mrb[0].mxu0
      %v780 = vpop.f32.mrb[0].mxu0
      %781 = vdwg.mxu0
      %782 = vmatprep.subr.bf16.mxu0 %v551
      %783 = vmatpush1.bf16.msra.mxu0 %v550
      %784 = vmatprep.subr.bf16.mxu0 %v555
      %785 = vmatpush1.bf16.msra.mxu0 %v554
      %786 = vmatprep.subr.bf16.mxu0 %v559
      %787 = vmatpush1.bf16.msra.mxu0 %v558
      %788 = vmatprep.subr.bf16.mxu0 %v563
      %789 = vmatpush1.bf16.msra.mxu0 %v562
      %790 = vmatprep.subr.bf16.mxu0 %v567
      %791 = vmatpush1.bf16.msra.mxu0 %v566
      %792 = vmatprep.subr.bf16.mxu0 %v571
      %793 = vmatpush1.bf16.msra.mxu0 %v570
      %794 = vmatprep.subr.bf16.mxu0 %v575
      %795 = vmatpush1.bf16.msra.mxu0 %v574
      %796 = vmatprep.subr.bf16.mxu0 %v579
      %797 = vmatpush1.bf16.msra.mxu0 %v578
      %798 = vmatprep.subr.bf16.mxu0 %v583
      %799 = vmatpush1.bf16.msra.mxu0 %v582
      %800 = vmatprep.subr.bf16.mxu0 %v587
      %801 = vmatpush1.bf16.msra.mxu0 %v586
      %802 = vmatprep.subr.bf16.mxu0 %v591
      %803 = vmatpush1.bf16.msra.mxu0 %v590
      %804 = vmatprep.subr.bf16.mxu0 %v595
      %805 = vmatpush1.bf16.msra.mxu0 %v594
      %806 = vmatprep.subr.bf16.mxu0 %v599
      %807 = vmatpush1.bf16.msra.mxu0 %v598
      %808 = vmatprep.subr.bf16.mxu0 %v603
      %809 = vmatpush1.bf16.msra.mxu0 %v602
      %810 = vmatprep.subr.bf16.mxu0 %v607
      %811 = vmatpush1.bf16.msra.mxu0 %v606
      %812 = vmatprep.subr.bf16.mxu0 %v611
      %813 = vmatpush1.bf16.msra.mxu0 %v610
      %814 = vmatprep.mubr.bf16.mxu0 %v346
      %815 = vmatmul.mubr.bf16.gmra.mrb[0].mxu0 %v345
      %v816 = vpop.f32.mrb[0].mxu0
      %v817 = vadd.f32 %v331, %v816
      %v818 = vpop.f32.mrb[0].mxu0
      %v819 = vadd.f32 %v335, %v818
      %v820 = vpop.f32.mrb[0].mxu0
      %v821 = vpop.f32.mrb[0].mxu0
      %822 = vdwg.mxu0
      %823 = vmatprep.subr.bf16.mxu0 %v698
      %824 = vmatpush1.bf16.msra.mxu0 %v695
      %825 = vmatprep.subr.bf16.mxu0 0
      %826 = vmatpush1.bf16.msra.mxu0 0
      %827 = vmatprep.subr.bf16.mxu0 0
      %828 = vmatpush1.bf16.msra.mxu0 0
      %829 = vmatprep.subr.bf16.mxu0 0
      %830 = vmatpush1.bf16.msra.mxu0 0
      %831 = vmatprep.subr.bf16.mxu0 0
      %832 = vmatpush1.bf16.msra.mxu0 0
      %833 = vmatprep.subr.bf16.mxu0 0
      %834 = vmatpush1.bf16.msra.mxu0 0
      %835 = vmatprep.subr.bf16.mxu0 0
      %836 = vmatpush1.bf16.msra.mxu0 0
      %837 = vmatprep.subr.bf16.mxu0 0
      %838 = vmatpush1.bf16.msra.mxu0 0
      %839 = vmatprep.subr.bf16.mxu0 0
      %840 = vmatpush1.bf16.msra.mxu0 0
      %841 = vmatprep.subr.bf16.mxu0 0
      %842 = vmatpush1.bf16.msra.mxu0 0
      %843 = vmatprep.subr.bf16.mxu0 0
      %844 = vmatpush1.bf16.msra.mxu0 0
      %845 = vmatprep.subr.bf16.mxu0 0
      %846 = vmatpush1.bf16.msra.mxu0 0
      %847 = vmatprep.subr.bf16.mxu0 0
      %848 = vmatpush1.bf16.msra.mxu0 0
      %849 = vmatprep.subr.bf16.mxu0 0
      %850 = vmatpush1.bf16.msra.mxu0 0
      %851 = vmatprep.subr.bf16.mxu0 0
      %852 = vmatpush1.bf16.msra.mxu0 0
      %853 = vmatprep.subr.bf16.mxu0 0
      %854 = vmatpush1.bf16.msra.mxu0 0
      %855 = vmatprep.mubr.bf16.mxu0 0
      %856 = vmatmul.mubr.bf16.gmra.mrb[0].mxu0 %v682
      %v857 = vpop.f32.mrb[0].mxu0
      %v858 = vadd.f32 %v817, %v857
      %v859 = vpop.f32.mrb[0].mxu0
      %v860 = vadd.f32 %v819, %v859
      %v861 = vpop.f32.mrb[0].mxu0
      %v862 = vpop.f32.mrb[0].mxu0
      %863 = vdwg.mxu0
      %v864 = vmax.f32 %v776, 0.0
      %v865 = vmax.f32 %v778, 0.0
      %v866 = vmax.f32 %v858, 0.0
      %v867 = vmax.f32 %v860, 0.0
      %v868 = vpack.c.bf16 %v864, %v864
      %v869 = vpack.c.bf16 %v865, %v865
      %v870 = vpack.c.bf16 %v866, %v866
      %v871 = vpack.c.bf16 %v867, %v867
      %v872 = vld [vmem:[%s3] sm:$0xff]
      %v873 = vld [vmem:[%s3 + $0x8] sm:$0xff]
      %v874 = vld [vmem:[%s3 + $0x10] sm:$0xff]
      %v875 = vld [vmem:[%s3 + $0x18] sm:$0xff]
      %v876 = vld [vmem:[%s3 + $0x20] sm:$0xff]
      %v877 = vld [vmem:[%s3 + $0x28] sm:$0xff]
      %v878 = vld [vmem:[%s3 + $0x30] sm:$0xff]
      %v879 = vld [vmem:[%s3 + $0x38] sm:$0xff]
      %v880 = vld [vmem:[%s3 + $0x40] sm:$0xff]
      %v881 = vld [vmem:[%s3 + $0x48] sm:$0xff]
      %v882 = vld [vmem:[%s3 + $0x50] sm:$0xff]
      %v883 = vld [vmem:[%s3 + $0x58] sm:$0xff]
      %v884 = vld [vmem:[%s3 + $0x60] sm:$0xff]
      %v885 = vld [vmem:[%s3 + $0x68] sm:$0xff]
      %v886 = vld [vmem:[%s3 + $0x70] sm:$0xff]
      %v887 = vld [vmem:[%s3 + $0x78] sm:$0xff]
      %v888 = vld [vmem:[%s3 + $0x80] sm:$0xff]
      %v889 = vld [vmem:[%s3 + $0x88] sm:$0xff]
      %v890 = vld [vmem:[%s3 + $0x90] sm:$0xff]
      %v891 = vld [vmem:[%s3 + $0x98] sm:$0xff]
      %v892 = vld [vmem:[%s3 + $0xa0] sm:$0xff]
      %v893 = vld [vmem:[%s3 + $0xa8] sm:$0xff]
      %v894 = vld [vmem:[%s3 + $0xb0] sm:$0xff]
      %v895 = vld [vmem:[%s3 + $0xb8] sm:$0xff]
      %v896 = vld [vmem:[%s3 + $0xc0] sm:$0xff]
      %v897 = vld [vmem:[%s3 + $0xc8] sm:$0xff]
      %v898 = vld [vmem:[%s3 + $0xd0] sm:$0xff]
      %v899 = vld [vmem:[%s3 + $0xd8] sm:$0xff]
      %v900 = vld [vmem:[%s3 + $0xe0] sm:$0xff]
      %v901 = vld [vmem:[%s3 + $0xe8] sm:$0xff]
      %v902 = vld [vmem:[%s3 + $0xf0] sm:$0xff]
      %v903 = vld [vmem:[%s3 + $0xf8] sm:$0xff]
      %v904 = vld [vmem:[%s3 + $0x100] sm:$0xff]
      %v905 = vld [vmem:[%s3 + $0x108] sm:$0xff]
      %v906 = vld [vmem:[%s3 + $0x110] sm:$0xff]
      %v907 = vld [vmem:[%s3 + $0x118] sm:$0xff]
      %v908 = vld [vmem:[%s3 + $0x120] sm:$0xff]
      %v909 = vld [vmem:[%s3 + $0x128] sm:$0xff]
      %v910 = vld [vmem:[%s3 + $0x130] sm:$0xff]
      %v911 = vld [vmem:[%s3 + $0x138] sm:$0xff]
      %v912 = vld [vmem:[%s3 + $0x140] sm:$0xff]
      %v913 = vld [vmem:[%s3 + $0x148] sm:$0xff]
      %v914 = vld [vmem:[%s3 + $0x150] sm:$0xff]
      %v915 = vld [vmem:[%s3 + $0x158] sm:$0xff]
      %v916 = vld [vmem:[%s3 + $0x160] sm:$0xff]
      %v917 = vld [vmem:[%s3 + $0x168] sm:$0xff]
      %v918 = vld [vmem:[%s3 + $0x170] sm:$0xff]
      %v919 = vld [vmem:[%s3 + $0x178] sm:$0xff]
      %v920 = vld [vmem:[%s3 + $0x180] sm:$0xff]
      %v921 = vld [vmem:[%s3 + $0x188] sm:$0xff]
      %v922 = vld [vmem:[%s3 + $0x190] sm:$0xff]
      %v923 = vld [vmem:[%s3 + $0x198] sm:$0xff]
      %v924 = vld [vmem:[%s3 + $0x1a0] sm:$0xff]
      %v925 = vld [vmem:[%s3 + $0x1a8] sm:$0xff]
      %v926 = vld [vmem:[%s3 + $0x1b0] sm:$0xff]
      %v927 = vld [vmem:[%s3 + $0x1b8] sm:$0xff]
      %v928 = vld [vmem:[%s3 + $0x1c0] sm:$0xff]
      %v929 = vld [vmem:[%s3 + $0x1c8] sm:$0xff]
      %v930 = vld [vmem:[%s3 + $0x1d0] sm:$0xff]
      %v931 = vld [vmem:[%s3 + $0x1d8] sm:$0xff]
      %v932 = vld [vmem:[%s3 + $0x1e0] sm:$0xff]
      %v933 = vld [vmem:[%s3 + $0x1e8] sm:$0xff]
      %v934 = vld [vmem:[%s3 + $0x1f0] sm:$0xff]
      %v935 = vld [vmem:[%s3 + $0x1f8] sm:$0xff]
      %v936 = vld [vmem:[%s3 + $0x200] sm:$0xff]
      %v937 = vld [vmem:[%s3 + $0x208] sm:$0xff]
      %v938 = vld [vmem:[%s3 + $0x210] sm:$0xff]
      %v939 = vld [vmem:[%s3 + $0x218] sm:$0xff]
      %v940 = vld [vmem:[%s3 + $0x220] sm:$0xff]
      %v941 = vld [vmem:[%s3 + $0x228] sm:$0xff]
      %v942 = vld [vmem:[%s3 + $0x230] sm:$0xff]
      %v943 = vld [vmem:[%s3 + $0x238] sm:$0xff]
      %v944 = vld [vmem:[%s3 + $0x240] sm:$0xff]
      %v945 = vld [vmem:[%s3 + $0x248] sm:$0xff]
      %v946 = vld [vmem:[%s3 + $0x250] sm:$0xff]
      %v947 = vld [vmem:[%s3 + $0x258] sm:$0xff]
      %v948 = vld [vmem:[%s3 + $0x260] sm:$0xff]
      %v949 = vld [vmem:[%s3 + $0x268] sm:$0xff]
      %v950 = vld [vmem:[%s3 + $0x270] sm:$0xff]
      %v951 = vld [vmem:[%s3 + $0x278] sm:$0xff]
      %v952 = vld [vmem:[%s3 + $0x280] sm:$0xff]
      %v953 = vld [vmem:[%s3 + $0x288] sm:$0xff]
      %v954 = vld [vmem:[%s3 + $0x290] sm:$0xff]
      %v955 = vld [vmem:[%s3 + $0x298] sm:$0xff]
      %v956 = vld [vmem:[%s3 + $0x2a0] sm:$0xff]
      %v957 = vld [vmem:[%s3 + $0x2a8] sm:$0xff]
      %v958 = vld [vmem:[%s3 + $0x2b0] sm:$0xff]
      %v959 = vld [vmem:[%s3 + $0x2b8] sm:$0xff]
      %v960 = vld [vmem:[%s3 + $0x2c0] sm:$0xff]
      %v961 = vld [vmem:[%s3 + $0x2c8] sm:$0xff]
      %v962 = vld [vmem:[%s3 + $0x2d0] sm:$0xff]
      %v963 = vld [vmem:[%s3 + $0x2d8] sm:$0xff]
      %v964 = vld [vmem:[%s3 + $0x2e0] sm:$0xff]
      %v965 = vld [vmem:[%s3 + $0x2e8] sm:$0xff]
      %v966 = vld [vmem:[%s3 + $0x2f0] sm:$0xff]
      %v967 = vld [vmem:[%s3 + $0x2f8] sm:$0xff]
      %v968 = vld [vmem:[%s3 + $0x300] sm:$0xff]
      %v969 = vld [vmem:[%s3 + $0x308] sm:$0xff]
      %v970 = vld [vmem:[%s3 + $0x310] sm:$0xff]
      %v971 = vld [vmem:[%s3 + $0x318] sm:$0xff]
      %v972 = vld [vmem:[%s3 + $0x320] sm:$0xff]
      %v973 = vld [vmem:[%s3 + $0x328] sm:$0xff]
      %v974 = vld [vmem:[%s3 + $0x330] sm:$0xff]
      %v975 = vld [vmem:[%s3 + $0x338] sm:$0xff]
      %v976 = vld [vmem:[%s3 + $0x340] sm:$0xff]
      %v977 = vld [vmem:[%s3 + $0x348] sm:$0xff]
      %v978 = vld [vmem:[%s3 + $0x350] sm:$0xff]
      %v979 = vld [vmem:[%s3 + $0x358] sm:$0xff]
      %v980 = vld [vmem:[%s3 + $0x360] sm:$0xff]
      %v981 = vld [vmem:[%s3 + $0x368] sm:$0xff]
      %v982 = vld [vmem:[%s3 + $0x370] sm:$0xff]
      %v983 = vld [vmem:[%s3 + $0x378] sm:$0xff]
      %v984 = vld [vmem:[%s3 + $0x380] sm:$0xff]
      %v985 = vld [vmem:[%s3 + $0x388] sm:$0xff]
      %v986 = vld [vmem:[%s3 + $0x390] sm:$0xff]
      %v987 = vld [vmem:[%s3 + $0x398] sm:$0xff]
      %v988 = vld [vmem:[%s3 + $0x3a0] sm:$0xff]
      %v989 = vld [vmem:[%s3 + $0x3a8] sm:$0xff]
      %v990 = vld [vmem:[%s3 + $0x3b0] sm:$0xff]
      %v991 = vld [vmem:[%s3 + $0x3b8] sm:$0xff]
      %v992 = vld [vmem:[%s3 + $0x3c0] sm:$0xff]
      %v993 = vld [vmem:[%s3 + $0x3c8] sm:$0xff]
      %v994 = vld [vmem:[%s3 + $0x3d0] sm:$0xff]
      %v995 = vld [vmem:[%s3 + $0x3d8] sm:$0xff]
      %v996 = vld [vmem:[%s3 + $0x3e0] sm:$0xff]
      %v997 = vld [vmem:[%s3 + $0x3e8] sm:$0xff]
      %v998 = vld [vmem:[%s3 + $0x3f0] sm:$0xff]
      %v999 = vld [vmem:[%s3 + $0x3f8] sm:$0xff]
      %v1000 = vld [vmem:[%s3 + $0x400] sm:$0xff]
      %v1001 = vld [vmem:[%s3 + $0x408] sm:$0xff]
      %v1002 = vld [vmem:[%s3 + $0x410] sm:$0xff]
      %v1003 = vld [vmem:[%s3 + $0x418] sm:$0xff]
      %v1004 = vld [vmem:[%s3 + $0x420] sm:$0xff]
      %v1005 = vld [vmem:[%s3 + $0x428] sm:$0xff]
      %v1006 = vld [vmem:[%s3 + $0x430] sm:$0xff]
      %v1007 = vld [vmem:[%s3 + $0x438] sm:$0xff]
      %v1008 = vld [vmem:[%s3 + $0x440] sm:$0xff]
      %v1009 = vld [vmem:[%s3 + $0x448] sm:$0xff]
      %v1010 = vld [vmem:[%s3 + $0x450] sm:$0xff]
      %v1011 = vld [vmem:[%s3 + $0x458] sm:$0xff]
      %v1012 = vld [vmem:[%s3 + $0x460] sm:$0xff]
      %v1013 = vld [vmem:[%s3 + $0x468] sm:$0xff]
      %v1014 = vld [vmem:[%s3 + $0x470] sm:$0xff]
      %v1015 = vld [vmem:[%s3 + $0x478] sm:$0xff]
      %v1016 = vld [vmem:[%s3 + $0x480] sm:$0xff]
      %v1017 = vld [vmem:[%s3 + $0x488] sm:$0xff]
      %v1018 = vld [vmem:[%s3 + $0x490] sm:$0xff]
      %v1019 = vld [vmem:[%s3 + $0x498] sm:$0xff]
      %v1020 = vld [vmem:[%s3 + $0x4a0] sm:$0xff]
      %v1021 = vld [vmem:[%s3 + $0x4a8] sm:$0xff]
      %v1022 = vld [vmem:[%s3 + $0x4b0] sm:$0xff]
      %v1023 = vld [vmem:[%s3 + $0x4b8] sm:$0xff]
      %v1024 = vld [vmem:[%s3 + $0x4c0] sm:$0xff]
      %v1025 = vld [vmem:[%s3 + $0x4c8] sm:$0xff]
      %v1026 = vld [vmem:[%s3 + $0x4d0] sm:$0xff]
      %v1027 = vld [vmem:[%s3 + $0x4d8] sm:$0xff]
      %v1028 = vld [vmem:[%s3 + $0x4e0] sm:$0xff]
      %v1029 = vld [vmem:[%s3 + $0x4e8] sm:$0xff]
      %v1030 = vld [vmem:[%s3 + $0x4f0] sm:$0xff]
      %v1031 = vld [vmem:[%s3 + $0x4f8] sm:$0xff]
      %v1032 = vld [vmem:[%s3 + $0x500] sm:$0xff]
      %v1033 = vld [vmem:[%s3 + $0x508] sm:$0xff]
      %v1034 = vld [vmem:[%s3 + $0x510] sm:$0xff]
      %v1035 = vld [vmem:[%s3 + $0x518] sm:$0xff]
      %v1036 = vld [vmem:[%s3 + $0x520] sm:$0xff]
      %v1037 = vld [vmem:[%s3 + $0x528] sm:$0xff]
      %v1038 = vld [vmem:[%s3 + $0x530] sm:$0xff]
      %v1039 = vld [vmem:[%s3 + $0x538] sm:$0xff]
      %v1040 = vld [vmem:[%s3 + $0x540] sm:$0xff]
      %v1041 = vld [vmem:[%s3 + $0x548] sm:$0xff]
      %v1042 = vld [vmem:[%s3 + $0x550] sm:$0xff]
      %v1043 = vld [vmem:[%s3 + $0x558] sm:$0xff]
      %v1044 = vld [vmem:[%s3 + $0x560] sm:$0xff]
      %v1045 = vld [vmem:[%s3 + $0x568] sm:$0xff]
      %v1046 = vld [vmem:[%s3 + $0x570] sm:$0xff]
      %v1047 = vld [vmem:[%s3 + $0x578] sm:$0xff]
      %v1048 = vld [vmem:[%s3 + $0x580] sm:$0xff]
      %v1049 = vld [vmem:[%s3 + $0x588] sm:$0xff]
      %v1050 = vld [vmem:[%s3 + $0x590] sm:$0xff]
      %v1051 = vld [vmem:[%s3 + $0x598] sm:$0xff]
      %v1052 = vld [vmem:[%s3 + $0x5a0] sm:$0xff]
      %v1053 = vld [vmem:[%s3 + $0x5a8] sm:$0xff]
      %v1054 = vld [vmem:[%s3 + $0x5b0] sm:$0xff]
      %v1055 = vld [vmem:[%s3 + $0x5b8] sm:$0xff]
      %v1056 = vld [vmem:[%s3 + $0x5c0] sm:$0xff]
      %v1057 = vld [vmem:[%s3 + $0x5c8] sm:$0xff]
      %v1058 = vld [vmem:[%s3 + $0x5d0] sm:$0xff]
      %v1059 = vld [vmem:[%s3 + $0x5d8] sm:$0xff]
      %v1060 = vld [vmem:[%s3 + $0x5e0] sm:$0xff]
      %v1061 = vld [vmem:[%s3 + $0x5e8] sm:$0xff]
      %v1062 = vld [vmem:[%s3 + $0x5f0] sm:$0xff]
      %v1063 = vld [vmem:[%s3 + $0x5f8] sm:$0xff]
      %v1064 = vld [vmem:[%s3 + $0x600] sm:$0xff]
      %v1065 = vld [vmem:[%s3 + $0x608] sm:$0xff]
      %v1066 = vld [vmem:[%s3 + $0x610] sm:$0xff]
      %v1067 = vld [vmem:[%s3 + $0x618] sm:$0xff]
      %v1068 = vld [vmem:[%s3 + $0x620] sm:$0xff]
      %v1069 = vld [vmem:[%s3 + $0x628] sm:$0xff]
      %v1070 = vld [vmem:[%s3 + $0x630] sm:$0xff]
      %v1071 = vld [vmem:[%s3 + $0x638] sm:$0xff]
      %v1072 = vld [vmem:[%s3 + $0x640] sm:$0xff]
      %v1073 = vld [vmem:[%s3 + $0x648] sm:$0xff]
      %v1074 = vld [vmem:[%s3 + $0x650] sm:$0xff]
      %v1075 = vld [vmem:[%s3 + $0x658] sm:$0xff]
      %v1076 = vld [vmem:[%s3 + $0x660] sm:$0xff]
      %v1077 = vld [vmem:[%s3 + $0x668] sm:$0xff]
      %v1078 = vld [vmem:[%s3 + $0x670] sm:$0xff]
      %v1079 = vld [vmem:[%s3 + $0x678] sm:$0xff]
      %v1080 = vld [vmem:[%s3 + $0x680] sm:$0xff]
      %v1081 = vld [vmem:[%s3 + $0x688] sm:$0xff]
      %v1082 = vld [vmem:[%s3 + $0x690] sm:$0xff]
      %v1083 = vld [vmem:[%s3 + $0x698] sm:$0xff]
      %v1084 = vld [vmem:[%s3 + $0x6a0] sm:$0xff]
      %v1085 = vld [vmem:[%s3 + $0x6a8] sm:$0xff]
      %v1086 = vld [vmem:[%s3 + $0x6b0] sm:$0xff]
      %v1087 = vld [vmem:[%s3 + $0x6b8] sm:$0xff]
      %v1088 = vld [vmem:[%s3 + $0x6c0] sm:$0xff]
      %v1089 = vld [vmem:[%s3 + $0x6c8] sm:$0xff]
      %v1090 = vld [vmem:[%s3 + $0x6d0] sm:$0xff]
      %v1091 = vld [vmem:[%s3 + $0x6d8] sm:$0xff]
      %v1092 = vld [vmem:[%s3 + $0x6e0] sm:$0xff]
      %v1093 = vld [vmem:[%s3 + $0x6e8] sm:$0xff]
      %v1094 = vld [vmem:[%s3 + $0x6f0] sm:$0xff]
      %v1095 = vld [vmem:[%s3 + $0x6f8] sm:$0xff]
      %v1096 = vld [vmem:[%s3 + $0x700] sm:$0xff]
      %v1097 = vld [vmem:[%s3 + $0x708] sm:$0xff]
      %v1098 = vld [vmem:[%s3 + $0x710] sm:$0xff]
      %v1099 = vld [vmem:[%s3 + $0x718] sm:$0xff]
      %v1100 = vld [vmem:[%s3 + $0x720] sm:$0xff]
      %v1101 = vld [vmem:[%s3 + $0x728] sm:$0xff]
      %v1102 = vld [vmem:[%s3 + $0x730] sm:$0xff]
      %v1103 = vld [vmem:[%s3 + $0x738] sm:$0xff]
      %v1104 = vld [vmem:[%s3 + $0x740] sm:$0xff]
      %v1105 = vld [vmem:[%s3 + $0x748] sm:$0xff]
      %v1106 = vld [vmem:[%s3 + $0x750] sm:$0xff]
      %v1107 = vld [vmem:[%s3 + $0x758] sm:$0xff]
      %v1108 = vld [vmem:[%s3 + $0x760] sm:$0xff]
      %v1109 = vld [vmem:[%s3 + $0x768] sm:$0xff]
      %v1110 = vld [vmem:[%s3 + $0x770] sm:$0xff]
      %v1111 = vld [vmem:[%s3 + $0x778] sm:$0xff]
      %v1112 = vld [vmem:[%s3 + $0x780] sm:$0xff]
      %v1113 = vld [vmem:[%s3 + $0x788] sm:$0xff]
      %v1114 = vld [vmem:[%s3 + $0x790] sm:$0xff]
      %v1115 = vld [vmem:[%s3 + $0x798] sm:$0xff]
      %v1116 = vld [vmem:[%s3 + $0x7a0] sm:$0xff]
      %v1117 = vld [vmem:[%s3 + $0x7a8] sm:$0xff]
      %v1118 = vld [vmem:[%s3 + $0x7b0] sm:$0xff]
      %v1119 = vld [vmem:[%s3 + $0x7b8] sm:$0xff]
      %v1120 = vld [vmem:[%s3 + $0x7c0] sm:$0xff]
      %v1121 = vld [vmem:[%s3 + $0x7c8] sm:$0xff]
      %v1122 = vld [vmem:[%s3 + $0x7d0] sm:$0xff]
      %v1123 = vld [vmem:[%s3 + $0x7d8] sm:$0xff]
      %v1124 = vld [vmem:[%s3 + $0x7e0] sm:$0xff]
      %v1125 = vld [vmem:[%s3 + $0x7e8] sm:$0xff]
      %v1126 = vld [vmem:[%s3 + $0x7f0] sm:$0xff]
      %v1127 = vld [vmem:[%s3 + $0x7f8] sm:$0xff]
      %v1128 = vld [vmem:[%s4] sm:$0xff]
      %v1130 = vlaneseq
      %v1131 = vshrl.u32 %v1130, 7
      %v1132 = vsub.s32 0, %v1131
      %v1133 = vrot.slane %v1128, %v1132
      %v1134 = vlaneseq
      %v1135 = vshrl.u32 %v1134, 7
      %v1136 = vsub.s32 1, %v1135
      %v1137 = vrot.slane %v1128, %v1136
      %v1138 = vlaneseq
      %v1139 = vshrl.u32 %v1138, 7
      %v1140 = vsub.s32 2, %v1139
      %v1141 = vrot.slane %v1128, %v1140
      %v1142 = vlaneseq
      %v1143 = vshrl.u32 %v1142, 7
      %v1144 = vsub.s32 3, %v1143
      %v1145 = vrot.slane %v1128, %v1144
      %v1146 = vlaneseq
      %v1147 = vshrl.u32 %v1146, 7
      %v1148 = vsub.s32 4, %v1147
      %v1149 = vrot.slane %v1128, %v1148
      %v1150 = vlaneseq
      %v1151 = vshrl.u32 %v1150, 7
      %v1152 = vsub.s32 5, %v1151
      %v1153 = vrot.slane %v1128, %v1152
      %v1154 = vlaneseq
      %v1155 = vshrl.u32 %v1154, 7
      %v1156 = vsub.s32 6, %v1155
      %v1157 = vrot.slane %v1128, %v1156
      %v1158 = vlaneseq
      %v1159 = vshrl.u32 %v1158, 7
      %v1160 = vsub.s32 7, %v1159
      %v1161 = vrot.slane %v1128, %v1160
      %v1426 = vunpack.c.l.b16 %v872
      %v1427 = vunpack.c.h.b16 %v872
      %v1428 = vunpack.c.l.b16 %v873
      %v1429 = vunpack.c.h.b16 %v873
      %v1430 = vunpack.c.l.b16 %v874
      %v1431 = vunpack.c.h.b16 %v874
      %v1432 = vunpack.c.l.b16 %v875
      %v1433 = vunpack.c.h.b16 %v875
      %v1434 = vunpack.c.l.b16 %v876
      %v1435 = vunpack.c.h.b16 %v876
      %v1436 = vunpack.c.l.b16 %v877
      %v1437 = vunpack.c.h.b16 %v877
      %v1438 = vunpack.c.l.b16 %v878
      %v1439 = vunpack.c.h.b16 %v878
      %v1440 = vunpack.c.l.b16 %v879
      %v1441 = vunpack.c.h.b16 %v879
      %v1442 = vunpack.c.l.b16 %v880
      %v1443 = vunpack.c.h.b16 %v880
      %v1444 = vunpack.c.l.b16 %v881
      %v1445 = vunpack.c.h.b16 %v881
      %v1446 = vunpack.c.l.b16 %v882
      %v1447 = vunpack.c.h.b16 %v882
      %v1448 = vunpack.c.l.b16 %v883
      %v1449 = vunpack.c.h.b16 %v883
      %v1450 = vunpack.c.l.b16 %v884
      %v1451 = vunpack.c.h.b16 %v884
      %v1452 = vunpack.c.l.b16 %v885
      %v1453 = vunpack.c.h.b16 %v885
      %v1454 = vunpack.c.l.b16 %v886
      %v1455 = vunpack.c.h.b16 %v886
      %v1456 = vunpack.c.l.b16 %v887
      %v1457 = vunpack.c.h.b16 %v887
      %v1458 = vunpack.c.l.b16 %v888
      %v1459 = vunpack.c.h.b16 %v888
      %v1460 = vunpack.c.l.b16 %v889
      %v1461 = vunpack.c.h.b16 %v889
      %v1462 = vunpack.c.l.b16 %v890
      %v1463 = vunpack.c.h.b16 %v890
      %v1464 = vunpack.c.l.b16 %v891
      %v1465 = vunpack.c.h.b16 %v891
      %v1466 = vunpack.c.l.b16 %v892
      %v1467 = vunpack.c.h.b16 %v892
      %v1468 = vunpack.c.l.b16 %v893
      %v1469 = vunpack.c.h.b16 %v893
      %v1470 = vunpack.c.l.b16 %v894
      %v1471 = vunpack.c.h.b16 %v894
      %v1472 = vunpack.c.l.b16 %v895
      %v1473 = vunpack.c.h.b16 %v895
      %v1474 = vunpack.c.l.b16 %v896
      %v1475 = vunpack.c.h.b16 %v896
      %v1476 = vunpack.c.l.b16 %v897
      %v1477 = vunpack.c.h.b16 %v897
      %v1478 = vunpack.c.l.b16 %v898
      %v1479 = vunpack.c.h.b16 %v898
      %v1480 = vunpack.c.l.b16 %v899
      %v1481 = vunpack.c.h.b16 %v899
      %v1482 = vunpack.c.l.b16 %v900
      %v1483 = vunpack.c.h.b16 %v900
      %v1484 = vunpack.c.l.b16 %v901
      %v1485 = vunpack.c.h.b16 %v901
      %v1486 = vunpack.c.l.b16 %v902
      %v1487 = vunpack.c.h.b16 %v902
      %v1488 = vunpack.c.l.b16 %v903
      %v1489 = vunpack.c.h.b16 %v903
      %v1490 = vunpack.c.l.b16 %v904
      %v1491 = vunpack.c.h.b16 %v904
      %v1492 = vunpack.c.l.b16 %v905
      %v1493 = vunpack.c.h.b16 %v905
      %v1494 = vunpack.c.l.b16 %v906
      %v1495 = vunpack.c.h.b16 %v906
      %v1496 = vunpack.c.l.b16 %v907
      %v1497 = vunpack.c.h.b16 %v907
      %v1498 = vunpack.c.l.b16 %v908
      %v1499 = vunpack.c.h.b16 %v908
      %v1500 = vunpack.c.l.b16 %v909
      %v1501 = vunpack.c.h.b16 %v909
      %v1502 = vunpack.c.l.b16 %v910
      %v1503 = vunpack.c.h.b16 %v910
      %v1504 = vunpack.c.l.b16 %v911
      %v1505 = vunpack.c.h.b16 %v911
      %v1506 = vunpack.c.l.b16 %v912
      %v1507 = vunpack.c.h.b16 %v912
      %v1508 = vunpack.c.l.b16 %v913
      %v1509 = vunpack.c.h.b16 %v913
      %v1510 = vunpack.c.l.b16 %v914
      %v1511 = vunpack.c.h.b16 %v914
      %v1512 = vunpack.c.l.b16 %v915
      %v1513 = vunpack.c.h.b16 %v915
      %v1514 = vunpack.c.l.b16 %v916
      %v1515 = vunpack.c.h.b16 %v916
      %v1516 = vunpack.c.l.b16 %v917
      %v1517 = vunpack.c.h.b16 %v917
      %v1518 = vunpack.c.l.b16 %v918
      %v1519 = vunpack.c.h.b16 %v918
      %v1520 = vunpack.c.l.b16 %v919
      %v1521 = vunpack.c.h.b16 %v919
      %v1522 = vunpack.c.l.b16 %v920
      %v1523 = vunpack.c.h.b16 %v920
      %v1524 = vunpack.c.l.b16 %v921
      %v1525 = vunpack.c.h.b16 %v921
      %v1526 = vunpack.c.l.b16 %v922
      %v1527 = vunpack.c.h.b16 %v922
      %v1528 = vunpack.c.l.b16 %v923
      %v1529 = vunpack.c.h.b16 %v923
      %v1530 = vunpack.c.l.b16 %v924
      %v1531 = vunpack.c.h.b16 %v924
      %v1532 = vunpack.c.l.b16 %v925
      %v1533 = vunpack.c.h.b16 %v925
      %v1534 = vunpack.c.l.b16 %v926
      %v1535 = vunpack.c.h.b16 %v926
      %v1536 = vunpack.c.l.b16 %v927
      %v1537 = vunpack.c.h.b16 %v927
      %v1538 = vunpack.c.l.b16 %v928
      %v1539 = vunpack.c.h.b16 %v928
      %v1540 = vunpack.c.l.b16 %v929
      %v1541 = vunpack.c.h.b16 %v929
      %v1542 = vunpack.c.l.b16 %v930
      %v1543 = vunpack.c.h.b16 %v930
      %v1544 = vunpack.c.l.b16 %v931
      %v1545 = vunpack.c.h.b16 %v931
      %v1546 = vunpack.c.l.b16 %v932
      %v1547 = vunpack.c.h.b16 %v932
      %v1548 = vunpack.c.l.b16 %v933
      %v1549 = vunpack.c.h.b16 %v933
      %v1550 = vunpack.c.l.b16 %v934
      %v1551 = vunpack.c.h.b16 %v934
      %v1552 = vunpack.c.l.b16 %v935
      %v1553 = vunpack.c.h.b16 %v935
      %v1554 = vunpack.c.l.b16 %v936
      %v1555 = vunpack.c.h.b16 %v936
      %v1556 = vunpack.c.l.b16 %v937
      %v1557 = vunpack.c.h.b16 %v937
      %v1558 = vunpack.c.l.b16 %v938
      %v1559 = vunpack.c.h.b16 %v938
      %v1560 = vunpack.c.l.b16 %v939
      %v1561 = vunpack.c.h.b16 %v939
      %v1562 = vunpack.c.l.b16 %v940
      %v1563 = vunpack.c.h.b16 %v940
      %v1564 = vunpack.c.l.b16 %v941
      %v1565 = vunpack.c.h.b16 %v941
      %v1566 = vunpack.c.l.b16 %v942
      %v1567 = vunpack.c.h.b16 %v942
      %v1568 = vunpack.c.l.b16 %v943
      %v1569 = vunpack.c.h.b16 %v943
      %v1570 = vunpack.c.l.b16 %v944
      %v1571 = vunpack.c.h.b16 %v944
      %v1572 = vunpack.c.l.b16 %v945
      %v1573 = vunpack.c.h.b16 %v945
      %v1574 = vunpack.c.l.b16 %v946
      %v1575 = vunpack.c.h.b16 %v946
      %v1576 = vunpack.c.l.b16 %v947
      %v1577 = vunpack.c.h.b16 %v947
      %v1578 = vunpack.c.l.b16 %v948
      %v1579 = vunpack.c.h.b16 %v948
      %v1580 = vunpack.c.l.b16 %v949
      %v1581 = vunpack.c.h.b16 %v949
      %v1582 = vunpack.c.l.b16 %v950
      %v1583 = vunpack.c.h.b16 %v950
      %v1584 = vunpack.c.l.b16 %v951
      %v1585 = vunpack.c.h.b16 %v951
      %v1586 = vunpack.c.l.b16 %v952
      %v1587 = vunpack.c.h.b16 %v952
      %v1588 = vunpack.c.l.b16 %v953
      %v1589 = vunpack.c.h.b16 %v953
      %v1590 = vunpack.c.l.b16 %v954
      %v1591 = vunpack.c.h.b16 %v954
      %v1592 = vunpack.c.l.b16 %v955
      %v1593 = vunpack.c.h.b16 %v955
      %v1594 = vunpack.c.l.b16 %v956
      %v1595 = vunpack.c.h.b16 %v956
      %v1596 = vunpack.c.l.b16 %v957
      %v1597 = vunpack.c.h.b16 %v957
      %v1598 = vunpack.c.l.b16 %v958
      %v1599 = vunpack.c.h.b16 %v958
      %v1600 = vunpack.c.l.b16 %v959
      %v1601 = vunpack.c.h.b16 %v959
      %v1602 = vunpack.c.l.b16 %v960
      %v1603 = vunpack.c.h.b16 %v960
      %v1604 = vunpack.c.l.b16 %v961
      %v1605 = vunpack.c.h.b16 %v961
      %v1606 = vunpack.c.l.b16 %v962
      %v1607 = vunpack.c.h.b16 %v962
      %v1608 = vunpack.c.l.b16 %v963
      %v1609 = vunpack.c.h.b16 %v963
      %v1610 = vunpack.c.l.b16 %v964
      %v1611 = vunpack.c.h.b16 %v964
      %v1612 = vunpack.c.l.b16 %v965
      %v1613 = vunpack.c.h.b16 %v965
      %v1614 = vunpack.c.l.b16 %v966
      %v1615 = vunpack.c.h.b16 %v966
      %v1616 = vunpack.c.l.b16 %v967
      %v1617 = vunpack.c.h.b16 %v967
      %v1618 = vunpack.c.l.b16 %v968
      %v1619 = vunpack.c.h.b16 %v968
      %v1620 = vunpack.c.l.b16 %v969
      %v1621 = vunpack.c.h.b16 %v969
      %v1622 = vunpack.c.l.b16 %v970
      %v1623 = vunpack.c.h.b16 %v970
      %v1624 = vunpack.c.l.b16 %v971
      %v1625 = vunpack.c.h.b16 %v971
      %v1626 = vunpack.c.l.b16 %v972
      %v1627 = vunpack.c.h.b16 %v972
      %v1628 = vunpack.c.l.b16 %v973
      %v1629 = vunpack.c.h.b16 %v973
      %v1630 = vunpack.c.l.b16 %v974
      %v1631 = vunpack.c.h.b16 %v974
      %v1632 = vunpack.c.l.b16 %v975
      %v1633 = vunpack.c.h.b16 %v975
      %v1634 = vunpack.c.l.b16 %v976
      %v1635 = vunpack.c.h.b16 %v976
      %v1636 = vunpack.c.l.b16 %v977
      %v1637 = vunpack.c.h.b16 %v977
      %v1638 = vunpack.c.l.b16 %v978
      %v1639 = vunpack.c.h.b16 %v978
      %v1640 = vunpack.c.l.b16 %v979
      %v1641 = vunpack.c.h.b16 %v979
      %v1642 = vunpack.c.l.b16 %v980
      %v1643 = vunpack.c.h.b16 %v980
      %v1644 = vunpack.c.l.b16 %v981
      %v1645 = vunpack.c.h.b16 %v981
      %v1646 = vunpack.c.l.b16 %v982
      %v1647 = vunpack.c.h.b16 %v982
      %v1648 = vunpack.c.l.b16 %v983
      %v1649 = vunpack.c.h.b16 %v983
      %v1650 = vunpack.c.l.b16 %v984
      %v1651 = vunpack.c.h.b16 %v984
      %v1652 = vunpack.c.l.b16 %v985
      %v1653 = vunpack.c.h.b16 %v985
      %v1654 = vunpack.c.l.b16 %v986
      %v1655 = vunpack.c.h.b16 %v986
      %v1656 = vunpack.c.l.b16 %v987
      %v1657 = vunpack.c.h.b16 %v987
      %v1658 = vunpack.c.l.b16 %v988
      %v1659 = vunpack.c.h.b16 %v988
      %v1660 = vunpack.c.l.b16 %v989
      %v1661 = vunpack.c.h.b16 %v989
      %v1662 = vunpack.c.l.b16 %v990
      %v1663 = vunpack.c.h.b16 %v990
      %v1664 = vunpack.c.l.b16 %v991
      %v1665 = vunpack.c.h.b16 %v991
      %v1666 = vunpack.c.l.b16 %v992
      %v1667 = vunpack.c.h.b16 %v992
      %v1668 = vunpack.c.l.b16 %v993
      %v1669 = vunpack.c.h.b16 %v993
      %v1670 = vunpack.c.l.b16 %v994
      %v1671 = vunpack.c.h.b16 %v994
      %v1672 = vunpack.c.l.b16 %v995
      %v1673 = vunpack.c.h.b16 %v995
      %v1674 = vunpack.c.l.b16 %v996
      %v1675 = vunpack.c.h.b16 %v996
      %v1676 = vunpack.c.l.b16 %v997
      %v1677 = vunpack.c.h.b16 %v997
      %v1678 = vunpack.c.l.b16 %v998
      %v1679 = vunpack.c.h.b16 %v998
      %v1680 = vunpack.c.l.b16 %v999
      %v1681 = vunpack.c.h.b16 %v999
      %v1682 = vunpack.c.l.b16 %v1000
      %v1683 = vunpack.c.h.b16 %v1000
      %v1684 = vunpack.c.l.b16 %v1001
      %v1685 = vunpack.c.h.b16 %v1001
      %v1686 = vunpack.c.l.b16 %v1002
      %v1687 = vunpack.c.h.b16 %v1002
      %v1688 = vunpack.c.l.b16 %v1003
      %v1689 = vunpack.c.h.b16 %v1003
      %v1690 = vunpack.c.l.b16 %v1004
      %v1691 = vunpack.c.h.b16 %v1004
      %v1692 = vunpack.c.l.b16 %v1005
      %v1693 = vunpack.c.h.b16 %v1005
      %v1694 = vunpack.c.l.b16 %v1006
      %v1695 = vunpack.c.h.b16 %v1006
      %v1696 = vunpack.c.l.b16 %v1007
      %v1697 = vunpack.c.h.b16 %v1007
      %v1698 = vunpack.c.l.b16 %v1008
      %v1699 = vunpack.c.h.b16 %v1008
      %v1700 = vunpack.c.l.b16 %v1009
      %v1701 = vunpack.c.h.b16 %v1009
      %v1702 = vunpack.c.l.b16 %v1010
      %v1703 = vunpack.c.h.b16 %v1010
      %v1704 = vunpack.c.l.b16 %v1011
      %v1705 = vunpack.c.h.b16 %v1011
      %v1706 = vunpack.c.l.b16 %v1012
      %v1707 = vunpack.c.h.b16 %v1012
      %v1708 = vunpack.c.l.b16 %v1013
      %v1709 = vunpack.c.h.b16 %v1013
      %v1710 = vunpack.c.l.b16 %v1014
      %v1711 = vunpack.c.h.b16 %v1014
      %v1712 = vunpack.c.l.b16 %v1015
      %v1713 = vunpack.c.h.b16 %v1015
      %v1714 = vunpack.c.l.b16 %v1016
      %v1715 = vunpack.c.h.b16 %v1016
      %v1716 = vunpack.c.l.b16 %v1017
      %v1717 = vunpack.c.h.b16 %v1017
      %v1718 = vunpack.c.l.b16 %v1018
      %v1719 = vunpack.c.h.b16 %v1018
      %v1720 = vunpack.c.l.b16 %v1019
      %v1721 = vunpack.c.h.b16 %v1019
      %v1722 = vunpack.c.l.b16 %v1020
      %v1723 = vunpack.c.h.b16 %v1020
      %v1724 = vunpack.c.l.b16 %v1021
      %v1725 = vunpack.c.h.b16 %v1021
      %v1726 = vunpack.c.l.b16 %v1022
      %v1727 = vunpack.c.h.b16 %v1022
      %v1728 = vunpack.c.l.b16 %v1023
      %v1729 = vunpack.c.h.b16 %v1023
      %v1730 = vunpack.c.l.b16 %v1024
      %v1731 = vunpack.c.h.b16 %v1024
      %v1732 = vunpack.c.l.b16 %v1025
      %v1733 = vunpack.c.h.b16 %v1025
      %v1734 = vunpack.c.l.b16 %v1026
      %v1735 = vunpack.c.h.b16 %v1026
      %v1736 = vunpack.c.l.b16 %v1027
      %v1737 = vunpack.c.h.b16 %v1027
      %v1738 = vunpack.c.l.b16 %v1028
      %v1739 = vunpack.c.h.b16 %v1028
      %v1740 = vunpack.c.l.b16 %v1029
      %v1741 = vunpack.c.h.b16 %v1029
      %v1742 = vunpack.c.l.b16 %v1030
      %v1743 = vunpack.c.h.b16 %v1030
      %v1744 = vunpack.c.l.b16 %v1031
      %v1745 = vunpack.c.h.b16 %v1031
      %v1746 = vunpack.c.l.b16 %v1032
      %v1747 = vunpack.c.h.b16 %v1032
      %v1748 = vunpack.c.l.b16 %v1033
      %v1749 = vunpack.c.h.b16 %v1033
      %v1750 = vunpack.c.l.b16 %v1034
      %v1751 = vunpack.c.h.b16 %v1034
      %v1752 = vunpack.c.l.b16 %v1035
      %v1753 = vunpack.c.h.b16 %v1035
      %v1754 = vunpack.c.l.b16 %v1036
      %v1755 = vunpack.c.h.b16 %v1036
      %v1756 = vunpack.c.l.b16 %v1037
      %v1757 = vunpack.c.h.b16 %v1037
      %v1758 = vunpack.c.l.b16 %v1038
      %v1759 = vunpack.c.h.b16 %v1038
      %v1760 = vunpack.c.l.b16 %v1039
      %v1761 = vunpack.c.h.b16 %v1039
      %v1762 = vunpack.c.l.b16 %v1040
      %v1763 = vunpack.c.h.b16 %v1040
      %v1764 = vunpack.c.l.b16 %v1041
      %v1765 = vunpack.c.h.b16 %v1041
      %v1766 = vunpack.c.l.b16 %v1042
      %v1767 = vunpack.c.h.b16 %v1042
      %v1768 = vunpack.c.l.b16 %v1043
      %v1769 = vunpack.c.h.b16 %v1043
      %v1770 = vunpack.c.l.b16 %v1044
      %v1771 = vunpack.c.h.b16 %v1044
      %v1772 = vunpack.c.l.b16 %v1045
      %v1773 = vunpack.c.h.b16 %v1045
      %v1774 = vunpack.c.l.b16 %v1046
      %v1775 = vunpack.c.h.b16 %v1046
      %v1776 = vunpack.c.l.b16 %v1047
      %v1777 = vunpack.c.h.b16 %v1047
      %v1778 = vunpack.c.l.b16 %v1048
      %v1779 = vunpack.c.h.b16 %v1048
      %v1780 = vunpack.c.l.b16 %v1049
      %v1781 = vunpack.c.h.b16 %v1049
      %v1782 = vunpack.c.l.b16 %v1050
      %v1783 = vunpack.c.h.b16 %v1050
      %v1784 = vunpack.c.l.b16 %v1051
      %v1785 = vunpack.c.h.b16 %v1051
      %v1786 = vunpack.c.l.b16 %v1052
      %v1787 = vunpack.c.h.b16 %v1052
      %v1788 = vunpack.c.l.b16 %v1053
      %v1789 = vunpack.c.h.b16 %v1053
      %v1790 = vunpack.c.l.b16 %v1054
      %v1791 = vunpack.c.h.b16 %v1054
      %v1792 = vunpack.c.l.b16 %v1055
      %v1793 = vunpack.c.h.b16 %v1055
      %v1794 = vunpack.c.l.b16 %v1056
      %v1795 = vunpack.c.h.b16 %v1056
      %v1796 = vunpack.c.l.b16 %v1057
      %v1797 = vunpack.c.h.b16 %v1057
      %v1798 = vunpack.c.l.b16 %v1058
      %v1799 = vunpack.c.h.b16 %v1058
      %v1800 = vunpack.c.l.b16 %v1059
      %v1801 = vunpack.c.h.b16 %v1059
      %v1802 = vunpack.c.l.b16 %v1060
      %v1803 = vunpack.c.h.b16 %v1060
      %v1804 = vunpack.c.l.b16 %v1061
      %v1805 = vunpack.c.h.b16 %v1061
      %v1806 = vunpack.c.l.b16 %v1062
      %v1807 = vunpack.c.h.b16 %v1062
      %v1808 = vunpack.c.l.b16 %v1063
      %v1809 = vunpack.c.h.b16 %v1063
      %v1810 = vunpack.c.l.b16 %v1064
      %v1811 = vunpack.c.h.b16 %v1064
      %v1812 = vunpack.c.l.b16 %v1065
      %v1813 = vunpack.c.h.b16 %v1065
      %v1814 = vunpack.c.l.b16 %v1066
      %v1815 = vunpack.c.h.b16 %v1066
      %v1816 = vunpack.c.l.b16 %v1067
      %v1817 = vunpack.c.h.b16 %v1067
      %v1818 = vunpack.c.l.b16 %v1068
      %v1819 = vunpack.c.h.b16 %v1068
      %v1820 = vunpack.c.l.b16 %v1069
      %v1821 = vunpack.c.h.b16 %v1069
      %v1822 = vunpack.c.l.b16 %v1070
      %v1823 = vunpack.c.h.b16 %v1070
      %v1824 = vunpack.c.l.b16 %v1071
      %v1825 = vunpack.c.h.b16 %v1071
      %v1826 = vunpack.c.l.b16 %v1072
      %v1827 = vunpack.c.h.b16 %v1072
      %v1828 = vunpack.c.l.b16 %v1073
      %v1829 = vunpack.c.h.b16 %v1073
      %v1830 = vunpack.c.l.b16 %v1074
      %v1831 = vunpack.c.h.b16 %v1074
      %v1832 = vunpack.c.l.b16 %v1075
      %v1833 = vunpack.c.h.b16 %v1075
      %v1834 = vunpack.c.l.b16 %v1076
      %v1835 = vunpack.c.h.b16 %v1076
      %v1836 = vunpack.c.l.b16 %v1077
      %v1837 = vunpack.c.h.b16 %v1077
      %v1838 = vunpack.c.l.b16 %v1078
      %v1839 = vunpack.c.h.b16 %v1078
      %v1840 = vunpack.c.l.b16 %v1079
      %v1841 = vunpack.c.h.b16 %v1079
      %v1842 = vunpack.c.l.b16 %v1080
      %v1843 = vunpack.c.h.b16 %v1080
      %v1844 = vunpack.c.l.b16 %v1081
      %v1845 = vunpack.c.h.b16 %v1081
      %v1846 = vunpack.c.l.b16 %v1082
      %v1847 = vunpack.c.h.b16 %v1082
      %v1848 = vunpack.c.l.b16 %v1083
      %v1849 = vunpack.c.h.b16 %v1083
      %v1850 = vunpack.c.l.b16 %v1084
      %v1851 = vunpack.c.h.b16 %v1084
      %v1852 = vunpack.c.l.b16 %v1085
      %v1853 = vunpack.c.h.b16 %v1085
      %v1854 = vunpack.c.l.b16 %v1086
      %v1855 = vunpack.c.h.b16 %v1086
      %v1856 = vunpack.c.l.b16 %v1087
      %v1857 = vunpack.c.h.b16 %v1087
      %v1858 = vunpack.c.l.b16 %v1088
      %v1859 = vunpack.c.h.b16 %v1088
      %v1860 = vunpack.c.l.b16 %v1089
      %v1861 = vunpack.c.h.b16 %v1089
      %v1862 = vunpack.c.l.b16 %v1090
      %v1863 = vunpack.c.h.b16 %v1090
      %v1864 = vunpack.c.l.b16 %v1091
      %v1865 = vunpack.c.h.b16 %v1091
      %v1866 = vunpack.c.l.b16 %v1092
      %v1867 = vunpack.c.h.b16 %v1092
      %v1868 = vunpack.c.l.b16 %v1093
      %v1869 = vunpack.c.h.b16 %v1093
      %v1870 = vunpack.c.l.b16 %v1094
      %v1871 = vunpack.c.h.b16 %v1094
      %v1872 = vunpack.c.l.b16 %v1095
      %v1873 = vunpack.c.h.b16 %v1095
      %v1874 = vunpack.c.l.b16 %v1096
      %v1875 = vunpack.c.h.b16 %v1096
      %v1876 = vunpack.c.l.b16 %v1097
      %v1877 = vunpack.c.h.b16 %v1097
      %v1878 = vunpack.c.l.b16 %v1098
      %v1879 = vunpack.c.h.b16 %v1098
      %v1880 = vunpack.c.l.b16 %v1099
      %v1881 = vunpack.c.h.b16 %v1099
      %v1882 = vunpack.c.l.b16 %v1100
      %v1883 = vunpack.c.h.b16 %v1100
      %v1884 = vunpack.c.l.b16 %v1101
      %v1885 = vunpack.c.h.b16 %v1101
      %v1886 = vunpack.c.l.b16 %v1102
      %v1887 = vunpack.c.h.b16 %v1102
      %v1888 = vunpack.c.l.b16 %v1103
      %v1889 = vunpack.c.h.b16 %v1103
      %v1890 = vunpack.c.l.b16 %v1104
      %v1891 = vunpack.c.h.b16 %v1104
      %v1892 = vunpack.c.l.b16 %v1105
      %v1893 = vunpack.c.h.b16 %v1105
      %v1894 = vunpack.c.l.b16 %v1106
      %v1895 = vunpack.c.h.b16 %v1106
      %v1896 = vunpack.c.l.b16 %v1107
      %v1897 = vunpack.c.h.b16 %v1107
      %v1898 = vunpack.c.l.b16 %v1108
      %v1899 = vunpack.c.h.b16 %v1108
      %v1900 = vunpack.c.l.b16 %v1109
      %v1901 = vunpack.c.h.b16 %v1109
      %v1902 = vunpack.c.l.b16 %v1110
      %v1903 = vunpack.c.h.b16 %v1110
      %v1904 = vunpack.c.l.b16 %v1111
      %v1905 = vunpack.c.h.b16 %v1111
      %v1906 = vunpack.c.l.b16 %v1112
      %v1907 = vunpack.c.h.b16 %v1112
      %v1908 = vunpack.c.l.b16 %v1113
      %v1909 = vunpack.c.h.b16 %v1113
      %v1910 = vunpack.c.l.b16 %v1114
      %v1911 = vunpack.c.h.b16 %v1114
      %v1912 = vunpack.c.l.b16 %v1115
      %v1913 = vunpack.c.h.b16 %v1115
      %v1914 = vunpack.c.l.b16 %v1116
      %v1915 = vunpack.c.h.b16 %v1116
      %v1916 = vunpack.c.l.b16 %v1117
      %v1917 = vunpack.c.h.b16 %v1117
      %v1918 = vunpack.c.l.b16 %v1118
      %v1919 = vunpack.c.h.b16 %v1118
      %v1920 = vunpack.c.l.b16 %v1119
      %v1921 = vunpack.c.h.b16 %v1119
      %v1922 = vunpack.c.l.b16 %v1120
      %v1923 = vunpack.c.h.b16 %v1120
      %v1924 = vunpack.c.l.b16 %v1121
      %v1925 = vunpack.c.h.b16 %v1121
      %v1926 = vunpack.c.l.b16 %v1122
      %v1927 = vunpack.c.h.b16 %v1122
      %v1928 = vunpack.c.l.b16 %v1123
      %v1929 = vunpack.c.h.b16 %v1123
      %v1930 = vunpack.c.l.b16 %v1124
      %v1931 = vunpack.c.h.b16 %v1124
      %v1932 = vunpack.c.l.b16 %v1125
      %v1933 = vunpack.c.h.b16 %v1125
      %v1934 = vunpack.c.l.b16 %v1126
      %v1935 = vunpack.c.h.b16 %v1126
      %v1936 = vunpack.c.l.b16 %v1127
      %v1937 = vunpack.c.h.b16 %v1127
      %v1938 = vpack.c.b16 %v1434, %v1426
      %v1939 = vpack.c.b16 %v1435, %v1427
      %v1940 = vpack.c.b16 %v1436, %v1428
      %v1941 = vpack.c.b16 %v1437, %v1429
      %v1942 = vpack.c.b16 %v1438, %v1430
      %v1943 = vpack.c.b16 %v1439, %v1431
      %v1944 = vpack.c.b16 %v1440, %v1432
      %v1945 = vpack.c.b16 %v1441, %v1433
      %v1946 = vpack.c.b16 %v1450, %v1442
      %v1947 = vpack.c.b16 %v1451, %v1443
      %v1948 = vpack.c.b16 %v1452, %v1444
      %v1949 = vpack.c.b16 %v1453, %v1445
      %v1950 = vpack.c.b16 %v1454, %v1446
      %v1951 = vpack.c.b16 %v1455, %v1447
      %v1952 = vpack.c.b16 %v1456, %v1448
      %v1953 = vpack.c.b16 %v1457, %v1449
      %v1954 = vpack.c.b16 %v1466, %v1458
      %v1955 = vpack.c.b16 %v1467, %v1459
      %v1956 = vpack.c.b16 %v1468, %v1460
      %v1957 = vpack.c.b16 %v1469, %v1461
      %v1958 = vpack.c.b16 %v1470, %v1462
      %v1959 = vpack.c.b16 %v1471, %v1463
      %v1960 = vpack.c.b16 %v1472, %v1464
      %v1961 = vpack.c.b16 %v1473, %v1465
      %v1962 = vpack.c.b16 %v1482, %v1474
      %v1963 = vpack.c.b16 %v1483, %v1475
      %v1964 = vpack.c.b16 %v1484, %v1476
      %v1965 = vpack.c.b16 %v1485, %v1477
      %v1966 = vpack.c.b16 %v1486, %v1478
      %v1967 = vpack.c.b16 %v1487, %v1479
      %v1968 = vpack.c.b16 %v1488, %v1480
      %v1969 = vpack.c.b16 %v1489, %v1481
      %v1970 = vpack.c.b16 %v1498, %v1490
      %v1971 = vpack.c.b16 %v1499, %v1491
      %v1972 = vpack.c.b16 %v1500, %v1492
      %v1973 = vpack.c.b16 %v1501, %v1493
      %v1974 = vpack.c.b16 %v1502, %v1494
      %v1975 = vpack.c.b16 %v1503, %v1495
      %v1976 = vpack.c.b16 %v1504, %v1496
      %v1977 = vpack.c.b16 %v1505, %v1497
      %v1978 = vpack.c.b16 %v1514, %v1506
      %v1979 = vpack.c.b16 %v1515, %v1507
      %v1980 = vpack.c.b16 %v1516, %v1508
      %v1981 = vpack.c.b16 %v1517, %v1509
      %v1982 = vpack.c.b16 %v1518, %v1510
      %v1983 = vpack.c.b16 %v1519, %v1511
      %v1984 = vpack.c.b16 %v1520, %v1512
      %v1985 = vpack.c.b16 %v1521, %v1513
      %v1986 = vpack.c.b16 %v1530, %v1522
      %v1987 = vpack.c.b16 %v1531, %v1523
      %v1988 = vpack.c.b16 %v1532, %v1524
      %v1989 = vpack.c.b16 %v1533, %v1525
      %v1990 = vpack.c.b16 %v1534, %v1526
      %v1991 = vpack.c.b16 %v1535, %v1527
      %v1992 = vpack.c.b16 %v1536, %v1528
      %v1993 = vpack.c.b16 %v1537, %v1529
      %v1994 = vpack.c.b16 %v1546, %v1538
      %v1995 = vpack.c.b16 %v1547, %v1539
      %v1996 = vpack.c.b16 %v1548, %v1540
      %v1997 = vpack.c.b16 %v1549, %v1541
      %v1998 = vpack.c.b16 %v1550, %v1542
      %v1999 = vpack.c.b16 %v1551, %v1543
      %v2000 = vpack.c.b16 %v1552, %v1544
      %v2001 = vpack.c.b16 %v1553, %v1545
      %v2002 = vpack.c.b16 %v1562, %v1554
      %v2003 = vpack.c.b16 %v1563, %v1555
      %v2004 = vpack.c.b16 %v1564, %v1556
      %v2005 = vpack.c.b16 %v1565, %v1557
      %v2006 = vpack.c.b16 %v1566, %v1558
      %v2007 = vpack.c.b16 %v1567, %v1559
      %v2008 = vpack.c.b16 %v1568, %v1560
      %v2009 = vpack.c.b16 %v1569, %v1561
      %v2010 = vpack.c.b16 %v1578, %v1570
      %v2011 = vpack.c.b16 %v1579, %v1571
      %v2012 = vpack.c.b16 %v1580, %v1572
      %v2013 = vpack.c.b16 %v1581, %v1573
      %v2014 = vpack.c.b16 %v1582, %v1574
      %v2015 = vpack.c.b16 %v1583, %v1575
      %v2016 = vpack.c.b16 %v1584, %v1576
      %v2017 = vpack.c.b16 %v1585, %v1577
      %v2018 = vpack.c.b16 %v1594, %v1586
      %v2019 = vpack.c.b16 %v1595, %v1587
      %v2020 = vpack.c.b16 %v1596, %v1588
      %v2021 = vpack.c.b16 %v1597, %v1589
      %v2022 = vpack.c.b16 %v1598, %v1590
      %v2023 = vpack.c.b16 %v1599, %v1591
      %v2024 = vpack.c.b16 %v1600, %v1592
      %v2025 = vpack.c.b16 %v1601, %v1593
      %v2026 = vpack.c.b16 %v1610, %v1602
      %v2027 = vpack.c.b16 %v1611, %v1603
      %v2028 = vpack.c.b16 %v1612, %v1604
      %v2029 = vpack.c.b16 %v1613, %v1605
      %v2030 = vpack.c.b16 %v1614, %v1606
      %v2031 = vpack.c.b16 %v1615, %v1607
      %v2032 = vpack.c.b16 %v1616, %v1608
      %v2033 = vpack.c.b16 %v1617, %v1609
      %v2034 = vpack.c.b16 %v1626, %v1618
      %v2035 = vpack.c.b16 %v1627, %v1619
      %v2036 = vpack.c.b16 %v1628, %v1620
      %v2037 = vpack.c.b16 %v1629, %v1621
      %v2038 = vpack.c.b16 %v1630, %v1622
      %v2039 = vpack.c.b16 %v1631, %v1623
      %v2040 = vpack.c.b16 %v1632, %v1624
      %v2041 = vpack.c.b16 %v1633, %v1625
      %v2042 = vpack.c.b16 %v1642, %v1634
      %v2043 = vpack.c.b16 %v1643, %v1635
      %v2044 = vpack.c.b16 %v1644, %v1636
      %v2045 = vpack.c.b16 %v1645, %v1637
      %v2046 = vpack.c.b16 %v1646, %v1638
      %v2047 = vpack.c.b16 %v1647, %v1639
      %v2048 = vpack.c.b16 %v1648, %v1640
      %v2049 = vpack.c.b16 %v1649, %v1641
      %v2050 = vpack.c.b16 %v1658, %v1650
      %v2051 = vpack.c.b16 %v1659, %v1651
      %v2052 = vpack.c.b16 %v1660, %v1652
      %v2053 = vpack.c.b16 %v1661, %v1653
      %v2054 = vpack.c.b16 %v1662, %v1654
      %v2055 = vpack.c.b16 %v1663, %v1655
      %v2056 = vpack.c.b16 %v1664, %v1656
      %v2057 = vpack.c.b16 %v1665, %v1657
      %v2058 = vpack.c.b16 %v1674, %v1666
      %v2059 = vpack.c.b16 %v1675, %v1667
      %v2060 = vpack.c.b16 %v1676, %v1668
      %v2061 = vpack.c.b16 %v1677, %v1669
      %v2062 = vpack.c.b16 %v1678, %v1670
      %v2063 = vpack.c.b16 %v1679, %v1671
      %v2064 = vpack.c.b16 %v1680, %v1672
      %v2065 = vpack.c.b16 %v1681, %v1673
      %v2066 = vpack.c.b16 %v1690, %v1682
      %v2067 = vpack.c.b16 %v1691, %v1683
      %v2068 = vpack.c.b16 %v1692, %v1684
      %v2069 = vpack.c.b16 %v1693, %v1685
      %v2070 = vpack.c.b16 %v1694, %v1686
      %v2071 = vpack.c.b16 %v1695, %v1687
      %v2072 = vpack.c.b16 %v1696, %v1688
      %v2073 = vpack.c.b16 %v1697, %v1689
      %v2074 = vpack.c.b16 %v1706, %v1698
      %v2075 = vpack.c.b16 %v1707, %v1699
      %v2076 = vpack.c.b16 %v1708, %v1700
      %v2077 = vpack.c.b16 %v1709, %v1701
      %v2078 = vpack.c.b16 %v1710, %v1702
      %v2079 = vpack.c.b16 %v1711, %v1703
      %v2080 = vpack.c.b16 %v1712, %v1704
      %v2081 = vpack.c.b16 %v1713, %v1705
      %v2082 = vpack.c.b16 %v1722, %v1714
      %v2083 = vpack.c.b16 %v1723, %v1715
      %v2084 = vpack.c.b16 %v1724, %v1716
      %v2085 = vpack.c.b16 %v1725, %v1717
      %v2086 = vpack.c.b16 %v1726, %v1718
      %v2087 = vpack.c.b16 %v1727, %v1719
      %v2088 = vpack.c.b16 %v1728, %v1720
      %v2089 = vpack.c.b16 %v1729, %v1721
      %v2090 = vpack.c.b16 %v1738, %v1730
      %v2091 = vpack.c.b16 %v1739, %v1731
      %v2092 = vpack.c.b16 %v1740, %v1732
      %v2093 = vpack.c.b16 %v1741, %v1733
      %v2094 = vpack.c.b16 %v1742, %v1734
      %v2095 = vpack.c.b16 %v1743, %v1735
      %v2096 = vpack.c.b16 %v1744, %v1736
      %v2097 = vpack.c.b16 %v1745, %v1737
      %v2098 = vpack.c.b16 %v1754, %v1746
      %v2099 = vpack.c.b16 %v1755, %v1747
      %v2100 = vpack.c.b16 %v1756, %v1748
      %v2101 = vpack.c.b16 %v1757, %v1749
      %v2102 = vpack.c.b16 %v1758, %v1750
      %v2103 = vpack.c.b16 %v1759, %v1751
      %v2104 = vpack.c.b16 %v1760, %v1752
      %v2105 = vpack.c.b16 %v1761, %v1753
      %v2106 = vpack.c.b16 %v1770, %v1762
      %v2107 = vpack.c.b16 %v1771, %v1763
      %v2108 = vpack.c.b16 %v1772, %v1764
      %v2109 = vpack.c.b16 %v1773, %v1765
      %v2110 = vpack.c.b16 %v1774, %v1766
      %v2111 = vpack.c.b16 %v1775, %v1767
      %v2112 = vpack.c.b16 %v1776, %v1768
      %v2113 = vpack.c.b16 %v1777, %v1769
      %v2114 = vpack.c.b16 %v1786, %v1778
      %v2115 = vpack.c.b16 %v1787, %v1779
      %v2116 = vpack.c.b16 %v1788, %v1780
      %v2117 = vpack.c.b16 %v1789, %v1781
      %v2118 = vpack.c.b16 %v1790, %v1782
      %v2119 = vpack.c.b16 %v1791, %v1783
      %v2120 = vpack.c.b16 %v1792, %v1784
      %v2121 = vpack.c.b16 %v1793, %v1785
      %v2122 = vpack.c.b16 %v1802, %v1794
      %v2123 = vpack.c.b16 %v1803, %v1795
      %v2124 = vpack.c.b16 %v1804, %v1796
      %v2125 = vpack.c.b16 %v1805, %v1797
      %v2126 = vpack.c.b16 %v1806, %v1798
      %v2127 = vpack.c.b16 %v1807, %v1799
      %v2128 = vpack.c.b16 %v1808, %v1800
      %v2129 = vpack.c.b16 %v1809, %v1801
      %v2130 = vpack.c.b16 %v1818, %v1810
      %v2131 = vpack.c.b16 %v1819, %v1811
      %v2132 = vpack.c.b16 %v1820, %v1812
      %v2133 = vpack.c.b16 %v1821, %v1813
      %v2134 = vpack.c.b16 %v1822, %v1814
      %v2135 = vpack.c.b16 %v1823, %v1815
      %v2136 = vpack.c.b16 %v1824, %v1816
      %v2137 = vpack.c.b16 %v1825, %v1817
      %v2138 = vpack.c.b16 %v1834, %v1826
      %v2139 = vpack.c.b16 %v1835, %v1827
      %v2140 = vpack.c.b16 %v1836, %v1828
      %v2141 = vpack.c.b16 %v1837, %v1829
      %v2142 = vpack.c.b16 %v1838, %v1830
      %v2143 = vpack.c.b16 %v1839, %v1831
      %v2144 = vpack.c.b16 %v1840, %v1832
      %v2145 = vpack.c.b16 %v1841, %v1833
      %v2146 = vpack.c.b16 %v1850, %v1842
      %v2147 = vpack.c.b16 %v1851, %v1843
      %v2148 = vpack.c.b16 %v1852, %v1844
      %v2149 = vpack.c.b16 %v1853, %v1845
      %v2150 = vpack.c.b16 %v1854, %v1846
      %v2151 = vpack.c.b16 %v1855, %v1847
      %v2152 = vpack.c.b16 %v1856, %v1848
      %v2153 = vpack.c.b16 %v1857, %v1849
      %v2154 = vpack.c.b16 %v1866, %v1858
      %v2155 = vpack.c.b16 %v1867, %v1859
      %v2156 = vpack.c.b16 %v1868, %v1860
      %v2157 = vpack.c.b16 %v1869, %v1861
      %v2158 = vpack.c.b16 %v1870, %v1862
      %v2159 = vpack.c.b16 %v1871, %v1863
      %v2160 = vpack.c.b16 %v1872, %v1864
      %v2161 = vpack.c.b16 %v1873, %v1865
      %v2162 = vpack.c.b16 %v1882, %v1874
      %v2163 = vpack.c.b16 %v1883, %v1875
      %v2164 = vpack.c.b16 %v1884, %v1876
      %v2165 = vpack.c.b16 %v1885, %v1877
      %v2166 = vpack.c.b16 %v1886, %v1878
      %v2167 = vpack.c.b16 %v1887, %v1879
      %v2168 = vpack.c.b16 %v1888, %v1880
      %v2169 = vpack.c.b16 %v1889, %v1881
      %v2170 = vpack.c.b16 %v1898, %v1890
      %v2171 = vpack.c.b16 %v1899, %v1891
      %v2172 = vpack.c.b16 %v1900, %v1892
      %v2173 = vpack.c.b16 %v1901, %v1893
      %v2174 = vpack.c.b16 %v1902, %v1894
      %v2175 = vpack.c.b16 %v1903, %v1895
      %v2176 = vpack.c.b16 %v1904, %v1896
      %v2177 = vpack.c.b16 %v1905, %v1897
      %v2178 = vpack.c.b16 %v1914, %v1906
      %v2179 = vpack.c.b16 %v1915, %v1907
      %v2180 = vpack.c.b16 %v1916, %v1908
      %v2181 = vpack.c.b16 %v1917, %v1909
      %v2182 = vpack.c.b16 %v1918, %v1910
      %v2183 = vpack.c.b16 %v1919, %v1911
      %v2184 = vpack.c.b16 %v1920, %v1912
      %v2185 = vpack.c.b16 %v1921, %v1913
      %v2186 = vpack.c.b16 %v1930, %v1922
      %v2187 = vpack.c.b16 %v1931, %v1923
      %v2188 = vpack.c.b16 %v1932, %v1924
      %v2189 = vpack.c.b16 %v1933, %v1925
      %v2190 = vpack.c.b16 %v1934, %v1926
      %v2191 = vpack.c.b16 %v1935, %v1927
      %v2192 = vpack.c.b16 %v1936, %v1928
      %v2193 = vpack.c.b16 %v1937, %v1929
      %2450 = vmatprep.subr.bf16.mxu0 %v1939
      %2451 = vmatpush1.bf16.msra.mxu0 %v1938
      %2452 = vmatprep.subr.bf16.mxu0 %v1947
      %2453 = vmatpush1.bf16.msra.mxu0 %v1946
      %2454 = vmatprep.subr.bf16.mxu0 %v1955
      %2455 = vmatpush1.bf16.msra.mxu0 %v1954
      %2456 = vmatprep.subr.bf16.mxu0 %v1963
      %2457 = vmatpush1.bf16.msra.mxu0 %v1962
      %2458 = vmatprep.subr.bf16.mxu0 %v1971
      %2459 = vmatpush1.bf16.msra.mxu0 %v1970
      %2460 = vmatprep.subr.bf16.mxu0 %v1979
      %2461 = vmatpush1.bf16.msra.mxu0 %v1978
      %2462 = vmatprep.subr.bf16.mxu0 %v1987
      %2463 = vmatpush1.bf16.msra.mxu0 %v1986
      %2464 = vmatprep.subr.bf16.mxu0 %v1995
      %2465 = vmatpush1.bf16.msra.mxu0 %v1994
      %2466 = vmatprep.subr.bf16.mxu0 %v2003
      %2467 = vmatpush1.bf16.msra.mxu0 %v2002
      %2468 = vmatprep.subr.bf16.mxu0 %v2011
      %2469 = vmatpush1.bf16.msra.mxu0 %v2010
      %2470 = vmatprep.subr.bf16.mxu0 %v2019
      %2471 = vmatpush1.bf16.msra.mxu0 %v2018
      %2472 = vmatprep.subr.bf16.mxu0 %v2027
      %2473 = vmatpush1.bf16.msra.mxu0 %v2026
      %2474 = vmatprep.subr.bf16.mxu0 %v2035
      %2475 = vmatpush1.bf16.msra.mxu0 %v2034
      %2476 = vmatprep.subr.bf16.mxu0 %v2043
      %2477 = vmatpush1.bf16.msra.mxu0 %v2042
      %2478 = vmatprep.subr.bf16.mxu0 %v2051
      %2479 = vmatpush1.bf16.msra.mxu0 %v2050
      %2480 = vmatprep.subr.bf16.mxu0 %v2059
      %2481 = vmatpush1.bf16.msra.mxu0 %v2058
      %2482 = vmatprep.mubr.bf16.mxu0 %v869
      %2483 = vmatmul.mubr.bf16.gmra.mrb[0].mxu0 %v868
      %v2484 = vpop.f32.mrb[0].mxu0
      %v2485 = vadd.f32 %v1133, %v2484
      %v2486 = vpop.f32.mrb[0].mxu0
      %v2487 = vadd.f32 %v1137, %v2486
      %v2488 = vpop.f32.mrb[0].mxu0
      %v2489 = vpop.f32.mrb[0].mxu0
      %2490 = vdwg.mxu0
      %2491 = vmatprep.subr.bf16.mxu0 %v2067
      %2492 = vmatpush1.bf16.msra.mxu0 %v2066
      %2493 = vmatprep.subr.bf16.mxu0 %v2075
      %2494 = vmatpush1.bf16.msra.mxu0 %v2074
      %2495 = vmatprep.subr.bf16.mxu0 %v2083
      %2496 = vmatpush1.bf16.msra.mxu0 %v2082
      %2497 = vmatprep.subr.bf16.mxu0 %v2091
      %2498 = vmatpush1.bf16.msra.mxu0 %v2090
      %2499 = vmatprep.subr.bf16.mxu0 %v2099
      %2500 = vmatpush1.bf16.msra.mxu0 %v2098
      %2501 = vmatprep.subr.bf16.mxu0 %v2107
      %2502 = vmatpush1.bf16.msra.mxu0 %v2106
      %2503 = vmatprep.subr.bf16.mxu0 %v2115
      %2504 = vmatpush1.bf16.msra.mxu0 %v2114
      %2505 = vmatprep.subr.bf16.mxu0 %v2123
      %2506 = vmatpush1.bf16.msra.mxu0 %v2122
      %2507 = vmatprep.subr.bf16.mxu0 %v2131
      %2508 = vmatpush1.bf16.msra.mxu0 %v2130
      %2509 = vmatprep.subr.bf16.mxu0 %v2139
      %2510 = vmatpush1.bf16.msra.mxu0 %v2138
      %2511 = vmatprep.subr.bf16.mxu0 %v2147
      %2512 = vmatpush1.bf16.msra.mxu0 %v2146
      %2513 = vmatprep.subr.bf16.mxu0 %v2155
      %2514 = vmatpush1.bf16.msra.mxu0 %v2154
      %2515 = vmatprep.subr.bf16.mxu0 %v2163
      %2516 = vmatpush1.bf16.msra.mxu0 %v2162
      %2517 = vmatprep.subr.bf16.mxu0 %v2171
      %2518 = vmatpush1.bf16.msra.mxu0 %v2170
      %2519 = vmatprep.subr.bf16.mxu0 %v2179
      %2520 = vmatpush1.bf16.msra.mxu0 %v2178
      %2521 = vmatprep.subr.bf16.mxu0 %v2187
      %2522 = vmatpush1.bf16.msra.mxu0 %v2186
      %2523 = vmatprep.mubr.bf16.mxu0 %v871
      %2524 = vmatmul.mubr.bf16.gmra.mrb[0].mxu0 %v870
      %v2525 = vpop.f32.mrb[0].mxu0
      %v2526 = vadd.f32 %v2485, %v2525
      %v2527 = vpop.f32.mrb[0].mxu0
      %v2528 = vadd.f32 %v2487, %v2527
      %v2529 = vpop.f32.mrb[0].mxu0
      %v2530 = vpop.f32.mrb[0].mxu0
      %2531 = vdwg.mxu0
      %2532 = vmatprep.subr.bf16.mxu0 %v1941
      %2533 = vmatpush1.bf16.msra.mxu0 %v1940
      %2534 = vmatprep.subr.bf16.mxu0 %v1949
      %2535 = vmatpush1.bf16.msra.mxu0 %v1948
      %2536 = vmatprep.subr.bf16.mxu0 %v1957
      %2537 = vmatpush1.bf16.msra.mxu0 %v1956
      %2538 = vmatprep.subr.bf16.mxu0 %v1965
      %2539 = vmatpush1.bf16.msra.mxu0 %v1964
      %2540 = vmatprep.subr.bf16.mxu0 %v1973
      %2541 = vmatpush1.bf16.msra.mxu0 %v1972
      %2542 = vmatprep.subr.bf16.mxu0 %v1981
      %2543 = vmatpush1.bf16.msra.mxu0 %v1980
      %2544 = vmatprep.subr.bf16.mxu0 %v1989
      %2545 = vmatpush1.bf16.msra.mxu0 %v1988
      %2546 = vmatprep.subr.bf16.mxu0 %v1997
      %2547 = vmatpush1.bf16.msra.mxu0 %v1996
      %2548 = vmatprep.subr.bf16.mxu0 %v2005
      %2549 = vmatpush1.bf16.msra.mxu0 %v2004
      %2550 = vmatprep.subr.bf16.mxu0 %v2013
      %2551 = vmatpush1.bf16.msra.mxu0 %v2012
      %2552 = vmatprep.subr.bf16.mxu0 %v2021
      %2553 = vmatpush1.bf16.msra.mxu0 %v2020
      %2554 = vmatprep.subr.bf16.mxu0 %v2029
      %2555 = vmatpush1.bf16.msra.mxu0 %v2028
      %2556 = vmatprep.subr.bf16.mxu0 %v2037
      %2557 = vmatpush1.bf16.msra.mxu0 %v2036
      %2558 = vmatprep.subr.bf16.mxu0 %v2045
      %2559 = vmatpush1.bf16.msra.mxu0 %v2044
      %2560 = vmatprep.subr.bf16.mxu0 %v2053
      %2561 = vmatpush1.bf16.msra.mxu0 %v2052
      %2562 = vmatprep.subr.bf16.mxu0 %v2061
      %2563 = vmatpush1.bf16.msra.mxu0 %v2060
      %2564 = vmatprep.mubr.bf16.mxu0 %v869
      %2565 = vmatmul.mubr.bf16.gmra.mrb[0].mxu0 %v868
      %v2566 = vpop.f32.mrb[0].mxu0
      %v2567 = vadd.f32 %v1141, %v2566
      %v2568 = vpop.f32.mrb[0].mxu0
      %v2569 = vadd.f32 %v1145, %v2568
      %v2570 = vpop.f32.mrb[0].mxu0
      %v2571 = vpop.f32.mrb[0].mxu0
      %2572 = vdwg.mxu0
      %2573 = vmatprep.subr.bf16.mxu0 %v2069
      %2574 = vmatpush1.bf16.msra.mxu0 %v2068
      %2575 = vmatprep.subr.bf16.mxu0 %v2077
      %2576 = vmatpush1.bf16.msra.mxu0 %v2076
      %2577 = vmatprep.subr.bf16.mxu0 %v2085
      %2578 = vmatpush1.bf16.msra.mxu0 %v2084
      %2579 = vmatprep.subr.bf16.mxu0 %v2093
      %2580 = vmatpush1.bf16.msra.mxu0 %v2092
      %2581 = vmatprep.subr.bf16.mxu0 %v2101
      %2582 = vmatpush1.bf16.msra.mxu0 %v2100
      %2583 = vmatprep.subr.bf16.mxu0 %v2109
      %2584 = vmatpush1.bf16.msra.mxu0 %v2108
      %2585 = vmatprep.subr.bf16.mxu0 %v2117
      %2586 = vmatpush1.bf16.msra.mxu0 %v2116
      %2587 = vmatprep.subr.bf16.mxu0 %v2125
      %2588 = vmatpush1.bf16.msra.mxu0 %v2124
      %2589 = vmatprep.subr.bf16.mxu0 %v2133
      %2590 = vmatpush1.bf16.msra.mxu0 %v2132
      %2591 = vmatprep.subr.bf16.mxu0 %v2141
      %2592 = vmatpush1.bf16.msra.mxu0 %v2140
      %2593 = vmatprep.subr.bf16.mxu0 %v2149
      %2594 = vmatpush1.bf16.msra.mxu0 %v2148
      %2595 = vmatprep.subr.bf16.mxu0 %v2157
      %2596 = vmatpush1.bf16.msra.mxu0 %v2156
      %2597 = vmatprep.subr.bf16.mxu0 %v2165
      %2598 = vmatpush1.bf16.msra.mxu0 %v2164
      %2599 = vmatprep.subr.bf16.mxu0 %v2173
      %2600 = vmatpush1.bf16.msra.mxu0 %v2172
      %2601 = vmatprep.subr.bf16.mxu0 %v2181
      %2602 = vmatpush1.bf16.msra.mxu0 %v2180
      %2603 = vmatprep.subr.bf16.mxu0 %v2189
      %2604 = vmatpush1.bf16.msra.mxu0 %v2188
      %2605 = vmatprep.mubr.bf16.mxu0 %v871
      %2606 = vmatmul.mubr.bf16.gmra.mrb[0].mxu0 %v870
      %v2607 = vpop.f32.mrb[0].mxu0
      %v2608 = vadd.f32 %v2567, %v2607
      %v2609 = vpop.f32.mrb[0].mxu0
      %v2610 = vadd.f32 %v2569, %v2609
      %v2611 = vpop.f32.mrb[0].mxu0
      %v2612 = vpop.f32.mrb[0].mxu0
      %2613 = vdwg.mxu0
      %2614 = vmatprep.subr.bf16.mxu0 %v1943
      %2615 = vmatpush1.bf16.msra.mxu0 %v1942
      %2616 = vmatprep.subr.bf16.mxu0 %v1951
      %2617 = vmatpush1.bf16.msra.mxu0 %v1950
      %2618 = vmatprep.subr.bf16.mxu0 %v1959
      %2619 = vmatpush1.bf16.msra.mxu0 %v1958
      %2620 = vmatprep.subr.bf16.mxu0 %v1967
      %2621 = vmatpush1.bf16.msra.mxu0 %v1966
      %2622 = vmatprep.subr.bf16.mxu0 %v1975
      %2623 = vmatpush1.bf16.msra.mxu0 %v1974
      %2624 = vmatprep.subr.bf16.mxu0 %v1983
      %2625 = vmatpush1.bf16.msra.mxu0 %v1982
      %2626 = vmatprep.subr.bf16.mxu0 %v1991
      %2627 = vmatpush1.bf16.msra.mxu0 %v1990
      %2628 = vmatprep.subr.bf16.mxu0 %v1999
      %2629 = vmatpush1.bf16.msra.mxu0 %v1998
      %2630 = vmatprep.subr.bf16.mxu0 %v2007
      %2631 = vmatpush1.bf16.msra.mxu0 %v2006
      %2632 = vmatprep.subr.bf16.mxu0 %v2015
      %2633 = vmatpush1.bf16.msra.mxu0 %v2014
      %2634 = vmatprep.subr.bf16.mxu0 %v2023
      %2635 = vmatpush1.bf16.msra.mxu0 %v2022
      %2636 = vmatprep.subr.bf16.mxu0 %v2031
      %2637 = vmatpush1.bf16.msra.mxu0 %v2030
      %2638 = vmatprep.subr.bf16.mxu0 %v2039
      %2639 = vmatpush1.bf16.msra.mxu0 %v2038
      %2640 = vmatprep.subr.bf16.mxu0 %v2047
      %2641 = vmatpush1.bf16.msra.mxu0 %v2046
      %2642 = vmatprep.subr.bf16.mxu0 %v2055
      %2643 = vmatpush1.bf16.msra.mxu0 %v2054
      %2644 = vmatprep.subr.bf16.mxu0 %v2063
      %2645 = vmatpush1.bf16.msra.mxu0 %v2062
      %2646 = vmatprep.mubr.bf16.mxu0 %v869
      %2647 = vmatmul.mubr.bf16.gmra.mrb[0].mxu0 %v868
      %v2648 = vpop.f32.mrb[0].mxu0
      %v2649 = vadd.f32 %v1149, %v2648
      %v2650 = vpop.f32.mrb[0].mxu0
      %v2651 = vadd.f32 %v1153, %v2650
      %v2652 = vpop.f32.mrb[0].mxu0
      %v2653 = vpop.f32.mrb[0].mxu0
      %2654 = vdwg.mxu0
      %2655 = vmatprep.subr.bf16.mxu0 %v2071
      %2656 = vmatpush1.bf16.msra.mxu0 %v2070
      %2657 = vmatprep.subr.bf16.mxu0 %v2079
      %2658 = vmatpush1.bf16.msra.mxu0 %v2078
      %2659 = vmatprep.subr.bf16.mxu0 %v2087
      %2660 = vmatpush1.bf16.msra.mxu0 %v2086
      %2661 = vmatprep.subr.bf16.mxu0 %v2095
      %2662 = vmatpush1.bf16.msra.mxu0 %v2094
      %2663 = vmatprep.subr.bf16.mxu0 %v2103
      %2664 = vmatpush1.bf16.msra.mxu0 %v2102
      %2665 = vmatprep.subr.bf16.mxu0 %v2111
      %2666 = vmatpush1.bf16.msra.mxu0 %v2110
      %2667 = vmatprep.subr.bf16.mxu0 %v2119
      %2668 = vmatpush1.bf16.msra.mxu0 %v2118
      %2669 = vmatprep.subr.bf16.mxu0 %v2127
      %2670 = vmatpush1.bf16.msra.mxu0 %v2126
      %2671 = vmatprep.subr.bf16.mxu0 %v2135
      %2672 = vmatpush1.bf16.msra.mxu0 %v2134
      %2673 = vmatprep.subr.bf16.mxu0 %v2143
      %2674 = vmatpush1.bf16.msra.mxu0 %v2142
      %2675 = vmatprep.subr.bf16.mxu0 %v2151
      %2676 = vmatpush1.bf16.msra.mxu0 %v2150
      %2677 = vmatprep.subr.bf16.mxu0 %v2159
      %2678 = vmatpush1.bf16.msra.mxu0 %v2158
      %2679 = vmatprep.subr.bf16.mxu0 %v2167
      %2680 = vmatpush1.bf16.msra.mxu0 %v2166
      %2681 = vmatprep.subr.bf16.mxu0 %v2175
      %2682 = vmatpush1.bf16.msra.mxu0 %v2174
      %2683 = vmatprep.subr.bf16.mxu0 %v2183
      %2684 = vmatpush1.bf16.msra.mxu0 %v2182
      %2685 = vmatprep.subr.bf16.mxu0 %v2191
      %2686 = vmatpush1.bf16.msra.mxu0 %v2190
      %2687 = vmatprep.mubr.bf16.mxu0 %v871
      %2688 = vmatmul.mubr.bf16.gmra.mrb[0].mxu0 %v870
      %v2689 = vpop.f32.mrb[0].mxu0
      %v2690 = vadd.f32 %v2649, %v2689
      %v2691 = vpop.f32.mrb[0].mxu0
      %v2692 = vadd.f32 %v2651, %v2691
      %v2693 = vpop.f32.mrb[0].mxu0
      %v2694 = vpop.f32.mrb[0].mxu0
      %2695 = vdwg.mxu0
      %2696 = vmatprep.subr.bf16.mxu0 %v1945
      %2697 = vmatpush1.bf16.msra.mxu0 %v1944
      %2698 = vmatprep.subr.bf16.mxu0 %v1953
      %2699 = vmatpush1.bf16.msra.mxu0 %v1952
      %2700 = vmatprep.subr.bf16.mxu0 %v1961
      %2701 = vmatpush1.bf16.msra.mxu0 %v1960
      %2702 = vmatprep.subr.bf16.mxu0 %v1969
      %2703 = vmatpush1.bf16.msra.mxu0 %v1968
      %2704 = vmatprep.subr.bf16.mxu0 %v1977
      %2705 = vmatpush1.bf16.msra.mxu0 %v1976
      %2706 = vmatprep.subr.bf16.mxu0 %v1985
      %2707 = vmatpush1.bf16.msra.mxu0 %v1984
      %2708 = vmatprep.subr.bf16.mxu0 %v1993
      %2709 = vmatpush1.bf16.msra.mxu0 %v1992
      %2710 = vmatprep.subr.bf16.mxu0 %v2001
      %2711 = vmatpush1.bf16.msra.mxu0 %v2000
      %2712 = vmatprep.subr.bf16.mxu0 %v2009
      %2713 = vmatpush1.bf16.msra.mxu0 %v2008
      %2714 = vmatprep.subr.bf16.mxu0 %v2017
      %2715 = vmatpush1.bf16.msra.mxu0 %v2016
      %2716 = vmatprep.subr.bf16.mxu0 %v2025
      %2717 = vmatpush1.bf16.msra.mxu0 %v2024
      %2718 = vmatprep.subr.bf16.mxu0 %v2033
      %2719 = vmatpush1.bf16.msra.mxu0 %v2032
      %2720 = vmatprep.subr.bf16.mxu0 %v2041
      %2721 = vmatpush1.bf16.msra.mxu0 %v2040
      %2722 = vmatprep.subr.bf16.mxu0 %v2049
      %2723 = vmatpush1.bf16.msra.mxu0 %v2048
      %2724 = vmatprep.subr.bf16.mxu0 %v2057
      %2725 = vmatpush1.bf16.msra.mxu0 %v2056
      %2726 = vmatprep.subr.bf16.mxu0 %v2065
      %2727 = vmatpush1.bf16.msra.mxu0 %v2064
      %2728 = vmatprep.mubr.bf16.mxu0 %v869
      %2729 = vmatmul.mubr.bf16.gmra.mrb[0].mxu0 %v868
      %v2730 = vpop.f32.mrb[0].mxu0
      %v2731 = vadd.f32 %v1157, %v2730
      %v2732 = vpop.f32.mrb[0].mxu0
      %v2733 = vadd.f32 %v1161, %v2732
      %v2734 = vpop.f32.mrb[0].mxu0
      %v2735 = vpop.f32.mrb[0].mxu0
      %2736 = vdwg.mxu0
      %2737 = vmatprep.subr.bf16.mxu0 %v2073
      %2738 = vmatpush1.bf16.msra.mxu0 %v2072
      %2739 = vmatprep.subr.bf16.mxu0 %v2081
      %2740 = vmatpush1.bf16.msra.mxu0 %v2080
      %2741 = vmatprep.subr.bf16.mxu0 %v2089
      %2742 = vmatpush1.bf16.msra.mxu0 %v2088
      %2743 = vmatprep.subr.bf16.mxu0 %v2097
      %2744 = vmatpush1.bf16.msra.mxu0 %v2096
      %2745 = vmatprep.subr.bf16.mxu0 %v2105
      %2746 = vmatpush1.bf16.msra.mxu0 %v2104
      %2747 = vmatprep.subr.bf16.mxu0 %v2113
      %2748 = vmatpush1.bf16.msra.mxu0 %v2112
      %2749 = vmatprep.subr.bf16.mxu0 %v2121
      %2750 = vmatpush1.bf16.msra.mxu0 %v2120
      %2751 = vmatprep.subr.bf16.mxu0 %v2129
      %2752 = vmatpush1.bf16.msra.mxu0 %v2128
      %2753 = vmatprep.subr.bf16.mxu0 %v2137
      %2754 = vmatpush1.bf16.msra.mxu0 %v2136
      %2755 = vmatprep.subr.bf16.mxu0 %v2145
      %2756 = vmatpush1.bf16.msra.mxu0 %v2144
      %2757 = vmatprep.subr.bf16.mxu0 %v2153
      %2758 = vmatpush1.bf16.msra.mxu0 %v2152
      %2759 = vmatprep.subr.bf16.mxu0 %v2161
      %2760 = vmatpush1.bf16.msra.mxu0 %v2160
      %2761 = vmatprep.subr.bf16.mxu0 %v2169
      %2762 = vmatpush1.bf16.msra.mxu0 %v2168
      %2763 = vmatprep.subr.bf16.mxu0 %v2177
      %2764 = vmatpush1.bf16.msra.mxu0 %v2176
      %2765 = vmatprep.subr.bf16.mxu0 %v2185
      %2766 = vmatpush1.bf16.msra.mxu0 %v2184
      %2767 = vmatprep.subr.bf16.mxu0 %v2193
      %2768 = vmatpush1.bf16.msra.mxu0 %v2192
      %2769 = vmatprep.mubr.bf16.mxu0 %v871
      %2770 = vmatmul.mubr.bf16.gmra.mrb[0].mxu0 %v870
      %v2771 = vpop.f32.mrb[0].mxu0
      %v2772 = vadd.f32 %v2731, %v2771
      %v2773 = vpop.f32.mrb[0].mxu0
      %v2774 = vadd.f32 %v2733, %v2773
      %v2775 = vpop.f32.mrb[0].mxu0
      %v2776 = vpop.f32.mrb[0].mxu0
      %2777 = vdwg.mxu0
      %v2778 = vmax.f32 %v2526, 0.0
      %v2779 = vmax.f32 %v2528, 0.0
      %v2780 = vmax.f32 %v2608, 0.0
      %v2781 = vmax.f32 %v2610, 0.0
      %v2782 = vmax.f32 %v2690, 0.0
      %v2783 = vmax.f32 %v2692, 0.0
      %v2784 = vmax.f32 %v2772, 0.0
      %v2785 = vmax.f32 %v2774, 0.0
      %v2786 = vrot.slane %v2778, 4
      %v2787 = vmax.f32 %v2778, %v2786
      %v2788 = vrot.slane %v2787, 2
      %v2789 = vmax.f32 %v2787, %v2788
      %v2790 = vrot.slane %v2789, 1
      %v2791 = vmax.f32 %v2789, %v2790
      %v2792 = vrot.slane %v2779, 4
      %v2793 = vmax.f32 %v2779, %v2792
      %v2794 = vrot.slane %v2793, 2
      %v2795 = vmax.f32 %v2793, %v2794
      %v2796 = vrot.slane %v2795, 1
      %v2797 = vmax.f32 %v2795, %v2796
      %v2798 = vrot.slane %v2780, 4
      %v2799 = vmax.f32 %v2780, %v2798
      %v2800 = vrot.slane %v2799, 2
      %v2801 = vmax.f32 %v2799, %v2800
      %v2802 = vrot.slane %v2801, 1
      %v2803 = vmax.f32 %v2801, %v2802
      %v2804 = vrot.slane %v2781, 4
      %v2805 = vmax.f32 %v2781, %v2804
      %v2806 = vrot.slane %v2805, 2
      %v2807 = vmax.f32 %v2805, %v2806
      %v2808 = vrot.slane %v2807, 1
      %v2809 = vmax.f32 %v2807, %v2808
      %v2810 = vrot.slane %v2782, 4
      %v2811 = vmax.f32 %v2782, %v2810
      %v2812 = vrot.slane %v2811, 2
      %v2813 = vmax.f32 %v2811, %v2812
      %v2814 = vrot.slane %v2813, 1
      %v2815 = vmax.f32 %v2813, %v2814
      %v2816 = vrot.slane %v2783, 4
      %v2817 = vmax.f32 %v2783, %v2816
      %v2818 = vrot.slane %v2817, 2
      %v2819 = vmax.f32 %v2817, %v2818
      %v2820 = vrot.slane %v2819, 1
      %v2821 = vmax.f32 %v2819, %v2820
      %v2822 = vrot.slane %v2784, 4
      %v2823 = vmax.f32 %v2784, %v2822
      %v2824 = vrot.slane %v2823, 2
      %v2825 = vmax.f32 %v2823, %v2824
      %v2826 = vrot.slane %v2825, 1
      %v2827 = vmax.f32 %v2825, %v2826
      %v2828 = vrot.slane %v2785, 4
      %v2829 = vmax.f32 %v2785, %v2828
      %v2830 = vrot.slane %v2829, 2
      %v2831 = vmax.f32 %v2829, %v2830
      %v2832 = vrot.slane %v2831, 1
      %v2833 = vmax.f32 %v2831, %v2832
      %p2834 = scmp.eq.s32.totalorder %s21, 0
      // Predicated region
      $region41: #{pointnet2_forward.8} parent=39 // pred_check
        %p2835 = pneg %p2834
      $region42: #{pointnet2_forward.8} parent=39 // pred_check_branch
        %2837 = sbr.rel (%p2835) target = $region44
      $region43: #{pointnet2_forward.8} parent=39 // pred_region
        %v2846 = vcombine.low %v2791, %v2797
        %v2847 = vcombine.low %v2803, %v2809
        %v2848 = vcombine.low %v2815, %v2821
        %v2849 = vcombine.low %v2827, %v2833
        %v2851 = vunpack.c.l.s4 1966171168
        %v2852 = vunpack.c.0.s8 %v2851
        %v2853 = vlaneseq
        %v2854 = vshrl.u32 %v2853, 7
        %v2855 = vsub.s32 %v2852, %v2854
        %v2856 = vrot.slane %v2846, %v2855
        %v2858 = vunpack.c.l.s4 1966171168
        %v2859 = vunpack.c.0.s8 %v2858
        %v2860 = vlaneseq
        %v2861 = vshrl.u32 %v2860, 7
        %v2862 = vsub.s32 %v2859, %v2861
        %v2863 = vrot.slane %v2847, %v2862
        %v2865 = vunpack.c.l.s4 1966171168
        %v2866 = vunpack.c.0.s8 %v2865
        %v2867 = vlaneseq
        %v2868 = vshrl.u32 %v2867, 7
        %v2869 = vsub.s32 %v2866, %v2868
        %v2870 = vrot.slane %v2848, %v2869
        %v2872 = vunpack.c.l.s4 1966171168
        %v2873 = vunpack.c.0.s8 %v2872
        %v2874 = vlaneseq
        %v2875 = vshrl.u32 %v2874, 7
        %v2876 = vsub.s32 %v2873, %v2875
        %v2877 = vrot.slane %v2849, %v2876
        %v2878 = vcombine.low %v2856, %v2863
        %v2879 = vcombine.low %v2870, %v2877
        %v2881 = vunpack.c.l.s4 1966171168
        %v2882 = vunpack.c.0.s8 %v2881
        %v2883 = vlaneseq
        %v2884 = vshrl.u32 %v2883, 7
        %v2885 = vsub.s32 %v2882, %v2884
        %v2886 = vrot.slane %v2878, %v2885
        %v2888 = vunpack.c.l.s4 1966171168
        %v2889 = vunpack.c.0.s8 %v2888
        %v2890 = vlaneseq
        %v2891 = vshrl.u32 %v2890, 7
        %v2892 = vsub.s32 %v2889, %v2891
        %v2893 = vrot.slane %v2879, %v2892
        %v2894 = vcombine.low %v2886, %v2893
        %2896 = vst [vmem:[%s248] sm:$0xff] %v2894
      $region44: #{pointnet2_forward.8} parent=39 // pred_fallthru
        _
      %p2897 = scmp.gt.s32.totalorder %s21, 0
      // Predicated region
      $region45: #{pointnet2_forward.8} parent=39 // pred_check
        %p2898 = pneg %p2897
      $region46: #{pointnet2_forward.8} parent=39 // pred_check_branch
        %2900 = sbr.rel (%p2898) target = $region48
      $region47: #{pointnet2_forward.8} parent=39 // pred_region
        %v2901 = vld [vmem:[%s248] sm:$0xff]
        %v2910 = vcombine.low %v2791, %v2797
        %v2911 = vcombine.low %v2803, %v2809
        %v2912 = vcombine.low %v2815, %v2821
        %v2913 = vcombine.low %v2827, %v2833
        %v2915 = vunpack.c.l.s4 1966171168
        %v2916 = vunpack.c.0.s8 %v2915
        %v2917 = vlaneseq
        %v2918 = vshrl.u32 %v2917, 7
        %v2919 = vsub.s32 %v2916, %v2918
        %v2920 = vrot.slane %v2910, %v2919
        %v2922 = vunpack.c.l.s4 1966171168
        %v2923 = vunpack.c.0.s8 %v2922
        %v2924 = vlaneseq
        %v2925 = vshrl.u32 %v2924, 7
        %v2926 = vsub.s32 %v2923, %v2925
        %v2927 = vrot.slane %v2911, %v2926
        %v2929 = vunpack.c.l.s4 1966171168
        %v2930 = vunpack.c.0.s8 %v2929
        %v2931 = vlaneseq
        %v2932 = vshrl.u32 %v2931, 7
        %v2933 = vsub.s32 %v2930, %v2932
        %v2934 = vrot.slane %v2912, %v2933
        %v2936 = vunpack.c.l.s4 1966171168
        %v2937 = vunpack.c.0.s8 %v2936
        %v2938 = vlaneseq
        %v2939 = vshrl.u32 %v2938, 7
        %v2940 = vsub.s32 %v2937, %v2939
        %v2941 = vrot.slane %v2913, %v2940
        %v2942 = vcombine.low %v2920, %v2927
        %v2943 = vcombine.low %v2934, %v2941
        %v2945 = vunpack.c.l.s4 1966171168
        %v2946 = vunpack.c.0.s8 %v2945
        %v2947 = vlaneseq
        %v2948 = vshrl.u32 %v2947, 7
        %v2949 = vsub.s32 %v2946, %v2948
        %v2950 = vrot.slane %v2942, %v2949
        %v2952 = vunpack.c.l.s4 1966171168
        %v2953 = vunpack.c.0.s8 %v2952
        %v2954 = vlaneseq
        %v2955 = vshrl.u32 %v2954, 7
        %v2956 = vsub.s32 %v2953, %v2955
        %v2957 = vrot.slane %v2943, %v2956
        %v2958 = vcombine.low %v2950, %v2957
        %v2960 = vmax.f32 %v2901, %v2958
        %2961 = vst [vmem:[%s248] sm:$0xff] %v2960
      $region48: #{pointnet2_forward.8} parent=39 // pred_fallthru
        _
      %p2962 = scmp.lt.s32.totalorder %s20, 1
      %s2963 = scalar_select %p2962, %s20, 1
      %s2964 = smul.addr %s2963, 8
      %s2965 = scalar_lea.vmem %s5, %s2964
      // Predicated region
      $region49: #{pointnet2_forward.8} parent=39 // pred_check
        %p2966 = pneg %p158
      $region50: #{pointnet2_forward.8} parent=39 // pred_check_branch
        %2968 = sbr.rel (%p2966) target = $region52
      $region51: #{pointnet2_forward.8} parent=39 // pred_region
        _
      $region52: #{pointnet2_forward.8} parent=39 // pred_fallthru
        _
    $region40: #{pointnet2_forward.8} parent=5 // pred_fallthru
      _
    %p2969 = scmp.le.s32.totalorder 2, %s11
    // Predicated region
    $region53: #{pointnet2_forward.8} parent=5 // pred_check
      %p2970 = pneg %p2969
    $region54: #{pointnet2_forward.8} parent=5 // pred_check_branch
      %2972 = sbr.rel (%p2970) target = $region56
    $region55: #{pointnet2_forward.8} parent=5 // pred_region
      %s2973 = ssub.s32 %s11, 2
      // Predicated region
      $region57: #{pointnet2_forward.8} parent=55 // pred_check
        %p2974 = pneg %p164
      $region58: #{pointnet2_forward.8} parent=55 // pred_check_branch
        %2976 = sbr.rel (%p2974) target = $region60
      $region59: #{pointnet2_forward.8} parent=55 // pred_region
        %p2977 = scmp.lt.s32.totalorder %s22, 1
        %s2978 = scalar_select %p2977, %s22, 1
        %s2979 = smul.addr %s2978, 8
        %s2980 = scalar_lea.vmem %s5, %s2979
      $region60: #{pointnet2_forward.8} parent=55 // pred_fallthru
        _
    $region56: #{pointnet2_forward.8} parent=5 // pred_fallthru
      _
  $region6: #{pointnet2_forward.8} parent=0 // loop_footer
    %s15 = sadd.s32 1, %s11
  $region7: #{pointnet2_forward.8} parent=0 // loop_footer_branch
    %10 = sbr.rel target = $region3
  $region8: #{pointnet2_forward.8} parent=0 // loop_exit
    _

// kernel: pointnet2_forward.9
$region0: #{pointnet2_forward.9}
  #allocation0 [shape = 'u32[]', space=smem, size = 0x4, offset = 0x4, fixed_abs, tag = 'smem constant byte address 0x4 - core index']
  #allocation1 [shape = 'u32[144,128]{1,0:T(1,128)}', space=vmem, size = 0x12000, scoped, tag = 'internal scratch']
  %s0 = inlined_call_operand.vmem [shape: bf16[2,1024], index: 0, kind: input, shape index: {}]
  %s1 = inlined_call_operand.vmem [shape: bf16[1024,512], index: 1, kind: input, shape index: {}]
  %s2 = inlined_call_operand.vmem [shape: f32[1,512], index: 2, kind: input, shape index: {}]
  %s3 = inlined_call_operand.vmem [shape: bf16[512,256], index: 3, kind: input, shape index: {}]
  %s4 = inlined_call_operand.vmem [shape: f32[1,256], index: 4, kind: input, shape index: {}]
  %s5 = inlined_call_operand.vmem [shape: bf16[256,128], index: 5, kind: input, shape index: {}]
  %s6 = inlined_call_operand.vmem [shape: f32[1,128], index: 6, kind: input, shape index: {}]
  %s7 = inlined_call_operand.hbm [shape: f32[2,512], index: 7, kind: output, shape index: {0}]
  %s8 = inlined_call_operand.hbm [shape: f32[2,256], index: 8, kind: output, shape index: {1}]
  %s9 = inlined_call_operand.vmem [shape: f32[2,128], index: 9, kind: output, shape index: {2}]
  %10 = xla_tuple %s7, %s8, %s9
  %s11 = sld [smem:[#allocation0]]
  $region54: #{pointnet2_forward.9} parent=0
    _
  %s13 = ssub.s32 1, %s11
  %s14 = scalar_select 0, %s13, %s11
  $region1: #{pointnet2_forward.9} parent=0
    #allocation2 [shape = 'u8[4096]{0}', space=vmem, size = 0x1000, scoped, tag = 'output window, operand 0, single buffered']
    #allocation3 [shape = 's32[1]{0}', space=sflag, size = 0x4, scoped, tag = 'scoped memory for pointnet2_forward.9']
    #allocation4 [shape = 'u8[2048]{0}', space=vmem, size = 0x800, scoped, tag = 'output window, operand 1, single buffered']
    #allocation5 [shape = 's32[1]{0}', space=sflag, size = 0x4, scoped, tag = 'scoped memory for pointnet2_forward.9']
    %15 = vsyncpa [#allocation3], 0
    %16 = vsyncpa [#allocation5], 0
    // Predicated region
    $region2: #{pointnet2_forward.9} parent=1 // pred_check
      _
    $region3: #{pointnet2_forward.9} parent=1 // pred_check_branch
      %18 = sbr.rel (0) target = $region5
    $region4: #{pointnet2_forward.9} parent=1 // pred_region
      _
    $region5: #{pointnet2_forward.9} parent=1 // pred_fallthru
      _
    // Predicated region
    $region6: #{pointnet2_forward.9} parent=1 // pred_check
      _
    $region7: #{pointnet2_forward.9} parent=1 // pred_check_branch
      %20 = sbr.rel (0) target = $region9
    $region8: #{pointnet2_forward.9} parent=1 // pred_region
      _
    $region9: #{pointnet2_forward.9} parent=1 // pred_fallthru
      _
    // Predicated region
    $region10: #{pointnet2_forward.9} parent=1 // pred_check
      _
    $region11: #{pointnet2_forward.9} parent=1 // pred_check_branch
      %22 = sbr.rel (0) target = $region13
    $region12: #{pointnet2_forward.9} parent=1 // pred_region
      _
    $region13: #{pointnet2_forward.9} parent=1 // pred_fallthru
      _
    // Predicated region
    $region14: #{pointnet2_forward.9} parent=1 // pred_check
      _
    $region15: #{pointnet2_forward.9} parent=1 // pred_check_branch
      %24 = sbr.rel (0) target = $region17
    $region16: #{pointnet2_forward.9} parent=1 // pred_region
      _
    $region17: #{pointnet2_forward.9} parent=1 // pred_fallthru
      _
    // Predicated region
    $region18: #{pointnet2_forward.9} parent=1 // pred_check
      _
    $region19: #{pointnet2_forward.9} parent=1 // pred_check_branch
      %26 = sbr.rel (0) target = $region21
    $region20: #{pointnet2_forward.9} parent=1 // pred_region
      _
    $region21: #{pointnet2_forward.9} parent=1 // pred_fallthru
      _
    // Predicated region
    $region22: #{pointnet2_forward.9} parent=1 // pred_check
      _
    $region23: #{pointnet2_forward.9} parent=1 // pred_check_branch
      %28 = sbr.rel (0) target = $region25
    $region24: #{pointnet2_forward.9} parent=1 // pred_region
      _
    $region25: #{pointnet2_forward.9} parent=1 // pred_fallthru
      _
    // Predicated region
    $region26: #{pointnet2_forward.9} parent=1 // pred_check
      _
    $region27: #{pointnet2_forward.9} parent=1 // pred_check_branch
      %30 = sbr.rel (0) target = $region29
    $region28: #{pointnet2_forward.9} parent=1 // pred_region
      _
    $region29: #{pointnet2_forward.9} parent=1 // pred_fallthru
      _
    %v32 = vld [vmem:[%s0] sm:$0xff]
    %v33 = vld [vmem:[%s1] sm:$0xff]
    %v34 = vld [vmem:[%s1 + $0x8] sm:$0xff]
    %v35 = vld [vmem:[%s1 + $0x10] sm:$0xff]
    %v36 = vld [vmem:[%s1 + $0x18] sm:$0xff]
    %v37 = vld [vmem:[%s1 + $0x20] sm:$0xff]
    %v38 = vld [vmem:[%s1 + $0x28] sm:$0xff]
    %v39 = vld [vmem:[%s1 + $0x30] sm:$0xff]
    %v40 = vld [vmem:[%s1 + $0x38] sm:$0xff]
    %v41 = vld [vmem:[%s1 + $0x40] sm:$0xff]
    %v42 = vld [vmem:[%s1 + $0x48] sm:$0xff]
    %v43 = vld [vmem:[%s1 + $0x50] sm:$0xff]
    %v44 = vld [vmem:[%s1 + $0x58] sm:$0xff]
    %v45 = vld [vmem:[%s1 + $0x60] sm:$0xff]
    %v46 = vld [vmem:[%s1 + $0x68] sm:$0xff]
    %v47 = vld [vmem:[%s1 + $0x70] sm:$0xff]
    %v48 = vld [vmem:[%s1 + $0x78] sm:$0xff]
    %v49 = vld [vmem:[%s1 + $0x80] sm:$0xff]
    %v50 = vld [vmem:[%s1 + $0x88] sm:$0xff]
    %v51 = vld [vmem:[%s1 + $0x90] sm:$0xff]
    %v52 = vld [vmem:[%s1 + $0x98] sm:$0xff]
    %v53 = vld [vmem:[%s1 + $0xa0] sm:$0xff]
    %v54 = vld [vmem:[%s1 + $0xa8] sm:$0xff]
    %v55 = vld [vmem:[%s1 + $0xb0] sm:$0xff]
    %v56 = vld [vmem:[%s1 + $0xb8] sm:$0xff]
    %v57 = vld [vmem:[%s1 + $0xc0] sm:$0xff]
    %v58 = vld [vmem:[%s1 + $0xc8] sm:$0xff]
    %v59 = vld [vmem:[%s1 + $0xd0] sm:$0xff]
    %v60 = vld [vmem:[%s1 + $0xd8] sm:$0xff]
    %v61 = vld [vmem:[%s1 + $0xe0] sm:$0xff]
    %v62 = vld [vmem:[%s1 + $0xe8] sm:$0xff]
    %v63 = vld [vmem:[%s1 + $0xf0] sm:$0xff]
    %v64 = vld [vmem:[%s1 + $0xf8] sm:$0xff]
    %v65 = vld [vmem:[%s1 + $0x100] sm:$0xff]
    %v66 = vld [vmem:[%s1 + $0x108] sm:$0xff]
    %v67 = vld [vmem:[%s1 + $0x110] sm:$0xff]
    %v68 = vld [vmem:[%s1 + $0x118] sm:$0xff]
    %v69 = vld [vmem:[%s1 + $0x120] sm:$0xff]
    %v70 = vld [vmem:[%s1 + $0x128] sm:$0xff]
    %v71 = vld [vmem:[%s1 + $0x130] sm:$0xff]
    %v72 = vld [vmem:[%s1 + $0x138] sm:$0xff]
    %v73 = vld [vmem:[%s1 + $0x140] sm:$0xff]
    %v74 = vld [vmem:[%s1 + $0x148] sm:$0xff]
    %v75 = vld [vmem:[%s1 + $0x150] sm:$0xff]
    %v76 = vld [vmem:[%s1 + $0x158] sm:$0xff]
    %v77 = vld [vmem:[%s1 + $0x160] sm:$0xff]
    %v78 = vld [vmem:[%s1 + $0x168] sm:$0xff]
    %v79 = vld [vmem:[%s1 + $0x170] sm:$0xff]
    %v80 = vld [vmem:[%s1 + $0x178] sm:$0xff]
    %v81 = vld [vmem:[%s1 + $0x180] sm:$0xff]
    %v82 = vld [vmem:[%s1 + $0x188] sm:$0xff]
    %v83 = vld [vmem:[%s1 + $0x190] sm:$0xff]
    %v84 = vld [vmem:[%s1 + $0x198] sm:$0xff]
    %v85 = vld [vmem:[%s1 + $0x1a0] sm:$0xff]
    %v86 = vld [vmem:[%s1 + $0x1a8] sm:$0xff]
    %v87 = vld [vmem:[%s1 + $0x1b0] sm:$0xff]
    %v88 = vld [vmem:[%s1 + $0x1b8] sm:$0xff]
    %v89 = vld [vmem:[%s1 + $0x1c0] sm:$0xff]
    %v90 = vld [vmem:[%s1 + $0x1c8] sm:$0xff]
    %v91 = vld [vmem:[%s1 + $0x1d0] sm:$0xff]
    %v92 = vld [vmem:[%s1 + $0x1d8] sm:$0xff]
    %v93 = vld [vmem:[%s1 + $0x1e0] sm:$0xff]
    %v94 = vld [vmem:[%s1 + $0x1e8] sm:$0xff]
    %v95 = vld [vmem:[%s1 + $0x1f0] sm:$0xff]
    %v96 = vld [vmem:[%s1 + $0x1f8] sm:$0xff]
    %v97 = vld [vmem:[%s1 + $0x200] sm:$0xff]
    %v98 = vld [vmem:[%s1 + $0x208] sm:$0xff]
    %v99 = vld [vmem:[%s1 + $0x210] sm:$0xff]
    %v100 = vld [vmem:[%s1 + $0x218] sm:$0xff]
    %v101 = vld [vmem:[%s1 + $0x220] sm:$0xff]
    %v102 = vld [vmem:[%s1 + $0x228] sm:$0xff]
    %v103 = vld [vmem:[%s1 + $0x230] sm:$0xff]
    %v104 = vld [vmem:[%s1 + $0x238] sm:$0xff]
    %v105 = vld [vmem:[%s1 + $0x240] sm:$0xff]
    %v106 = vld [vmem:[%s1 + $0x248] sm:$0xff]
    %v107 = vld [vmem:[%s1 + $0x250] sm:$0xff]
    %v108 = vld [vmem:[%s1 + $0x258] sm:$0xff]
    %v109 = vld [vmem:[%s1 + $0x260] sm:$0xff]
    %v110 = vld [vmem:[%s1 + $0x268] sm:$0xff]
    %v111 = vld [vmem:[%s1 + $0x270] sm:$0xff]
    %v112 = vld [vmem:[%s1 + $0x278] sm:$0xff]
    %v113 = vld [vmem:[%s1 + $0x280] sm:$0xff]
    %v114 = vld [vmem:[%s1 + $0x288] sm:$0xff]
    %v115 = vld [vmem:[%s1 + $0x290] sm:$0xff]
    %v116 = vld [vmem:[%s1 + $0x298] sm:$0xff]
    %v117 = vld [vmem:[%s1 + $0x2a0] sm:$0xff]
    %v118 = vld [vmem:[%s1 + $0x2a8] sm:$0xff]
    %v119 = vld [vmem:[%s1 + $0x2b0] sm:$0xff]
    %v120 = vld [vmem:[%s1 + $0x2b8] sm:$0xff]
    %v121 = vld [vmem:[%s1 + $0x2c0] sm:$0xff]
    %v122 = vld [vmem:[%s1 + $0x2c8] sm:$0xff]
    %v123 = vld [vmem:[%s1 + $0x2d0] sm:$0xff]
    %v124 = vld [vmem:[%s1 + $0x2d8] sm:$0xff]
    %v125 = vld [vmem:[%s1 + $0x2e0] sm:$0xff]
    %v126 = vld [vmem:[%s1 + $0x2e8] sm:$0xff]
    %v127 = vld [vmem:[%s1 + $0x2f0] sm:$0xff]
    %v128 = vld [vmem:[%s1 + $0x2f8] sm:$0xff]
    %v129 = vld [vmem:[%s1 + $0x300] sm:$0xff]
    %v130 = vld [vmem:[%s1 + $0x308] sm:$0xff]
    %v131 = vld [vmem:[%s1 + $0x310] sm:$0xff]
    %v132 = vld [vmem:[%s1 + $0x318] sm:$0xff]
    %v133 = vld [vmem:[%s1 + $0x320] sm:$0xff]
    %v134 = vld [vmem:[%s1 + $0x328] sm:$0xff]
    %v135 = vld [vmem:[%s1 + $0x330] sm:$0xff]
    %v136 = vld [vmem:[%s1 + $0x338] sm:$0xff]
    %v137 = vld [vmem:[%s1 + $0x340] sm:$0xff]
    %v138 = vld [vmem:[%s1 + $0x348] sm:$0xff]
    %v139 = vld [vmem:[%s1 + $0x350] sm:$0xff]
    %v140 = vld [vmem:[%s1 + $0x358] sm:$0xff]
    %v141 = vld [vmem:[%s1 + $0x360] sm:$0xff]
    %v142 = vld [vmem:[%s1 + $0x368] sm:$0xff]
    %v143 = vld [vmem:[%s1 + $0x370] sm:$0xff]
    %v144 = vld [vmem:[%s1 + $0x378] sm:$0xff]
    %v145 = vld [vmem:[%s1 + $0x380] sm:$0xff]
    %v146 = vld [vmem:[%s1 + $0x388] sm:$0xff]
    %v147 = vld [vmem:[%s1 + $0x390] sm:$0xff]
    %v148 = vld [vmem:[%s1 + $0x398] sm:$0xff]
    %v149 = vld [vmem:[%s1 + $0x3a0] sm:$0xff]
    %v150 = vld [vmem:[%s1 + $0x3a8] sm:$0xff]
    %v151 = vld [vmem:[%s1 + $0x3b0] sm:$0xff]
    %v152 = vld [vmem:[%s1 + $0x3b8] sm:$0xff]
    %v153 = vld [vmem:[%s1 + $0x3c0] sm:$0xff]
    %v154 = vld [vmem:[%s1 + $0x3c8] sm:$0xff]
    %v155 = vld [vmem:[%s1 + $0x3d0] sm:$0xff]
    %v156 = vld [vmem:[%s1 + $0x3d8] sm:$0xff]
    %v157 = vld [vmem:[%s1 + $0x3e0] sm:$0xff]
    %v158 = vld [vmem:[%s1 + $0x3e8] sm:$0xff]
    %v159 = vld [vmem:[%s1 + $0x3f0] sm:$0xff]
    %v160 = vld [vmem:[%s1 + $0x3f8] sm:$0xff]
    %v161 = vld [vmem:[%s1 + $0x400] sm:$0xff]
    %v162 = vld [vmem:[%s1 + $0x408] sm:$0xff]
    %v163 = vld [vmem:[%s1 + $0x410] sm:$0xff]
    %v164 = vld [vmem:[%s1 + $0x418] sm:$0xff]
    %v165 = vld [vmem:[%s1 + $0x420] sm:$0xff]
    %v166 = vld [vmem:[%s1 + $0x428] sm:$0xff]
    %v167 = vld [vmem:[%s1 + $0x430] sm:$0xff]
    %v168 = vld [vmem:[%s1 + $0x438] sm:$0xff]
    %v169 = vld [vmem:[%s1 + $0x440] sm:$0xff]
    %v170 = vld [vmem:[%s1 + $0x448] sm:$0xff]
    %v171 = vld [vmem:[%s1 + $0x450] sm:$0xff]
    %v172 = vld [vmem:[%s1 + $0x458] sm:$0xff]
    %v173 = vld [vmem:[%s1 + $0x460] sm:$0xff]
    %v174 = vld [vmem:[%s1 + $0x468] sm:$0xff]
    %v175 = vld [vmem:[%s1 + $0x470] sm:$0xff]
    %v176 = vld [vmem:[%s1 + $0x478] sm:$0xff]
    %v177 = vld [vmem:[%s1 + $0x480] sm:$0xff]
    %v178 = vld [vmem:[%s1 + $0x488] sm:$0xff]
    %v179 = vld [vmem:[%s1 + $0x490] sm:$0xff]
    %v180 = vld [vmem:[%s1 + $0x498] sm:$0xff]
    %v181 = vld [vmem:[%s1 + $0x4a0] sm:$0xff]
    %v182 = vld [vmem:[%s1 + $0x4a8] sm:$0xff]
    %v183 = vld [vmem:[%s1 + $0x4b0] sm:$0xff]
    %v184 = vld [vmem:[%s1 + $0x4b8] sm:$0xff]
    %v185 = vld [vmem:[%s1 + $0x4c0] sm:$0xff]
    %v186 = vld [vmem:[%s1 + $0x4c8] sm:$0xff]
    %v187 = vld [vmem:[%s1 + $0x4d0] sm:$0xff]
    %v188 = vld [vmem:[%s1 + $0x4d8] sm:$0xff]
    %v189 = vld [vmem:[%s1 + $0x4e0] sm:$0xff]
    %v190 = vld [vmem:[%s1 + $0x4e8] sm:$0xff]
    %v191 = vld [vmem:[%s1 + $0x4f0] sm:$0xff]
    %v192 = vld [vmem:[%s1 + $0x4f8] sm:$0xff]
    %v193 = vld [vmem:[%s1 + $0x500] sm:$0xff]
    %v194 = vld [vmem:[%s1 + $0x508] sm:$0xff]
    %v195 = vld [vmem:[%s1 + $0x510] sm:$0xff]
    %v196 = vld [vmem:[%s1 + $0x518] sm:$0xff]
    %v197 = vld [vmem:[%s1 + $0x520] sm:$0xff]
    %v198 = vld [vmem:[%s1 + $0x528] sm:$0xff]
    %v199 = vld [vmem:[%s1 + $0x530] sm:$0xff]
    %v200 = vld [vmem:[%s1 + $0x538] sm:$0xff]
    %v201 = vld [vmem:[%s1 + $0x540] sm:$0xff]
    %v202 = vld [vmem:[%s1 + $0x548] sm:$0xff]
    %v203 = vld [vmem:[%s1 + $0x550] sm:$0xff]
    %v204 = vld [vmem:[%s1 + $0x558] sm:$0xff]
    %v205 = vld [vmem:[%s1 + $0x560] sm:$0xff]
    %v206 = vld [vmem:[%s1 + $0x568] sm:$0xff]
    %v207 = vld [vmem:[%s1 + $0x570] sm:$0xff]
    %v208 = vld [vmem:[%s1 + $0x578] sm:$0xff]
    %v209 = vld [vmem:[%s1 + $0x580] sm:$0xff]
    %v210 = vld [vmem:[%s1 + $0x588] sm:$0xff]
    %v211 = vld [vmem:[%s1 + $0x590] sm:$0xff]
    %v212 = vld [vmem:[%s1 + $0x598] sm:$0xff]
    %v213 = vld [vmem:[%s1 + $0x5a0] sm:$0xff]
    %v214 = vld [vmem:[%s1 + $0x5a8] sm:$0xff]
    %v215 = vld [vmem:[%s1 + $0x5b0] sm:$0xff]
    %v216 = vld [vmem:[%s1 + $0x5b8] sm:$0xff]
    %v217 = vld [vmem:[%s1 + $0x5c0] sm:$0xff]
    %v218 = vld [vmem:[%s1 + $0x5c8] sm:$0xff]
    %v219 = vld [vmem:[%s1 + $0x5d0] sm:$0xff]
    %v220 = vld [vmem:[%s1 + $0x5d8] sm:$0xff]
    %v221 = vld [vmem:[%s1 + $0x5e0] sm:$0xff]
    %v222 = vld [vmem:[%s1 + $0x5e8] sm:$0xff]
    %v223 = vld [vmem:[%s1 + $0x5f0] sm:$0xff]
    %v224 = vld [vmem:[%s1 + $0x5f8] sm:$0xff]
    %v225 = vld [vmem:[%s1 + $0x600] sm:$0xff]
    %v226 = vld [vmem:[%s1 + $0x608] sm:$0xff]
    %v227 = vld [vmem:[%s1 + $0x610] sm:$0xff]
    %v228 = vld [vmem:[%s1 + $0x618] sm:$0xff]
    %v229 = vld [vmem:[%s1 + $0x620] sm:$0xff]
    %v230 = vld [vmem:[%s1 + $0x628] sm:$0xff]
    %v231 = vld [vmem:[%s1 + $0x630] sm:$0xff]
    %v232 = vld [vmem:[%s1 + $0x638] sm:$0xff]
    %v233 = vld [vmem:[%s1 + $0x640] sm:$0xff]
    %v234 = vld [vmem:[%s1 + $0x648] sm:$0xff]
    %v235 = vld [vmem:[%s1 + $0x650] sm:$0xff]
    %v236 = vld [vmem:[%s1 + $0x658] sm:$0xff]
    %v237 = vld [vmem:[%s1 + $0x660] sm:$0xff]
    %v238 = vld [vmem:[%s1 + $0x668] sm:$0xff]
    %v239 = vld [vmem:[%s1 + $0x670] sm:$0xff]
    %v240 = vld [vmem:[%s1 + $0x678] sm:$0xff]
    %v241 = vld [vmem:[%s1 + $0x680] sm:$0xff]
    %v242 = vld [vmem:[%s1 + $0x688] sm:$0xff]
    %v243 = vld [vmem:[%s1 + $0x690] sm:$0xff]
    %v244 = vld [vmem:[%s1 + $0x698] sm:$0xff]
    %v245 = vld [vmem:[%s1 + $0x6a0] sm:$0xff]
    %v246 = vld [vmem:[%s1 + $0x6a8] sm:$0xff]
    %v247 = vld [vmem:[%s1 + $0x6b0] sm:$0xff]
    %v248 = vld [vmem:[%s1 + $0x6b8] sm:$0xff]
    %v249 = vld [vmem:[%s1 + $0x6c0] sm:$0xff]
    %v250 = vld [vmem:[%s1 + $0x6c8] sm:$0xff]
    %v251 = vld [vmem:[%s1 + $0x6d0] sm:$0xff]
    %v252 = vld [vmem:[%s1 + $0x6d8] sm:$0xff]
    %v253 = vld [vmem:[%s1 + $0x6e0] sm:$0xff]
    %v254 = vld [vmem:[%s1 + $0x6e8] sm:$0xff]
    %v255 = vld [vmem:[%s1 + $0x6f0] sm:$0xff]
    %v256 = vld [vmem:[%s1 + $0x6f8] sm:$0xff]
    %v257 = vld [vmem:[%s1 + $0x700] sm:$0xff]
    %v258 = vld [vmem:[%s1 + $0x708] sm:$0xff]
    %v259 = vld [vmem:[%s1 + $0x710] sm:$0xff]
    %v260 = vld [vmem:[%s1 + $0x718] sm:$0xff]
    %v261 = vld [vmem:[%s1 + $0x720] sm:$0xff]
    %v262 = vld [vmem:[%s1 + $0x728] sm:$0xff]
    %v263 = vld [vmem:[%s1 + $0x730] sm:$0xff]
    %v264 = vld [vmem:[%s1 + $0x738] sm:$0xff]
    %v265 = vld [vmem:[%s1 + $0x740] sm:$0xff]
    %v266 = vld [vmem:[%s1 + $0x748] sm:$0xff]
    %v267 = vld [vmem:[%s1 + $0x750] sm:$0xff]
    %v268 = vld [vmem:[%s1 + $0x758] sm:$0xff]
    %v269 = vld [vmem:[%s1 + $0x760] sm:$0xff]
    %v270 = vld [vmem:[%s1 + $0x768] sm:$0xff]
    %v271 = vld [vmem:[%s1 + $0x770] sm:$0xff]
    %v272 = vld [vmem:[%s1 + $0x778] sm:$0xff]
    %v273 = vld [vmem:[%s1 + $0x780] sm:$0xff]
    %v274 = vld [vmem:[%s1 + $0x788] sm:$0xff]
    %v275 = vld [vmem:[%s1 + $0x790] sm:$0xff]
    %v276 = vld [vmem:[%s1 + $0x798] sm:$0xff]
    %v277 = vld [vmem:[%s1 + $0x7a0] sm:$0xff]
    %v278 = vld [vmem:[%s1 + $0x7a8] sm:$0xff]
    %v279 = vld [vmem:[%s1 + $0x7b0] sm:$0xff]
    %v280 = vld [vmem:[%s1 + $0x7b8] sm:$0xff]
    %v281 = vld [vmem:[%s1 + $0x7c0] sm:$0xff]
    %v282 = vld [vmem:[%s1 + $0x7c8] sm:$0xff]
    %v283 = vld [vmem:[%s1 + $0x7d0] sm:$0xff]
    %v284 = vld [vmem:[%s1 + $0x7d8] sm:$0xff]
    %v285 = vld [vmem:[%s1 + $0x7e0] sm:$0xff]
    %v286 = vld [vmem:[%s1 + $0x7e8] sm:$0xff]
    %v287 = vld [vmem:[%s1 + $0x7f0] sm:$0xff]
    %v288 = vld [vmem:[%s1 + $0x7f8] sm:$0xff]
    %v289 = vld [vmem:[%s2] sm:$0xf]
    %v291 = vlaneseq
    %v292 = vshrl.u32 %v291, 7
    %v293 = vsub.s32 0, %v292
    %v294 = vrot.slane %v289, %v293
    %v295 = vlaneseq
    %v296 = vshrl.u32 %v295, 7
    %v297 = vsub.s32 1, %v296
    %v298 = vrot.slane %v289, %v297
    %v299 = vlaneseq
    %v300 = vshrl.u32 %v299, 7
    %v301 = vsub.s32 2, %v300
    %v302 = vrot.slane %v289, %v301
    %v303 = vlaneseq
    %v304 = vshrl.u32 %v303, 7
    %v305 = vsub.s32 3, %v304
    %v306 = vrot.slane %v289, %v305
    %v312 = vcombine.high %v32, %v32
    %v314 = vunpack.c.l.s4 1966171168
    %v315 = vunpack.c.0.s8 %v314
    %v316 = vlaneseq
    %v317 = vshrl.u32 %v316, 7
    %v318 = vsub.s32 %v315, %v317
    %v319 = vrot.slane %v32, %v318
    %v321 = vunpack.c.l.s4 1966171168
    %v322 = vunpack.c.0.s8 %v321
    %v323 = vlaneseq
    %v324 = vshrl.u32 %v323, 7
    %v325 = vsub.s32 %v322, %v324
    %v326 = vrot.slane %v312, %v325
    %v327 = vcombine.high %v319, %v319
    %v328 = vcombine.high %v326, %v326
    %v330 = vunpack.c.l.s4 1966171168
    %v331 = vunpack.c.0.s8 %v330
    %v332 = vlaneseq
    %v333 = vshrl.u32 %v332, 7
    %v334 = vsub.s32 %v331, %v333
    %v335 = vrot.slane %v319, %v334
    %v337 = vunpack.c.l.s4 1966171168
    %v338 = vunpack.c.0.s8 %v337
    %v339 = vlaneseq
    %v340 = vshrl.u32 %v339, 7
    %v341 = vsub.s32 %v338, %v340
    %v342 = vrot.slane %v326, %v341
    %v344 = vunpack.c.l.s4 1966171168
    %v345 = vunpack.c.0.s8 %v344
    %v346 = vlaneseq
    %v347 = vshrl.u32 %v346, 7
    %v348 = vsub.s32 %v345, %v347
    %v349 = vrot.slane %v327, %v348
    %v351 = vunpack.c.l.s4 1966171168
    %v352 = vunpack.c.0.s8 %v351
    %v353 = vlaneseq
    %v354 = vshrl.u32 %v353, 7
    %v355 = vsub.s32 %v352, %v354
    %v356 = vrot.slane %v328, %v355
    %v357 = vcombine.high %v335, %v335
    %v358 = vcombine.high %v342, %v342
    %v359 = vcombine.high %v349, %v349
    %v360 = vcombine.high %v356, %v356
    %v625 = vunpack.c.l.b16 %v33
    %v626 = vunpack.c.h.b16 %v33
    %v627 = vunpack.c.l.b16 %v34
    %v628 = vunpack.c.h.b16 %v34
    %v629 = vunpack.c.l.b16 %v35
    %v630 = vunpack.c.h.b16 %v35
    %v631 = vunpack.c.l.b16 %v36
    %v632 = vunpack.c.h.b16 %v36
    %v633 = vunpack.c.l.b16 %v37
    %v634 = vunpack.c.h.b16 %v37
    %v635 = vunpack.c.l.b16 %v38
    %v636 = vunpack.c.h.b16 %v38
    %v637 = vunpack.c.l.b16 %v39
    %v638 = vunpack.c.h.b16 %v39
    %v639 = vunpack.c.l.b16 %v40
    %v640 = vunpack.c.h.b16 %v40
    %v641 = vunpack.c.l.b16 %v41
    %v642 = vunpack.c.h.b16 %v41
    %v643 = vunpack.c.l.b16 %v42
    %v644 = vunpack.c.h.b16 %v42
    %v645 = vunpack.c.l.b16 %v43
    %v646 = vunpack.c.h.b16 %v43
    %v647 = vunpack.c.l.b16 %v44
    %v648 = vunpack.c.h.b16 %v44
    %v649 = vunpack.c.l.b16 %v45
    %v650 = vunpack.c.h.b16 %v45
    %v651 = vunpack.c.l.b16 %v46
    %v652 = vunpack.c.h.b16 %v46
    %v653 = vunpack.c.l.b16 %v47
    %v654 = vunpack.c.h.b16 %v47
    %v655 = vunpack.c.l.b16 %v48
    %v656 = vunpack.c.h.b16 %v48
    %v657 = vunpack.c.l.b16 %v49
    %v658 = vunpack.c.h.b16 %v49
    %v659 = vunpack.c.l.b16 %v50
    %v660 = vunpack.c.h.b16 %v50
    %v661 = vunpack.c.l.b16 %v51
    %v662 = vunpack.c.h.b16 %v51
    %v663 = vunpack.c.l.b16 %v52
    %v664 = vunpack.c.h.b16 %v52
    %v665 = vunpack.c.l.b16 %v53
    %v666 = vunpack.c.h.b16 %v53
    %v667 = vunpack.c.l.b16 %v54
    %v668 = vunpack.c.h.b16 %v54
    %v669 = vunpack.c.l.b16 %v55
    %v670 = vunpack.c.h.b16 %v55
    %v671 = vunpack.c.l.b16 %v56
    %v672 = vunpack.c.h.b16 %v56
    %v673 = vunpack.c.l.b16 %v57
    %v674 = vunpack.c.h.b16 %v57
    %v675 = vunpack.c.l.b16 %v58
    %v676 = vunpack.c.h.b16 %v58
    %v677 = vunpack.c.l.b16 %v59
    %v678 = vunpack.c.h.b16 %v59
    %v679 = vunpack.c.l.b16 %v60
    %v680 = vunpack.c.h.b16 %v60
    %v681 = vunpack.c.l.b16 %v61
    %v682 = vunpack.c.h.b16 %v61
    %v683 = vunpack.c.l.b16 %v62
    %v684 = vunpack.c.h.b16 %v62
    %v685 = vunpack.c.l.b16 %v63
    %v686 = vunpack.c.h.b16 %v63
    %v687 = vunpack.c.l.b16 %v64
    %v688 = vunpack.c.h.b16 %v64
    %v689 = vunpack.c.l.b16 %v65
    %v690 = vunpack.c.h.b16 %v65
    %v691 = vunpack.c.l.b16 %v66
    %v692 = vunpack.c.h.b16 %v66
    %v693 = vunpack.c.l.b16 %v67
    %v694 = vunpack.c.h.b16 %v67
    %v695 = vunpack.c.l.b16 %v68
    %v696 = vunpack.c.h.b16 %v68
    %v697 = vunpack.c.l.b16 %v69
    %v698 = vunpack.c.h.b16 %v69
    %v699 = vunpack.c.l.b16 %v70
    %v700 = vunpack.c.h.b16 %v70
    %v701 = vunpack.c.l.b16 %v71
    %v702 = vunpack.c.h.b16 %v71
    %v703 = vunpack.c.l.b16 %v72
    %v704 = vunpack.c.h.b16 %v72
    %v705 = vunpack.c.l.b16 %v73
    %v706 = vunpack.c.h.b16 %v73
    %v707 = vunpack.c.l.b16 %v74
    %v708 = vunpack.c.h.b16 %v74
    %v709 = vunpack.c.l.b16 %v75
    %v710 = vunpack.c.h.b16 %v75
    %v711 = vunpack.c.l.b16 %v76
    %v712 = vunpack.c.h.b16 %v76
    %v713 = vunpack.c.l.b16 %v77
    %v714 = vunpack.c.h.b16 %v77
    %v715 = vunpack.c.l.b16 %v78
    %v716 = vunpack.c.h.b16 %v78
    %v717 = vunpack.c.l.b16 %v79
    %v718 = vunpack.c.h.b16 %v79
    %v719 = vunpack.c.l.b16 %v80
    %v720 = vunpack.c.h.b16 %v80
    %v721 = vunpack.c.l.b16 %v81
    %v722 = vunpack.c.h.b16 %v81
    %v723 = vunpack.c.l.b16 %v82
    %v724 = vunpack.c.h.b16 %v82
    %v725 = vunpack.c.l.b16 %v83
    %v726 = vunpack.c.h.b16 %v83
    %v727 = vunpack.c.l.b16 %v84
    %v728 = vunpack.c.h.b16 %v84
    %v729 = vunpack.c.l.b16 %v85
    %v730 = vunpack.c.h.b16 %v85
    %v731 = vunpack.c.l.b16 %v86
    %v732 = vunpack.c.h.b16 %v86
    %v733 = vunpack.c.l.b16 %v87
    %v734 = vunpack.c.h.b16 %v87
    %v735 = vunpack.c.l.b16 %v88
    %v736 = vunpack.c.h.b16 %v88
    %v737 = vunpack.c.l.b16 %v89
    %v738 = vunpack.c.h.b16 %v89
    %v739 = vunpack.c.l.b16 %v90
    %v740 = vunpack.c.h.b16 %v90
    %v741 = vunpack.c.l.b16 %v91
    %v742 = vunpack.c.h.b16 %v91
    %v743 = vunpack.c.l.b16 %v92
    %v744 = vunpack.c.h.b16 %v92
    %v745 = vunpack.c.l.b16 %v93
    %v746 = vunpack.c.h.b16 %v93
    %v747 = vunpack.c.l.b16 %v94
    %v748 = vunpack.c.h.b16 %v94
    %v749 = vunpack.c.l.b16 %v95
    %v750 = vunpack.c.h.b16 %v95
    %v751 = vunpack.c.l.b16 %v96
    %v752 = vunpack.c.h.b16 %v96
    %v753 = vunpack.c.l.b16 %v97
    %v754 = vunpack.c.h.b16 %v97
    %v755 = vunpack.c.l.b16 %v98
    %v756 = vunpack.c.h.b16 %v98
    %v757 = vunpack.c.l.b16 %v99
    %v758 = vunpack.c.h.b16 %v99
    %v759 = vunpack.c.l.b16 %v100
    %v760 = vunpack.c.h.b16 %v100
    %v761 = vunpack.c.l.b16 %v101
    %v762 = vunpack.c.h.b16 %v101
    %v763 = vunpack.c.l.b16 %v102
    %v764 = vunpack.c.h.b16 %v102
    %v765 = vunpack.c.l.b16 %v103
    %v766 = vunpack.c.h.b16 %v103
    %v767 = vunpack.c.l.b16 %v104
    %v768 = vunpack.c.h.b16 %v104
    %v769 = vunpack.c.l.b16 %v105
    %v770 = vunpack.c.h.b16 %v105
    %v771 = vunpack.c.l.b16 %v106
    %v772 = vunpack.c.h.b16 %v106
    %v773 = vunpack.c.l.b16 %v107
    %v774 = vunpack.c.h.b16 %v107
    %v775 = vunpack.c.l.b16 %v108
    %v776 = vunpack.c.h.b16 %v108
    %v777 = vunpack.c.l.b16 %v109
    %v778 = vunpack.c.h.b16 %v109
    %v779 = vunpack.c.l.b16 %v110
    %v780 = vunpack.c.h.b16 %v110
    %v781 = vunpack.c.l.b16 %v111
    %v782 = vunpack.c.h.b16 %v111
    %v783 = vunpack.c.l.b16 %v112
    %v784 = vunpack.c.h.b16 %v112
    %v785 = vunpack.c.l.b16 %v113
    %v786 = vunpack.c.h.b16 %v113
    %v787 = vunpack.c.l.b16 %v114
    %v788 = vunpack.c.h.b16 %v114
    %v789 = vunpack.c.l.b16 %v115
    %v790 = vunpack.c.h.b16 %v115
    %v791 = vunpack.c.l.b16 %v116
    %v792 = vunpack.c.h.b16 %v116
    %v793 = vunpack.c.l.b16 %v117
    %v794 = vunpack.c.h.b16 %v117
    %v795 = vunpack.c.l.b16 %v118
    %v796 = vunpack.c.h.b16 %v118
    %v797 = vunpack.c.l.b16 %v119
    %v798 = vunpack.c.h.b16 %v119
    %v799 = vunpack.c.l.b16 %v120
    %v800 = vunpack.c.h.b16 %v120
    %v801 = vunpack.c.l.b16 %v121
    %v802 = vunpack.c.h.b16 %v121
    %v803 = vunpack.c.l.b16 %v122
    %v804 = vunpack.c.h.b16 %v122
    %v805 = vunpack.c.l.b16 %v123
    %v806 = vunpack.c.h.b16 %v123
    %v807 = vunpack.c.l.b16 %v124
    %v808 = vunpack.c.h.b16 %v124
    %v809 = vunpack.c.l.b16 %v125
    %v810 = vunpack.c.h.b16 %v125
    %v811 = vunpack.c.l.b16 %v126
    %v812 = vunpack.c.h.b16 %v126
    %v813 = vunpack.c.l.b16 %v127
    %v814 = vunpack.c.h.b16 %v127
    %v815 = vunpack.c.l.b16 %v128
    %v816 = vunpack.c.h.b16 %v128
    %v817 = vunpack.c.l.b16 %v129
    %v818 = vunpack.c.h.b16 %v129
    %v819 = vunpack.c.l.b16 %v130
    %v820 = vunpack.c.h.b16 %v130
    %v821 = vunpack.c.l.b16 %v131
    %v822 = vunpack.c.h.b16 %v131
    %v823 = vunpack.c.l.b16 %v132
    %v824 = vunpack.c.h.b16 %v132
    %v825 = vunpack.c.l.b16 %v133
    %v826 = vunpack.c.h.b16 %v133
    %v827 = vunpack.c.l.b16 %v134
    %v828 = vunpack.c.h.b16 %v134
    %v829 = vunpack.c.l.b16 %v135
    %v830 = vunpack.c.h.b16 %v135
    %v831 = vunpack.c.l.b16 %v136
    %v832 = vunpack.c.h.b16 %v136
    %v833 = vunpack.c.l.b16 %v137
    %v834 = vunpack.c.h.b16 %v137
    %v835 = vunpack.c.l.b16 %v138
    %v836 = vunpack.c.h.b16 %v138
    %v837 = vunpack.c.l.b16 %v139
    %v838 = vunpack.c.h.b16 %v139
    %v839 = vunpack.c.l.b16 %v140
    %v840 = vunpack.c.h.b16 %v140
    %v841 = vunpack.c.l.b16 %v141
    %v842 = vunpack.c.h.b16 %v141
    %v843 = vunpack.c.l.b16 %v142
    %v844 = vunpack.c.h.b16 %v142
    %v845 = vunpack.c.l.b16 %v143
    %v846 = vunpack.c.h.b16 %v143
    %v847 = vunpack.c.l.b16 %v144
    %v848 = vunpack.c.h.b16 %v144
    %v849 = vunpack.c.l.b16 %v145
    %v850 = vunpack.c.h.b16 %v145
    %v851 = vunpack.c.l.b16 %v146
    %v852 = vunpack.c.h.b16 %v146
    %v853 = vunpack.c.l.b16 %v147
    %v854 = vunpack.c.h.b16 %v147
    %v855 = vunpack.c.l.b16 %v148
    %v856 = vunpack.c.h.b16 %v148
    %v857 = vunpack.c.l.b16 %v149
    %v858 = vunpack.c.h.b16 %v149
    %v859 = vunpack.c.l.b16 %v150
    %v860 = vunpack.c.h.b16 %v150
    %v861 = vunpack.c.l.b16 %v151
    %v862 = vunpack.c.h.b16 %v151
    %v863 = vunpack.c.l.b16 %v152
    %v864 = vunpack.c.h.b16 %v152
    %v865 = vunpack.c.l.b16 %v153
    %v866 = vunpack.c.h.b16 %v153
    %v867 = vunpack.c.l.b16 %v154
    %v868 = vunpack.c.h.b16 %v154
    %v869 = vunpack.c.l.b16 %v155
    %v870 = vunpack.c.h.b16 %v155
    %v871 = vunpack.c.l.b16 %v156
    %v872 = vunpack.c.h.b16 %v156
    %v873 = vunpack.c.l.b16 %v157
    %v874 = vunpack.c.h.b16 %v157
    %v875 = vunpack.c.l.b16 %v158
    %v876 = vunpack.c.h.b16 %v158
    %v877 = vunpack.c.l.b16 %v159
    %v878 = vunpack.c.h.b16 %v159
    %v879 = vunpack.c.l.b16 %v160
    %v880 = vunpack.c.h.b16 %v160
    %v881 = vunpack.c.l.b16 %v161
    %v882 = vunpack.c.h.b16 %v161
    %v883 = vunpack.c.l.b16 %v162
    %v884 = vunpack.c.h.b16 %v162
    %v885 = vunpack.c.l.b16 %v163
    %v886 = vunpack.c.h.b16 %v163
    %v887 = vunpack.c.l.b16 %v164
    %v888 = vunpack.c.h.b16 %v164
    %v889 = vunpack.c.l.b16 %v165
    %v890 = vunpack.c.h.b16 %v165
    %v891 = vunpack.c.l.b16 %v166
    %v892 = vunpack.c.h.b16 %v166
    %v893 = vunpack.c.l.b16 %v167
    %v894 = vunpack.c.h.b16 %v167
    %v895 = vunpack.c.l.b16 %v168
    %v896 = vunpack.c.h.b16 %v168
    %v897 = vunpack.c.l.b16 %v169
    %v898 = vunpack.c.h.b16 %v169
    %v899 = vunpack.c.l.b16 %v170
    %v900 = vunpack.c.h.b16 %v170
    %v901 = vunpack.c.l.b16 %v171
    %v902 = vunpack.c.h.b16 %v171
    %v903 = vunpack.c.l.b16 %v172
    %v904 = vunpack.c.h.b16 %v172
    %v905 = vunpack.c.l.b16 %v173
    %v906 = vunpack.c.h.b16 %v173
    %v907 = vunpack.c.l.b16 %v174
    %v908 = vunpack.c.h.b16 %v174
    %v909 = vunpack.c.l.b16 %v175
    %v910 = vunpack.c.h.b16 %v175
    %v911 = vunpack.c.l.b16 %v176
    %v912 = vunpack.c.h.b16 %v176
    %v913 = vunpack.c.l.b16 %v177
    %v914 = vunpack.c.h.b16 %v177
    %v915 = vunpack.c.l.b16 %v178
    %v916 = vunpack.c.h.b16 %v178
    %v917 = vunpack.c.l.b16 %v179
    %v918 = vunpack.c.h.b16 %v179
    %v919 = vunpack.c.l.b16 %v180
    %v920 = vunpack.c.h.b16 %v180
    %v921 = vunpack.c.l.b16 %v181
    %v922 = vunpack.c.h.b16 %v181
    %v923 = vunpack.c.l.b16 %v182
    %v924 = vunpack.c.h.b16 %v182
    %v925 = vunpack.c.l.b16 %v183
    %v926 = vunpack.c.h.b16 %v183
    %v927 = vunpack.c.l.b16 %v184
    %v928 = vunpack.c.h.b16 %v184
    %v929 = vunpack.c.l.b16 %v185
    %v930 = vunpack.c.h.b16 %v185
    %v931 = vunpack.c.l.b16 %v186
    %v932 = vunpack.c.h.b16 %v186
    %v933 = vunpack.c.l.b16 %v187
    %v934 = vunpack.c.h.b16 %v187
    %v935 = vunpack.c.l.b16 %v188
    %v936 = vunpack.c.h.b16 %v188
    %v937 = vunpack.c.l.b16 %v189
    %v938 = vunpack.c.h.b16 %v189
    %v939 = vunpack.c.l.b16 %v190
    %v940 = vunpack.c.h.b16 %v190
    %v941 = vunpack.c.l.b16 %v191
    %v942 = vunpack.c.h.b16 %v191
    %v943 = vunpack.c.l.b16 %v192
    %v944 = vunpack.c.h.b16 %v192
    %v945 = vunpack.c.l.b16 %v193
    %v946 = vunpack.c.h.b16 %v193
    %v947 = vunpack.c.l.b16 %v194
    %v948 = vunpack.c.h.b16 %v194
    %v949 = vunpack.c.l.b16 %v195
    %v950 = vunpack.c.h.b16 %v195
    %v951 = vunpack.c.l.b16 %v196
    %v952 = vunpack.c.h.b16 %v196
    %v953 = vunpack.c.l.b16 %v197
    %v954 = vunpack.c.h.b16 %v197
    %v955 = vunpack.c.l.b16 %v198
    %v956 = vunpack.c.h.b16 %v198
    %v957 = vunpack.c.l.b16 %v199
    %v958 = vunpack.c.h.b16 %v199
    %v959 = vunpack.c.l.b16 %v200
    %v960 = vunpack.c.h.b16 %v200
    %v961 = vunpack.c.l.b16 %v201
    %v962 = vunpack.c.h.b16 %v201
    %v963 = vunpack.c.l.b16 %v202
    %v964 = vunpack.c.h.b16 %v202
    %v965 = vunpack.c.l.b16 %v203
    %v966 = vunpack.c.h.b16 %v203
    %v967 = vunpack.c.l.b16 %v204
    %v968 = vunpack.c.h.b16 %v204
    %v969 = vunpack.c.l.b16 %v205
    %v970 = vunpack.c.h.b16 %v205
    %v971 = vunpack.c.l.b16 %v206
    %v972 = vunpack.c.h.b16 %v206
    %v973 = vunpack.c.l.b16 %v207
    %v974 = vunpack.c.h.b16 %v207
    %v975 = vunpack.c.l.b16 %v208
    %v976 = vunpack.c.h.b16 %v208
    %v977 = vunpack.c.l.b16 %v209
    %v978 = vunpack.c.h.b16 %v209
    %v979 = vunpack.c.l.b16 %v210
    %v980 = vunpack.c.h.b16 %v210
    %v981 = vunpack.c.l.b16 %v211
    %v982 = vunpack.c.h.b16 %v211
    %v983 = vunpack.c.l.b16 %v212
    %v984 = vunpack.c.h.b16 %v212
    %v985 = vunpack.c.l.b16 %v213
    %v986 = vunpack.c.h.b16 %v213
    %v987 = vunpack.c.l.b16 %v214
    %v988 = vunpack.c.h.b16 %v214
    %v989 = vunpack.c.l.b16 %v215
    %v990 = vunpack.c.h.b16 %v215
    %v991 = vunpack.c.l.b16 %v216
    %v992 = vunpack.c.h.b16 %v216
    %v993 = vunpack.c.l.b16 %v217
    %v994 = vunpack.c.h.b16 %v217
    %v995 = vunpack.c.l.b16 %v218
    %v996 = vunpack.c.h.b16 %v218
    %v997 = vunpack.c.l.b16 %v219
    %v998 = vunpack.c.h.b16 %v219
    %v999 = vunpack.c.l.b16 %v220
    %v1000 = vunpack.c.h.b16 %v220
    %v1001 = vunpack.c.l.b16 %v221
    %v1002 = vunpack.c.h.b16 %v221
    %v1003 = vunpack.c.l.b16 %v222
    %v1004 = vunpack.c.h.b16 %v222
    %v1005 = vunpack.c.l.b16 %v223
    %v1006 = vunpack.c.h.b16 %v223
    %v1007 = vunpack.c.l.b16 %v224
    %v1008 = vunpack.c.h.b16 %v224
    %v1009 = vunpack.c.l.b16 %v225
    %v1010 = vunpack.c.h.b16 %v225
    %v1011 = vunpack.c.l.b16 %v226
    %v1012 = vunpack.c.h.b16 %v226
    %v1013 = vunpack.c.l.b16 %v227
    %v1014 = vunpack.c.h.b16 %v227
    %v1015 = vunpack.c.l.b16 %v228
    %v1016 = vunpack.c.h.b16 %v228
    %v1017 = vunpack.c.l.b16 %v229
    %v1018 = vunpack.c.h.b16 %v229
    %v1019 = vunpack.c.l.b16 %v230
    %v1020 = vunpack.c.h.b16 %v230
    %v1021 = vunpack.c.l.b16 %v231
    %v1022 = vunpack.c.h.b16 %v231
    %v1023 = vunpack.c.l.b16 %v232
    %v1024 = vunpack.c.h.b16 %v232
    %v1025 = vunpack.c.l.b16 %v233
    %v1026 = vunpack.c.h.b16 %v233
    %v1027 = vunpack.c.l.b16 %v234
    %v1028 = vunpack.c.h.b16 %v234
    %v1029 = vunpack.c.l.b16 %v235
    %v1030 = vunpack.c.h.b16 %v235
    %v1031 = vunpack.c.l.b16 %v236
    %v1032 = vunpack.c.h.b16 %v236
    %v1033 = vunpack.c.l.b16 %v237
    %v1034 = vunpack.c.h.b16 %v237
    %v1035 = vunpack.c.l.b16 %v238
    %v1036 = vunpack.c.h.b16 %v238
    %v1037 = vunpack.c.l.b16 %v239
    %v1038 = vunpack.c.h.b16 %v239
    %v1039 = vunpack.c.l.b16 %v240
    %v1040 = vunpack.c.h.b16 %v240
    %v1041 = vunpack.c.l.b16 %v241
    %v1042 = vunpack.c.h.b16 %v241
    %v1043 = vunpack.c.l.b16 %v242
    %v1044 = vunpack.c.h.b16 %v242
    %v1045 = vunpack.c.l.b16 %v243
    %v1046 = vunpack.c.h.b16 %v243
    %v1047 = vunpack.c.l.b16 %v244
    %v1048 = vunpack.c.h.b16 %v244
    %v1049 = vunpack.c.l.b16 %v245
    %v1050 = vunpack.c.h.b16 %v245
    %v1051 = vunpack.c.l.b16 %v246
    %v1052 = vunpack.c.h.b16 %v246
    %v1053 = vunpack.c.l.b16 %v247
    %v1054 = vunpack.c.h.b16 %v247
    %v1055 = vunpack.c.l.b16 %v248
    %v1056 = vunpack.c.h.b16 %v248
    %v1057 = vunpack.c.l.b16 %v249
    %v1058 = vunpack.c.h.b16 %v249
    %v1059 = vunpack.c.l.b16 %v250
    %v1060 = vunpack.c.h.b16 %v250
    %v1061 = vunpack.c.l.b16 %v251
    %v1062 = vunpack.c.h.b16 %v251
    %v1063 = vunpack.c.l.b16 %v252
    %v1064 = vunpack.c.h.b16 %v252
    %v1065 = vunpack.c.l.b16 %v253
    %v1066 = vunpack.c.h.b16 %v253
    %v1067 = vunpack.c.l.b16 %v254
    %v1068 = vunpack.c.h.b16 %v254
    %v1069 = vunpack.c.l.b16 %v255
    %v1070 = vunpack.c.h.b16 %v255
    %v1071 = vunpack.c.l.b16 %v256
    %v1072 = vunpack.c.h.b16 %v256
    %v1073 = vunpack.c.l.b16 %v257
    %v1074 = vunpack.c.h.b16 %v257
    %v1075 = vunpack.c.l.b16 %v258
    %v1076 = vunpack.c.h.b16 %v258
    %v1077 = vunpack.c.l.b16 %v259
    %v1078 = vunpack.c.h.b16 %v259
    %v1079 = vunpack.c.l.b16 %v260
    %v1080 = vunpack.c.h.b16 %v260
    %v1081 = vunpack.c.l.b16 %v261
    %v1082 = vunpack.c.h.b16 %v261
    %v1083 = vunpack.c.l.b16 %v262
    %v1084 = vunpack.c.h.b16 %v262
    %v1085 = vunpack.c.l.b16 %v263
    %v1086 = vunpack.c.h.b16 %v263
    %v1087 = vunpack.c.l.b16 %v264
    %v1088 = vunpack.c.h.b16 %v264
    %v1089 = vunpack.c.l.b16 %v265
    %v1090 = vunpack.c.h.b16 %v265
    %v1091 = vunpack.c.l.b16 %v266
    %v1092 = vunpack.c.h.b16 %v266
    %v1093 = vunpack.c.l.b16 %v267
    %v1094 = vunpack.c.h.b16 %v267
    %v1095 = vunpack.c.l.b16 %v268
    %v1096 = vunpack.c.h.b16 %v268
    %v1097 = vunpack.c.l.b16 %v269
    %v1098 = vunpack.c.h.b16 %v269
    %v1099 = vunpack.c.l.b16 %v270
    %v1100 = vunpack.c.h.b16 %v270
    %v1101 = vunpack.c.l.b16 %v271
    %v1102 = vunpack.c.h.b16 %v271
    %v1103 = vunpack.c.l.b16 %v272
    %v1104 = vunpack.c.h.b16 %v272
    %v1105 = vunpack.c.l.b16 %v273
    %v1106 = vunpack.c.h.b16 %v273
    %v1107 = vunpack.c.l.b16 %v274
    %v1108 = vunpack.c.h.b16 %v274
    %v1109 = vunpack.c.l.b16 %v275
    %v1110 = vunpack.c.h.b16 %v275
    %v1111 = vunpack.c.l.b16 %v276
    %v1112 = vunpack.c.h.b16 %v276
    %v1113 = vunpack.c.l.b16 %v277
    %v1114 = vunpack.c.h.b16 %v277
    %v1115 = vunpack.c.l.b16 %v278
    %v1116 = vunpack.c.h.b16 %v278
    %v1117 = vunpack.c.l.b16 %v279
    %v1118 = vunpack.c.h.b16 %v279
    %v1119 = vunpack.c.l.b16 %v280
    %v1120 = vunpack.c.h.b16 %v280
    %v1121 = vunpack.c.l.b16 %v281
    %v1122 = vunpack.c.h.b16 %v281
    %v1123 = vunpack.c.l.b16 %v282
    %v1124 = vunpack.c.h.b16 %v282
    %v1125 = vunpack.c.l.b16 %v283
    %v1126 = vunpack.c.h.b16 %v283
    %v1127 = vunpack.c.l.b16 %v284
    %v1128 = vunpack.c.h.b16 %v284
    %v1129 = vunpack.c.l.b16 %v285
    %v1130 = vunpack.c.h.b16 %v285
    %v1131 = vunpack.c.l.b16 %v286
    %v1132 = vunpack.c.h.b16 %v286
    %v1133 = vunpack.c.l.b16 %v287
    %v1134 = vunpack.c.h.b16 %v287
    %v1135 = vunpack.c.l.b16 %v288
    %v1136 = vunpack.c.h.b16 %v288
    %v1137 = vpack.c.b16 %v629, %v625
    %v1138 = vpack.c.b16 %v630, %v626
    %v1139 = vpack.c.b16 %v631, %v627
    %v1140 = vpack.c.b16 %v632, %v628
    %v1141 = vpack.c.b16 %v637, %v633
    %v1142 = vpack.c.b16 %v638, %v634
    %v1143 = vpack.c.b16 %v639, %v635
    %v1144 = vpack.c.b16 %v640, %v636
    %v1145 = vpack.c.b16 %v645, %v641
    %v1146 = vpack.c.b16 %v646, %v642
    %v1147 = vpack.c.b16 %v647, %v643
    %v1148 = vpack.c.b16 %v648, %v644
    %v1149 = vpack.c.b16 %v653, %v649
    %v1150 = vpack.c.b16 %v654, %v650
    %v1151 = vpack.c.b16 %v655, %v651
    %v1152 = vpack.c.b16 %v656, %v652
    %v1153 = vpack.c.b16 %v661, %v657
    %v1154 = vpack.c.b16 %v662, %v658
    %v1155 = vpack.c.b16 %v663, %v659
    %v1156 = vpack.c.b16 %v664, %v660
    %v1157 = vpack.c.b16 %v669, %v665
    %v1158 = vpack.c.b16 %v670, %v666
    %v1159 = vpack.c.b16 %v671, %v667
    %v1160 = vpack.c.b16 %v672, %v668
    %v1161 = vpack.c.b16 %v677, %v673
    %v1162 = vpack.c.b16 %v678, %v674
    %v1163 = vpack.c.b16 %v679, %v675
    %v1164 = vpack.c.b16 %v680, %v676
    %v1165 = vpack.c.b16 %v685, %v681
    %v1166 = vpack.c.b16 %v686, %v682
    %v1167 = vpack.c.b16 %v687, %v683
    %v1168 = vpack.c.b16 %v688, %v684
    %v1169 = vpack.c.b16 %v693, %v689
    %v1170 = vpack.c.b16 %v694, %v690
    %v1171 = vpack.c.b16 %v695, %v691
    %v1172 = vpack.c.b16 %v696, %v692
    %v1173 = vpack.c.b16 %v701, %v697
    %v1174 = vpack.c.b16 %v702, %v698
    %v1175 = vpack.c.b16 %v703, %v699
    %v1176 = vpack.c.b16 %v704, %v700
    %v1177 = vpack.c.b16 %v709, %v705
    %v1178 = vpack.c.b16 %v710, %v706
    %v1179 = vpack.c.b16 %v711, %v707
    %v1180 = vpack.c.b16 %v712, %v708
    %v1181 = vpack.c.b16 %v717, %v713
    %v1182 = vpack.c.b16 %v718, %v714
    %v1183 = vpack.c.b16 %v719, %v715
    %v1184 = vpack.c.b16 %v720, %v716
    %v1185 = vpack.c.b16 %v725, %v721
    %v1186 = vpack.c.b16 %v726, %v722
    %v1187 = vpack.c.b16 %v727, %v723
    %v1188 = vpack.c.b16 %v728, %v724
    %v1189 = vpack.c.b16 %v733, %v729
    %v1190 = vpack.c.b16 %v734, %v730
    %v1191 = vpack.c.b16 %v735, %v731
    %v1192 = vpack.c.b16 %v736, %v732
    %v1193 = vpack.c.b16 %v741, %v737
    %v1194 = vpack.c.b16 %v742, %v738
    %v1195 = vpack.c.b16 %v743, %v739
    %v1196 = vpack.c.b16 %v744, %v740
    %v1197 = vpack.c.b16 %v749, %v745
    %v1198 = vpack.c.b16 %v750, %v746
    %v1199 = vpack.c.b16 %v751, %v747
    %v1200 = vpack.c.b16 %v752, %v748
    %v1201 = vpack.c.b16 %v757, %v753
    %v1202 = vpack.c.b16 %v758, %v754
    %v1203 = vpack.c.b16 %v759, %v755
    %v1204 = vpack.c.b16 %v760, %v756
    %v1205 = vpack.c.b16 %v765, %v761
    %v1206 = vpack.c.b16 %v766, %v762
    %v1207 = vpack.c.b16 %v767, %v763
    %v1208 = vpack.c.b16 %v768, %v764
    %v1209 = vpack.c.b16 %v773, %v769
    %v1210 = vpack.c.b16 %v774, %v770
    %v1211 = vpack.c.b16 %v775, %v771
    %v1212 = vpack.c.b16 %v776, %v772
    %v1213 = vpack.c.b16 %v781, %v777
    %v1214 = vpack.c.b16 %v782, %v778
    %v1215 = vpack.c.b16 %v783, %v779
    %v1216 = vpack.c.b16 %v784, %v780
    %v1217 = vpack.c.b16 %v789, %v785
    %v1218 = vpack.c.b16 %v790, %v786
    %v1219 = vpack.c.b16 %v791, %v787
    %v1220 = vpack.c.b16 %v792, %v788
    %v1221 = vpack.c.b16 %v797, %v793
    %v1222 = vpack.c.b16 %v798, %v794
    %v1223 = vpack.c.b16 %v799, %v795
    %v1224 = vpack.c.b16 %v800, %v796
    %v1225 = vpack.c.b16 %v805, %v801
    %v1226 = vpack.c.b16 %v806, %v802
    %v1227 = vpack.c.b16 %v807, %v803
    %v1228 = vpack.c.b16 %v808, %v804
    %v1229 = vpack.c.b16 %v813, %v809
    %v1230 = vpack.c.b16 %v814, %v810
    %v1231 = vpack.c.b16 %v815, %v811
    %v1232 = vpack.c.b16 %v816, %v812
    %v1233 = vpack.c.b16 %v821, %v817
    %v1234 = vpack.c.b16 %v822, %v818
    %v1235 = vpack.c.b16 %v823, %v819
    %v1236 = vpack.c.b16 %v824, %v820
    %v1237 = vpack.c.b16 %v829, %v825
    %v1238 = vpack.c.b16 %v830, %v826
    %v1239 = vpack.c.b16 %v831, %v827
    %v1240 = vpack.c.b16 %v832, %v828
    %v1241 = vpack.c.b16 %v837, %v833
    %v1242 = vpack.c.b16 %v838, %v834
    %v1243 = vpack.c.b16 %v839, %v835
    %v1244 = vpack.c.b16 %v840, %v836
    %v1245 = vpack.c.b16 %v845, %v841
    %v1246 = vpack.c.b16 %v846, %v842
    %v1247 = vpack.c.b16 %v847, %v843
    %v1248 = vpack.c.b16 %v848, %v844
    %v1249 = vpack.c.b16 %v853, %v849
    %v1250 = vpack.c.b16 %v854, %v850
    %v1251 = vpack.c.b16 %v855, %v851
    %v1252 = vpack.c.b16 %v856, %v852
    %v1253 = vpack.c.b16 %v861, %v857
    %v1254 = vpack.c.b16 %v862, %v858
    %v1255 = vpack.c.b16 %v863, %v859
    %v1256 = vpack.c.b16 %v864, %v860
    %v1257 = vpack.c.b16 %v869, %v865
    %v1258 = vpack.c.b16 %v870, %v866
    %v1259 = vpack.c.b16 %v871, %v867
    %v1260 = vpack.c.b16 %v872, %v868
    %v1261 = vpack.c.b16 %v877, %v873
    %v1262 = vpack.c.b16 %v878, %v874
    %v1263 = vpack.c.b16 %v879, %v875
    %v1264 = vpack.c.b16 %v880, %v876
    %v1265 = vpack.c.b16 %v885, %v881
    %v1266 = vpack.c.b16 %v886, %v882
    %v1267 = vpack.c.b16 %v887, %v883
    %v1268 = vpack.c.b16 %v888, %v884
    %v1269 = vpack.c.b16 %v893, %v889
    %v1270 = vpack.c.b16 %v894, %v890
    %v1271 = vpack.c.b16 %v895, %v891
    %v1272 = vpack.c.b16 %v896, %v892
    %v1273 = vpack.c.b16 %v901, %v897
    %v1274 = vpack.c.b16 %v902, %v898
    %v1275 = vpack.c.b16 %v903, %v899
    %v1276 = vpack.c.b16 %v904, %v900
    %v1277 = vpack.c.b16 %v909, %v905
    %v1278 = vpack.c.b16 %v910, %v906
    %v1279 = vpack.c.b16 %v911, %v907
    %v1280 = vpack.c.b16 %v912, %v908
    %v1281 = vpack.c.b16 %v917, %v913
    %v1282 = vpack.c.b16 %v918, %v914
    %v1283 = vpack.c.b16 %v919, %v915
    %v1284 = vpack.c.b16 %v920, %v916
    %v1285 = vpack.c.b16 %v925, %v921
    %v1286 = vpack.c.b16 %v926, %v922
    %v1287 = vpack.c.b16 %v927, %v923
    %v1288 = vpack.c.b16 %v928, %v924
    %v1289 = vpack.c.b16 %v933, %v929
    %v1290 = vpack.c.b16 %v934, %v930
    %v1291 = vpack.c.b16 %v935, %v931
    %v1292 = vpack.c.b16 %v936, %v932
    %v1293 = vpack.c.b16 %v941, %v937
    %v1294 = vpack.c.b16 %v942, %v938
    %v1295 = vpack.c.b16 %v943, %v939
    %v1296 = vpack.c.b16 %v944, %v940
    %v1297 = vpack.c.b16 %v949, %v945
    %v1298 = vpack.c.b16 %v950, %v946
    %v1299 = vpack.c.b16 %v951, %v947
    %v1300 = vpack.c.b16 %v952, %v948
    %v1301 = vpack.c.b16 %v957, %v953
    %v1302 = vpack.c.b16 %v958, %v954
    %v1303 = vpack.c.b16 %v959, %v955
    %v1304 = vpack.c.b16 %v960, %v956
    %v1305 = vpack.c.b16 %v965, %v961
    %v1306 = vpack.c.b16 %v966, %v962
    %v1307 = vpack.c.b16 %v967, %v963
    %v1308 = vpack.c.b16 %v968, %v964
    %v1309 = vpack.c.b16 %v973, %v969
    %v1310 = vpack.c.b16 %v974, %v970
    %v1311 = vpack.c.b16 %v975, %v971
    %v1312 = vpack.c.b16 %v976, %v972
    %v1313 = vpack.c.b16 %v981, %v977
    %v1314 = vpack.c.b16 %v982, %v978
    %v1315 = vpack.c.b16 %v983, %v979
    %v1316 = vpack.c.b16 %v984, %v980
    %v1317 = vpack.c.b16 %v989, %v985
    %v1318 = vpack.c.b16 %v990, %v986
    %v1319 = vpack.c.b16 %v991, %v987
    %v1320 = vpack.c.b16 %v992, %v988
    %v1321 = vpack.c.b16 %v997, %v993
    %v1322 = vpack.c.b16 %v998, %v994
    %v1323 = vpack.c.b16 %v999, %v995
    %v1324 = vpack.c.b16 %v1000, %v996
    %v1325 = vpack.c.b16 %v1005, %v1001
    %v1326 = vpack.c.b16 %v1006, %v1002
    %v1327 = vpack.c.b16 %v1007, %v1003
    %v1328 = vpack.c.b16 %v1008, %v1004
    %v1329 = vpack.c.b16 %v1013, %v1009
    %v1330 = vpack.c.b16 %v1014, %v1010
    %v1331 = vpack.c.b16 %v1015, %v1011
    %v1332 = vpack.c.b16 %v1016, %v1012
    %v1333 = vpack.c.b16 %v1021, %v1017
    %v1334 = vpack.c.b16 %v1022, %v1018
    %v1335 = vpack.c.b16 %v1023, %v1019
    %v1336 = vpack.c.b16 %v1024, %v1020
    %v1337 = vpack.c.b16 %v1029, %v1025
    %v1338 = vpack.c.b16 %v1030, %v1026
    %v1339 = vpack.c.b16 %v1031, %v1027
    %v1340 = vpack.c.b16 %v1032, %v1028
    %v1341 = vpack.c.b16 %v1037, %v1033
    %v1342 = vpack.c.b16 %v1038, %v1034
    %v1343 = vpack.c.b16 %v1039, %v1035
    %v1344 = vpack.c.b16 %v1040, %v1036
    %v1345 = vpack.c.b16 %v1045, %v1041
    %v1346 = vpack.c.b16 %v1046, %v1042
    %v1347 = vpack.c.b16 %v1047, %v1043
    %v1348 = vpack.c.b16 %v1048, %v1044
    %v1349 = vpack.c.b16 %v1053, %v1049
    %v1350 = vpack.c.b16 %v1054, %v1050
    %v1351 = vpack.c.b16 %v1055, %v1051
    %v1352 = vpack.c.b16 %v1056, %v1052
    %v1353 = vpack.c.b16 %v1061, %v1057
    %v1354 = vpack.c.b16 %v1062, %v1058
    %v1355 = vpack.c.b16 %v1063, %v1059
    %v1356 = vpack.c.b16 %v1064, %v1060
    %v1357 = vpack.c.b16 %v1069, %v1065
    %v1358 = vpack.c.b16 %v1070, %v1066
    %v1359 = vpack.c.b16 %v1071, %v1067
    %v1360 = vpack.c.b16 %v1072, %v1068
    %v1361 = vpack.c.b16 %v1077, %v1073
    %v1362 = vpack.c.b16 %v1078, %v1074
    %v1363 = vpack.c.b16 %v1079, %v1075
    %v1364 = vpack.c.b16 %v1080, %v1076
    %v1365 = vpack.c.b16 %v1085, %v1081
    %v1366 = vpack.c.b16 %v1086, %v1082
    %v1367 = vpack.c.b16 %v1087, %v1083
    %v1368 = vpack.c.b16 %v1088, %v1084
    %v1369 = vpack.c.b16 %v1093, %v1089
    %v1370 = vpack.c.b16 %v1094, %v1090
    %v1371 = vpack.c.b16 %v1095, %v1091
    %v1372 = vpack.c.b16 %v1096, %v1092
    %v1373 = vpack.c.b16 %v1101, %v1097
    %v1374 = vpack.c.b16 %v1102, %v1098
    %v1375 = vpack.c.b16 %v1103, %v1099
    %v1376 = vpack.c.b16 %v1104, %v1100
    %v1377 = vpack.c.b16 %v1109, %v1105
    %v1378 = vpack.c.b16 %v1110, %v1106
    %v1379 = vpack.c.b16 %v1111, %v1107
    %v1380 = vpack.c.b16 %v1112, %v1108
    %v1381 = vpack.c.b16 %v1117, %v1113
    %v1382 = vpack.c.b16 %v1118, %v1114
    %v1383 = vpack.c.b16 %v1119, %v1115
    %v1384 = vpack.c.b16 %v1120, %v1116
    %v1385 = vpack.c.b16 %v1125, %v1121
    %v1386 = vpack.c.b16 %v1126, %v1122
    %v1387 = vpack.c.b16 %v1127, %v1123
    %v1388 = vpack.c.b16 %v1128, %v1124
    %v1389 = vpack.c.b16 %v1133, %v1129
    %v1390 = vpack.c.b16 %v1134, %v1130
    %v1391 = vpack.c.b16 %v1135, %v1131
    %v1392 = vpack.c.b16 %v1136, %v1132
    %1649 = vmatprep.subr.bf16.mxu0 %v1138
    %1650 = vmatpush1.bf16.msra.mxu0 %v1137
    %1651 = vmatprep.subr.bf16.mxu0 %v1142
    %1652 = vmatpush1.bf16.msra.mxu0 %v1141
    %1653 = vmatprep.subr.bf16.mxu0 %v1146
    %1654 = vmatpush1.bf16.msra.mxu0 %v1145
    %1655 = vmatprep.subr.bf16.mxu0 %v1150
    %1656 = vmatpush1.bf16.msra.mxu0 %v1149
    %1657 = vmatprep.subr.bf16.mxu0 %v1154
    %1658 = vmatpush1.bf16.msra.mxu0 %v1153
    %1659 = vmatprep.subr.bf16.mxu0 %v1158
    %1660 = vmatpush1.bf16.msra.mxu0 %v1157
    %1661 = vmatprep.subr.bf16.mxu0 %v1162
    %1662 = vmatpush1.bf16.msra.mxu0 %v1161
    %1663 = vmatprep.subr.bf16.mxu0 %v1166
    %1664 = vmatpush1.bf16.msra.mxu0 %v1165
    %1665 = vmatprep.subr.bf16.mxu0 %v1170
    %1666 = vmatpush1.bf16.msra.mxu0 %v1169
    %1667 = vmatprep.subr.bf16.mxu0 %v1174
    %1668 = vmatpush1.bf16.msra.mxu0 %v1173
    %1669 = vmatprep.subr.bf16.mxu0 %v1178
    %1670 = vmatpush1.bf16.msra.mxu0 %v1177
    %1671 = vmatprep.subr.bf16.mxu0 %v1182
    %1672 = vmatpush1.bf16.msra.mxu0 %v1181
    %1673 = vmatprep.subr.bf16.mxu0 %v1186
    %1674 = vmatpush1.bf16.msra.mxu0 %v1185
    %1675 = vmatprep.subr.bf16.mxu0 %v1190
    %1676 = vmatpush1.bf16.msra.mxu0 %v1189
    %1677 = vmatprep.subr.bf16.mxu0 %v1194
    %1678 = vmatpush1.bf16.msra.mxu0 %v1193
    %1679 = vmatprep.subr.bf16.mxu0 %v1198
    %1680 = vmatpush1.bf16.msra.mxu0 %v1197
    %1681 = vmatprep.mubr.bf16.mxu0 %v349
    %1682 = vmatmul.mubr.bf16.gmra.mrb[0].mxu0 %v335
    %v1683 = vpop.f32.mrb[0].mxu0
    %v1684 = vadd.f32 %v294, %v1683
    %v1685 = vpop.f32.mrb[0].mxu0
    %v1686 = vadd.f32 %v298, %v1685
    %v1687 = vpop.f32.mrb[0].mxu0
    %v1688 = vpop.f32.mrb[0].mxu0
    %1689 = vdwg.mxu0
    %1690 = vmatprep.subr.bf16.mxu0 %v1202
    %1691 = vmatpush1.bf16.msra.mxu0 %v1201
    %1692 = vmatprep.subr.bf16.mxu0 %v1206
    %1693 = vmatpush1.bf16.msra.mxu0 %v1205
    %1694 = vmatprep.subr.bf16.mxu0 %v1210
    %1695 = vmatpush1.bf16.msra.mxu0 %v1209
    %1696 = vmatprep.subr.bf16.mxu0 %v1214
    %1697 = vmatpush1.bf16.msra.mxu0 %v1213
    %1698 = vmatprep.subr.bf16.mxu0 %v1218
    %1699 = vmatpush1.bf16.msra.mxu0 %v1217
    %1700 = vmatprep.subr.bf16.mxu0 %v1222
    %1701 = vmatpush1.bf16.msra.mxu0 %v1221
    %1702 = vmatprep.subr.bf16.mxu0 %v1226
    %1703 = vmatpush1.bf16.msra.mxu0 %v1225
    %1704 = vmatprep.subr.bf16.mxu0 %v1230
    %1705 = vmatpush1.bf16.msra.mxu0 %v1229
    %1706 = vmatprep.subr.bf16.mxu0 %v1234
    %1707 = vmatpush1.bf16.msra.mxu0 %v1233
    %1708 = vmatprep.subr.bf16.mxu0 %v1238
    %1709 = vmatpush1.bf16.msra.mxu0 %v1237
    %1710 = vmatprep.subr.bf16.mxu0 %v1242
    %1711 = vmatpush1.bf16.msra.mxu0 %v1241
    %1712 = vmatprep.subr.bf16.mxu0 %v1246
    %1713 = vmatpush1.bf16.msra.mxu0 %v1245
    %1714 = vmatprep.subr.bf16.mxu0 %v1250
    %1715 = vmatpush1.bf16.msra.mxu0 %v1249
    %1716 = vmatprep.subr.bf16.mxu0 %v1254
    %1717 = vmatpush1.bf16.msra.mxu0 %v1253
    %1718 = vmatprep.subr.bf16.mxu0 %v1258
    %1719 = vmatpush1.bf16.msra.mxu0 %v1257
    %1720 = vmatprep.subr.bf16.mxu0 %v1262
    %1721 = vmatpush1.bf16.msra.mxu0 %v1261
    %1722 = vmatprep.mubr.bf16.mxu0 %v359
    %1723 = vmatmul.mubr.bf16.gmra.mrb[0].mxu0 %v357
    %v1724 = vpop.f32.mrb[0].mxu0
    %v1725 = vadd.f32 %v1684, %v1724
    %v1726 = vpop.f32.mrb[0].mxu0
    %v1727 = vadd.f32 %v1686, %v1726
    %v1728 = vpop.f32.mrb[0].mxu0
    %v1729 = vpop.f32.mrb[0].mxu0
    %1730 = vdwg.mxu0
    %1731 = vmatprep.subr.bf16.mxu0 %v1266
    %1732 = vmatpush1.bf16.msra.mxu0 %v1265
    %1733 = vmatprep.subr.bf16.mxu0 %v1270
    %1734 = vmatpush1.bf16.msra.mxu0 %v1269
    %1735 = vmatprep.subr.bf16.mxu0 %v1274
    %1736 = vmatpush1.bf16.msra.mxu0 %v1273
    %1737 = vmatprep.subr.bf16.mxu0 %v1278
    %1738 = vmatpush1.bf16.msra.mxu0 %v1277
    %1739 = vmatprep.subr.bf16.mxu0 %v1282
    %1740 = vmatpush1.bf16.msra.mxu0 %v1281
    %1741 = vmatprep.subr.bf16.mxu0 %v1286
    %1742 = vmatpush1.bf16.msra.mxu0 %v1285
    %1743 = vmatprep.subr.bf16.mxu0 %v1290
    %1744 = vmatpush1.bf16.msra.mxu0 %v1289
    %1745 = vmatprep.subr.bf16.mxu0 %v1294
    %1746 = vmatpush1.bf16.msra.mxu0 %v1293
    %1747 = vmatprep.subr.bf16.mxu0 %v1298
    %1748 = vmatpush1.bf16.msra.mxu0 %v1297
    %1749 = vmatprep.subr.bf16.mxu0 %v1302
    %1750 = vmatpush1.bf16.msra.mxu0 %v1301
    %1751 = vmatprep.subr.bf16.mxu0 %v1306
    %1752 = vmatpush1.bf16.msra.mxu0 %v1305
    %1753 = vmatprep.subr.bf16.mxu0 %v1310
    %1754 = vmatpush1.bf16.msra.mxu0 %v1309
    %1755 = vmatprep.subr.bf16.mxu0 %v1314
    %1756 = vmatpush1.bf16.msra.mxu0 %v1313
    %1757 = vmatprep.subr.bf16.mxu0 %v1318
    %1758 = vmatpush1.bf16.msra.mxu0 %v1317
    %1759 = vmatprep.subr.bf16.mxu0 %v1322
    %1760 = vmatpush1.bf16.msra.mxu0 %v1321
    %1761 = vmatprep.subr.bf16.mxu0 %v1326
    %1762 = vmatpush1.bf16.msra.mxu0 %v1325
    %1763 = vmatprep.mubr.bf16.mxu0 %v356
    %1764 = vmatmul.mubr.bf16.gmra.mrb[0].mxu0 %v342
    %v1765 = vpop.f32.mrb[0].mxu0
    %v1766 = vadd.f32 %v1725, %v1765
    %v1767 = vpop.f32.mrb[0].mxu0
    %v1768 = vadd.f32 %v1727, %v1767
    %v1769 = vpop.f32.mrb[0].mxu0
    %v1770 = vpop.f32.mrb[0].mxu0
    %1771 = vdwg.mxu0
    %1772 = vmatprep.subr.bf16.mxu0 %v1330
    %1773 = vmatpush1.bf16.msra.mxu0 %v1329
    %1774 = vmatprep.subr.bf16.mxu0 %v1334
    %1775 = vmatpush1.bf16.msra.mxu0 %v1333
    %1776 = vmatprep.subr.bf16.mxu0 %v1338
    %1777 = vmatpush1.bf16.msra.mxu0 %v1337
    %1778 = vmatprep.subr.bf16.mxu0 %v1342
    %1779 = vmatpush1.bf16.msra.mxu0 %v1341
    %1780 = vmatprep.subr.bf16.mxu0 %v1346
    %1781 = vmatpush1.bf16.msra.mxu0 %v1345
    %1782 = vmatprep.subr.bf16.mxu0 %v1350
    %1783 = vmatpush1.bf16.msra.mxu0 %v1349
    %1784 = vmatprep.subr.bf16.mxu0 %v1354
    %1785 = vmatpush1.bf16.msra.mxu0 %v1353
    %1786 = vmatprep.subr.bf16.mxu0 %v1358
    %1787 = vmatpush1.bf16.msra.mxu0 %v1357
    %1788 = vmatprep.subr.bf16.mxu0 %v1362
    %1789 = vmatpush1.bf16.msra.mxu0 %v1361
    %1790 = vmatprep.subr.bf16.mxu0 %v1366
    %1791 = vmatpush1.bf16.msra.mxu0 %v1365
    %1792 = vmatprep.subr.bf16.mxu0 %v1370
    %1793 = vmatpush1.bf16.msra.mxu0 %v1369
    %1794 = vmatprep.subr.bf16.mxu0 %v1374
    %1795 = vmatpush1.bf16.msra.mxu0 %v1373
    %1796 = vmatprep.subr.bf16.mxu0 %v1378
    %1797 = vmatpush1.bf16.msra.mxu0 %v1377
    %1798 = vmatprep.subr.bf16.mxu0 %v1382
    %1799 = vmatpush1.bf16.msra.mxu0 %v1381
    %1800 = vmatprep.subr.bf16.mxu0 %v1386
    %1801 = vmatpush1.bf16.msra.mxu0 %v1385
    %1802 = vmatprep.subr.bf16.mxu0 %v1390
    %1803 = vmatpush1.bf16.msra.mxu0 %v1389
    %1804 = vmatprep.mubr.bf16.mxu0 %v360
    %1805 = vmatmul.mubr.bf16.gmra.mrb[0].mxu0 %v358
    %v1806 = vpop.f32.mrb[0].mxu0
    %v1807 = vadd.f32 %v1766, %v1806
    %v1808 = vpop.f32.mrb[0].mxu0
    %v1809 = vadd.f32 %v1768, %v1808
    %v1810 = vpop.f32.mrb[0].mxu0
    %v1811 = vpop.f32.mrb[0].mxu0
    %1812 = vdwg.mxu0
    %1813 = vmatprep.subr.bf16.mxu0 %v1140
    %1814 = vmatpush1.bf16.msra.mxu0 %v1139
    %1815 = vmatprep.subr.bf16.mxu0 %v1144
    %1816 = vmatpush1.bf16.msra.mxu0 %v1143
    %1817 = vmatprep.subr.bf16.mxu0 %v1148
    %1818 = vmatpush1.bf16.msra.mxu0 %v1147
    %1819 = vmatprep.subr.bf16.mxu0 %v1152
    %1820 = vmatpush1.bf16.msra.mxu0 %v1151
    %1821 = vmatprep.subr.bf16.mxu0 %v1156
    %1822 = vmatpush1.bf16.msra.mxu0 %v1155
    %1823 = vmatprep.subr.bf16.mxu0 %v1160
    %1824 = vmatpush1.bf16.msra.mxu0 %v1159
    %1825 = vmatprep.subr.bf16.mxu0 %v1164
    %1826 = vmatpush1.bf16.msra.mxu0 %v1163
    %1827 = vmatprep.subr.bf16.mxu0 %v1168
    %1828 = vmatpush1.bf16.msra.mxu0 %v1167
    %1829 = vmatprep.subr.bf16.mxu0 %v1172
    %1830 = vmatpush1.bf16.msra.mxu0 %v1171
    %1831 = vmatprep.subr.bf16.mxu0 %v1176
    %1832 = vmatpush1.bf16.msra.mxu0 %v1175
    %1833 = vmatprep.subr.bf16.mxu0 %v1180
    %1834 = vmatpush1.bf16.msra.mxu0 %v1179
    %1835 = vmatprep.subr.bf16.mxu0 %v1184
    %1836 = vmatpush1.bf16.msra.mxu0 %v1183
    %1837 = vmatprep.subr.bf16.mxu0 %v1188
    %1838 = vmatpush1.bf16.msra.mxu0 %v1187
    %1839 = vmatprep.subr.bf16.mxu0 %v1192
    %1840 = vmatpush1.bf16.msra.mxu0 %v1191
    %1841 = vmatprep.subr.bf16.mxu0 %v1196
    %1842 = vmatpush1.bf16.msra.mxu0 %v1195
    %1843 = vmatprep.subr.bf16.mxu0 %v1200
    %1844 = vmatpush1.bf16.msra.mxu0 %v1199
    %1845 = vmatprep.mubr.bf16.mxu0 %v349
    %1846 = vmatmul.mubr.bf16.gmra.mrb[0].mxu0 %v335
    %v1847 = vpop.f32.mrb[0].mxu0
    %v1848 = vadd.f32 %v302, %v1847
    %v1849 = vpop.f32.mrb[0].mxu0
    %v1850 = vadd.f32 %v306, %v1849
    %v1851 = vpop.f32.mrb[0].mxu0
    %v1852 = vpop.f32.mrb[0].mxu0
    %1853 = vdwg.mxu0
    %1854 = vmatprep.subr.bf16.mxu0 %v1204
    %1855 = vmatpush1.bf16.msra.mxu0 %v1203
    %1856 = vmatprep.subr.bf16.mxu0 %v1208
    %1857 = vmatpush1.bf16.msra.mxu0 %v1207
    %1858 = vmatprep.subr.bf16.mxu0 %v1212
    %1859 = vmatpush1.bf16.msra.mxu0 %v1211
    %1860 = vmatprep.subr.bf16.mxu0 %v1216
    %1861 = vmatpush1.bf16.msra.mxu0 %v1215
    %1862 = vmatprep.subr.bf16.mxu0 %v1220
    %1863 = vmatpush1.bf16.msra.mxu0 %v1219
    %1864 = vmatprep.subr.bf16.mxu0 %v1224
    %1865 = vmatpush1.bf16.msra.mxu0 %v1223
    %1866 = vmatprep.subr.bf16.mxu0 %v1228
    %1867 = vmatpush1.bf16.msra.mxu0 %v1227
    %1868 = vmatprep.subr.bf16.mxu0 %v1232
    %1869 = vmatpush1.bf16.msra.mxu0 %v1231
    %1870 = vmatprep.subr.bf16.mxu0 %v1236
    %1871 = vmatpush1.bf16.msra.mxu0 %v1235
    %1872 = vmatprep.subr.bf16.mxu0 %v1240
    %1873 = vmatpush1.bf16.msra.mxu0 %v1239
    %1874 = vmatprep.subr.bf16.mxu0 %v1244
    %1875 = vmatpush1.bf16.msra.mxu0 %v1243
    %1876 = vmatprep.subr.bf16.mxu0 %v1248
    %1877 = vmatpush1.bf16.msra.mxu0 %v1247
    %1878 = vmatprep.subr.bf16.mxu0 %v1252
    %1879 = vmatpush1.bf16.msra.mxu0 %v1251
    %1880 = vmatprep.subr.bf16.mxu0 %v1256
    %1881 = vmatpush1.bf16.msra.mxu0 %v1255
    %1882 = vmatprep.subr.bf16.mxu0 %v1260
    %1883 = vmatpush1.bf16.msra.mxu0 %v1259
    %1884 = vmatprep.subr.bf16.mxu0 %v1264
    %1885 = vmatpush1.bf16.msra.mxu0 %v1263
    %1886 = vmatprep.mubr.bf16.mxu0 %v359
    %1887 = vmatmul.mubr.bf16.gmra.mrb[0].mxu0 %v357
    %v1888 = vpop.f32.mrb[0].mxu0
    %v1889 = vadd.f32 %v1848, %v1888
    %v1890 = vpop.f32.mrb[0].mxu0
    %v1891 = vadd.f32 %v1850, %v1890
    %v1892 = vpop.f32.mrb[0].mxu0
    %v1893 = vpop.f32.mrb[0].mxu0
    %1894 = vdwg.mxu0
    %1895 = vmatprep.subr.bf16.mxu0 %v1268
    %1896 = vmatpush1.bf16.msra.mxu0 %v1267
    %1897 = vmatprep.subr.bf16.mxu0 %v1272
    %1898 = vmatpush1.bf16.msra.mxu0 %v1271
    %1899 = vmatprep.subr.bf16.mxu0 %v1276
    %1900 = vmatpush1.bf16.msra.mxu0 %v1275
    %1901 = vmatprep.subr.bf16.mxu0 %v1280
    %1902 = vmatpush1.bf16.msra.mxu0 %v1279
    %1903 = vmatprep.subr.bf16.mxu0 %v1284
    %1904 = vmatpush1.bf16.msra.mxu0 %v1283
    %1905 = vmatprep.subr.bf16.mxu0 %v1288
    %1906 = vmatpush1.bf16.msra.mxu0 %v1287
    %1907 = vmatprep.subr.bf16.mxu0 %v1292
    %1908 = vmatpush1.bf16.msra.mxu0 %v1291
    %1909 = vmatprep.subr.bf16.mxu0 %v1296
    %1910 = vmatpush1.bf16.msra.mxu0 %v1295
    %1911 = vmatprep.subr.bf16.mxu0 %v1300
    %1912 = vmatpush1.bf16.msra.mxu0 %v1299
    %1913 = vmatprep.subr.bf16.mxu0 %v1304
    %1914 = vmatpush1.bf16.msra.mxu0 %v1303
    %1915 = vmatprep.subr.bf16.mxu0 %v1308
    %1916 = vmatpush1.bf16.msra.mxu0 %v1307
    %1917 = vmatprep.subr.bf16.mxu0 %v1312
    %1918 = vmatpush1.bf16.msra.mxu0 %v1311
    %1919 = vmatprep.subr.bf16.mxu0 %v1316
    %1920 = vmatpush1.bf16.msra.mxu0 %v1315
    %1921 = vmatprep.subr.bf16.mxu0 %v1320
    %1922 = vmatpush1.bf16.msra.mxu0 %v1319
    %1923 = vmatprep.subr.bf16.mxu0 %v1324
    %1924 = vmatpush1.bf16.msra.mxu0 %v1323
    %1925 = vmatprep.subr.bf16.mxu0 %v1328
    %1926 = vmatpush1.bf16.msra.mxu0 %v1327
    %1927 = vmatprep.mubr.bf16.mxu0 %v356
    %1928 = vmatmul.mubr.bf16.gmra.mrb[0].mxu0 %v342
    %v1929 = vpop.f32.mrb[0].mxu0
    %v1930 = vadd.f32 %v1889, %v1929
    %v1931 = vpop.f32.mrb[0].mxu0
    %v1932 = vadd.f32 %v1891, %v1931
    %v1933 = vpop.f32.mrb[0].mxu0
    %v1934 = vpop.f32.mrb[0].mxu0
    %1935 = vdwg.mxu0
    %1936 = vmatprep.subr.bf16.mxu0 %v1332
    %1937 = vmatpush1.bf16.msra.mxu0 %v1331
    %1938 = vmatprep.subr.bf16.mxu0 %v1336
    %1939 = vmatpush1.bf16.msra.mxu0 %v1335
    %1940 = vmatprep.subr.bf16.mxu0 %v1340
    %1941 = vmatpush1.bf16.msra.mxu0 %v1339
    %1942 = vmatprep.subr.bf16.mxu0 %v1344
    %1943 = vmatpush1.bf16.msra.mxu0 %v1343
    %1944 = vmatprep.subr.bf16.mxu0 %v1348
    %1945 = vmatpush1.bf16.msra.mxu0 %v1347
    %1946 = vmatprep.subr.bf16.mxu0 %v1352
    %1947 = vmatpush1.bf16.msra.mxu0 %v1351
    %1948 = vmatprep.subr.bf16.mxu0 %v1356
    %1949 = vmatpush1.bf16.msra.mxu0 %v1355
    %1950 = vmatprep.subr.bf16.mxu0 %v1360
    %1951 = vmatpush1.bf16.msra.mxu0 %v1359
    %1952 = vmatprep.subr.bf16.mxu0 %v1364
    %1953 = vmatpush1.bf16.msra.mxu0 %v1363
    %1954 = vmatprep.subr.bf16.mxu0 %v1368
    %1955 = vmatpush1.bf16.msra.mxu0 %v1367
    %1956 = vmatprep.subr.bf16.mxu0 %v1372
    %1957 = vmatpush1.bf16.msra.mxu0 %v1371
    %1958 = vmatprep.subr.bf16.mxu0 %v1376
    %1959 = vmatpush1.bf16.msra.mxu0 %v1375
    %1960 = vmatprep.subr.bf16.mxu0 %v1380
    %1961 = vmatpush1.bf16.msra.mxu0 %v1379
    %1962 = vmatprep.subr.bf16.mxu0 %v1384
    %1963 = vmatpush1.bf16.msra.mxu0 %v1383
    %1964 = vmatprep.subr.bf16.mxu0 %v1388
    %1965 = vmatpush1.bf16.msra.mxu0 %v1387
    %1966 = vmatprep.subr.bf16.mxu0 %v1392
    %1967 = vmatpush1.bf16.msra.mxu0 %v1391
    %1968 = vmatprep.mubr.bf16.mxu0 %v360
    %1969 = vmatmul.mubr.bf16.gmra.mrb[0].mxu0 %v358
    %v1970 = vpop.f32.mrb[0].mxu0
    %v1971 = vadd.f32 %v1930, %v1970
    %v1972 = vpop.f32.mrb[0].mxu0
    %v1973 = vadd.f32 %v1932, %v1972
    %v1974 = vpop.f32.mrb[0].mxu0
    %v1975 = vpop.f32.mrb[0].mxu0
    %1976 = vdwg.mxu0
    %v1977 = vmax.f32 %v1807, 0.0
    %v1978 = vmax.f32 %v1809, 0.0
    %v1979 = vmax.f32 %v1971, 0.0
    %v1980 = vmax.f32 %v1973, 0.0
    %v1985 = vcombine.low %v1977, %v1978
    %v1986 = vcombine.low %v1979, %v1980
    %v1988 = vunpack.c.l.s4 1983009808
    %v1989 = vunpack.c.0.s8 %v1988
    %v1990 = vlaneseq
    %v1991 = vshrl.u32 %v1990, 7
    %v1992 = vsub.s32 %v1989, %v1991
    %v1993 = vrot.slane %v1985, %v1992
    %v1995 = vunpack.c.l.s4 1983009808
    %v1996 = vunpack.c.0.s8 %v1995
    %v1997 = vlaneseq
    %v1998 = vshrl.u32 %v1997, 7
    %v1999 = vsub.s32 %v1996, %v1998
    %v2000 = vrot.slane %v1986, %v1999
    %v2001 = vcombine.low %v1993, %v2000
    %2003 = vst [vmem:[#allocation2] sm:$0xff] %v2001
    %v2004 = vpack.c.bf16 %v1977, %v1977
    %v2005 = vpack.c.bf16 %v1978, %v1978
    %v2006 = vpack.c.bf16 %v1979, %v1979
    %v2007 = vpack.c.bf16 %v1980, %v1980
    %v2008 = vld [vmem:[%s3] sm:$0xff]
    %v2009 = vld [vmem:[%s3 + $0x8] sm:$0xff]
    %v2010 = vld [vmem:[%s3 + $0x10] sm:$0xff]
    %v2011 = vld [vmem:[%s3 + $0x18] sm:$0xff]
    %v2012 = vld [vmem:[%s3 + $0x20] sm:$0xff]
    %v2013 = vld [vmem:[%s3 + $0x28] sm:$0xff]
    %v2014 = vld [vmem:[%s3 + $0x30] sm:$0xff]
    %v2015 = vld [vmem:[%s3 + $0x38] sm:$0xff]
    %v2016 = vld [vmem:[%s3 + $0x40] sm:$0xff]
    %v2017 = vld [vmem:[%s3 + $0x48] sm:$0xff]
    %v2018 = vld [vmem:[%s3 + $0x50] sm:$0xff]
    %v2019 = vld [vmem:[%s3 + $0x58] sm:$0xff]
    %v2020 = vld [vmem:[%s3 + $0x60] sm:$0xff]
    %v2021 = vld [vmem:[%s3 + $0x68] sm:$0xff]
    %v2022 = vld [vmem:[%s3 + $0x70] sm:$0xff]
    %v2023 = vld [vmem:[%s3 + $0x78] sm:$0xff]
    %v2024 = vld [vmem:[%s3 + $0x80] sm:$0xff]
    %v2025 = vld [vmem:[%s3 + $0x88] sm:$0xff]
    %v2026 = vld [vmem:[%s3 + $0x90] sm:$0xff]
    %v2027 = vld [vmem:[%s3 + $0x98] sm:$0xff]
    %v2028 = vld [vmem:[%s3 + $0xa0] sm:$0xff]
    %v2029 = vld [vmem:[%s3 + $0xa8] sm:$0xff]
    %v2030 = vld [vmem:[%s3 + $0xb0] sm:$0xff]
    %v2031 = vld [vmem:[%s3 + $0xb8] sm:$0xff]
    %v2032 = vld [vmem:[%s3 + $0xc0] sm:$0xff]
    %v2033 = vld [vmem:[%s3 + $0xc8] sm:$0xff]
    %v2034 = vld [vmem:[%s3 + $0xd0] sm:$0xff]
    %v2035 = vld [vmem:[%s3 + $0xd8] sm:$0xff]
    %v2036 = vld [vmem:[%s3 + $0xe0] sm:$0xff]
    %v2037 = vld [vmem:[%s3 + $0xe8] sm:$0xff]
    %v2038 = vld [vmem:[%s3 + $0xf0] sm:$0xff]
    %v2039 = vld [vmem:[%s3 + $0xf8] sm:$0xff]
    %v2040 = vld [vmem:[%s3 + $0x100] sm:$0xff]
    %v2041 = vld [vmem:[%s3 + $0x108] sm:$0xff]
    %v2042 = vld [vmem:[%s3 + $0x110] sm:$0xff]
    %v2043 = vld [vmem:[%s3 + $0x118] sm:$0xff]
    %v2044 = vld [vmem:[%s3 + $0x120] sm:$0xff]
    %v2045 = vld [vmem:[%s3 + $0x128] sm:$0xff]
    %v2046 = vld [vmem:[%s3 + $0x130] sm:$0xff]
    %v2047 = vld [vmem:[%s3 + $0x138] sm:$0xff]
    %v2048 = vld [vmem:[%s3 + $0x140] sm:$0xff]
    %v2049 = vld [vmem:[%s3 + $0x148] sm:$0xff]
    %v2050 = vld [vmem:[%s3 + $0x150] sm:$0xff]
    %v2051 = vld [vmem:[%s3 + $0x158] sm:$0xff]
    %v2052 = vld [vmem:[%s3 + $0x160] sm:$0xff]
    %v2053 = vld [vmem:[%s3 + $0x168] sm:$0xff]
    %v2054 = vld [vmem:[%s3 + $0x170] sm:$0xff]
    %v2055 = vld [vmem:[%s3 + $0x178] sm:$0xff]
    %v2056 = vld [vmem:[%s3 + $0x180] sm:$0xff]
    %v2057 = vld [vmem:[%s3 + $0x188] sm:$0xff]
    %v2058 = vld [vmem:[%s3 + $0x190] sm:$0xff]
    %v2059 = vld [vmem:[%s3 + $0x198] sm:$0xff]
    %v2060 = vld [vmem:[%s3 + $0x1a0] sm:$0xff]
    %v2061 = vld [vmem:[%s3 + $0x1a8] sm:$0xff]
    %v2062 = vld [vmem:[%s3 + $0x1b0] sm:$0xff]
    %v2063 = vld [vmem:[%s3 + $0x1b8] sm:$0xff]
    %v2064 = vld [vmem:[%s3 + $0x1c0] sm:$0xff]
    %v2065 = vld [vmem:[%s3 + $0x1c8] sm:$0xff]
    %v2066 = vld [vmem:[%s3 + $0x1d0] sm:$0xff]
    %v2067 = vld [vmem:[%s3 + $0x1d8] sm:$0xff]
    %v2068 = vld [vmem:[%s3 + $0x1e0] sm:$0xff]
    %v2069 = vld [vmem:[%s3 + $0x1e8] sm:$0xff]
    %v2070 = vld [vmem:[%s3 + $0x1f0] sm:$0xff]
    %v2071 = vld [vmem:[%s3 + $0x1f8] sm:$0xff]
    %v2072 = vld [vmem:[%s4] sm:$0x3]
    %v2074 = vlaneseq
    %v2075 = vshrl.u32 %v2074, 7
    %v2076 = vsub.s32 0, %v2075
    %v2077 = vrot.slane %v2072, %v2076
    %v2078 = vlaneseq
    %v2079 = vshrl.u32 %v2078, 7
    %v2080 = vsub.s32 1, %v2079
    %v2081 = vrot.slane %v2072, %v2080
    %v2148 = vunpack.c.l.b16 %v2008
    %v2149 = vunpack.c.h.b16 %v2008
    %v2150 = vunpack.c.l.b16 %v2009
    %v2151 = vunpack.c.h.b16 %v2009
    %v2152 = vunpack.c.l.b16 %v2010
    %v2153 = vunpack.c.h.b16 %v2010
    %v2154 = vunpack.c.l.b16 %v2011
    %v2155 = vunpack.c.h.b16 %v2011
    %v2156 = vunpack.c.l.b16 %v2012
    %v2157 = vunpack.c.h.b16 %v2012
    %v2158 = vunpack.c.l.b16 %v2013
    %v2159 = vunpack.c.h.b16 %v2013
    %v2160 = vunpack.c.l.b16 %v2014
    %v2161 = vunpack.c.h.b16 %v2014
    %v2162 = vunpack.c.l.b16 %v2015
    %v2163 = vunpack.c.h.b16 %v2015
    %v2164 = vunpack.c.l.b16 %v2016
    %v2165 = vunpack.c.h.b16 %v2016
    %v2166 = vunpack.c.l.b16 %v2017
    %v2167 = vunpack.c.h.b16 %v2017
    %v2168 = vunpack.c.l.b16 %v2018
    %v2169 = vunpack.c.h.b16 %v2018
    %v2170 = vunpack.c.l.b16 %v2019
    %v2171 = vunpack.c.h.b16 %v2019
    %v2172 = vunpack.c.l.b16 %v2020
    %v2173 = vunpack.c.h.b16 %v2020
    %v2174 = vunpack.c.l.b16 %v2021
    %v2175 = vunpack.c.h.b16 %v2021
    %v2176 = vunpack.c.l.b16 %v2022
    %v2177 = vunpack.c.h.b16 %v2022
    %v2178 = vunpack.c.l.b16 %v2023
    %v2179 = vunpack.c.h.b16 %v2023
    %v2180 = vunpack.c.l.b16 %v2024
    %v2181 = vunpack.c.h.b16 %v2024
    %v2182 = vunpack.c.l.b16 %v2025
    %v2183 = vunpack.c.h.b16 %v2025
    %v2184 = vunpack.c.l.b16 %v2026
    %v2185 = vunpack.c.h.b16 %v2026
    %v2186 = vunpack.c.l.b16 %v2027
    %v2187 = vunpack.c.h.b16 %v2027
    %v2188 = vunpack.c.l.b16 %v2028
    %v2189 = vunpack.c.h.b16 %v2028
    %v2190 = vunpack.c.l.b16 %v2029
    %v2191 = vunpack.c.h.b16 %v2029
    %v2192 = vunpack.c.l.b16 %v2030
    %v2193 = vunpack.c.h.b16 %v2030
    %v2194 = vunpack.c.l.b16 %v2031
    %v2195 = vunpack.c.h.b16 %v2031
    %v2196 = vunpack.c.l.b16 %v2032
    %v2197 = vunpack.c.h.b16 %v2032
    %v2198 = vunpack.c.l.b16 %v2033
    %v2199 = vunpack.c.h.b16 %v2033
    %v2200 = vunpack.c.l.b16 %v2034
    %v2201 = vunpack.c.h.b16 %v2034
    %v2202 = vunpack.c.l.b16 %v2035
    %v2203 = vunpack.c.h.b16 %v2035
    %v2204 = vunpack.c.l.b16 %v2036
    %v2205 = vunpack.c.h.b16 %v2036
    %v2206 = vunpack.c.l.b16 %v2037
    %v2207 = vunpack.c.h.b16 %v2037
    %v2208 = vunpack.c.l.b16 %v2038
    %v2209 = vunpack.c.h.b16 %v2038
    %v2210 = vunpack.c.l.b16 %v2039
    %v2211 = vunpack.c.h.b16 %v2039
    %v2212 = vunpack.c.l.b16 %v2040
    %v2213 = vunpack.c.h.b16 %v2040
    %v2214 = vunpack.c.l.b16 %v2041
    %v2215 = vunpack.c.h.b16 %v2041
    %v2216 = vunpack.c.l.b16 %v2042
    %v2217 = vunpack.c.h.b16 %v2042
    %v2218 = vunpack.c.l.b16 %v2043
    %v2219 = vunpack.c.h.b16 %v2043
    %v2220 = vunpack.c.l.b16 %v2044
    %v2221 = vunpack.c.h.b16 %v2044
    %v2222 = vunpack.c.l.b16 %v2045
    %v2223 = vunpack.c.h.b16 %v2045
    %v2224 = vunpack.c.l.b16 %v2046
    %v2225 = vunpack.c.h.b16 %v2046
    %v2226 = vunpack.c.l.b16 %v2047
    %v2227 = vunpack.c.h.b16 %v2047
    %v2228 = vunpack.c.l.b16 %v2048
    %v2229 = vunpack.c.h.b16 %v2048
    %v2230 = vunpack.c.l.b16 %v2049
    %v2231 = vunpack.c.h.b16 %v2049
    %v2232 = vunpack.c.l.b16 %v2050
    %v2233 = vunpack.c.h.b16 %v2050
    %v2234 = vunpack.c.l.b16 %v2051
    %v2235 = vunpack.c.h.b16 %v2051
    %v2236 = vunpack.c.l.b16 %v2052
    %v2237 = vunpack.c.h.b16 %v2052
    %v2238 = vunpack.c.l.b16 %v2053
    %v2239 = vunpack.c.h.b16 %v2053
    %v2240 = vunpack.c.l.b16 %v2054
    %v2241 = vunpack.c.h.b16 %v2054
    %v2242 = vunpack.c.l.b16 %v2055
    %v2243 = vunpack.c.h.b16 %v2055
    %v2244 = vunpack.c.l.b16 %v2056
    %v2245 = vunpack.c.h.b16 %v2056
    %v2246 = vunpack.c.l.b16 %v2057
    %v2247 = vunpack.c.h.b16 %v2057
    %v2248 = vunpack.c.l.b16 %v2058
    %v2249 = vunpack.c.h.b16 %v2058
    %v2250 = vunpack.c.l.b16 %v2059
    %v2251 = vunpack.c.h.b16 %v2059
    %v2252 = vunpack.c.l.b16 %v2060
    %v2253 = vunpack.c.h.b16 %v2060
    %v2254 = vunpack.c.l.b16 %v2061
    %v2255 = vunpack.c.h.b16 %v2061
    %v2256 = vunpack.c.l.b16 %v2062
    %v2257 = vunpack.c.h.b16 %v2062
    %v2258 = vunpack.c.l.b16 %v2063
    %v2259 = vunpack.c.h.b16 %v2063
    %v2260 = vunpack.c.l.b16 %v2064
    %v2261 = vunpack.c.h.b16 %v2064
    %v2262 = vunpack.c.l.b16 %v2065
    %v2263 = vunpack.c.h.b16 %v2065
    %v2264 = vunpack.c.l.b16 %v2066
    %v2265 = vunpack.c.h.b16 %v2066
    %v2266 = vunpack.c.l.b16 %v2067
    %v2267 = vunpack.c.h.b16 %v2067
    %v2268 = vunpack.c.l.b16 %v2068
    %v2269 = vunpack.c.h.b16 %v2068
    %v2270 = vunpack.c.l.b16 %v2069
    %v2271 = vunpack.c.h.b16 %v2069
    %v2272 = vunpack.c.l.b16 %v2070
    %v2273 = vunpack.c.h.b16 %v2070
    %v2274 = vunpack.c.l.b16 %v2071
    %v2275 = vunpack.c.h.b16 %v2071
    %v2276 = vpack.c.b16 %v2150, %v2148
    %v2277 = vpack.c.b16 %v2151, %v2149
    %v2278 = vpack.c.b16 %v2154, %v2152
    %v2279 = vpack.c.b16 %v2155, %v2153
    %v2280 = vpack.c.b16 %v2158, %v2156
    %v2281 = vpack.c.b16 %v2159, %v2157
    %v2282 = vpack.c.b16 %v2162, %v2160
    %v2283 = vpack.c.b16 %v2163, %v2161
    %v2284 = vpack.c.b16 %v2166, %v2164
    %v2285 = vpack.c.b16 %v2167, %v2165
    %v2286 = vpack.c.b16 %v2170, %v2168
    %v2287 = vpack.c.b16 %v2171, %v2169
    %v2288 = vpack.c.b16 %v2174, %v2172
    %v2289 = vpack.c.b16 %v2175, %v2173
    %v2290 = vpack.c.b16 %v2178, %v2176
    %v2291 = vpack.c.b16 %v2179, %v2177
    %v2292 = vpack.c.b16 %v2182, %v2180
    %v2293 = vpack.c.b16 %v2183, %v2181
    %v2294 = vpack.c.b16 %v2186, %v2184
    %v2295 = vpack.c.b16 %v2187, %v2185
    %v2296 = vpack.c.b16 %v2190, %v2188
    %v2297 = vpack.c.b16 %v2191, %v2189
    %v2298 = vpack.c.b16 %v2194, %v2192
    %v2299 = vpack.c.b16 %v2195, %v2193
    %v2300 = vpack.c.b16 %v2198, %v2196
    %v2301 = vpack.c.b16 %v2199, %v2197
    %v2302 = vpack.c.b16 %v2202, %v2200
    %v2303 = vpack.c.b16 %v2203, %v2201
    %v2304 = vpack.c.b16 %v2206, %v2204
    %v2305 = vpack.c.b16 %v2207, %v2205
    %v2306 = vpack.c.b16 %v2210, %v2208
    %v2307 = vpack.c.b16 %v2211, %v2209
    %v2308 = vpack.c.b16 %v2214, %v2212
    %v2309 = vpack.c.b16 %v2215, %v2213
    %v2310 = vpack.c.b16 %v2218, %v2216
    %v2311 = vpack.c.b16 %v2219, %v2217
    %v2312 = vpack.c.b16 %v2222, %v2220
    %v2313 = vpack.c.b16 %v2223, %v2221
    %v2314 = vpack.c.b16 %v2226, %v2224
    %v2315 = vpack.c.b16 %v2227, %v2225
    %v2316 = vpack.c.b16 %v2230, %v2228
    %v2317 = vpack.c.b16 %v2231, %v2229
    %v2318 = vpack.c.b16 %v2234, %v2232
    %v2319 = vpack.c.b16 %v2235, %v2233
    %v2320 = vpack.c.b16 %v2238, %v2236
    %v2321 = vpack.c.b16 %v2239, %v2237
    %v2322 = vpack.c.b16 %v2242, %v2240
    %v2323 = vpack.c.b16 %v2243, %v2241
    %v2324 = vpack.c.b16 %v2246, %v2244
    %v2325 = vpack.c.b16 %v2247, %v2245
    %v2326 = vpack.c.b16 %v2250, %v2248
    %v2327 = vpack.c.b16 %v2251, %v2249
    %v2328 = vpack.c.b16 %v2254, %v2252
    %v2329 = vpack.c.b16 %v2255, %v2253
    %v2330 = vpack.c.b16 %v2258, %v2256
    %v2331 = vpack.c.b16 %v2259, %v2257
    %v2332 = vpack.c.b16 %v2262, %v2260
    %v2333 = vpack.c.b16 %v2263, %v2261
    %v2334 = vpack.c.b16 %v2266, %v2264
    %v2335 = vpack.c.b16 %v2267, %v2265
    %v2336 = vpack.c.b16 %v2270, %v2268
    %v2337 = vpack.c.b16 %v2271, %v2269
    %v2338 = vpack.c.b16 %v2274, %v2272
    %v2339 = vpack.c.b16 %v2275, %v2273
    %2404 = vmatprep.subr.bf16.mxu0 %v2277
    %2405 = vmatpush1.bf16.msra.mxu0 %v2276
    %2406 = vmatprep.subr.bf16.mxu0 %v2279
    %2407 = vmatpush1.bf16.msra.mxu0 %v2278
    %2408 = vmatprep.subr.bf16.mxu0 %v2281
    %2409 = vmatpush1.bf16.msra.mxu0 %v2280
    %2410 = vmatprep.subr.bf16.mxu0 %v2283
    %2411 = vmatpush1.bf16.msra.mxu0 %v2282
    %2412 = vmatprep.subr.bf16.mxu0 %v2285
    %2413 = vmatpush1.bf16.msra.mxu0 %v2284
    %2414 = vmatprep.subr.bf16.mxu0 %v2287
    %2415 = vmatpush1.bf16.msra.mxu0 %v2286
    %2416 = vmatprep.subr.bf16.mxu0 %v2289
    %2417 = vmatpush1.bf16.msra.mxu0 %v2288
    %2418 = vmatprep.subr.bf16.mxu0 %v2291
    %2419 = vmatpush1.bf16.msra.mxu0 %v2290
    %2420 = vmatprep.subr.bf16.mxu0 %v2293
    %2421 = vmatpush1.bf16.msra.mxu0 %v2292
    %2422 = vmatprep.subr.bf16.mxu0 %v2295
    %2423 = vmatpush1.bf16.msra.mxu0 %v2294
    %2424 = vmatprep.subr.bf16.mxu0 %v2297
    %2425 = vmatpush1.bf16.msra.mxu0 %v2296
    %2426 = vmatprep.subr.bf16.mxu0 %v2299
    %2427 = vmatpush1.bf16.msra.mxu0 %v2298
    %2428 = vmatprep.subr.bf16.mxu0 %v2301
    %2429 = vmatpush1.bf16.msra.mxu0 %v2300
    %2430 = vmatprep.subr.bf16.mxu0 %v2303
    %2431 = vmatpush1.bf16.msra.mxu0 %v2302
    %2432 = vmatprep.subr.bf16.mxu0 %v2305
    %2433 = vmatpush1.bf16.msra.mxu0 %v2304
    %2434 = vmatprep.subr.bf16.mxu0 %v2307
    %2435 = vmatpush1.bf16.msra.mxu0 %v2306
    %2436 = vmatprep.mubr.bf16.mxu0 %v2005
    %2437 = vmatmul.mubr.bf16.gmra.mrb[0].mxu0 %v2004
    %v2438 = vpop.f32.mrb[0].mxu0
    %v2439 = vadd.f32 %v2077, %v2438
    %v2440 = vpop.f32.mrb[0].mxu0
    %v2441 = vadd.f32 %v2081, %v2440
    %v2442 = vpop.f32.mrb[0].mxu0
    %v2443 = vpop.f32.mrb[0].mxu0
    %2444 = vdwg.mxu0
    %2445 = vmatprep.subr.bf16.mxu0 %v2309
    %2446 = vmatpush1.bf16.msra.mxu0 %v2308
    %2447 = vmatprep.subr.bf16.mxu0 %v2311
    %2448 = vmatpush1.bf16.msra.mxu0 %v2310
    %2449 = vmatprep.subr.bf16.mxu0 %v2313
    %2450 = vmatpush1.bf16.msra.mxu0 %v2312
    %2451 = vmatprep.subr.bf16.mxu0 %v2315
    %2452 = vmatpush1.bf16.msra.mxu0 %v2314
    %2453 = vmatprep.subr.bf16.mxu0 %v2317
    %2454 = vmatpush1.bf16.msra.mxu0 %v2316
    %2455 = vmatprep.subr.bf16.mxu0 %v2319
    %2456 = vmatpush1.bf16.msra.mxu0 %v2318
    %2457 = vmatprep.subr.bf16.mxu0 %v2321
    %2458 = vmatpush1.bf16.msra.mxu0 %v2320
    %2459 = vmatprep.subr.bf16.mxu0 %v2323
    %2460 = vmatpush1.bf16.msra.mxu0 %v2322
    %2461 = vmatprep.subr.bf16.mxu0 %v2325
    %2462 = vmatpush1.bf16.msra.mxu0 %v2324
    %2463 = vmatprep.subr.bf16.mxu0 %v2327
    %2464 = vmatpush1.bf16.msra.mxu0 %v2326
    %2465 = vmatprep.subr.bf16.mxu0 %v2329
    %2466 = vmatpush1.bf16.msra.mxu0 %v2328
    %2467 = vmatprep.subr.bf16.mxu0 %v2331
    %2468 = vmatpush1.bf16.msra.mxu0 %v2330
    %2469 = vmatprep.subr.bf16.mxu0 %v2333
    %2470 = vmatpush1.bf16.msra.mxu0 %v2332
    %2471 = vmatprep.subr.bf16.mxu0 %v2335
    %2472 = vmatpush1.bf16.msra.mxu0 %v2334
    %2473 = vmatprep.subr.bf16.mxu0 %v2337
    %2474 = vmatpush1.bf16.msra.mxu0 %v2336
    %2475 = vmatprep.subr.bf16.mxu0 %v2339
    %2476 = vmatpush1.bf16.msra.mxu0 %v2338
    %2477 = vmatprep.mubr.bf16.mxu0 %v2007
    %2478 = vmatmul.mubr.bf16.gmra.mrb[0].mxu0 %v2006
    %v2479 = vpop.f32.mrb[0].mxu0
    %v2480 = vadd.f32 %v2439, %v2479
    %v2481 = vpop.f32.mrb[0].mxu0
    %v2482 = vadd.f32 %v2441, %v2481
    %v2483 = vpop.f32.mrb[0].mxu0
    %v2484 = vpop.f32.mrb[0].mxu0
    %2485 = vdwg.mxu0
    %v2486 = vmax.f32 %v2480, 0.0
    %v2487 = vmax.f32 %v2482, 0.0
    %v2490 = vcombine.low %v2486, %v2487
    %v2492 = vunpack.c.l.s4 1983009808
    %v2493 = vunpack.c.0.s8 %v2492
    %v2494 = vlaneseq
    %v2495 = vshrl.u32 %v2494, 7
    %v2496 = vsub.s32 %v2493, %v2495
    %v2497 = vrot.slane %v2490, %v2496
    %2499 = vst [vmem:[#allocation4] sm:$0xf] %v2497
    %v2500 = vpack.c.bf16 %v2486, %v2486
    %v2501 = vpack.c.bf16 %v2487, %v2487
    %v2502 = vld [vmem:[%s5] sm:$0xf]
    %v2503 = vld [vmem:[%s5 + $0x4] sm:$0xf]
    %v2504 = vld [vmem:[%s5 + $0x8] sm:$0xf]
    %v2505 = vld [vmem:[%s5 + $0xc] sm:$0xf]
    %v2506 = vld [vmem:[%s5 + $0x10] sm:$0xf]
    %v2507 = vld [vmem:[%s5 + $0x14] sm:$0xf]
    %v2508 = vld [vmem:[%s5 + $0x18] sm:$0xf]
    %v2509 = vld [vmem:[%s5 + $0x1c] sm:$0xf]
    %v2510 = vld [vmem:[%s5 + $0x20] sm:$0xf]
    %v2511 = vld [vmem:[%s5 + $0x24] sm:$0xf]
    %v2512 = vld [vmem:[%s5 + $0x28] sm:$0xf]
    %v2513 = vld [vmem:[%s5 + $0x2c] sm:$0xf]
    %v2514 = vld [vmem:[%s5 + $0x30] sm:$0xf]
    %v2515 = vld [vmem:[%s5 + $0x34] sm:$0xf]
    %v2516 = vld [vmem:[%s5 + $0x38] sm:$0xf]
    %v2517 = vld [vmem:[%s5 + $0x3c] sm:$0xf]
    %v2518 = vld [vmem:[%s5 + $0x40] sm:$0xf]
    %v2519 = vld [vmem:[%s5 + $0x44] sm:$0xf]
    %v2520 = vld [vmem:[%s5 + $0x48] sm:$0xf]
    %v2521 = vld [vmem:[%s5 + $0x4c] sm:$0xf]
    %v2522 = vld [vmem:[%s5 + $0x50] sm:$0xf]
    %v2523 = vld [vmem:[%s5 + $0x54] sm:$0xf]
    %v2524 = vld [vmem:[%s5 + $0x58] sm:$0xf]
    %v2525 = vld [vmem:[%s5 + $0x5c] sm:$0xf]
    %v2526 = vld [vmem:[%s5 + $0x60] sm:$0xf]
    %v2527 = vld [vmem:[%s5 + $0x64] sm:$0xf]
    %v2528 = vld [vmem:[%s5 + $0x68] sm:$0xf]
    %v2529 = vld [vmem:[%s5 + $0x6c] sm:$0xf]
    %v2530 = vld [vmem:[%s5 + $0x70] sm:$0xf]
    %v2531 = vld [vmem:[%s5 + $0x74] sm:$0xf]
    %v2532 = vld [vmem:[%s5 + $0x78] sm:$0xf]
    %v2533 = vld [vmem:[%s5 + $0x7c] sm:$0xf]
    %v2534 = vld [vmem:[%s6] sm:$0x1]
    %v2536 = vlaneseq
    %v2537 = vshrl.u32 %v2536, 7
    %v2538 = vsub.s32 0, %v2537
    %v2539 = vrot.slane %v2534, %v2538
    %v2573 = vunpack.c.l.b16 %v2502
    %v2574 = vunpack.c.l.b16 %v2503
    %v2575 = vunpack.c.l.b16 %v2504
    %v2576 = vunpack.c.l.b16 %v2505
    %v2577 = vunpack.c.l.b16 %v2506
    %v2578 = vunpack.c.l.b16 %v2507
    %v2579 = vunpack.c.l.b16 %v2508
    %v2580 = vunpack.c.l.b16 %v2509
    %v2581 = vunpack.c.l.b16 %v2510
    %v2582 = vunpack.c.l.b16 %v2511
    %v2583 = vunpack.c.l.b16 %v2512
    %v2584 = vunpack.c.l.b16 %v2513
    %v2585 = vunpack.c.l.b16 %v2514
    %v2586 = vunpack.c.l.b16 %v2515
    %v2587 = vunpack.c.l.b16 %v2516
    %v2588 = vunpack.c.l.b16 %v2517
    %v2589 = vunpack.c.l.b16 %v2518
    %v2590 = vunpack.c.l.b16 %v2519
    %v2591 = vunpack.c.l.b16 %v2520
    %v2592 = vunpack.c.l.b16 %v2521
    %v2593 = vunpack.c.l.b16 %v2522
    %v2594 = vunpack.c.l.b16 %v2523
    %v2595 = vunpack.c.l.b16 %v2524
    %v2596 = vunpack.c.l.b16 %v2525
    %v2597 = vunpack.c.l.b16 %v2526
    %v2598 = vunpack.c.l.b16 %v2527
    %v2599 = vunpack.c.l.b16 %v2528
    %v2600 = vunpack.c.l.b16 %v2529
    %v2601 = vunpack.c.l.b16 %v2530
    %v2602 = vunpack.c.l.b16 %v2531
    %v2603 = vunpack.c.l.b16 %v2532
    %v2604 = vunpack.c.l.b16 %v2533
    %v2605 = vpack.c.b16 %v2574, %v2573
    %v2606 = vpack.c.b16 %v2576, %v2575
    %v2607 = vpack.c.b16 %v2578, %v2577
    %v2608 = vpack.c.b16 %v2580, %v2579
    %v2609 = vpack.c.b16 %v2582, %v2581
    %v2610 = vpack.c.b16 %v2584, %v2583
    %v2611 = vpack.c.b16 %v2586, %v2585
    %v2612 = vpack.c.b16 %v2588, %v2587
    %v2613 = vpack.c.b16 %v2590, %v2589
    %v2614 = vpack.c.b16 %v2592, %v2591
    %v2615 = vpack.c.b16 %v2594, %v2593
    %v2616 = vpack.c.b16 %v2596, %v2595
    %v2617 = vpack.c.b16 %v2598, %v2597
    %v2618 = vpack.c.b16 %v2600, %v2599
    %v2619 = vpack.c.b16 %v2602, %v2601
    %v2620 = vpack.c.b16 %v2604, %v2603
    %2637 = vmatprep.subr.bf16.mxu0 0
    %2638 = vmatpush1.bf16.msra.mxu0 %v2605
    %2639 = vmatprep.subr.bf16.mxu0 0
    %2640 = vmatpush1.bf16.msra.mxu0 %v2606
    %2641 = vmatprep.subr.bf16.mxu0 0
    %2642 = vmatpush1.bf16.msra.mxu0 %v2607
    %2643 = vmatprep.subr.bf16.mxu0 0
    %2644 = vmatpush1.bf16.msra.mxu0 %v2608
    %2645 = vmatprep.subr.bf16.mxu0 0
    %2646 = vmatpush1.bf16.msra.mxu0 %v2609
    %2647 = vmatprep.subr.bf16.mxu0 0
    %2648 = vmatpush1.bf16.msra.mxu0 %v2610
    %2649 = vmatprep.subr.bf16.mxu0 0
    %2650 = vmatpush1.bf16.msra.mxu0 %v2611
    %2651 = vmatprep.subr.bf16.mxu0 0
    %2652 = vmatpush1.bf16.msra.mxu0 %v2612
    %2653 = vmatprep.subr.bf16.mxu0 0
    %2654 = vmatpush1.bf16.msra.mxu0 %v2613
    %2655 = vmatprep.subr.bf16.mxu0 0
    %2656 = vmatpush1.bf16.msra.mxu0 %v2614
    %2657 = vmatprep.subr.bf16.mxu0 0
    %2658 = vmatpush1.bf16.msra.mxu0 %v2615
    %2659 = vmatprep.subr.bf16.mxu0 0
    %2660 = vmatpush1.bf16.msra.mxu0 %v2616
    %2661 = vmatprep.subr.bf16.mxu0 0
    %2662 = vmatpush1.bf16.msra.mxu0 %v2617
    %2663 = vmatprep.subr.bf16.mxu0 0
    %2664 = vmatpush1.bf16.msra.mxu0 %v2618
    %2665 = vmatprep.subr.bf16.mxu0 0
    %2666 = vmatpush1.bf16.msra.mxu0 %v2619
    %2667 = vmatprep.subr.bf16.mxu0 0
    %2668 = vmatpush1.bf16.msra.mxu0 %v2620
    %2669 = vmatprep.mubr.bf16.mxu0 %v2501
    %2670 = vmatmul.mubr.bf16.gmra.mrb[0].mxu0 %v2500
    %v2671 = vpop.f32.mrb[0].mxu0
    %v2672 = vadd.f32 %v2539, %v2671
    %v2673 = vpop.f32.mrb[0].mxu0
    %v2674 = vpop.f32.mrb[0].mxu0
    %v2675 = vpop.f32.mrb[0].mxu0
    %2676 = vdwg.mxu0
    %2677 = vst [vmem:[%s9] sm:$0x3] %v2672
    // Predicated region
    $region30: #{pointnet2_forward.9} parent=1 // pred_check
      _
    $region31: #{pointnet2_forward.9} parent=1 // pred_check_branch
      %2679 = sbr.rel (0) target = $region33
    $region32: #{pointnet2_forward.9} parent=1 // pred_region
      %s2681 = ssub.s32 128, 128
      %2682 = vsyncadd [#allocation3], %s2681
      %s2684 = sshll.u32 [#allocation2], 4
      %s2685 = int_to_ptr.vmem [resolvable:$true] %s2684
      %2687 = dma.vmem_to_hbm [thread:$0]  %s2685, 128, %s7, [#allocation3]
    $region33: #{pointnet2_forward.9} parent=1 // pred_fallthru
      _
    // Predicated region
    $region34: #{pointnet2_forward.9} parent=1 // pred_check
      _
    $region35: #{pointnet2_forward.9} parent=1 // pred_check_branch
      %2689 = sbr.rel (0) target = $region37
    $region36: #{pointnet2_forward.9} parent=1 // pred_region
      %s2691 = ssub.s32 64, 64
      %2692 = vsyncadd [#allocation5], %s2691
      %s2694 = sshll.u32 [#allocation4], 4
      %s2695 = int_to_ptr.vmem [resolvable:$true] %s2694
      %2697 = dma.vmem_to_hbm [thread:$0]  %s2695, 64, %s8, [#allocation5]
    $region37: #{pointnet2_forward.9} parent=1 // pred_fallthru
      _
    // Predicated region
    $region38: #{pointnet2_forward.9} parent=1 // pred_check
      _
    $region39: #{pointnet2_forward.9} parent=1 // pred_check_branch
      %2699 = sbr.rel (0) target = $region41
    $region40: #{pointnet2_forward.9} parent=1 // pred_region
      _
    $region41: #{pointnet2_forward.9} parent=1 // pred_fallthru
      _
    // Predicated region
    $region42: #{pointnet2_forward.9} parent=1 // pred_check
      _
    $region43: #{pointnet2_forward.9} parent=1 // pred_check_branch
      %2701 = sbr.rel (0) target = $region45
    $region44: #{pointnet2_forward.9} parent=1 // pred_region
      %2702 = dma.done [#allocation3], 128
    $region45: #{pointnet2_forward.9} parent=1 // pred_fallthru
      _
    // Predicated region
    $region46: #{pointnet2_forward.9} parent=1 // pred_check
      _
    $region47: #{pointnet2_forward.9} parent=1 // pred_check_branch
      %2704 = sbr.rel (0) target = $region49
    $region48: #{pointnet2_forward.9} parent=1 // pred_region
      %2705 = dma.done [#allocation5], 64
    $region49: #{pointnet2_forward.9} parent=1 // pred_fallthru
      _
    // Predicated region
    $region50: #{pointnet2_forward.9} parent=1 // pred_check
      _
    $region51: #{pointnet2_forward.9} parent=1 // pred_check_branch
      %2707 = sbr.rel (0) target = $region53
    $region52: #{pointnet2_forward.9} parent=1 // pred_region
      _
    $region53: #{pointnet2_forward.9} parent=1 // pred_fallthru
      _
    %2708 = vsyncpa [#allocation3], 1
    %2709 = vsyncpa [#allocation5], 1

</llo_original>
